<compile_context>
chip_gen: v7x
topology: tpu7x:2x2x1
jax: 0.10.0
libtpu: 0.0.40
codegen_flags: <defaults>
</compile_context>

<pallas_src>
import math
import functools

import jax
import jax.numpy as jnp
from jax.experimental import pallas as pl
from jax.experimental.pallas import tpu as pltpu


def ckgnet_kernel(x_ref, protos_ref, probs_ref, wqkv_ref, wo_ref, bias_ref,
                  out_ref, *, head_num):
    """Fused CKGNet forward.

    Shapes (all float32):
      x_ref:     (N, D)            query features
      protos_ref:(2, M, D)         [prototype_offline; prototype_online]
      probs_ref: (2, N, C)         [probs_offline; probs_online]
      wqkv_ref:  (3, G, D, h)      per-head Q/K/V weights, G = 2*head_num,
                                   Q weights pre-scaled by 1/sqrt(h)
      wo_ref:    (G, h, C)         per-head output-projection weights
      bias_ref:  (2, C)            [bias_offline; bias_online]
      out_ref:   (N, C)            softmax over classes
    """
    H = head_num
    G = 2 * H

    x = x_ref[...]                                  # (N, D)
    N, D = x.shape
    M = protos_ref.shape[1]

    wq = wqkv_ref[0]                                # (G, D, h)
    wk = wqkv_ref[1]
    wv = wqkv_ref[2]
    wo = wo_ref[...]                                # (G, h, C)
    b = bias_ref[...]                               # (2, C)

    # Broadcast the query features over all groups and build the per-group
    # key/value source (off-branch heads see proto_off, on-branch heads proto_on).
    xb = jnp.broadcast_to(x[None, :, :], (G, N, D))                 # (G, N, D)
    yb = jnp.concatenate(
        [jnp.broadcast_to(protos_ref[0][None, :, :], (H, M, D)),
         jnp.broadcast_to(protos_ref[1][None, :, :], (H, M, D))],
        axis=0)                                                     # (G, M, D)

    # Batched projections (MXU). Scale for Q already folded into wq.
    qb = jnp.einsum('gnd,gdk->gnk', xb, wq,
                    preferred_element_type=jnp.float32)             # (G, N, h)
    kb = jnp.einsum('gmd,gdk->gmk', yb, wk,
                    preferred_element_type=jnp.float32)             # (G, M, h)
    vb = jnp.einsum('gmd,gdk->gmk', yb, wv,
                    preferred_element_type=jnp.float32)             # (G, M, h)

    # Batched attention scores + single softmax over all groups.
    s = jnp.einsum('gnk,gmk->gnm', qb, kb,
                   preferred_element_type=jnp.float32)              # (G, N, M)
    s = s - jnp.max(s, axis=-1, keepdims=True)
    p = jnp.exp(s)
    p = p / jnp.sum(p, axis=-1, keepdims=True)

    # Batched context and per-head output projection.
    ctx = jnp.einsum('gnm,gmk->gnk', p, vb,
                     preferred_element_type=jnp.float32)            # (G, N, h)
    o3 = jnp.einsum('gnk,gkc->gnc', ctx, wo,
                    preferred_element_type=jnp.float32)             # (G, N, C)

    # Sum per-head contributions (== concat(ctx) @ Wo) and add bias per branch.
    w_off = jnp.sum(o3[:H], axis=0) + b[0:1, :]                     # (N, C)
    w_on = jnp.sum(o3[H:], axis=0) + b[1:2, :]                      # (N, C)

    # Probability-weighted merge + final softmax over classes.
    logits = w_off * probs_ref[0] + w_on * probs_ref[1]
    logits = logits - jnp.max(logits, axis=-1, keepdims=True)
    e = jnp.exp(logits)
    out_ref[...] = e / jnp.sum(e, axis=-1, keepdims=True)


def pack_params(params, head_num):
    """One-time host-side packing of the per-branch weights.

    Returns:
      wqkv: (3, 2*head_num, hidden, h)  -- Q weights pre-scaled by 1/sqrt(h)
      wo:   (2*head_num, h, num_classes)
      bias: (2, num_classes)
    """
    wq_off = params["off"]["wq"]
    D, A = wq_off.shape
    C = params["off"]["wo"].shape[1]
    assert A % head_num == 0, "head_num must divide all_head_size"
    h = A // head_num
    scale = 1.0 / math.sqrt(h)

    def per_head(w):  # (D, A) -> (head_num, D, h)
        return jnp.transpose(w.reshape(D, head_num, h), (1, 0, 2))

    wq = jnp.concatenate([per_head(params["off"]["wq"]) * scale,
                          per_head(params["on"]["wq"]) * scale], axis=0)
    wk = jnp.concatenate([per_head(params["off"]["wk"]),
                          per_head(params["on"]["wk"])], axis=0)
    wv = jnp.concatenate([per_head(params["off"]["wv"]),
                          per_head(params["on"]["wv"])], axis=0)
    wqkv = jnp.stack([wq, wk, wv], axis=0)                          # (3, G, D, h)

    wo = jnp.concatenate([params["off"]["wo"].reshape(head_num, h, C),
                          params["on"]["wo"].reshape(head_num, h, C)], axis=0)
    bias = jnp.concatenate([params["off"]["bo"], params["on"]["bo"]], axis=0)
    return dict(wqkv=wqkv, wo=wo, bias=bias)


def ckgnet_forward(x, proto_off, proto_on, probs_off, probs_on, packed, head_num):
    N, D = x.shape
    M = proto_off.shape[0]
    C = probs_off.shape[1]
    G = 2 * head_num
    h = packed["wqkv"].shape[-1]

    # Pack runtime inputs to minimize per-input DMA count (2 instead of 4).
    protos = jnp.stack([proto_off, proto_on], axis=0)               # (2, M, D)
    probs = jnp.stack([probs_off, probs_on], axis=0)                # (2, N, C)

    args = (x, protos, probs, packed["wqkv"], packed["wo"], packed["bias"])

    flops = 2 * G * (N * D * h + 2 * M * D * h + 2 * N * M * h + N * h * C)
    transcendentals = G * N * M + N * C
    bytes_accessed = sum(int(a.size) * 4 for a in args) + N * C * 4

    kernel = functools.partial(ckgnet_kernel, head_num=head_num)

    return pl.pallas_call(
        kernel,
        out_shape=jax.ShapeDtypeStruct((N, C), jnp.float32),
        in_specs=[pl.BlockSpec(memory_space=pltpu.MemorySpace.VMEM)] * len(args),
        out_specs=pl.BlockSpec(memory_space=pltpu.MemorySpace.VMEM),
        cost_estimate=pl.CostEstimate(flops=flops,
                                      transcendentals=transcendentals,
                                      bytes_accessed=bytes_accessed),
    )(*args)


def ckgnet_reference(x, proto_off, proto_on, probs_off, probs_on, params, head_num):
    """Pure-JAX reference mirroring the PyTorch forward."""
    def cross(xx, yy, p):
        A = p["wq"].shape[1]
        h = A // head_num
        q = (xx @ p["wq"]).reshape(-1, head_num, h).transpose(1, 0, 2)
        k = (yy @ p["wk"]).reshape(-1, head_num, h).transpose(1, 0, 2)
        v = (yy @ p["wv"]).reshape(-1, head_num, h).transpose(1, 0, 2)
        s = jnp.einsum("hnd,hmd->hnm", q, k) / math.sqrt(h)
        a = jax.nn.softmax(s, axis=-1)
        ctx = jnp.einsum("hnm,hmd->hnd", a, v).transpose(1, 0, 2).reshape(-1, A)
        return ctx @ p["wo"] + p["bo"]

    w_off = cross(x, proto_off, params["off"])
    w_on = cross(x, proto_on, params["on"])
    return jax.nn.softmax(w_off * probs_off + w_on * probs_on, axis=1)


def init_params(key, hidden, all_head, num_classes):
    """Deterministic xavier-normal weights (bias zero), matching weight_init."""
    def xavier(k, fan_in, fan_out):
        std = math.sqrt(2.0 / (fan_in + fan_out))
        return std * jax.random.normal(k, (fan_in, fan_out), dtype=jnp.float32)

    keys = jax.random.split(key, 8)

    def branch(ks):
        return dict(
            wq=xavier(ks[0], hidden, all_head),
            wk=xavier(ks[1], hidden, all_head),
            wv=xavier(ks[2], hidden, all_head),
            wo=xavier(ks[3], all_head, num_classes),
            bo=jnp.zeros((1, num_classes), jnp.float32),
        )

    return dict(off=branch(keys[:4]), on=branch(keys[4:]))


if __name__ == "__main__":
    N = 8           # number of query tokens (rows of x)
    M = 8           # number of prototypes
    HIDDEN = 32     # hidden_size == MODEL.MERGE_DIM
    ALL_HEAD = 32   # all_head_size == hidden_size
    HEADS = 8       # default head_num
    C = 8           # num_classes (= len(thing_classes) + 1)

    root = jax.random.PRNGKey(0)
    kx, kpo, kpn, kqo, kqn, kp = jax.random.split(root, 6)

    x = jax.random.normal(kx, (N, HIDDEN), dtype=jnp.float32)
    prototype_offline = jax.random.normal(kpo, (M, HIDDEN), dtype=jnp.float32)
    prototype_online = jax.random.normal(kpn, (M, HIDDEN), dtype=jnp.float32)
    probs_offline = jax.nn.softmax(jax.random.normal(kqo, (N, C), dtype=jnp.float32), axis=1)
    probs_online = jax.nn.softmax(jax.random.normal(kqn, (N, C), dtype=jnp.float32), axis=1)

    params = init_params(kp, HIDDEN, ALL_HEAD, C)
    packed = pack_params(params, HEADS)   # one-time weight transform (scale folded)

    out = ckgnet_forward(x, prototype_offline, prototype_online,
                         probs_offline, probs_online, packed, HEADS)
    out = jax.block_until_ready(out)

    ref = ckgnet_reference(x, prototype_offline, prototype_online,
                           probs_offline, probs_online, params, HEADS)
    assert out.shape == (N, C)
    assert jnp.allclose(out, ref, rtol=1e-4, atol=1e-5), "mismatch vs JAX reference"

    print("KERNEL_OK")
</pallas_src>

<mosaic_0001>
module attributes {stable_mosaic.version = 11 : i64} {
  func.func @ckgnet_kernel(%arg0: memref<8x32xf32, #tpu.memory_space<vmem>>, %arg1: memref<2x8x32xf32, #tpu.memory_space<vmem>>, %arg2: memref<2x8x8xf32, #tpu.memory_space<vmem>>, %arg3: memref<3x16x32x4xf32, #tpu.memory_space<vmem>>, %arg4: memref<16x4x8xf32, #tpu.memory_space<vmem>>, %arg5: memref<2x8xf32, #tpu.memory_space<vmem>>, %arg6: memref<8x8xf32, #tpu.memory_space<vmem>>) attributes {dimension_semantics = [], scalar_prefetch = 0 : i64, scratch_operands = 0 : i64, tpu.core_type = #tpu.core_type<tc>} {
    %c0 = arith.constant 0 : index
    %c0_0 = arith.constant 0 : index
    %0 = vector.load %arg0[%c0, %c0_0] : memref<8x32xf32, #tpu.memory_space<vmem>>, vector<8x32xf32>
    %c0_1 = arith.constant 0 : index
    %c0_2 = arith.constant 0 : index
    %c0_3 = arith.constant 0 : index
    %c0_4 = arith.constant 0 : index
    %1 = vector.load %arg3[%c0_1, %c0_2, %c0_3, %c0_4] : memref<3x16x32x4xf32, #tpu.memory_space<vmem>>, vector<1x16x32x4xf32>
    %2 = vector.shape_cast %1 : vector<1x16x32x4xf32> to vector<16x32x4xf32>
    %c1 = arith.constant 1 : index
    %c0_5 = arith.constant 0 : index
    %c0_6 = arith.constant 0 : index
    %c0_7 = arith.constant 0 : index
    %3 = vector.load %arg3[%c1, %c0_5, %c0_6, %c0_7] : memref<3x16x32x4xf32, #tpu.memory_space<vmem>>, vector<1x16x32x4xf32>
    %4 = vector.shape_cast %3 : vector<1x16x32x4xf32> to vector<16x32x4xf32>
    %c2 = arith.constant 2 : index
    %c0_8 = arith.constant 0 : index
    %c0_9 = arith.constant 0 : index
    %c0_10 = arith.constant 0 : index
    %5 = vector.load %arg3[%c2, %c0_8, %c0_9, %c0_10] : memref<3x16x32x4xf32, #tpu.memory_space<vmem>>, vector<1x16x32x4xf32>
    %6 = vector.shape_cast %5 : vector<1x16x32x4xf32> to vector<16x32x4xf32>
    %c0_11 = arith.constant 0 : index
    %c0_12 = arith.constant 0 : index
    %c0_13 = arith.constant 0 : index
    %7 = vector.load %arg4[%c0_11, %c0_12, %c0_13] : memref<16x4x8xf32, #tpu.memory_space<vmem>>, vector<16x4x8xf32>
    %c0_14 = arith.constant 0 : index
    %c0_15 = arith.constant 0 : index
    %8 = vector.load %arg5[%c0_14, %c0_15] : memref<2x8xf32, #tpu.memory_space<vmem>>, vector<2x8xf32>
    %9 = vector.shape_cast %0 : vector<8x32xf32> to vector<1x8x32xf32>
    %10 = vector.shape_cast %9 : vector<1x8x32xf32> to vector<1x8x32xf32>
    %11 = vector.broadcast %10 : vector<1x8x32xf32> to vector<16x8x32xf32>
    %c0_16 = arith.constant 0 : index
    %c0_17 = arith.constant 0 : index
    %c0_18 = arith.constant 0 : index
    %12 = vector.load %arg1[%c0_16, %c0_17, %c0_18] : memref<2x8x32xf32, #tpu.memory_space<vmem>>, vector<1x8x32xf32>
    %13 = vector.shape_cast %12 : vector<1x8x32xf32> to vector<8x32xf32>
    %14 = vector.shape_cast %13 : vector<8x32xf32> to vector<1x8x32xf32>
    %15 = vector.shape_cast %14 : vector<1x8x32xf32> to vector<1x8x32xf32>
    %16 = vector.broadcast %15 : vector<1x8x32xf32> to vector<8x8x32xf32>
    %c1_19 = arith.constant 1 : index
    %c0_20 = arith.constant 0 : index
    %c0_21 = arith.constant 0 : index
    %17 = vector.load %arg1[%c1_19, %c0_20, %c0_21] : memref<2x8x32xf32, #tpu.memory_space<vmem>>, vector<1x8x32xf32>
    %18 = vector.shape_cast %17 : vector<1x8x32xf32> to vector<8x32xf32>
    %19 = vector.shape_cast %18 : vector<8x32xf32> to vector<1x8x32xf32>
    %20 = vector.shape_cast %19 : vector<1x8x32xf32> to vector<1x8x32xf32>
    %21 = vector.broadcast %20 : vector<1x8x32xf32> to vector<8x8x32xf32>
    %22 = tpu.concatenate %16, %21 in 0 : vector<8x8x32xf32>, vector<8x8x32xf32> -> vector<16x8x32xf32>
    "tpu.trace_start"() <{level = 10 : i32, message = "gnd,gdk->gnk"}> : () -> ()
    %cst = arith.constant dense<0.000000e+00> : vector<16x8x4xf32>
    %23 = tpu.matmul %11, %2, %cst {dimension_numbers = #tpu.dot_dimension_numbers<[2], [1], [1], [2], [0, 0, 0, 1, 1, 2], [0], [0]>} : vector<16x8x32xf32>, vector<16x32x4xf32>, vector<16x8x4xf32> -> vector<16x8x4xf32>
    "tpu.trace_stop"() : () -> ()
    "tpu.trace_start"() <{level = 10 : i32, message = "gmd,gdk->gmk"}> : () -> ()
    %cst_22 = arith.constant dense<0.000000e+00> : vector<16x8x4xf32>
    %24 = tpu.matmul %22, %4, %cst_22 {dimension_numbers = #tpu.dot_dimension_numbers<[2], [1], [1], [2], [0, 0, 0, 1, 1, 2], [0], [0]>} : vector<16x8x32xf32>, vector<16x32x4xf32>, vector<16x8x4xf32> -> vector<16x8x4xf32>
    %cst_23 = arith.constant dense<0.000000e+00> : vector<16x8x4xf32>
    %25 = tpu.matmul %22, %6, %cst_23 {dimension_numbers = #tpu.dot_dimension_numbers<[2], [1], [1], [2], [0, 0, 0, 1, 1, 2], [0], [0]>} : vector<16x8x32xf32>, vector<16x32x4xf32>, vector<16x8x4xf32> -> vector<16x8x4xf32>
    "tpu.trace_stop"() : () -> ()
    "tpu.trace_start"() <{level = 10 : i32, message = "gnk,gmk->gnm"}> : () -> ()
    %cst_24 = arith.constant dense<0.000000e+00> : vector<16x8x8xf32>
    %26 = tpu.matmul %23, %24, %cst_24 {dimension_numbers = #tpu.dot_dimension_numbers<[2], [2], [1], [1], [0, 0, 0, 1, 1, 1], [0], [0]>} : vector<16x8x4xf32>, vector<16x8x4xf32>, vector<16x8x8xf32> -> vector<16x8x8xf32>
    "tpu.trace_stop"() : () -> ()
    %cst_25 = arith.constant dense<0xFF800000> : vector<16x8xf32>
    %27 = vector.multi_reduction <maximumf>, %26, %cst_25 [2] : vector<16x8x8xf32> to vector<16x8xf32>
    %28 = vector.shape_cast %27 : vector<16x8xf32> to vector<16x8x1xf32>
    %29 = vector.broadcast %28 : vector<16x8x1xf32> to vector<16x8x8xf32>
    %30 = arith.subf %26, %29 : vector<16x8x8xf32>
    %31 = math.exp %30 : vector<16x8x8xf32>
    %cst_26 = arith.constant dense<0.000000e+00> : vector<16x8xf32>
    %32 = vector.multi_reduction <add>, %31, %cst_26 [2] : vector<16x8x8xf32> to vector<16x8xf32>
    %33 = vector.shape_cast %32 : vector<16x8xf32> to vector<16x8x1xf32>
    %34 = vector.broadcast %33 : vector<16x8x1xf32> to vector<16x8x8xf32>
    %35 = arith.divf %31, %34 : vector<16x8x8xf32>
    "tpu.trace_start"() <{level = 10 : i32, message = "gnm,gmk->gnk"}> : () -> ()
    %cst_27 = arith.constant dense<0.000000e+00> : vector<16x8x4xf32>
    %36 = tpu.matmul %35, %25, %cst_27 {dimension_numbers = #tpu.dot_dimension_numbers<[2], [1], [1], [2], [0, 0, 0, 1, 1, 2], [0], [0]>} : vector<16x8x8xf32>, vector<16x8x4xf32>, vector<16x8x4xf32> -> vector<16x8x4xf32>
    "tpu.trace_stop"() : () -> ()
    "tpu.trace_start"() <{level = 10 : i32, message = "gnk,gkc->gnc"}> : () -> ()
    %cst_28 = arith.constant dense<0.000000e+00> : vector<16x8x8xf32>
    %37 = tpu.matmul %36, %7, %cst_28 {dimension_numbers = #tpu.dot_dimension_numbers<[2], [1], [1], [2], [0, 0, 0, 1, 1, 2], [0], [0]>} : vector<16x8x4xf32>, vector<16x4x8xf32>, vector<16x8x8xf32> -> vector<16x8x8xf32>
    "tpu.trace_stop"() : () -> ()
    %38 = vector.extract_strided_slice %37 {offsets = [0, 0, 0], sizes = [8, 8, 8], strides = [1, 1, 1]} : vector<16x8x8xf32> to vector<8x8x8xf32>
    %cst_29 = arith.constant dense<0.000000e+00> : vector<8x8xf32>
    %39 = vector.multi_reduction <add>, %38, %cst_29 [0] : vector<8x8x8xf32> to vector<8x8xf32>
    %40 = vector.extract_strided_slice %8 {offsets = [0, 0], sizes = [1, 8], strides = [1, 1]} : vector<2x8xf32> to vector<1x8xf32>
    %41 = vector.broadcast %40 : vector<1x8xf32> to vector<8x8xf32>
    %42 = arith.addf %39, %41 : vector<8x8xf32>
    %43 = vector.extract_strided_slice %37 {offsets = [8, 0, 0], sizes = [8, 8, 8], strides = [1, 1, 1]} : vector<16x8x8xf32> to vector<8x8x8xf32>
    %cst_30 = arith.constant dense<0.000000e+00> : vector<8x8xf32>
    %44 = vector.multi_reduction <add>, %43, %cst_30 [0] : vector<8x8x8xf32> to vector<8x8xf32>
    %45 = vector.extract_strided_slice %8 {offsets = [1, 0], sizes = [1, 8], strides = [1, 1]} : vector<2x8xf32> to vector<1x8xf32>
    %46 = vector.broadcast %45 : vector<1x8xf32> to vector<8x8xf32>
    %47 = arith.addf %44, %46 : vector<8x8xf32>
    %c0_31 = arith.constant 0 : index
    %c0_32 = arith.constant 0 : index
    %c0_33 = arith.constant 0 : index
    %48 = vector.load %arg2[%c0_31, %c0_32, %c0_33] : memref<2x8x8xf32, #tpu.memory_space<vmem>>, vector<1x8x8xf32>
    %49 = vector.shape_cast %48 : vector<1x8x8xf32> to vector<8x8xf32>
    %50 = arith.mulf %42, %49 : vector<8x8xf32>
    %c1_34 = arith.constant 1 : index
    %c0_35 = arith.constant 0 : index
    %c0_36 = arith.constant 0 : index
    %51 = vector.load %arg2[%c1_34, %c0_35, %c0_36] : memref<2x8x8xf32, #tpu.memory_space<vmem>>, vector<1x8x8xf32>
    %52 = vector.shape_cast %51 : vector<1x8x8xf32> to vector<8x8xf32>
    %53 = arith.mulf %47, %52 : vector<8x8xf32>
    %54 = arith.addf %50, %53 : vector<8x8xf32>
    %cst_37 = arith.constant dense<0xFF800000> : vector<8xf32>
    %55 = vector.multi_reduction <maximumf>, %54, %cst_37 [1] : vector<8x8xf32> to vector<8xf32>
    %56 = vector.shape_cast %55 : vector<8xf32> to vector<8x1xf32>
    %57 = vector.broadcast %56 : vector<8x1xf32> to vector<8x8xf32>
    %58 = arith.subf %54, %57 : vector<8x8xf32>
    %59 = math.exp %58 : vector<8x8xf32>
    %cst_38 = arith.constant dense<0.000000e+00> : vector<8xf32>
    %60 = vector.multi_reduction <add>, %59, %cst_38 [1] : vector<8x8xf32> to vector<8xf32>
    %61 = vector.shape_cast %60 : vector<8xf32> to vector<8x1xf32>
    %62 = vector.broadcast %61 : vector<8x1xf32> to vector<8x8xf32>
    %63 = arith.divf %59, %62 : vector<8x8xf32>
    %c0_39 = arith.constant 0 : index
    %c0_40 = arith.constant 0 : index
    %64 = vector.load %arg6[%c0_39, %c0_40] : memref<8x8xf32, #tpu.memory_space<vmem>>, vector<8x8xf32>
    tpu.vector_store %arg6[%c0_39, %c0_40], %63 {strides = array<i32>} : memref<8x8xf32, #tpu.memory_space<vmem>>, vector<8x8xf32>,
    return
  }
}

</mosaic_0001>

<llo_original>
// kernel: tpu_custom_call.1
$region0: #{tpu_custom_call.1}
  #allocation0 [shape = 'u32[]', space=smem, size = 0x4, offset = 0x4, fixed_abs, tag = 'smem constant byte address 0x4 - core index']
  #allocation1 [shape = 'u32[144,128]{1,0:T(1,128)}', space=vmem, size = 0x12000, scoped, tag = 'internal scratch']
  %s0 = inlined_call_operand.vmem [shape: f32[8,32], index: 0, kind: input, shape index: {}]
  %s1 = inlined_call_operand.vmem [shape: f32[2,8,32], index: 1, kind: input, shape index: {}]
  %s2 = inlined_call_operand.vmem [shape: f32[2,8,8], index: 2, kind: input, shape index: {}]
  %s3 = inlined_call_operand.vmem [shape: f32[3,16,32,4], index: 3, kind: input, shape index: {}]
  %s4 = inlined_call_operand.vmem [shape: f32[16,4,8], index: 4, kind: input, shape index: {}]
  %s5 = inlined_call_operand.vmem [shape: f32[2,8], index: 5, kind: input, shape index: {}]
  %s6 = inlined_call_operand.hbm [shape: f32[8,8], index: 6, kind: output, shape index: {}]
  %s7 = sld [smem:[#allocation0]]
  $region34: #{tpu_custom_call.1} parent=0
    _
  %s9 = ssub.s32 1, %s7
  %s10 = scalar_select 0, %s9, %s7
  $region1: #{tpu_custom_call.1} parent=0
    #allocation2 [shape = 'u8[4096]{0}', space=vmem, size = 0x1000, scoped, tag = 'output window, operand 0, single buffered']
    #allocation3 [shape = 's32[1]{0}', space=sflag, size = 0x4, scoped, tag = 'scoped memory for tpu_custom_call.1']
    %11 = vsyncpa [#allocation3], 0
    // Predicated region
    $region2: #{tpu_custom_call.1} parent=1 // pred_check
      _
    $region3: #{tpu_custom_call.1} parent=1 // pred_check_branch
      %13 = sbr.rel (0) target = $region5
    $region4: #{tpu_custom_call.1} parent=1 // pred_region
      _
    $region5: #{tpu_custom_call.1} parent=1 // pred_fallthru
      _
    // Predicated region
    $region6: #{tpu_custom_call.1} parent=1 // pred_check
      _
    $region7: #{tpu_custom_call.1} parent=1 // pred_check_branch
      %15 = sbr.rel (0) target = $region9
    $region8: #{tpu_custom_call.1} parent=1 // pred_region
      _
    $region9: #{tpu_custom_call.1} parent=1 // pred_fallthru
      _
    // Predicated region
    $region10: #{tpu_custom_call.1} parent=1 // pred_check
      _
    $region11: #{tpu_custom_call.1} parent=1 // pred_check_branch
      %17 = sbr.rel (0) target = $region13
    $region12: #{tpu_custom_call.1} parent=1 // pred_region
      _
    $region13: #{tpu_custom_call.1} parent=1 // pred_fallthru
      _
    // Predicated region
    $region14: #{tpu_custom_call.1} parent=1 // pred_check
      _
    $region15: #{tpu_custom_call.1} parent=1 // pred_check_branch
      %19 = sbr.rel (0) target = $region17
    $region16: #{tpu_custom_call.1} parent=1 // pred_region
      _
    $region17: #{tpu_custom_call.1} parent=1 // pred_fallthru
      _
    // Predicated region
    $region18: #{tpu_custom_call.1} parent=1 // pred_check
      _
    $region19: #{tpu_custom_call.1} parent=1 // pred_check_branch
      %21 = sbr.rel (0) target = $region21
    $region20: #{tpu_custom_call.1} parent=1 // pred_region
      _
    $region21: #{tpu_custom_call.1} parent=1 // pred_fallthru
      _
    // Predicated region
    $region22: #{tpu_custom_call.1} parent=1 // pred_check
      _
    $region23: #{tpu_custom_call.1} parent=1 // pred_check_branch
      %23 = sbr.rel (0) target = $region25
    $region24: #{tpu_custom_call.1} parent=1 // pred_region
      _
    $region25: #{tpu_custom_call.1} parent=1 // pred_fallthru
      _
    %v24 = vld [vmem:[%s0] sm:$0xff]
    %v25 = vld [vmem:[%s3] sm:$0xff]
    %v26 = vld [vmem:[%s3 + $0x8] sm:$0xff]
    %v27 = vld [vmem:[%s3 + $0x10] sm:$0xff]
    %v28 = vld [vmem:[%s3 + $0x18] sm:$0xff]
    %v29 = vld [vmem:[%s3 + $0x20] sm:$0xff]
    %v30 = vld [vmem:[%s3 + $0x28] sm:$0xff]
    %v31 = vld [vmem:[%s3 + $0x30] sm:$0xff]
    %v32 = vld [vmem:[%s3 + $0x38] sm:$0xff]
    %v33 = vld [vmem:[%s3 + $0x40] sm:$0xff]
    %v34 = vld [vmem:[%s3 + $0x48] sm:$0xff]
    %v35 = vld [vmem:[%s3 + $0x50] sm:$0xff]
    %v36 = vld [vmem:[%s3 + $0x58] sm:$0xff]
    %v37 = vld [vmem:[%s3 + $0x60] sm:$0xff]
    %v38 = vld [vmem:[%s3 + $0x68] sm:$0xff]
    %v39 = vld [vmem:[%s3 + $0x70] sm:$0xff]
    %v40 = vld [vmem:[%s3 + $0x78] sm:$0xff]
    %v41 = vld [vmem:[%s3 + $0x80] sm:$0xff]
    %v42 = vld [vmem:[%s3 + $0x88] sm:$0xff]
    %v43 = vld [vmem:[%s3 + $0x90] sm:$0xff]
    %v44 = vld [vmem:[%s3 + $0x98] sm:$0xff]
    %v45 = vld [vmem:[%s3 + $0xa0] sm:$0xff]
    %v46 = vld [vmem:[%s3 + $0xa8] sm:$0xff]
    %v47 = vld [vmem:[%s3 + $0xb0] sm:$0xff]
    %v48 = vld [vmem:[%s3 + $0xb8] sm:$0xff]
    %v49 = vld [vmem:[%s3 + $0xc0] sm:$0xff]
    %v50 = vld [vmem:[%s3 + $0xc8] sm:$0xff]
    %v51 = vld [vmem:[%s3 + $0xd0] sm:$0xff]
    %v52 = vld [vmem:[%s3 + $0xd8] sm:$0xff]
    %v53 = vld [vmem:[%s3 + $0xe0] sm:$0xff]
    %v54 = vld [vmem:[%s3 + $0xe8] sm:$0xff]
    %v55 = vld [vmem:[%s3 + $0xf0] sm:$0xff]
    %v56 = vld [vmem:[%s3 + $0xf8] sm:$0xff]
    %v57 = vld [vmem:[%s3 + $0x100] sm:$0xff]
    %v58 = vld [vmem:[%s3 + $0x108] sm:$0xff]
    %v59 = vld [vmem:[%s3 + $0x110] sm:$0xff]
    %v60 = vld [vmem:[%s3 + $0x118] sm:$0xff]
    %v61 = vld [vmem:[%s3 + $0x120] sm:$0xff]
    %v62 = vld [vmem:[%s3 + $0x128] sm:$0xff]
    %v63 = vld [vmem:[%s3 + $0x130] sm:$0xff]
    %v64 = vld [vmem:[%s3 + $0x138] sm:$0xff]
    %v65 = vld [vmem:[%s3 + $0x140] sm:$0xff]
    %v66 = vld [vmem:[%s3 + $0x148] sm:$0xff]
    %v67 = vld [vmem:[%s3 + $0x150] sm:$0xff]
    %v68 = vld [vmem:[%s3 + $0x158] sm:$0xff]
    %v69 = vld [vmem:[%s3 + $0x160] sm:$0xff]
    %v70 = vld [vmem:[%s3 + $0x168] sm:$0xff]
    %v71 = vld [vmem:[%s3 + $0x170] sm:$0xff]
    %v72 = vld [vmem:[%s3 + $0x178] sm:$0xff]
    %v73 = vld [vmem:[%s3 + $0x180] sm:$0xff]
    %v74 = vld [vmem:[%s3 + $0x188] sm:$0xff]
    %v75 = vld [vmem:[%s3 + $0x190] sm:$0xff]
    %v76 = vld [vmem:[%s3 + $0x198] sm:$0xff]
    %v77 = vld [vmem:[%s3 + $0x1a0] sm:$0xff]
    %v78 = vld [vmem:[%s3 + $0x1a8] sm:$0xff]
    %v79 = vld [vmem:[%s3 + $0x1b0] sm:$0xff]
    %v80 = vld [vmem:[%s3 + $0x1b8] sm:$0xff]
    %v81 = vld [vmem:[%s3 + $0x1c0] sm:$0xff]
    %v82 = vld [vmem:[%s3 + $0x1c8] sm:$0xff]
    %v83 = vld [vmem:[%s3 + $0x1d0] sm:$0xff]
    %v84 = vld [vmem:[%s3 + $0x1d8] sm:$0xff]
    %v85 = vld [vmem:[%s3 + $0x1e0] sm:$0xff]
    %v86 = vld [vmem:[%s3 + $0x1e8] sm:$0xff]
    %v87 = vld [vmem:[%s3 + $0x1f0] sm:$0xff]
    %v88 = vld [vmem:[%s3 + $0x1f8] sm:$0xff]
    %s89 = scalar_lea.vmem %s3, 512
    %v90 = vld [vmem:[%s89] sm:$0xff]
    %v91 = vld [vmem:[%s89 + $0x8] sm:$0xff]
    %v92 = vld [vmem:[%s89 + $0x10] sm:$0xff]
    %v93 = vld [vmem:[%s89 + $0x18] sm:$0xff]
    %v94 = vld [vmem:[%s89 + $0x20] sm:$0xff]
    %v95 = vld [vmem:[%s89 + $0x28] sm:$0xff]
    %v96 = vld [vmem:[%s89 + $0x30] sm:$0xff]
    %v97 = vld [vmem:[%s89 + $0x38] sm:$0xff]
    %v98 = vld [vmem:[%s89 + $0x40] sm:$0xff]
    %v99 = vld [vmem:[%s89 + $0x48] sm:$0xff]
    %v100 = vld [vmem:[%s89 + $0x50] sm:$0xff]
    %v101 = vld [vmem:[%s89 + $0x58] sm:$0xff]
    %v102 = vld [vmem:[%s89 + $0x60] sm:$0xff]
    %v103 = vld [vmem:[%s89 + $0x68] sm:$0xff]
    %v104 = vld [vmem:[%s89 + $0x70] sm:$0xff]
    %v105 = vld [vmem:[%s89 + $0x78] sm:$0xff]
    %v106 = vld [vmem:[%s89 + $0x80] sm:$0xff]
    %v107 = vld [vmem:[%s89 + $0x88] sm:$0xff]
    %v108 = vld [vmem:[%s89 + $0x90] sm:$0xff]
    %v109 = vld [vmem:[%s89 + $0x98] sm:$0xff]
    %v110 = vld [vmem:[%s89 + $0xa0] sm:$0xff]
    %v111 = vld [vmem:[%s89 + $0xa8] sm:$0xff]
    %v112 = vld [vmem:[%s89 + $0xb0] sm:$0xff]
    %v113 = vld [vmem:[%s89 + $0xb8] sm:$0xff]
    %v114 = vld [vmem:[%s89 + $0xc0] sm:$0xff]
    %v115 = vld [vmem:[%s89 + $0xc8] sm:$0xff]
    %v116 = vld [vmem:[%s89 + $0xd0] sm:$0xff]
    %v117 = vld [vmem:[%s89 + $0xd8] sm:$0xff]
    %v118 = vld [vmem:[%s89 + $0xe0] sm:$0xff]
    %v119 = vld [vmem:[%s89 + $0xe8] sm:$0xff]
    %v120 = vld [vmem:[%s89 + $0xf0] sm:$0xff]
    %v121 = vld [vmem:[%s89 + $0xf8] sm:$0xff]
    %v122 = vld [vmem:[%s89 + $0x100] sm:$0xff]
    %v123 = vld [vmem:[%s89 + $0x108] sm:$0xff]
    %v124 = vld [vmem:[%s89 + $0x110] sm:$0xff]
    %v125 = vld [vmem:[%s89 + $0x118] sm:$0xff]
    %v126 = vld [vmem:[%s89 + $0x120] sm:$0xff]
    %v127 = vld [vmem:[%s89 + $0x128] sm:$0xff]
    %v128 = vld [vmem:[%s89 + $0x130] sm:$0xff]
    %v129 = vld [vmem:[%s89 + $0x138] sm:$0xff]
    %v130 = vld [vmem:[%s89 + $0x140] sm:$0xff]
    %v131 = vld [vmem:[%s89 + $0x148] sm:$0xff]
    %v132 = vld [vmem:[%s89 + $0x150] sm:$0xff]
    %v133 = vld [vmem:[%s89 + $0x158] sm:$0xff]
    %v134 = vld [vmem:[%s89 + $0x160] sm:$0xff]
    %v135 = vld [vmem:[%s89 + $0x168] sm:$0xff]
    %v136 = vld [vmem:[%s89 + $0x170] sm:$0xff]
    %v137 = vld [vmem:[%s89 + $0x178] sm:$0xff]
    %v138 = vld [vmem:[%s89 + $0x180] sm:$0xff]
    %v139 = vld [vmem:[%s89 + $0x188] sm:$0xff]
    %v140 = vld [vmem:[%s89 + $0x190] sm:$0xff]
    %v141 = vld [vmem:[%s89 + $0x198] sm:$0xff]
    %v142 = vld [vmem:[%s89 + $0x1a0] sm:$0xff]
    %v143 = vld [vmem:[%s89 + $0x1a8] sm:$0xff]
    %v144 = vld [vmem:[%s89 + $0x1b0] sm:$0xff]
    %v145 = vld [vmem:[%s89 + $0x1b8] sm:$0xff]
    %v146 = vld [vmem:[%s89 + $0x1c0] sm:$0xff]
    %v147 = vld [vmem:[%s89 + $0x1c8] sm:$0xff]
    %v148 = vld [vmem:[%s89 + $0x1d0] sm:$0xff]
    %v149 = vld [vmem:[%s89 + $0x1d8] sm:$0xff]
    %v150 = vld [vmem:[%s89 + $0x1e0] sm:$0xff]
    %v151 = vld [vmem:[%s89 + $0x1e8] sm:$0xff]
    %v152 = vld [vmem:[%s89 + $0x1f0] sm:$0xff]
    %v153 = vld [vmem:[%s89 + $0x1f8] sm:$0xff]
    %s154 = scalar_lea.vmem %s3, 1024
    %v155 = vld [vmem:[%s154] sm:$0xff]
    %v156 = vld [vmem:[%s154 + $0x8] sm:$0xff]
    %v157 = vld [vmem:[%s154 + $0x10] sm:$0xff]
    %v158 = vld [vmem:[%s154 + $0x18] sm:$0xff]
    %v159 = vld [vmem:[%s154 + $0x20] sm:$0xff]
    %v160 = vld [vmem:[%s154 + $0x28] sm:$0xff]
    %v161 = vld [vmem:[%s154 + $0x30] sm:$0xff]
    %v162 = vld [vmem:[%s154 + $0x38] sm:$0xff]
    %v163 = vld [vmem:[%s154 + $0x40] sm:$0xff]
    %v164 = vld [vmem:[%s154 + $0x48] sm:$0xff]
    %v165 = vld [vmem:[%s154 + $0x50] sm:$0xff]
    %v166 = vld [vmem:[%s154 + $0x58] sm:$0xff]
    %v167 = vld [vmem:[%s154 + $0x60] sm:$0xff]
    %v168 = vld [vmem:[%s154 + $0x68] sm:$0xff]
    %v169 = vld [vmem:[%s154 + $0x70] sm:$0xff]
    %v170 = vld [vmem:[%s154 + $0x78] sm:$0xff]
    %v171 = vld [vmem:[%s154 + $0x80] sm:$0xff]
    %v172 = vld [vmem:[%s154 + $0x88] sm:$0xff]
    %v173 = vld [vmem:[%s154 + $0x90] sm:$0xff]
    %v174 = vld [vmem:[%s154 + $0x98] sm:$0xff]
    %v175 = vld [vmem:[%s154 + $0xa0] sm:$0xff]
    %v176 = vld [vmem:[%s154 + $0xa8] sm:$0xff]
    %v177 = vld [vmem:[%s154 + $0xb0] sm:$0xff]
    %v178 = vld [vmem:[%s154 + $0xb8] sm:$0xff]
    %v179 = vld [vmem:[%s154 + $0xc0] sm:$0xff]
    %v180 = vld [vmem:[%s154 + $0xc8] sm:$0xff]
    %v181 = vld [vmem:[%s154 + $0xd0] sm:$0xff]
    %v182 = vld [vmem:[%s154 + $0xd8] sm:$0xff]
    %v183 = vld [vmem:[%s154 + $0xe0] sm:$0xff]
    %v184 = vld [vmem:[%s154 + $0xe8] sm:$0xff]
    %v185 = vld [vmem:[%s154 + $0xf0] sm:$0xff]
    %v186 = vld [vmem:[%s154 + $0xf8] sm:$0xff]
    %v187 = vld [vmem:[%s154 + $0x100] sm:$0xff]
    %v188 = vld [vmem:[%s154 + $0x108] sm:$0xff]
    %v189 = vld [vmem:[%s154 + $0x110] sm:$0xff]
    %v190 = vld [vmem:[%s154 + $0x118] sm:$0xff]
    %v191 = vld [vmem:[%s154 + $0x120] sm:$0xff]
    %v192 = vld [vmem:[%s154 + $0x128] sm:$0xff]
    %v193 = vld [vmem:[%s154 + $0x130] sm:$0xff]
    %v194 = vld [vmem:[%s154 + $0x138] sm:$0xff]
    %v195 = vld [vmem:[%s154 + $0x140] sm:$0xff]
    %v196 = vld [vmem:[%s154 + $0x148] sm:$0xff]
    %v197 = vld [vmem:[%s154 + $0x150] sm:$0xff]
    %v198 = vld [vmem:[%s154 + $0x158] sm:$0xff]
    %v199 = vld [vmem:[%s154 + $0x160] sm:$0xff]
    %v200 = vld [vmem:[%s154 + $0x168] sm:$0xff]
    %v201 = vld [vmem:[%s154 + $0x170] sm:$0xff]
    %v202 = vld [vmem:[%s154 + $0x178] sm:$0xff]
    %v203 = vld [vmem:[%s154 + $0x180] sm:$0xff]
    %v204 = vld [vmem:[%s154 + $0x188] sm:$0xff]
    %v205 = vld [vmem:[%s154 + $0x190] sm:$0xff]
    %v206 = vld [vmem:[%s154 + $0x198] sm:$0xff]
    %v207 = vld [vmem:[%s154 + $0x1a0] sm:$0xff]
    %v208 = vld [vmem:[%s154 + $0x1a8] sm:$0xff]
    %v209 = vld [vmem:[%s154 + $0x1b0] sm:$0xff]
    %v210 = vld [vmem:[%s154 + $0x1b8] sm:$0xff]
    %v211 = vld [vmem:[%s154 + $0x1c0] sm:$0xff]
    %v212 = vld [vmem:[%s154 + $0x1c8] sm:$0xff]
    %v213 = vld [vmem:[%s154 + $0x1d0] sm:$0xff]
    %v214 = vld [vmem:[%s154 + $0x1d8] sm:$0xff]
    %v215 = vld [vmem:[%s154 + $0x1e0] sm:$0xff]
    %v216 = vld [vmem:[%s154 + $0x1e8] sm:$0xff]
    %v217 = vld [vmem:[%s154 + $0x1f0] sm:$0xff]
    %v218 = vld [vmem:[%s154 + $0x1f8] sm:$0xff]
    %v219 = vld [vmem:[%s4] sm:$0xf]
    %v220 = vld [vmem:[%s4 + $0x4] sm:$0xf]
    %v221 = vld [vmem:[%s4 + $0x8] sm:$0xf]
    %v222 = vld [vmem:[%s4 + $0xc] sm:$0xf]
    %v223 = vld [vmem:[%s4 + $0x10] sm:$0xf]
    %v224 = vld [vmem:[%s4 + $0x14] sm:$0xf]
    %v225 = vld [vmem:[%s4 + $0x18] sm:$0xf]
    %v226 = vld [vmem:[%s4 + $0x1c] sm:$0xf]
    %v227 = vld [vmem:[%s4 + $0x20] sm:$0xf]
    %v228 = vld [vmem:[%s4 + $0x24] sm:$0xf]
    %v229 = vld [vmem:[%s4 + $0x28] sm:$0xf]
    %v230 = vld [vmem:[%s4 + $0x2c] sm:$0xf]
    %v231 = vld [vmem:[%s4 + $0x30] sm:$0xf]
    %v232 = vld [vmem:[%s4 + $0x34] sm:$0xf]
    %v233 = vld [vmem:[%s4 + $0x38] sm:$0xf]
    %v234 = vld [vmem:[%s4 + $0x3c] sm:$0xf]
    %v235 = vld [vmem:[%s5] sm:$0x3]
    %v236 = vld [vmem:[%s1] sm:$0xff]
    %s237 = scalar_lea.vmem %s1, 8
    %v238 = vld [vmem:[%s237] sm:$0xff]
    %vm239 = vcmask 261120
    %v241 = vsel %vm239, %v24, 0
    %243 = vmatprep.subr.mxu0 0.0
    %244 = vmatpush1.msra.mxu0 %v25
    %245 = vmatprep.subr.mxu0 0.0
    %246 = vmatpush1.msra.mxu0 %v26
    %247 = vmatprep.subr.mxu0 0.0
    %248 = vmatpush1.msra.mxu0 %v27
    %249 = vmatprep.subr.mxu0 0.0
    %250 = vmatpush1.msra.mxu0 %v28
    %251 = vmatprep.subr.mxu0 0.0
    %252 = vmatpush1.msra.mxu0 0.0
    %253 = vmatprep.subr.mxu0 0.0
    %254 = vmatpush1.msra.mxu0 0.0
    %255 = vmatprep.subr.mxu0 0.0
    %256 = vmatpush1.msra.mxu0 0.0
    %257 = vmatprep.subr.mxu0 0.0
    %258 = vmatpush1.msra.mxu0 0.0
    %259 = vmatprep.subr.mxu0 0.0
    %260 = vmatpush1.msra.mxu0 0.0
    %261 = vmatprep.subr.mxu0 0.0
    %262 = vmatpush1.msra.mxu0 0.0
    %263 = vmatprep.subr.mxu0 0.0
    %264 = vmatpush1.msra.mxu0 0.0
    %265 = vmatprep.subr.mxu0 0.0
    %266 = vmatpush1.msra.mxu0 0.0
    %267 = vmatprep.subr.mxu0 0.0
    %268 = vmatpush1.msra.mxu0 0.0
    %269 = vmatprep.subr.mxu0 0.0
    %270 = vmatpush1.msra.mxu0 0.0
    %271 = vmatprep.subr.mxu0 0.0
    %272 = vmatpush1.msra.mxu0 0.0
    %273 = vmatprep.subr.mxu0 0.0
    %274 = vmatpush1.msra.mxu0 0.0
    %275 = vmatprep.subr.mxu0 0.0
    %276 = vmatpush1.msra.mxu0 0.0
    %277 = vmatprep.subr.mxu0 0.0
    %278 = vmatpush1.msra.mxu0 0.0
    %279 = vmatprep.subr.mxu0 0.0
    %280 = vmatpush1.msra.mxu0 0.0
    %281 = vmatprep.subr.mxu0 0.0
    %282 = vmatpush1.msra.mxu0 0.0
    %283 = vmatprep.subr.mxu0 0.0
    %284 = vmatpush1.msra.mxu0 0.0
    %285 = vmatprep.subr.mxu0 0.0
    %286 = vmatpush1.msra.mxu0 0.0
    %287 = vmatprep.subr.mxu0 0.0
    %288 = vmatpush1.msra.mxu0 0.0
    %289 = vmatprep.subr.mxu0 0.0
    %290 = vmatpush1.msra.mxu0 0.0
    %291 = vmatprep.subr.mxu0 0.0
    %292 = vmatpush1.msra.mxu0 0.0
    %293 = vmatprep.subr.mxu0 0.0
    %294 = vmatpush1.msra.mxu0 0.0
    %295 = vmatprep.subr.mxu0 0.0
    %296 = vmatpush1.msra.mxu0 0.0
    %297 = vmatprep.subr.mxu0 0.0
    %298 = vmatpush1.msra.mxu0 0.0
    %299 = vmatprep.subr.mxu0 0.0
    %300 = vmatpush1.msra.mxu0 0.0
    %301 = vmatprep.subr.mxu0 0.0
    %302 = vmatpush1.msra.mxu0 0.0
    %303 = vmatprep.subr.mxu0 0.0
    %304 = vmatpush1.msra.mxu0 0.0
    %305 = vmatprep.subr.mxu0 0.0
    %306 = vmatpush1.msra.mxu0 0.0
    %307 = vmatprep.mubr.f32.mxu0 0.0
    %308 = vmatmul.mubr.f32.gmra.mrb[0].mxu0 %v241
    %v309 = vpop.f32.mrb[0].mxu0
    %v310 = vadd.f32 0.0, %v309
    %v311 = vpop.f32.mrb[0].mxu0
    %312 = vdwg.mxu0
    %313 = vmatprep.subr.mxu0 0.0
    %314 = vmatpush1.msra.mxu0 %v29
    %315 = vmatprep.subr.mxu0 0.0
    %316 = vmatpush1.msra.mxu0 %v30
    %317 = vmatprep.subr.mxu0 0.0
    %318 = vmatpush1.msra.mxu0 %v31
    %319 = vmatprep.subr.mxu0 0.0
    %320 = vmatpush1.msra.mxu0 %v32
    %321 = vmatprep.subr.mxu0 0.0
    %322 = vmatpush1.msra.mxu0 0.0
    %323 = vmatprep.subr.mxu0 0.0
    %324 = vmatpush1.msra.mxu0 0.0
    %325 = vmatprep.subr.mxu0 0.0
    %326 = vmatpush1.msra.mxu0 0.0
    %327 = vmatprep.subr.mxu0 0.0
    %328 = vmatpush1.msra.mxu0 0.0
    %329 = vmatprep.subr.mxu0 0.0
    %330 = vmatpush1.msra.mxu0 0.0
    %331 = vmatprep.subr.mxu0 0.0
    %332 = vmatpush1.msra.mxu0 0.0
    %333 = vmatprep.subr.mxu0 0.0
    %334 = vmatpush1.msra.mxu0 0.0
    %335 = vmatprep.subr.mxu0 0.0
    %336 = vmatpush1.msra.mxu0 0.0
    %337 = vmatprep.subr.mxu0 0.0
    %338 = vmatpush1.msra.mxu0 0.0
    %339 = vmatprep.subr.mxu0 0.0
    %340 = vmatpush1.msra.mxu0 0.0
    %341 = vmatprep.subr.mxu0 0.0
    %342 = vmatpush1.msra.mxu0 0.0
    %343 = vmatprep.subr.mxu0 0.0
    %344 = vmatpush1.msra.mxu0 0.0
    %345 = vmatprep.subr.mxu0 0.0
    %346 = vmatpush1.msra.mxu0 0.0
    %347 = vmatprep.subr.mxu0 0.0
    %348 = vmatpush1.msra.mxu0 0.0
    %349 = vmatprep.subr.mxu0 0.0
    %350 = vmatpush1.msra.mxu0 0.0
    %351 = vmatprep.subr.mxu0 0.0
    %352 = vmatpush1.msra.mxu0 0.0
    %353 = vmatprep.subr.mxu0 0.0
    %354 = vmatpush1.msra.mxu0 0.0
    %355 = vmatprep.subr.mxu0 0.0
    %356 = vmatpush1.msra.mxu0 0.0
    %357 = vmatprep.subr.mxu0 0.0
    %358 = vmatpush1.msra.mxu0 0.0
    %359 = vmatprep.subr.mxu0 0.0
    %360 = vmatpush1.msra.mxu0 0.0
    %361 = vmatprep.subr.mxu0 0.0
    %362 = vmatpush1.msra.mxu0 0.0
    %363 = vmatprep.subr.mxu0 0.0
    %364 = vmatpush1.msra.mxu0 0.0
    %365 = vmatprep.subr.mxu0 0.0
    %366 = vmatpush1.msra.mxu0 0.0
    %367 = vmatprep.subr.mxu0 0.0
    %368 = vmatpush1.msra.mxu0 0.0
    %369 = vmatprep.subr.mxu0 0.0
    %370 = vmatpush1.msra.mxu0 0.0
    %371 = vmatprep.subr.mxu0 0.0
    %372 = vmatpush1.msra.mxu0 0.0
    %373 = vmatprep.subr.mxu0 0.0
    %374 = vmatpush1.msra.mxu0 0.0
    %375 = vmatprep.subr.mxu0 0.0
    %376 = vmatpush1.msra.mxu0 0.0
    %377 = vmatprep.mubr.f32.mxu0 0.0
    %378 = vmatmul.mubr.f32.gmra.mrb[0].mxu0 %v241
    %v379 = vpop.f32.mrb[0].mxu0
    %v380 = vadd.f32 0.0, %v379
    %v381 = vpop.f32.mrb[0].mxu0
    %382 = vdwg.mxu0
    %383 = vmatprep.subr.mxu0 0.0
    %384 = vmatpush1.msra.mxu0 %v33
    %385 = vmatprep.subr.mxu0 0.0
    %386 = vmatpush1.msra.mxu0 %v34
    %387 = vmatprep.subr.mxu0 0.0
    %388 = vmatpush1.msra.mxu0 %v35
    %389 = vmatprep.subr.mxu0 0.0
    %390 = vmatpush1.msra.mxu0 %v36
    %391 = vmatprep.subr.mxu0 0.0
    %392 = vmatpush1.msra.mxu0 0.0
    %393 = vmatprep.subr.mxu0 0.0
    %394 = vmatpush1.msra.mxu0 0.0
    %395 = vmatprep.subr.mxu0 0.0
    %396 = vmatpush1.msra.mxu0 0.0
    %397 = vmatprep.subr.mxu0 0.0
    %398 = vmatpush1.msra.mxu0 0.0
    %399 = vmatprep.subr.mxu0 0.0
    %400 = vmatpush1.msra.mxu0 0.0
    %401 = vmatprep.subr.mxu0 0.0
    %402 = vmatpush1.msra.mxu0 0.0
    %403 = vmatprep.subr.mxu0 0.0
    %404 = vmatpush1.msra.mxu0 0.0
    %405 = vmatprep.subr.mxu0 0.0
    %406 = vmatpush1.msra.mxu0 0.0
    %407 = vmatprep.subr.mxu0 0.0
    %408 = vmatpush1.msra.mxu0 0.0
    %409 = vmatprep.subr.mxu0 0.0
    %410 = vmatpush1.msra.mxu0 0.0
    %411 = vmatprep.subr.mxu0 0.0
    %412 = vmatpush1.msra.mxu0 0.0
    %413 = vmatprep.subr.mxu0 0.0
    %414 = vmatpush1.msra.mxu0 0.0
    %415 = vmatprep.subr.mxu0 0.0
    %416 = vmatpush1.msra.mxu0 0.0
    %417 = vmatprep.subr.mxu0 0.0
    %418 = vmatpush1.msra.mxu0 0.0
    %419 = vmatprep.subr.mxu0 0.0
    %420 = vmatpush1.msra.mxu0 0.0
    %421 = vmatprep.subr.mxu0 0.0
    %422 = vmatpush1.msra.mxu0 0.0
    %423 = vmatprep.subr.mxu0 0.0
    %424 = vmatpush1.msra.mxu0 0.0
    %425 = vmatprep.subr.mxu0 0.0
    %426 = vmatpush1.msra.mxu0 0.0
    %427 = vmatprep.subr.mxu0 0.0
    %428 = vmatpush1.msra.mxu0 0.0
    %429 = vmatprep.subr.mxu0 0.0
    %430 = vmatpush1.msra.mxu0 0.0
    %431 = vmatprep.subr.mxu0 0.0
    %432 = vmatpush1.msra.mxu0 0.0
    %433 = vmatprep.subr.mxu0 0.0
    %434 = vmatpush1.msra.mxu0 0.0
    %435 = vmatprep.subr.mxu0 0.0
    %436 = vmatpush1.msra.mxu0 0.0
    %437 = vmatprep.subr.mxu0 0.0
    %438 = vmatpush1.msra.mxu0 0.0
    %439 = vmatprep.subr.mxu0 0.0
    %440 = vmatpush1.msra.mxu0 0.0
    %441 = vmatprep.subr.mxu0 0.0
    %442 = vmatpush1.msra.mxu0 0.0
    %443 = vmatprep.subr.mxu0 0.0
    %444 = vmatpush1.msra.mxu0 0.0
    %445 = vmatprep.subr.mxu0 0.0
    %446 = vmatpush1.msra.mxu0 0.0
    %447 = vmatprep.mubr.f32.mxu0 0.0
    %448 = vmatmul.mubr.f32.gmra.mrb[0].mxu0 %v241
    %v449 = vpop.f32.mrb[0].mxu0
    %v450 = vadd.f32 0.0, %v449
    %v451 = vpop.f32.mrb[0].mxu0
    %452 = vdwg.mxu0
    %453 = vmatprep.subr.mxu0 0.0
    %454 = vmatpush1.msra.mxu0 %v37
    %455 = vmatprep.subr.mxu0 0.0
    %456 = vmatpush1.msra.mxu0 %v38
    %457 = vmatprep.subr.mxu0 0.0
    %458 = vmatpush1.msra.mxu0 %v39
    %459 = vmatprep.subr.mxu0 0.0
    %460 = vmatpush1.msra.mxu0 %v40
    %461 = vmatprep.subr.mxu0 0.0
    %462 = vmatpush1.msra.mxu0 0.0
    %463 = vmatprep.subr.mxu0 0.0
    %464 = vmatpush1.msra.mxu0 0.0
    %465 = vmatprep.subr.mxu0 0.0
    %466 = vmatpush1.msra.mxu0 0.0
    %467 = vmatprep.subr.mxu0 0.0
    %468 = vmatpush1.msra.mxu0 0.0
    %469 = vmatprep.subr.mxu0 0.0
    %470 = vmatpush1.msra.mxu0 0.0
    %471 = vmatprep.subr.mxu0 0.0
    %472 = vmatpush1.msra.mxu0 0.0
    %473 = vmatprep.subr.mxu0 0.0
    %474 = vmatpush1.msra.mxu0 0.0
    %475 = vmatprep.subr.mxu0 0.0
    %476 = vmatpush1.msra.mxu0 0.0
    %477 = vmatprep.subr.mxu0 0.0
    %478 = vmatpush1.msra.mxu0 0.0
    %479 = vmatprep.subr.mxu0 0.0
    %480 = vmatpush1.msra.mxu0 0.0
    %481 = vmatprep.subr.mxu0 0.0
    %482 = vmatpush1.msra.mxu0 0.0
    %483 = vmatprep.subr.mxu0 0.0
    %484 = vmatpush1.msra.mxu0 0.0
    %485 = vmatprep.subr.mxu0 0.0
    %486 = vmatpush1.msra.mxu0 0.0
    %487 = vmatprep.subr.mxu0 0.0
    %488 = vmatpush1.msra.mxu0 0.0
    %489 = vmatprep.subr.mxu0 0.0
    %490 = vmatpush1.msra.mxu0 0.0
    %491 = vmatprep.subr.mxu0 0.0
    %492 = vmatpush1.msra.mxu0 0.0
    %493 = vmatprep.subr.mxu0 0.0
    %494 = vmatpush1.msra.mxu0 0.0
    %495 = vmatprep.subr.mxu0 0.0
    %496 = vmatpush1.msra.mxu0 0.0
    %497 = vmatprep.subr.mxu0 0.0
    %498 = vmatpush1.msra.mxu0 0.0
    %499 = vmatprep.subr.mxu0 0.0
    %500 = vmatpush1.msra.mxu0 0.0
    %501 = vmatprep.subr.mxu0 0.0
    %502 = vmatpush1.msra.mxu0 0.0
    %503 = vmatprep.subr.mxu0 0.0
    %504 = vmatpush1.msra.mxu0 0.0
    %505 = vmatprep.subr.mxu0 0.0
    %506 = vmatpush1.msra.mxu0 0.0
    %507 = vmatprep.subr.mxu0 0.0
    %508 = vmatpush1.msra.mxu0 0.0
    %509 = vmatprep.subr.mxu0 0.0
    %510 = vmatpush1.msra.mxu0 0.0
    %511 = vmatprep.subr.mxu0 0.0
    %512 = vmatpush1.msra.mxu0 0.0
    %513 = vmatprep.subr.mxu0 0.0
    %514 = vmatpush1.msra.mxu0 0.0
    %515 = vmatprep.subr.mxu0 0.0
    %516 = vmatpush1.msra.mxu0 0.0
    %517 = vmatprep.mubr.f32.mxu0 0.0
    %518 = vmatmul.mubr.f32.gmra.mrb[0].mxu0 %v241
    %v519 = vpop.f32.mrb[0].mxu0
    %v520 = vadd.f32 0.0, %v519
    %v521 = vpop.f32.mrb[0].mxu0
    %522 = vdwg.mxu0
    %523 = vmatprep.subr.mxu0 0.0
    %524 = vmatpush1.msra.mxu0 %v41
    %525 = vmatprep.subr.mxu0 0.0
    %526 = vmatpush1.msra.mxu0 %v42
    %527 = vmatprep.subr.mxu0 0.0
    %528 = vmatpush1.msra.mxu0 %v43
    %529 = vmatprep.subr.mxu0 0.0
    %530 = vmatpush1.msra.mxu0 %v44
    %531 = vmatprep.subr.mxu0 0.0
    %532 = vmatpush1.msra.mxu0 0.0
    %533 = vmatprep.subr.mxu0 0.0
    %534 = vmatpush1.msra.mxu0 0.0
    %535 = vmatprep.subr.mxu0 0.0
    %536 = vmatpush1.msra.mxu0 0.0
    %537 = vmatprep.subr.mxu0 0.0
    %538 = vmatpush1.msra.mxu0 0.0
    %539 = vmatprep.subr.mxu0 0.0
    %540 = vmatpush1.msra.mxu0 0.0
    %541 = vmatprep.subr.mxu0 0.0
    %542 = vmatpush1.msra.mxu0 0.0
    %543 = vmatprep.subr.mxu0 0.0
    %544 = vmatpush1.msra.mxu0 0.0
    %545 = vmatprep.subr.mxu0 0.0
    %546 = vmatpush1.msra.mxu0 0.0
    %547 = vmatprep.subr.mxu0 0.0
    %548 = vmatpush1.msra.mxu0 0.0
    %549 = vmatprep.subr.mxu0 0.0
    %550 = vmatpush1.msra.mxu0 0.0
    %551 = vmatprep.subr.mxu0 0.0
    %552 = vmatpush1.msra.mxu0 0.0
    %553 = vmatprep.subr.mxu0 0.0
    %554 = vmatpush1.msra.mxu0 0.0
    %555 = vmatprep.subr.mxu0 0.0
    %556 = vmatpush1.msra.mxu0 0.0
    %557 = vmatprep.subr.mxu0 0.0
    %558 = vmatpush1.msra.mxu0 0.0
    %559 = vmatprep.subr.mxu0 0.0
    %560 = vmatpush1.msra.mxu0 0.0
    %561 = vmatprep.subr.mxu0 0.0
    %562 = vmatpush1.msra.mxu0 0.0
    %563 = vmatprep.subr.mxu0 0.0
    %564 = vmatpush1.msra.mxu0 0.0
    %565 = vmatprep.subr.mxu0 0.0
    %566 = vmatpush1.msra.mxu0 0.0
    %567 = vmatprep.subr.mxu0 0.0
    %568 = vmatpush1.msra.mxu0 0.0
    %569 = vmatprep.subr.mxu0 0.0
    %570 = vmatpush1.msra.mxu0 0.0
    %571 = vmatprep.subr.mxu0 0.0
    %572 = vmatpush1.msra.mxu0 0.0
    %573 = vmatprep.subr.mxu0 0.0
    %574 = vmatpush1.msra.mxu0 0.0
    %575 = vmatprep.subr.mxu0 0.0
    %576 = vmatpush1.msra.mxu0 0.0
    %577 = vmatprep.subr.mxu0 0.0
    %578 = vmatpush1.msra.mxu0 0.0
    %579 = vmatprep.subr.mxu0 0.0
    %580 = vmatpush1.msra.mxu0 0.0
    %581 = vmatprep.subr.mxu0 0.0
    %582 = vmatpush1.msra.mxu0 0.0
    %583 = vmatprep.subr.mxu0 0.0
    %584 = vmatpush1.msra.mxu0 0.0
    %585 = vmatprep.subr.mxu0 0.0
    %586 = vmatpush1.msra.mxu0 0.0
    %587 = vmatprep.mubr.f32.mxu0 0.0
    %588 = vmatmul.mubr.f32.gmra.mrb[0].mxu0 %v241
    %v589 = vpop.f32.mrb[0].mxu0
    %v590 = vadd.f32 0.0, %v589
    %v591 = vpop.f32.mrb[0].mxu0
    %592 = vdwg.mxu0
    %593 = vmatprep.subr.mxu0 0.0
    %594 = vmatpush1.msra.mxu0 %v45
    %595 = vmatprep.subr.mxu0 0.0
    %596 = vmatpush1.msra.mxu0 %v46
    %597 = vmatprep.subr.mxu0 0.0
    %598 = vmatpush1.msra.mxu0 %v47
    %599 = vmatprep.subr.mxu0 0.0
    %600 = vmatpush1.msra.mxu0 %v48
    %601 = vmatprep.subr.mxu0 0.0
    %602 = vmatpush1.msra.mxu0 0.0
    %603 = vmatprep.subr.mxu0 0.0
    %604 = vmatpush1.msra.mxu0 0.0
    %605 = vmatprep.subr.mxu0 0.0
    %606 = vmatpush1.msra.mxu0 0.0
    %607 = vmatprep.subr.mxu0 0.0
    %608 = vmatpush1.msra.mxu0 0.0
    %609 = vmatprep.subr.mxu0 0.0
    %610 = vmatpush1.msra.mxu0 0.0
    %611 = vmatprep.subr.mxu0 0.0
    %612 = vmatpush1.msra.mxu0 0.0
    %613 = vmatprep.subr.mxu0 0.0
    %614 = vmatpush1.msra.mxu0 0.0
    %615 = vmatprep.subr.mxu0 0.0
    %616 = vmatpush1.msra.mxu0 0.0
    %617 = vmatprep.subr.mxu0 0.0
    %618 = vmatpush1.msra.mxu0 0.0
    %619 = vmatprep.subr.mxu0 0.0
    %620 = vmatpush1.msra.mxu0 0.0
    %621 = vmatprep.subr.mxu0 0.0
    %622 = vmatpush1.msra.mxu0 0.0
    %623 = vmatprep.subr.mxu0 0.0
    %624 = vmatpush1.msra.mxu0 0.0
    %625 = vmatprep.subr.mxu0 0.0
    %626 = vmatpush1.msra.mxu0 0.0
    %627 = vmatprep.subr.mxu0 0.0
    %628 = vmatpush1.msra.mxu0 0.0
    %629 = vmatprep.subr.mxu0 0.0
    %630 = vmatpush1.msra.mxu0 0.0
    %631 = vmatprep.subr.mxu0 0.0
    %632 = vmatpush1.msra.mxu0 0.0
    %633 = vmatprep.subr.mxu0 0.0
    %634 = vmatpush1.msra.mxu0 0.0
    %635 = vmatprep.subr.mxu0 0.0
    %636 = vmatpush1.msra.mxu0 0.0
    %637 = vmatprep.subr.mxu0 0.0
    %638 = vmatpush1.msra.mxu0 0.0
    %639 = vmatprep.subr.mxu0 0.0
    %640 = vmatpush1.msra.mxu0 0.0
    %641 = vmatprep.subr.mxu0 0.0
    %642 = vmatpush1.msra.mxu0 0.0
    %643 = vmatprep.subr.mxu0 0.0
    %644 = vmatpush1.msra.mxu0 0.0
    %645 = vmatprep.subr.mxu0 0.0
    %646 = vmatpush1.msra.mxu0 0.0
    %647 = vmatprep.subr.mxu0 0.0
    %648 = vmatpush1.msra.mxu0 0.0
    %649 = vmatprep.subr.mxu0 0.0
    %650 = vmatpush1.msra.mxu0 0.0
    %651 = vmatprep.subr.mxu0 0.0
    %652 = vmatpush1.msra.mxu0 0.0
    %653 = vmatprep.subr.mxu0 0.0
    %654 = vmatpush1.msra.mxu0 0.0
    %655 = vmatprep.subr.mxu0 0.0
    %656 = vmatpush1.msra.mxu0 0.0
    %657 = vmatprep.mubr.f32.mxu0 0.0
    %658 = vmatmul.mubr.f32.gmra.mrb[0].mxu0 %v241
    %v659 = vpop.f32.mrb[0].mxu0
    %v660 = vadd.f32 0.0, %v659
    %v661 = vpop.f32.mrb[0].mxu0
    %662 = vdwg.mxu0
    %663 = vmatprep.subr.mxu0 0.0
    %664 = vmatpush1.msra.mxu0 %v49
    %665 = vmatprep.subr.mxu0 0.0
    %666 = vmatpush1.msra.mxu0 %v50
    %667 = vmatprep.subr.mxu0 0.0
    %668 = vmatpush1.msra.mxu0 %v51
    %669 = vmatprep.subr.mxu0 0.0
    %670 = vmatpush1.msra.mxu0 %v52
    %671 = vmatprep.subr.mxu0 0.0
    %672 = vmatpush1.msra.mxu0 0.0
    %673 = vmatprep.subr.mxu0 0.0
    %674 = vmatpush1.msra.mxu0 0.0
    %675 = vmatprep.subr.mxu0 0.0
    %676 = vmatpush1.msra.mxu0 0.0
    %677 = vmatprep.subr.mxu0 0.0
    %678 = vmatpush1.msra.mxu0 0.0
    %679 = vmatprep.subr.mxu0 0.0
    %680 = vmatpush1.msra.mxu0 0.0
    %681 = vmatprep.subr.mxu0 0.0
    %682 = vmatpush1.msra.mxu0 0.0
    %683 = vmatprep.subr.mxu0 0.0
    %684 = vmatpush1.msra.mxu0 0.0
    %685 = vmatprep.subr.mxu0 0.0
    %686 = vmatpush1.msra.mxu0 0.0
    %687 = vmatprep.subr.mxu0 0.0
    %688 = vmatpush1.msra.mxu0 0.0
    %689 = vmatprep.subr.mxu0 0.0
    %690 = vmatpush1.msra.mxu0 0.0
    %691 = vmatprep.subr.mxu0 0.0
    %692 = vmatpush1.msra.mxu0 0.0
    %693 = vmatprep.subr.mxu0 0.0
    %694 = vmatpush1.msra.mxu0 0.0
    %695 = vmatprep.subr.mxu0 0.0
    %696 = vmatpush1.msra.mxu0 0.0
    %697 = vmatprep.subr.mxu0 0.0
    %698 = vmatpush1.msra.mxu0 0.0
    %699 = vmatprep.subr.mxu0 0.0
    %700 = vmatpush1.msra.mxu0 0.0
    %701 = vmatprep.subr.mxu0 0.0
    %702 = vmatpush1.msra.mxu0 0.0
    %703 = vmatprep.subr.mxu0 0.0
    %704 = vmatpush1.msra.mxu0 0.0
    %705 = vmatprep.subr.mxu0 0.0
    %706 = vmatpush1.msra.mxu0 0.0
    %707 = vmatprep.subr.mxu0 0.0
    %708 = vmatpush1.msra.mxu0 0.0
    %709 = vmatprep.subr.mxu0 0.0
    %710 = vmatpush1.msra.mxu0 0.0
    %711 = vmatprep.subr.mxu0 0.0
    %712 = vmatpush1.msra.mxu0 0.0
    %713 = vmatprep.subr.mxu0 0.0
    %714 = vmatpush1.msra.mxu0 0.0
    %715 = vmatprep.subr.mxu0 0.0
    %716 = vmatpush1.msra.mxu0 0.0
    %717 = vmatprep.subr.mxu0 0.0
    %718 = vmatpush1.msra.mxu0 0.0
    %719 = vmatprep.subr.mxu0 0.0
    %720 = vmatpush1.msra.mxu0 0.0
    %721 = vmatprep.subr.mxu0 0.0
    %722 = vmatpush1.msra.mxu0 0.0
    %723 = vmatprep.subr.mxu0 0.0
    %724 = vmatpush1.msra.mxu0 0.0
    %725 = vmatprep.subr.mxu0 0.0
    %726 = vmatpush1.msra.mxu0 0.0
    %727 = vmatprep.mubr.f32.mxu0 0.0
    %728 = vmatmul.mubr.f32.gmra.mrb[0].mxu0 %v241
    %v729 = vpop.f32.mrb[0].mxu0
    %v730 = vadd.f32 0.0, %v729
    %v731 = vpop.f32.mrb[0].mxu0
    %732 = vdwg.mxu0
    %733 = vmatprep.subr.mxu0 0.0
    %734 = vmatpush1.msra.mxu0 %v53
    %735 = vmatprep.subr.mxu0 0.0
    %736 = vmatpush1.msra.mxu0 %v54
    %737 = vmatprep.subr.mxu0 0.0
    %738 = vmatpush1.msra.mxu0 %v55
    %739 = vmatprep.subr.mxu0 0.0
    %740 = vmatpush1.msra.mxu0 %v56
    %741 = vmatprep.subr.mxu0 0.0
    %742 = vmatpush1.msra.mxu0 0.0
    %743 = vmatprep.subr.mxu0 0.0
    %744 = vmatpush1.msra.mxu0 0.0
    %745 = vmatprep.subr.mxu0 0.0
    %746 = vmatpush1.msra.mxu0 0.0
    %747 = vmatprep.subr.mxu0 0.0
    %748 = vmatpush1.msra.mxu0 0.0
    %749 = vmatprep.subr.mxu0 0.0
    %750 = vmatpush1.msra.mxu0 0.0
    %751 = vmatprep.subr.mxu0 0.0
    %752 = vmatpush1.msra.mxu0 0.0
    %753 = vmatprep.subr.mxu0 0.0
    %754 = vmatpush1.msra.mxu0 0.0
    %755 = vmatprep.subr.mxu0 0.0
    %756 = vmatpush1.msra.mxu0 0.0
    %757 = vmatprep.subr.mxu0 0.0
    %758 = vmatpush1.msra.mxu0 0.0
    %759 = vmatprep.subr.mxu0 0.0
    %760 = vmatpush1.msra.mxu0 0.0
    %761 = vmatprep.subr.mxu0 0.0
    %762 = vmatpush1.msra.mxu0 0.0
    %763 = vmatprep.subr.mxu0 0.0
    %764 = vmatpush1.msra.mxu0 0.0
    %765 = vmatprep.subr.mxu0 0.0
    %766 = vmatpush1.msra.mxu0 0.0
    %767 = vmatprep.subr.mxu0 0.0
    %768 = vmatpush1.msra.mxu0 0.0
    %769 = vmatprep.subr.mxu0 0.0
    %770 = vmatpush1.msra.mxu0 0.0
    %771 = vmatprep.subr.mxu0 0.0
    %772 = vmatpush1.msra.mxu0 0.0
    %773 = vmatprep.subr.mxu0 0.0
    %774 = vmatpush1.msra.mxu0 0.0
    %775 = vmatprep.subr.mxu0 0.0
    %776 = vmatpush1.msra.mxu0 0.0
    %777 = vmatprep.subr.mxu0 0.0
    %778 = vmatpush1.msra.mxu0 0.0
    %779 = vmatprep.subr.mxu0 0.0
    %780 = vmatpush1.msra.mxu0 0.0
    %781 = vmatprep.subr.mxu0 0.0
    %782 = vmatpush1.msra.mxu0 0.0
    %783 = vmatprep.subr.mxu0 0.0
    %784 = vmatpush1.msra.mxu0 0.0
    %785 = vmatprep.subr.mxu0 0.0
    %786 = vmatpush1.msra.mxu0 0.0
    %787 = vmatprep.subr.mxu0 0.0
    %788 = vmatpush1.msra.mxu0 0.0
    %789 = vmatprep.subr.mxu0 0.0
    %790 = vmatpush1.msra.mxu0 0.0
    %791 = vmatprep.subr.mxu0 0.0
    %792 = vmatpush1.msra.mxu0 0.0
    %793 = vmatprep.subr.mxu0 0.0
    %794 = vmatpush1.msra.mxu0 0.0
    %795 = vmatprep.subr.mxu0 0.0
    %796 = vmatpush1.msra.mxu0 0.0
    %797 = vmatprep.mubr.f32.mxu0 0.0
    %798 = vmatmul.mubr.f32.gmra.mrb[0].mxu0 %v241
    %v799 = vpop.f32.mrb[0].mxu0
    %v800 = vadd.f32 0.0, %v799
    %v801 = vpop.f32.mrb[0].mxu0
    %802 = vdwg.mxu0
    %803 = vmatprep.subr.mxu0 0.0
    %804 = vmatpush1.msra.mxu0 %v57
    %805 = vmatprep.subr.mxu0 0.0
    %806 = vmatpush1.msra.mxu0 %v58
    %807 = vmatprep.subr.mxu0 0.0
    %808 = vmatpush1.msra.mxu0 %v59
    %809 = vmatprep.subr.mxu0 0.0
    %810 = vmatpush1.msra.mxu0 %v60
    %811 = vmatprep.subr.mxu0 0.0
    %812 = vmatpush1.msra.mxu0 0.0
    %813 = vmatprep.subr.mxu0 0.0
    %814 = vmatpush1.msra.mxu0 0.0
    %815 = vmatprep.subr.mxu0 0.0
    %816 = vmatpush1.msra.mxu0 0.0
    %817 = vmatprep.subr.mxu0 0.0
    %818 = vmatpush1.msra.mxu0 0.0
    %819 = vmatprep.subr.mxu0 0.0
    %820 = vmatpush1.msra.mxu0 0.0
    %821 = vmatprep.subr.mxu0 0.0
    %822 = vmatpush1.msra.mxu0 0.0
    %823 = vmatprep.subr.mxu0 0.0
    %824 = vmatpush1.msra.mxu0 0.0
    %825 = vmatprep.subr.mxu0 0.0
    %826 = vmatpush1.msra.mxu0 0.0
    %827 = vmatprep.subr.mxu0 0.0
    %828 = vmatpush1.msra.mxu0 0.0
    %829 = vmatprep.subr.mxu0 0.0
    %830 = vmatpush1.msra.mxu0 0.0
    %831 = vmatprep.subr.mxu0 0.0
    %832 = vmatpush1.msra.mxu0 0.0
    %833 = vmatprep.subr.mxu0 0.0
    %834 = vmatpush1.msra.mxu0 0.0
    %835 = vmatprep.subr.mxu0 0.0
    %836 = vmatpush1.msra.mxu0 0.0
    %837 = vmatprep.subr.mxu0 0.0
    %838 = vmatpush1.msra.mxu0 0.0
    %839 = vmatprep.subr.mxu0 0.0
    %840 = vmatpush1.msra.mxu0 0.0
    %841 = vmatprep.subr.mxu0 0.0
    %842 = vmatpush1.msra.mxu0 0.0
    %843 = vmatprep.subr.mxu0 0.0
    %844 = vmatpush1.msra.mxu0 0.0
    %845 = vmatprep.subr.mxu0 0.0
    %846 = vmatpush1.msra.mxu0 0.0
    %847 = vmatprep.subr.mxu0 0.0
    %848 = vmatpush1.msra.mxu0 0.0
    %849 = vmatprep.subr.mxu0 0.0
    %850 = vmatpush1.msra.mxu0 0.0
    %851 = vmatprep.subr.mxu0 0.0
    %852 = vmatpush1.msra.mxu0 0.0
    %853 = vmatprep.subr.mxu0 0.0
    %854 = vmatpush1.msra.mxu0 0.0
    %855 = vmatprep.subr.mxu0 0.0
    %856 = vmatpush1.msra.mxu0 0.0
    %857 = vmatprep.subr.mxu0 0.0
    %858 = vmatpush1.msra.mxu0 0.0
    %859 = vmatprep.subr.mxu0 0.0
    %860 = vmatpush1.msra.mxu0 0.0
    %861 = vmatprep.subr.mxu0 0.0
    %862 = vmatpush1.msra.mxu0 0.0
    %863 = vmatprep.subr.mxu0 0.0
    %864 = vmatpush1.msra.mxu0 0.0
    %865 = vmatprep.subr.mxu0 0.0
    %866 = vmatpush1.msra.mxu0 0.0
    %867 = vmatprep.mubr.f32.mxu0 0.0
    %868 = vmatmul.mubr.f32.gmra.mrb[0].mxu0 %v241
    %v869 = vpop.f32.mrb[0].mxu0
    %v870 = vadd.f32 0.0, %v869
    %v871 = vpop.f32.mrb[0].mxu0
    %872 = vdwg.mxu0
    %873 = vmatprep.subr.mxu0 0.0
    %874 = vmatpush1.msra.mxu0 %v61
    %875 = vmatprep.subr.mxu0 0.0
    %876 = vmatpush1.msra.mxu0 %v62
    %877 = vmatprep.subr.mxu0 0.0
    %878 = vmatpush1.msra.mxu0 %v63
    %879 = vmatprep.subr.mxu0 0.0
    %880 = vmatpush1.msra.mxu0 %v64
    %881 = vmatprep.subr.mxu0 0.0
    %882 = vmatpush1.msra.mxu0 0.0
    %883 = vmatprep.subr.mxu0 0.0
    %884 = vmatpush1.msra.mxu0 0.0
    %885 = vmatprep.subr.mxu0 0.0
    %886 = vmatpush1.msra.mxu0 0.0
    %887 = vmatprep.subr.mxu0 0.0
    %888 = vmatpush1.msra.mxu0 0.0
    %889 = vmatprep.subr.mxu0 0.0
    %890 = vmatpush1.msra.mxu0 0.0
    %891 = vmatprep.subr.mxu0 0.0
    %892 = vmatpush1.msra.mxu0 0.0
    %893 = vmatprep.subr.mxu0 0.0
    %894 = vmatpush1.msra.mxu0 0.0
    %895 = vmatprep.subr.mxu0 0.0
    %896 = vmatpush1.msra.mxu0 0.0
    %897 = vmatprep.subr.mxu0 0.0
    %898 = vmatpush1.msra.mxu0 0.0
    %899 = vmatprep.subr.mxu0 0.0
    %900 = vmatpush1.msra.mxu0 0.0
    %901 = vmatprep.subr.mxu0 0.0
    %902 = vmatpush1.msra.mxu0 0.0
    %903 = vmatprep.subr.mxu0 0.0
    %904 = vmatpush1.msra.mxu0 0.0
    %905 = vmatprep.subr.mxu0 0.0
    %906 = vmatpush1.msra.mxu0 0.0
    %907 = vmatprep.subr.mxu0 0.0
    %908 = vmatpush1.msra.mxu0 0.0
    %909 = vmatprep.subr.mxu0 0.0
    %910 = vmatpush1.msra.mxu0 0.0
    %911 = vmatprep.subr.mxu0 0.0
    %912 = vmatpush1.msra.mxu0 0.0
    %913 = vmatprep.subr.mxu0 0.0
    %914 = vmatpush1.msra.mxu0 0.0
    %915 = vmatprep.subr.mxu0 0.0
    %916 = vmatpush1.msra.mxu0 0.0
    %917 = vmatprep.subr.mxu0 0.0
    %918 = vmatpush1.msra.mxu0 0.0
    %919 = vmatprep.subr.mxu0 0.0
    %920 = vmatpush1.msra.mxu0 0.0
    %921 = vmatprep.subr.mxu0 0.0
    %922 = vmatpush1.msra.mxu0 0.0
    %923 = vmatprep.subr.mxu0 0.0
    %924 = vmatpush1.msra.mxu0 0.0
    %925 = vmatprep.subr.mxu0 0.0
    %926 = vmatpush1.msra.mxu0 0.0
    %927 = vmatprep.subr.mxu0 0.0
    %928 = vmatpush1.msra.mxu0 0.0
    %929 = vmatprep.subr.mxu0 0.0
    %930 = vmatpush1.msra.mxu0 0.0
    %931 = vmatprep.subr.mxu0 0.0
    %932 = vmatpush1.msra.mxu0 0.0
    %933 = vmatprep.subr.mxu0 0.0
    %934 = vmatpush1.msra.mxu0 0.0
    %935 = vmatprep.subr.mxu0 0.0
    %936 = vmatpush1.msra.mxu0 0.0
    %937 = vmatprep.mubr.f32.mxu0 0.0
    %938 = vmatmul.mubr.f32.gmra.mrb[0].mxu0 %v241
    %v939 = vpop.f32.mrb[0].mxu0
    %v940 = vadd.f32 0.0, %v939
    %v941 = vpop.f32.mrb[0].mxu0
    %942 = vdwg.mxu0
    %943 = vmatprep.subr.mxu0 0.0
    %944 = vmatpush1.msra.mxu0 %v65
    %945 = vmatprep.subr.mxu0 0.0
    %946 = vmatpush1.msra.mxu0 %v66
    %947 = vmatprep.subr.mxu0 0.0
    %948 = vmatpush1.msra.mxu0 %v67
    %949 = vmatprep.subr.mxu0 0.0
    %950 = vmatpush1.msra.mxu0 %v68
    %951 = vmatprep.subr.mxu0 0.0
    %952 = vmatpush1.msra.mxu0 0.0
    %953 = vmatprep.subr.mxu0 0.0
    %954 = vmatpush1.msra.mxu0 0.0
    %955 = vmatprep.subr.mxu0 0.0
    %956 = vmatpush1.msra.mxu0 0.0
    %957 = vmatprep.subr.mxu0 0.0
    %958 = vmatpush1.msra.mxu0 0.0
    %959 = vmatprep.subr.mxu0 0.0
    %960 = vmatpush1.msra.mxu0 0.0
    %961 = vmatprep.subr.mxu0 0.0
    %962 = vmatpush1.msra.mxu0 0.0
    %963 = vmatprep.subr.mxu0 0.0
    %964 = vmatpush1.msra.mxu0 0.0
    %965 = vmatprep.subr.mxu0 0.0
    %966 = vmatpush1.msra.mxu0 0.0
    %967 = vmatprep.subr.mxu0 0.0
    %968 = vmatpush1.msra.mxu0 0.0
    %969 = vmatprep.subr.mxu0 0.0
    %970 = vmatpush1.msra.mxu0 0.0
    %971 = vmatprep.subr.mxu0 0.0
    %972 = vmatpush1.msra.mxu0 0.0
    %973 = vmatprep.subr.mxu0 0.0
    %974 = vmatpush1.msra.mxu0 0.0
    %975 = vmatprep.subr.mxu0 0.0
    %976 = vmatpush1.msra.mxu0 0.0
    %977 = vmatprep.subr.mxu0 0.0
    %978 = vmatpush1.msra.mxu0 0.0
    %979 = vmatprep.subr.mxu0 0.0
    %980 = vmatpush1.msra.mxu0 0.0
    %981 = vmatprep.subr.mxu0 0.0
    %982 = vmatpush1.msra.mxu0 0.0
    %983 = vmatprep.subr.mxu0 0.0
    %984 = vmatpush1.msra.mxu0 0.0
    %985 = vmatprep.subr.mxu0 0.0
    %986 = vmatpush1.msra.mxu0 0.0
    %987 = vmatprep.subr.mxu0 0.0
    %988 = vmatpush1.msra.mxu0 0.0
    %989 = vmatprep.subr.mxu0 0.0
    %990 = vmatpush1.msra.mxu0 0.0
    %991 = vmatprep.subr.mxu0 0.0
    %992 = vmatpush1.msra.mxu0 0.0
    %993 = vmatprep.subr.mxu0 0.0
    %994 = vmatpush1.msra.mxu0 0.0
    %995 = vmatprep.subr.mxu0 0.0
    %996 = vmatpush1.msra.mxu0 0.0
    %997 = vmatprep.subr.mxu0 0.0
    %998 = vmatpush1.msra.mxu0 0.0
    %999 = vmatprep.subr.mxu0 0.0
    %1000 = vmatpush1.msra.mxu0 0.0
    %1001 = vmatprep.subr.mxu0 0.0
    %1002 = vmatpush1.msra.mxu0 0.0
    %1003 = vmatprep.subr.mxu0 0.0
    %1004 = vmatpush1.msra.mxu0 0.0
    %1005 = vmatprep.subr.mxu0 0.0
    %1006 = vmatpush1.msra.mxu0 0.0
    %1007 = vmatprep.mubr.f32.mxu0 0.0
    %1008 = vmatmul.mubr.f32.gmra.mrb[0].mxu0 %v241
    %v1009 = vpop.f32.mrb[0].mxu0
    %v1010 = vadd.f32 0.0, %v1009
    %v1011 = vpop.f32.mrb[0].mxu0
    %1012 = vdwg.mxu0
    %1013 = vmatprep.subr.mxu0 0.0
    %1014 = vmatpush1.msra.mxu0 %v69
    %1015 = vmatprep.subr.mxu0 0.0
    %1016 = vmatpush1.msra.mxu0 %v70
    %1017 = vmatprep.subr.mxu0 0.0
    %1018 = vmatpush1.msra.mxu0 %v71
    %1019 = vmatprep.subr.mxu0 0.0
    %1020 = vmatpush1.msra.mxu0 %v72
    %1021 = vmatprep.subr.mxu0 0.0
    %1022 = vmatpush1.msra.mxu0 0.0
    %1023 = vmatprep.subr.mxu0 0.0
    %1024 = vmatpush1.msra.mxu0 0.0
    %1025 = vmatprep.subr.mxu0 0.0
    %1026 = vmatpush1.msra.mxu0 0.0
    %1027 = vmatprep.subr.mxu0 0.0
    %1028 = vmatpush1.msra.mxu0 0.0
    %1029 = vmatprep.subr.mxu0 0.0
    %1030 = vmatpush1.msra.mxu0 0.0
    %1031 = vmatprep.subr.mxu0 0.0
    %1032 = vmatpush1.msra.mxu0 0.0
    %1033 = vmatprep.subr.mxu0 0.0
    %1034 = vmatpush1.msra.mxu0 0.0
    %1035 = vmatprep.subr.mxu0 0.0
    %1036 = vmatpush1.msra.mxu0 0.0
    %1037 = vmatprep.subr.mxu0 0.0
    %1038 = vmatpush1.msra.mxu0 0.0
    %1039 = vmatprep.subr.mxu0 0.0
    %1040 = vmatpush1.msra.mxu0 0.0
    %1041 = vmatprep.subr.mxu0 0.0
    %1042 = vmatpush1.msra.mxu0 0.0
    %1043 = vmatprep.subr.mxu0 0.0
    %1044 = vmatpush1.msra.mxu0 0.0
    %1045 = vmatprep.subr.mxu0 0.0
    %1046 = vmatpush1.msra.mxu0 0.0
    %1047 = vmatprep.subr.mxu0 0.0
    %1048 = vmatpush1.msra.mxu0 0.0
    %1049 = vmatprep.subr.mxu0 0.0
    %1050 = vmatpush1.msra.mxu0 0.0
    %1051 = vmatprep.subr.mxu0 0.0
    %1052 = vmatpush1.msra.mxu0 0.0
    %1053 = vmatprep.subr.mxu0 0.0
    %1054 = vmatpush1.msra.mxu0 0.0
    %1055 = vmatprep.subr.mxu0 0.0
    %1056 = vmatpush1.msra.mxu0 0.0
    %1057 = vmatprep.subr.mxu0 0.0
    %1058 = vmatpush1.msra.mxu0 0.0
    %1059 = vmatprep.subr.mxu0 0.0
    %1060 = vmatpush1.msra.mxu0 0.0
    %1061 = vmatprep.subr.mxu0 0.0
    %1062 = vmatpush1.msra.mxu0 0.0
    %1063 = vmatprep.subr.mxu0 0.0
    %1064 = vmatpush1.msra.mxu0 0.0
    %1065 = vmatprep.subr.mxu0 0.0
    %1066 = vmatpush1.msra.mxu0 0.0
    %1067 = vmatprep.subr.mxu0 0.0
    %1068 = vmatpush1.msra.mxu0 0.0
    %1069 = vmatprep.subr.mxu0 0.0
    %1070 = vmatpush1.msra.mxu0 0.0
    %1071 = vmatprep.subr.mxu0 0.0
    %1072 = vmatpush1.msra.mxu0 0.0
    %1073 = vmatprep.subr.mxu0 0.0
    %1074 = vmatpush1.msra.mxu0 0.0
    %1075 = vmatprep.subr.mxu0 0.0
    %1076 = vmatpush1.msra.mxu0 0.0
    %1077 = vmatprep.mubr.f32.mxu0 0.0
    %1078 = vmatmul.mubr.f32.gmra.mrb[0].mxu0 %v241
    %v1079 = vpop.f32.mrb[0].mxu0
    %v1080 = vadd.f32 0.0, %v1079
    %v1081 = vpop.f32.mrb[0].mxu0
    %1082 = vdwg.mxu0
    %1083 = vmatprep.subr.mxu0 0.0
    %1084 = vmatpush1.msra.mxu0 %v73
    %1085 = vmatprep.subr.mxu0 0.0
    %1086 = vmatpush1.msra.mxu0 %v74
    %1087 = vmatprep.subr.mxu0 0.0
    %1088 = vmatpush1.msra.mxu0 %v75
    %1089 = vmatprep.subr.mxu0 0.0
    %1090 = vmatpush1.msra.mxu0 %v76
    %1091 = vmatprep.subr.mxu0 0.0
    %1092 = vmatpush1.msra.mxu0 0.0
    %1093 = vmatprep.subr.mxu0 0.0
    %1094 = vmatpush1.msra.mxu0 0.0
    %1095 = vmatprep.subr.mxu0 0.0
    %1096 = vmatpush1.msra.mxu0 0.0
    %1097 = vmatprep.subr.mxu0 0.0
    %1098 = vmatpush1.msra.mxu0 0.0
    %1099 = vmatprep.subr.mxu0 0.0
    %1100 = vmatpush1.msra.mxu0 0.0
    %1101 = vmatprep.subr.mxu0 0.0
    %1102 = vmatpush1.msra.mxu0 0.0
    %1103 = vmatprep.subr.mxu0 0.0
    %1104 = vmatpush1.msra.mxu0 0.0
    %1105 = vmatprep.subr.mxu0 0.0
    %1106 = vmatpush1.msra.mxu0 0.0
    %1107 = vmatprep.subr.mxu0 0.0
    %1108 = vmatpush1.msra.mxu0 0.0
    %1109 = vmatprep.subr.mxu0 0.0
    %1110 = vmatpush1.msra.mxu0 0.0
    %1111 = vmatprep.subr.mxu0 0.0
    %1112 = vmatpush1.msra.mxu0 0.0
    %1113 = vmatprep.subr.mxu0 0.0
    %1114 = vmatpush1.msra.mxu0 0.0
    %1115 = vmatprep.subr.mxu0 0.0
    %1116 = vmatpush1.msra.mxu0 0.0
    %1117 = vmatprep.subr.mxu0 0.0
    %1118 = vmatpush1.msra.mxu0 0.0
    %1119 = vmatprep.subr.mxu0 0.0
    %1120 = vmatpush1.msra.mxu0 0.0
    %1121 = vmatprep.subr.mxu0 0.0
    %1122 = vmatpush1.msra.mxu0 0.0
    %1123 = vmatprep.subr.mxu0 0.0
    %1124 = vmatpush1.msra.mxu0 0.0
    %1125 = vmatprep.subr.mxu0 0.0
    %1126 = vmatpush1.msra.mxu0 0.0
    %1127 = vmatprep.subr.mxu0 0.0
    %1128 = vmatpush1.msra.mxu0 0.0
    %1129 = vmatprep.subr.mxu0 0.0
    %1130 = vmatpush1.msra.mxu0 0.0
    %1131 = vmatprep.subr.mxu0 0.0
    %1132 = vmatpush1.msra.mxu0 0.0
    %1133 = vmatprep.subr.mxu0 0.0
    %1134 = vmatpush1.msra.mxu0 0.0
    %1135 = vmatprep.subr.mxu0 0.0
    %1136 = vmatpush1.msra.mxu0 0.0
    %1137 = vmatprep.subr.mxu0 0.0
    %1138 = vmatpush1.msra.mxu0 0.0
    %1139 = vmatprep.subr.mxu0 0.0
    %1140 = vmatpush1.msra.mxu0 0.0
    %1141 = vmatprep.subr.mxu0 0.0
    %1142 = vmatpush1.msra.mxu0 0.0
    %1143 = vmatprep.subr.mxu0 0.0
    %1144 = vmatpush1.msra.mxu0 0.0
    %1145 = vmatprep.subr.mxu0 0.0
    %1146 = vmatpush1.msra.mxu0 0.0
    %1147 = vmatprep.mubr.f32.mxu0 0.0
    %1148 = vmatmul.mubr.f32.gmra.mrb[0].mxu0 %v241
    %v1149 = vpop.f32.mrb[0].mxu0
    %v1150 = vadd.f32 0.0, %v1149
    %v1151 = vpop.f32.mrb[0].mxu0
    %1152 = vdwg.mxu0
    %1153 = vmatprep.subr.mxu0 0.0
    %1154 = vmatpush1.msra.mxu0 %v77
    %1155 = vmatprep.subr.mxu0 0.0
    %1156 = vmatpush1.msra.mxu0 %v78
    %1157 = vmatprep.subr.mxu0 0.0
    %1158 = vmatpush1.msra.mxu0 %v79
    %1159 = vmatprep.subr.mxu0 0.0
    %1160 = vmatpush1.msra.mxu0 %v80
    %1161 = vmatprep.subr.mxu0 0.0
    %1162 = vmatpush1.msra.mxu0 0.0
    %1163 = vmatprep.subr.mxu0 0.0
    %1164 = vmatpush1.msra.mxu0 0.0
    %1165 = vmatprep.subr.mxu0 0.0
    %1166 = vmatpush1.msra.mxu0 0.0
    %1167 = vmatprep.subr.mxu0 0.0
    %1168 = vmatpush1.msra.mxu0 0.0
    %1169 = vmatprep.subr.mxu0 0.0
    %1170 = vmatpush1.msra.mxu0 0.0
    %1171 = vmatprep.subr.mxu0 0.0
    %1172 = vmatpush1.msra.mxu0 0.0
    %1173 = vmatprep.subr.mxu0 0.0
    %1174 = vmatpush1.msra.mxu0 0.0
    %1175 = vmatprep.subr.mxu0 0.0
    %1176 = vmatpush1.msra.mxu0 0.0
    %1177 = vmatprep.subr.mxu0 0.0
    %1178 = vmatpush1.msra.mxu0 0.0
    %1179 = vmatprep.subr.mxu0 0.0
    %1180 = vmatpush1.msra.mxu0 0.0
    %1181 = vmatprep.subr.mxu0 0.0
    %1182 = vmatpush1.msra.mxu0 0.0
    %1183 = vmatprep.subr.mxu0 0.0
    %1184 = vmatpush1.msra.mxu0 0.0
    %1185 = vmatprep.subr.mxu0 0.0
    %1186 = vmatpush1.msra.mxu0 0.0
    %1187 = vmatprep.subr.mxu0 0.0
    %1188 = vmatpush1.msra.mxu0 0.0
    %1189 = vmatprep.subr.mxu0 0.0
    %1190 = vmatpush1.msra.mxu0 0.0
    %1191 = vmatprep.subr.mxu0 0.0
    %1192 = vmatpush1.msra.mxu0 0.0
    %1193 = vmatprep.subr.mxu0 0.0
    %1194 = vmatpush1.msra.mxu0 0.0
    %1195 = vmatprep.subr.mxu0 0.0
    %1196 = vmatpush1.msra.mxu0 0.0
    %1197 = vmatprep.subr.mxu0 0.0
    %1198 = vmatpush1.msra.mxu0 0.0
    %1199 = vmatprep.subr.mxu0 0.0
    %1200 = vmatpush1.msra.mxu0 0.0
    %1201 = vmatprep.subr.mxu0 0.0
    %1202 = vmatpush1.msra.mxu0 0.0
    %1203 = vmatprep.subr.mxu0 0.0
    %1204 = vmatpush1.msra.mxu0 0.0
    %1205 = vmatprep.subr.mxu0 0.0
    %1206 = vmatpush1.msra.mxu0 0.0
    %1207 = vmatprep.subr.mxu0 0.0
    %1208 = vmatpush1.msra.mxu0 0.0
    %1209 = vmatprep.subr.mxu0 0.0
    %1210 = vmatpush1.msra.mxu0 0.0
    %1211 = vmatprep.subr.mxu0 0.0
    %1212 = vmatpush1.msra.mxu0 0.0
    %1213 = vmatprep.subr.mxu0 0.0
    %1214 = vmatpush1.msra.mxu0 0.0
    %1215 = vmatprep.subr.mxu0 0.0
    %1216 = vmatpush1.msra.mxu0 0.0
    %1217 = vmatprep.mubr.f32.mxu0 0.0
    %1218 = vmatmul.mubr.f32.gmra.mrb[0].mxu0 %v241
    %v1219 = vpop.f32.mrb[0].mxu0
    %v1220 = vadd.f32 0.0, %v1219
    %v1221 = vpop.f32.mrb[0].mxu0
    %1222 = vdwg.mxu0
    %1223 = vmatprep.subr.mxu0 0.0
    %1224 = vmatpush1.msra.mxu0 %v81
    %1225 = vmatprep.subr.mxu0 0.0
    %1226 = vmatpush1.msra.mxu0 %v82
    %1227 = vmatprep.subr.mxu0 0.0
    %1228 = vmatpush1.msra.mxu0 %v83
    %1229 = vmatprep.subr.mxu0 0.0
    %1230 = vmatpush1.msra.mxu0 %v84
    %1231 = vmatprep.subr.mxu0 0.0
    %1232 = vmatpush1.msra.mxu0 0.0
    %1233 = vmatprep.subr.mxu0 0.0
    %1234 = vmatpush1.msra.mxu0 0.0
    %1235 = vmatprep.subr.mxu0 0.0
    %1236 = vmatpush1.msra.mxu0 0.0
    %1237 = vmatprep.subr.mxu0 0.0
    %1238 = vmatpush1.msra.mxu0 0.0
    %1239 = vmatprep.subr.mxu0 0.0
    %1240 = vmatpush1.msra.mxu0 0.0
    %1241 = vmatprep.subr.mxu0 0.0
    %1242 = vmatpush1.msra.mxu0 0.0
    %1243 = vmatprep.subr.mxu0 0.0
    %1244 = vmatpush1.msra.mxu0 0.0
    %1245 = vmatprep.subr.mxu0 0.0
    %1246 = vmatpush1.msra.mxu0 0.0
    %1247 = vmatprep.subr.mxu0 0.0
    %1248 = vmatpush1.msra.mxu0 0.0
    %1249 = vmatprep.subr.mxu0 0.0
    %1250 = vmatpush1.msra.mxu0 0.0
    %1251 = vmatprep.subr.mxu0 0.0
    %1252 = vmatpush1.msra.mxu0 0.0
    %1253 = vmatprep.subr.mxu0 0.0
    %1254 = vmatpush1.msra.mxu0 0.0
    %1255 = vmatprep.subr.mxu0 0.0
    %1256 = vmatpush1.msra.mxu0 0.0
    %1257 = vmatprep.subr.mxu0 0.0
    %1258 = vmatpush1.msra.mxu0 0.0
    %1259 = vmatprep.subr.mxu0 0.0
    %1260 = vmatpush1.msra.mxu0 0.0
    %1261 = vmatprep.subr.mxu0 0.0
    %1262 = vmatpush1.msra.mxu0 0.0
    %1263 = vmatprep.subr.mxu0 0.0
    %1264 = vmatpush1.msra.mxu0 0.0
    %1265 = vmatprep.subr.mxu0 0.0
    %1266 = vmatpush1.msra.mxu0 0.0
    %1267 = vmatprep.subr.mxu0 0.0
    %1268 = vmatpush1.msra.mxu0 0.0
    %1269 = vmatprep.subr.mxu0 0.0
    %1270 = vmatpush1.msra.mxu0 0.0
    %1271 = vmatprep.subr.mxu0 0.0
    %1272 = vmatpush1.msra.mxu0 0.0
    %1273 = vmatprep.subr.mxu0 0.0
    %1274 = vmatpush1.msra.mxu0 0.0
    %1275 = vmatprep.subr.mxu0 0.0
    %1276 = vmatpush1.msra.mxu0 0.0
    %1277 = vmatprep.subr.mxu0 0.0
    %1278 = vmatpush1.msra.mxu0 0.0
    %1279 = vmatprep.subr.mxu0 0.0
    %1280 = vmatpush1.msra.mxu0 0.0
    %1281 = vmatprep.subr.mxu0 0.0
    %1282 = vmatpush1.msra.mxu0 0.0
    %1283 = vmatprep.subr.mxu0 0.0
    %1284 = vmatpush1.msra.mxu0 0.0
    %1285 = vmatprep.subr.mxu0 0.0
    %1286 = vmatpush1.msra.mxu0 0.0
    %1287 = vmatprep.mubr.f32.mxu0 0.0
    %1288 = vmatmul.mubr.f32.gmra.mrb[0].mxu0 %v241
    %v1289 = vpop.f32.mrb[0].mxu0
    %v1290 = vadd.f32 0.0, %v1289
    %v1291 = vpop.f32.mrb[0].mxu0
    %1292 = vdwg.mxu0
    %1293 = vmatprep.subr.mxu0 0.0
    %1294 = vmatpush1.msra.mxu0 %v85
    %1295 = vmatprep.subr.mxu0 0.0
    %1296 = vmatpush1.msra.mxu0 %v86
    %1297 = vmatprep.subr.mxu0 0.0
    %1298 = vmatpush1.msra.mxu0 %v87
    %1299 = vmatprep.subr.mxu0 0.0
    %1300 = vmatpush1.msra.mxu0 %v88
    %1301 = vmatprep.subr.mxu0 0.0
    %1302 = vmatpush1.msra.mxu0 0.0
    %1303 = vmatprep.subr.mxu0 0.0
    %1304 = vmatpush1.msra.mxu0 0.0
    %1305 = vmatprep.subr.mxu0 0.0
    %1306 = vmatpush1.msra.mxu0 0.0
    %1307 = vmatprep.subr.mxu0 0.0
    %1308 = vmatpush1.msra.mxu0 0.0
    %1309 = vmatprep.subr.mxu0 0.0
    %1310 = vmatpush1.msra.mxu0 0.0
    %1311 = vmatprep.subr.mxu0 0.0
    %1312 = vmatpush1.msra.mxu0 0.0
    %1313 = vmatprep.subr.mxu0 0.0
    %1314 = vmatpush1.msra.mxu0 0.0
    %1315 = vmatprep.subr.mxu0 0.0
    %1316 = vmatpush1.msra.mxu0 0.0
    %1317 = vmatprep.subr.mxu0 0.0
    %1318 = vmatpush1.msra.mxu0 0.0
    %1319 = vmatprep.subr.mxu0 0.0
    %1320 = vmatpush1.msra.mxu0 0.0
    %1321 = vmatprep.subr.mxu0 0.0
    %1322 = vmatpush1.msra.mxu0 0.0
    %1323 = vmatprep.subr.mxu0 0.0
    %1324 = vmatpush1.msra.mxu0 0.0
    %1325 = vmatprep.subr.mxu0 0.0
    %1326 = vmatpush1.msra.mxu0 0.0
    %1327 = vmatprep.subr.mxu0 0.0
    %1328 = vmatpush1.msra.mxu0 0.0
    %1329 = vmatprep.subr.mxu0 0.0
    %1330 = vmatpush1.msra.mxu0 0.0
    %1331 = vmatprep.subr.mxu0 0.0
    %1332 = vmatpush1.msra.mxu0 0.0
    %1333 = vmatprep.subr.mxu0 0.0
    %1334 = vmatpush1.msra.mxu0 0.0
    %1335 = vmatprep.subr.mxu0 0.0
    %1336 = vmatpush1.msra.mxu0 0.0
    %1337 = vmatprep.subr.mxu0 0.0
    %1338 = vmatpush1.msra.mxu0 0.0
    %1339 = vmatprep.subr.mxu0 0.0
    %1340 = vmatpush1.msra.mxu0 0.0
    %1341 = vmatprep.subr.mxu0 0.0
    %1342 = vmatpush1.msra.mxu0 0.0
    %1343 = vmatprep.subr.mxu0 0.0
    %1344 = vmatpush1.msra.mxu0 0.0
    %1345 = vmatprep.subr.mxu0 0.0
    %1346 = vmatpush1.msra.mxu0 0.0
    %1347 = vmatprep.subr.mxu0 0.0
    %1348 = vmatpush1.msra.mxu0 0.0
    %1349 = vmatprep.subr.mxu0 0.0
    %1350 = vmatpush1.msra.mxu0 0.0
    %1351 = vmatprep.subr.mxu0 0.0
    %1352 = vmatpush1.msra.mxu0 0.0
    %1353 = vmatprep.subr.mxu0 0.0
    %1354 = vmatpush1.msra.mxu0 0.0
    %1355 = vmatprep.subr.mxu0 0.0
    %1356 = vmatpush1.msra.mxu0 0.0
    %1357 = vmatprep.mubr.f32.mxu0 0.0
    %1358 = vmatmul.mubr.f32.gmra.mrb[0].mxu0 %v241
    %v1359 = vpop.f32.mrb[0].mxu0
    %v1360 = vadd.f32 0.0, %v1359
    %v1361 = vpop.f32.mrb[0].mxu0
    %1362 = vdwg.mxu0
    %v1364 = vsel %vm239, %v236, 0
    %1366 = vmatprep.subr.mxu0 0.0
    %1367 = vmatpush1.msra.mxu0 %v90
    %1368 = vmatprep.subr.mxu0 0.0
    %1369 = vmatpush1.msra.mxu0 %v91
    %1370 = vmatprep.subr.mxu0 0.0
    %1371 = vmatpush1.msra.mxu0 %v92
    %1372 = vmatprep.subr.mxu0 0.0
    %1373 = vmatpush1.msra.mxu0 %v93
    %1374 = vmatprep.subr.mxu0 0.0
    %1375 = vmatpush1.msra.mxu0 0.0
    %1376 = vmatprep.subr.mxu0 0.0
    %1377 = vmatpush1.msra.mxu0 0.0
    %1378 = vmatprep.subr.mxu0 0.0
    %1379 = vmatpush1.msra.mxu0 0.0
    %1380 = vmatprep.subr.mxu0 0.0
    %1381 = vmatpush1.msra.mxu0 0.0
    %1382 = vmatprep.subr.mxu0 0.0
    %1383 = vmatpush1.msra.mxu0 0.0
    %1384 = vmatprep.subr.mxu0 0.0
    %1385 = vmatpush1.msra.mxu0 0.0
    %1386 = vmatprep.subr.mxu0 0.0
    %1387 = vmatpush1.msra.mxu0 0.0
    %1388 = vmatprep.subr.mxu0 0.0
    %1389 = vmatpush1.msra.mxu0 0.0
    %1390 = vmatprep.subr.mxu0 0.0
    %1391 = vmatpush1.msra.mxu0 0.0
    %1392 = vmatprep.subr.mxu0 0.0
    %1393 = vmatpush1.msra.mxu0 0.0
    %1394 = vmatprep.subr.mxu0 0.0
    %1395 = vmatpush1.msra.mxu0 0.0
    %1396 = vmatprep.subr.mxu0 0.0
    %1397 = vmatpush1.msra.mxu0 0.0
    %1398 = vmatprep.subr.mxu0 0.0
    %1399 = vmatpush1.msra.mxu0 0.0
    %1400 = vmatprep.subr.mxu0 0.0
    %1401 = vmatpush1.msra.mxu0 0.0
    %1402 = vmatprep.subr.mxu0 0.0
    %1403 = vmatpush1.msra.mxu0 0.0
    %1404 = vmatprep.subr.mxu0 0.0
    %1405 = vmatpush1.msra.mxu0 0.0
    %1406 = vmatprep.subr.mxu0 0.0
    %1407 = vmatpush1.msra.mxu0 0.0
    %1408 = vmatprep.subr.mxu0 0.0
    %1409 = vmatpush1.msra.mxu0 0.0
    %1410 = vmatprep.subr.mxu0 0.0
    %1411 = vmatpush1.msra.mxu0 0.0
    %1412 = vmatprep.subr.mxu0 0.0
    %1413 = vmatpush1.msra.mxu0 0.0
    %1414 = vmatprep.subr.mxu0 0.0
    %1415 = vmatpush1.msra.mxu0 0.0
    %1416 = vmatprep.subr.mxu0 0.0
    %1417 = vmatpush1.msra.mxu0 0.0
    %1418 = vmatprep.subr.mxu0 0.0
    %1419 = vmatpush1.msra.mxu0 0.0
    %1420 = vmatprep.subr.mxu0 0.0
    %1421 = vmatpush1.msra.mxu0 0.0
    %1422 = vmatprep.subr.mxu0 0.0
    %1423 = vmatpush1.msra.mxu0 0.0
    %1424 = vmatprep.subr.mxu0 0.0
    %1425 = vmatpush1.msra.mxu0 0.0
    %1426 = vmatprep.subr.mxu0 0.0
    %1427 = vmatpush1.msra.mxu0 0.0
    %1428 = vmatprep.subr.mxu0 0.0
    %1429 = vmatpush1.msra.mxu0 0.0
    %1430 = vmatprep.mubr.f32.mxu0 0.0
    %1431 = vmatmul.mubr.f32.gmra.mrb[0].mxu0 %v1364
    %v1432 = vpop.f32.mrb[0].mxu0
    %v1433 = vadd.f32 0.0, %v1432
    %v1434 = vpop.f32.mrb[0].mxu0
    %1435 = vdwg.mxu0
    %1436 = vmatprep.subr.mxu0 0.0
    %1437 = vmatpush1.msra.mxu0 %v94
    %1438 = vmatprep.subr.mxu0 0.0
    %1439 = vmatpush1.msra.mxu0 %v95
    %1440 = vmatprep.subr.mxu0 0.0
    %1441 = vmatpush1.msra.mxu0 %v96
    %1442 = vmatprep.subr.mxu0 0.0
    %1443 = vmatpush1.msra.mxu0 %v97
    %1444 = vmatprep.subr.mxu0 0.0
    %1445 = vmatpush1.msra.mxu0 0.0
    %1446 = vmatprep.subr.mxu0 0.0
    %1447 = vmatpush1.msra.mxu0 0.0
    %1448 = vmatprep.subr.mxu0 0.0
    %1449 = vmatpush1.msra.mxu0 0.0
    %1450 = vmatprep.subr.mxu0 0.0
    %1451 = vmatpush1.msra.mxu0 0.0
    %1452 = vmatprep.subr.mxu0 0.0
    %1453 = vmatpush1.msra.mxu0 0.0
    %1454 = vmatprep.subr.mxu0 0.0
    %1455 = vmatpush1.msra.mxu0 0.0
    %1456 = vmatprep.subr.mxu0 0.0
    %1457 = vmatpush1.msra.mxu0 0.0
    %1458 = vmatprep.subr.mxu0 0.0
    %1459 = vmatpush1.msra.mxu0 0.0
    %1460 = vmatprep.subr.mxu0 0.0
    %1461 = vmatpush1.msra.mxu0 0.0
    %1462 = vmatprep.subr.mxu0 0.0
    %1463 = vmatpush1.msra.mxu0 0.0
    %1464 = vmatprep.subr.mxu0 0.0
    %1465 = vmatpush1.msra.mxu0 0.0
    %1466 = vmatprep.subr.mxu0 0.0
    %1467 = vmatpush1.msra.mxu0 0.0
    %1468 = vmatprep.subr.mxu0 0.0
    %1469 = vmatpush1.msra.mxu0 0.0
    %1470 = vmatprep.subr.mxu0 0.0
    %1471 = vmatpush1.msra.mxu0 0.0
    %1472 = vmatprep.subr.mxu0 0.0
    %1473 = vmatpush1.msra.mxu0 0.0
    %1474 = vmatprep.subr.mxu0 0.0
    %1475 = vmatpush1.msra.mxu0 0.0
    %1476 = vmatprep.subr.mxu0 0.0
    %1477 = vmatpush1.msra.mxu0 0.0
    %1478 = vmatprep.subr.mxu0 0.0
    %1479 = vmatpush1.msra.mxu0 0.0
    %1480 = vmatprep.subr.mxu0 0.0
    %1481 = vmatpush1.msra.mxu0 0.0
    %1482 = vmatprep.subr.mxu0 0.0
    %1483 = vmatpush1.msra.mxu0 0.0
    %1484 = vmatprep.subr.mxu0 0.0
    %1485 = vmatpush1.msra.mxu0 0.0
    %1486 = vmatprep.subr.mxu0 0.0
    %1487 = vmatpush1.msra.mxu0 0.0
    %1488 = vmatprep.subr.mxu0 0.0
    %1489 = vmatpush1.msra.mxu0 0.0
    %1490 = vmatprep.subr.mxu0 0.0
    %1491 = vmatpush1.msra.mxu0 0.0
    %1492 = vmatprep.subr.mxu0 0.0
    %1493 = vmatpush1.msra.mxu0 0.0
    %1494 = vmatprep.subr.mxu0 0.0
    %1495 = vmatpush1.msra.mxu0 0.0
    %1496 = vmatprep.subr.mxu0 0.0
    %1497 = vmatpush1.msra.mxu0 0.0
    %1498 = vmatprep.subr.mxu0 0.0
    %1499 = vmatpush1.msra.mxu0 0.0
    %1500 = vmatprep.mubr.f32.mxu0 0.0
    %1501 = vmatmul.mubr.f32.gmra.mrb[0].mxu0 %v1364
    %v1502 = vpop.f32.mrb[0].mxu0
    %v1503 = vadd.f32 0.0, %v1502
    %v1504 = vpop.f32.mrb[0].mxu0
    %1505 = vdwg.mxu0
    %1506 = vmatprep.subr.mxu0 0.0
    %1507 = vmatpush1.msra.mxu0 %v98
    %1508 = vmatprep.subr.mxu0 0.0
    %1509 = vmatpush1.msra.mxu0 %v99
    %1510 = vmatprep.subr.mxu0 0.0
    %1511 = vmatpush1.msra.mxu0 %v100
    %1512 = vmatprep.subr.mxu0 0.0
    %1513 = vmatpush1.msra.mxu0 %v101
    %1514 = vmatprep.subr.mxu0 0.0
    %1515 = vmatpush1.msra.mxu0 0.0
    %1516 = vmatprep.subr.mxu0 0.0
    %1517 = vmatpush1.msra.mxu0 0.0
    %1518 = vmatprep.subr.mxu0 0.0
    %1519 = vmatpush1.msra.mxu0 0.0
    %1520 = vmatprep.subr.mxu0 0.0
    %1521 = vmatpush1.msra.mxu0 0.0
    %1522 = vmatprep.subr.mxu0 0.0
    %1523 = vmatpush1.msra.mxu0 0.0
    %1524 = vmatprep.subr.mxu0 0.0
    %1525 = vmatpush1.msra.mxu0 0.0
    %1526 = vmatprep.subr.mxu0 0.0
    %1527 = vmatpush1.msra.mxu0 0.0
    %1528 = vmatprep.subr.mxu0 0.0
    %1529 = vmatpush1.msra.mxu0 0.0
    %1530 = vmatprep.subr.mxu0 0.0
    %1531 = vmatpush1.msra.mxu0 0.0
    %1532 = vmatprep.subr.mxu0 0.0
    %1533 = vmatpush1.msra.mxu0 0.0
    %1534 = vmatprep.subr.mxu0 0.0
    %1535 = vmatpush1.msra.mxu0 0.0
    %1536 = vmatprep.subr.mxu0 0.0
    %1537 = vmatpush1.msra.mxu0 0.0
    %1538 = vmatprep.subr.mxu0 0.0
    %1539 = vmatpush1.msra.mxu0 0.0
    %1540 = vmatprep.subr.mxu0 0.0
    %1541 = vmatpush1.msra.mxu0 0.0
    %1542 = vmatprep.subr.mxu0 0.0
    %1543 = vmatpush1.msra.mxu0 0.0
    %1544 = vmatprep.subr.mxu0 0.0
    %1545 = vmatpush1.msra.mxu0 0.0
    %1546 = vmatprep.subr.mxu0 0.0
    %1547 = vmatpush1.msra.mxu0 0.0
    %1548 = vmatprep.subr.mxu0 0.0
    %1549 = vmatpush1.msra.mxu0 0.0
    %1550 = vmatprep.subr.mxu0 0.0
    %1551 = vmatpush1.msra.mxu0 0.0
    %1552 = vmatprep.subr.mxu0 0.0
    %1553 = vmatpush1.msra.mxu0 0.0
    %1554 = vmatprep.subr.mxu0 0.0
    %1555 = vmatpush1.msra.mxu0 0.0
    %1556 = vmatprep.subr.mxu0 0.0
    %1557 = vmatpush1.msra.mxu0 0.0
    %1558 = vmatprep.subr.mxu0 0.0
    %1559 = vmatpush1.msra.mxu0 0.0
    %1560 = vmatprep.subr.mxu0 0.0
    %1561 = vmatpush1.msra.mxu0 0.0
    %1562 = vmatprep.subr.mxu0 0.0
    %1563 = vmatpush1.msra.mxu0 0.0
    %1564 = vmatprep.subr.mxu0 0.0
    %1565 = vmatpush1.msra.mxu0 0.0
    %1566 = vmatprep.subr.mxu0 0.0
    %1567 = vmatpush1.msra.mxu0 0.0
    %1568 = vmatprep.subr.mxu0 0.0
    %1569 = vmatpush1.msra.mxu0 0.0
    %1570 = vmatprep.mubr.f32.mxu0 0.0
    %1571 = vmatmul.mubr.f32.gmra.mrb[0].mxu0 %v1364
    %v1572 = vpop.f32.mrb[0].mxu0
    %v1573 = vadd.f32 0.0, %v1572
    %v1574 = vpop.f32.mrb[0].mxu0
    %1575 = vdwg.mxu0
    %1576 = vmatprep.subr.mxu0 0.0
    %1577 = vmatpush1.msra.mxu0 %v102
    %1578 = vmatprep.subr.mxu0 0.0
    %1579 = vmatpush1.msra.mxu0 %v103
    %1580 = vmatprep.subr.mxu0 0.0
    %1581 = vmatpush1.msra.mxu0 %v104
    %1582 = vmatprep.subr.mxu0 0.0
    %1583 = vmatpush1.msra.mxu0 %v105
    %1584 = vmatprep.subr.mxu0 0.0
    %1585 = vmatpush1.msra.mxu0 0.0
    %1586 = vmatprep.subr.mxu0 0.0
    %1587 = vmatpush1.msra.mxu0 0.0
    %1588 = vmatprep.subr.mxu0 0.0
    %1589 = vmatpush1.msra.mxu0 0.0
    %1590 = vmatprep.subr.mxu0 0.0
    %1591 = vmatpush1.msra.mxu0 0.0
    %1592 = vmatprep.subr.mxu0 0.0
    %1593 = vmatpush1.msra.mxu0 0.0
    %1594 = vmatprep.subr.mxu0 0.0
    %1595 = vmatpush1.msra.mxu0 0.0
    %1596 = vmatprep.subr.mxu0 0.0
    %1597 = vmatpush1.msra.mxu0 0.0
    %1598 = vmatprep.subr.mxu0 0.0
    %1599 = vmatpush1.msra.mxu0 0.0
    %1600 = vmatprep.subr.mxu0 0.0
    %1601 = vmatpush1.msra.mxu0 0.0
    %1602 = vmatprep.subr.mxu0 0.0
    %1603 = vmatpush1.msra.mxu0 0.0
    %1604 = vmatprep.subr.mxu0 0.0
    %1605 = vmatpush1.msra.mxu0 0.0
    %1606 = vmatprep.subr.mxu0 0.0
    %1607 = vmatpush1.msra.mxu0 0.0
    %1608 = vmatprep.subr.mxu0 0.0
    %1609 = vmatpush1.msra.mxu0 0.0
    %1610 = vmatprep.subr.mxu0 0.0
    %1611 = vmatpush1.msra.mxu0 0.0
    %1612 = vmatprep.subr.mxu0 0.0
    %1613 = vmatpush1.msra.mxu0 0.0
    %1614 = vmatprep.subr.mxu0 0.0
    %1615 = vmatpush1.msra.mxu0 0.0
    %1616 = vmatprep.subr.mxu0 0.0
    %1617 = vmatpush1.msra.mxu0 0.0
    %1618 = vmatprep.subr.mxu0 0.0
    %1619 = vmatpush1.msra.mxu0 0.0
    %1620 = vmatprep.subr.mxu0 0.0
    %1621 = vmatpush1.msra.mxu0 0.0
    %1622 = vmatprep.subr.mxu0 0.0
    %1623 = vmatpush1.msra.mxu0 0.0
    %1624 = vmatprep.subr.mxu0 0.0
    %1625 = vmatpush1.msra.mxu0 0.0
    %1626 = vmatprep.subr.mxu0 0.0
    %1627 = vmatpush1.msra.mxu0 0.0
    %1628 = vmatprep.subr.mxu0 0.0
    %1629 = vmatpush1.msra.mxu0 0.0
    %1630 = vmatprep.subr.mxu0 0.0
    %1631 = vmatpush1.msra.mxu0 0.0
    %1632 = vmatprep.subr.mxu0 0.0
    %1633 = vmatpush1.msra.mxu0 0.0
    %1634 = vmatprep.subr.mxu0 0.0
    %1635 = vmatpush1.msra.mxu0 0.0
    %1636 = vmatprep.subr.mxu0 0.0
    %1637 = vmatpush1.msra.mxu0 0.0
    %1638 = vmatprep.subr.mxu0 0.0
    %1639 = vmatpush1.msra.mxu0 0.0
    %1640 = vmatprep.mubr.f32.mxu0 0.0
    %1641 = vmatmul.mubr.f32.gmra.mrb[0].mxu0 %v1364
    %v1642 = vpop.f32.mrb[0].mxu0
    %v1643 = vadd.f32 0.0, %v1642
    %v1644 = vpop.f32.mrb[0].mxu0
    %1645 = vdwg.mxu0
    %1646 = vmatprep.subr.mxu0 0.0
    %1647 = vmatpush1.msra.mxu0 %v106
    %1648 = vmatprep.subr.mxu0 0.0
    %1649 = vmatpush1.msra.mxu0 %v107
    %1650 = vmatprep.subr.mxu0 0.0
    %1651 = vmatpush1.msra.mxu0 %v108
    %1652 = vmatprep.subr.mxu0 0.0
    %1653 = vmatpush1.msra.mxu0 %v109
    %1654 = vmatprep.subr.mxu0 0.0
    %1655 = vmatpush1.msra.mxu0 0.0
    %1656 = vmatprep.subr.mxu0 0.0
    %1657 = vmatpush1.msra.mxu0 0.0
    %1658 = vmatprep.subr.mxu0 0.0
    %1659 = vmatpush1.msra.mxu0 0.0
    %1660 = vmatprep.subr.mxu0 0.0
    %1661 = vmatpush1.msra.mxu0 0.0
    %1662 = vmatprep.subr.mxu0 0.0
    %1663 = vmatpush1.msra.mxu0 0.0
    %1664 = vmatprep.subr.mxu0 0.0
    %1665 = vmatpush1.msra.mxu0 0.0
    %1666 = vmatprep.subr.mxu0 0.0
    %1667 = vmatpush1.msra.mxu0 0.0
    %1668 = vmatprep.subr.mxu0 0.0
    %1669 = vmatpush1.msra.mxu0 0.0
    %1670 = vmatprep.subr.mxu0 0.0
    %1671 = vmatpush1.msra.mxu0 0.0
    %1672 = vmatprep.subr.mxu0 0.0
    %1673 = vmatpush1.msra.mxu0 0.0
    %1674 = vmatprep.subr.mxu0 0.0
    %1675 = vmatpush1.msra.mxu0 0.0
    %1676 = vmatprep.subr.mxu0 0.0
    %1677 = vmatpush1.msra.mxu0 0.0
    %1678 = vmatprep.subr.mxu0 0.0
    %1679 = vmatpush1.msra.mxu0 0.0
    %1680 = vmatprep.subr.mxu0 0.0
    %1681 = vmatpush1.msra.mxu0 0.0
    %1682 = vmatprep.subr.mxu0 0.0
    %1683 = vmatpush1.msra.mxu0 0.0
    %1684 = vmatprep.subr.mxu0 0.0
    %1685 = vmatpush1.msra.mxu0 0.0
    %1686 = vmatprep.subr.mxu0 0.0
    %1687 = vmatpush1.msra.mxu0 0.0
    %1688 = vmatprep.subr.mxu0 0.0
    %1689 = vmatpush1.msra.mxu0 0.0
    %1690 = vmatprep.subr.mxu0 0.0
    %1691 = vmatpush1.msra.mxu0 0.0
    %1692 = vmatprep.subr.mxu0 0.0
    %1693 = vmatpush1.msra.mxu0 0.0
    %1694 = vmatprep.subr.mxu0 0.0
    %1695 = vmatpush1.msra.mxu0 0.0
    %1696 = vmatprep.subr.mxu0 0.0
    %1697 = vmatpush1.msra.mxu0 0.0
    %1698 = vmatprep.subr.mxu0 0.0
    %1699 = vmatpush1.msra.mxu0 0.0
    %1700 = vmatprep.subr.mxu0 0.0
    %1701 = vmatpush1.msra.mxu0 0.0
    %1702 = vmatprep.subr.mxu0 0.0
    %1703 = vmatpush1.msra.mxu0 0.0
    %1704 = vmatprep.subr.mxu0 0.0
    %1705 = vmatpush1.msra.mxu0 0.0
    %1706 = vmatprep.subr.mxu0 0.0
    %1707 = vmatpush1.msra.mxu0 0.0
    %1708 = vmatprep.subr.mxu0 0.0
    %1709 = vmatpush1.msra.mxu0 0.0
    %1710 = vmatprep.mubr.f32.mxu0 0.0
    %1711 = vmatmul.mubr.f32.gmra.mrb[0].mxu0 %v1364
    %v1712 = vpop.f32.mrb[0].mxu0
    %v1713 = vadd.f32 0.0, %v1712
    %v1714 = vpop.f32.mrb[0].mxu0
    %1715 = vdwg.mxu0
    %1716 = vmatprep.subr.mxu0 0.0
    %1717 = vmatpush1.msra.mxu0 %v110
    %1718 = vmatprep.subr.mxu0 0.0
    %1719 = vmatpush1.msra.mxu0 %v111
    %1720 = vmatprep.subr.mxu0 0.0
    %1721 = vmatpush1.msra.mxu0 %v112
    %1722 = vmatprep.subr.mxu0 0.0
    %1723 = vmatpush1.msra.mxu0 %v113
    %1724 = vmatprep.subr.mxu0 0.0
    %1725 = vmatpush1.msra.mxu0 0.0
    %1726 = vmatprep.subr.mxu0 0.0
    %1727 = vmatpush1.msra.mxu0 0.0
    %1728 = vmatprep.subr.mxu0 0.0
    %1729 = vmatpush1.msra.mxu0 0.0
    %1730 = vmatprep.subr.mxu0 0.0
    %1731 = vmatpush1.msra.mxu0 0.0
    %1732 = vmatprep.subr.mxu0 0.0
    %1733 = vmatpush1.msra.mxu0 0.0
    %1734 = vmatprep.subr.mxu0 0.0
    %1735 = vmatpush1.msra.mxu0 0.0
    %1736 = vmatprep.subr.mxu0 0.0
    %1737 = vmatpush1.msra.mxu0 0.0
    %1738 = vmatprep.subr.mxu0 0.0
    %1739 = vmatpush1.msra.mxu0 0.0
    %1740 = vmatprep.subr.mxu0 0.0
    %1741 = vmatpush1.msra.mxu0 0.0
    %1742 = vmatprep.subr.mxu0 0.0
    %1743 = vmatpush1.msra.mxu0 0.0
    %1744 = vmatprep.subr.mxu0 0.0
    %1745 = vmatpush1.msra.mxu0 0.0
    %1746 = vmatprep.subr.mxu0 0.0
    %1747 = vmatpush1.msra.mxu0 0.0
    %1748 = vmatprep.subr.mxu0 0.0
    %1749 = vmatpush1.msra.mxu0 0.0
    %1750 = vmatprep.subr.mxu0 0.0
    %1751 = vmatpush1.msra.mxu0 0.0
    %1752 = vmatprep.subr.mxu0 0.0
    %1753 = vmatpush1.msra.mxu0 0.0
    %1754 = vmatprep.subr.mxu0 0.0
    %1755 = vmatpush1.msra.mxu0 0.0
    %1756 = vmatprep.subr.mxu0 0.0
    %1757 = vmatpush1.msra.mxu0 0.0
    %1758 = vmatprep.subr.mxu0 0.0
    %1759 = vmatpush1.msra.mxu0 0.0
    %1760 = vmatprep.subr.mxu0 0.0
    %1761 = vmatpush1.msra.mxu0 0.0
    %1762 = vmatprep.subr.mxu0 0.0
    %1763 = vmatpush1.msra.mxu0 0.0
    %1764 = vmatprep.subr.mxu0 0.0
    %1765 = vmatpush1.msra.mxu0 0.0
    %1766 = vmatprep.subr.mxu0 0.0
    %1767 = vmatpush1.msra.mxu0 0.0
    %1768 = vmatprep.subr.mxu0 0.0
    %1769 = vmatpush1.msra.mxu0 0.0
    %1770 = vmatprep.subr.mxu0 0.0
    %1771 = vmatpush1.msra.mxu0 0.0
    %1772 = vmatprep.subr.mxu0 0.0
    %1773 = vmatpush1.msra.mxu0 0.0
    %1774 = vmatprep.subr.mxu0 0.0
    %1775 = vmatpush1.msra.mxu0 0.0
    %1776 = vmatprep.subr.mxu0 0.0
    %1777 = vmatpush1.msra.mxu0 0.0
    %1778 = vmatprep.subr.mxu0 0.0
    %1779 = vmatpush1.msra.mxu0 0.0
    %1780 = vmatprep.mubr.f32.mxu0 0.0
    %1781 = vmatmul.mubr.f32.gmra.mrb[0].mxu0 %v1364
    %v1782 = vpop.f32.mrb[0].mxu0
    %v1783 = vadd.f32 0.0, %v1782
    %v1784 = vpop.f32.mrb[0].mxu0
    %1785 = vdwg.mxu0
    %1786 = vmatprep.subr.mxu0 0.0
    %1787 = vmatpush1.msra.mxu0 %v114
    %1788 = vmatprep.subr.mxu0 0.0
    %1789 = vmatpush1.msra.mxu0 %v115
    %1790 = vmatprep.subr.mxu0 0.0
    %1791 = vmatpush1.msra.mxu0 %v116
    %1792 = vmatprep.subr.mxu0 0.0
    %1793 = vmatpush1.msra.mxu0 %v117
    %1794 = vmatprep.subr.mxu0 0.0
    %1795 = vmatpush1.msra.mxu0 0.0
    %1796 = vmatprep.subr.mxu0 0.0
    %1797 = vmatpush1.msra.mxu0 0.0
    %1798 = vmatprep.subr.mxu0 0.0
    %1799 = vmatpush1.msra.mxu0 0.0
    %1800 = vmatprep.subr.mxu0 0.0
    %1801 = vmatpush1.msra.mxu0 0.0
    %1802 = vmatprep.subr.mxu0 0.0
    %1803 = vmatpush1.msra.mxu0 0.0
    %1804 = vmatprep.subr.mxu0 0.0
    %1805 = vmatpush1.msra.mxu0 0.0
    %1806 = vmatprep.subr.mxu0 0.0
    %1807 = vmatpush1.msra.mxu0 0.0
    %1808 = vmatprep.subr.mxu0 0.0
    %1809 = vmatpush1.msra.mxu0 0.0
    %1810 = vmatprep.subr.mxu0 0.0
    %1811 = vmatpush1.msra.mxu0 0.0
    %1812 = vmatprep.subr.mxu0 0.0
    %1813 = vmatpush1.msra.mxu0 0.0
    %1814 = vmatprep.subr.mxu0 0.0
    %1815 = vmatpush1.msra.mxu0 0.0
    %1816 = vmatprep.subr.mxu0 0.0
    %1817 = vmatpush1.msra.mxu0 0.0
    %1818 = vmatprep.subr.mxu0 0.0
    %1819 = vmatpush1.msra.mxu0 0.0
    %1820 = vmatprep.subr.mxu0 0.0
    %1821 = vmatpush1.msra.mxu0 0.0
    %1822 = vmatprep.subr.mxu0 0.0
    %1823 = vmatpush1.msra.mxu0 0.0
    %1824 = vmatprep.subr.mxu0 0.0
    %1825 = vmatpush1.msra.mxu0 0.0
    %1826 = vmatprep.subr.mxu0 0.0
    %1827 = vmatpush1.msra.mxu0 0.0
    %1828 = vmatprep.subr.mxu0 0.0
    %1829 = vmatpush1.msra.mxu0 0.0
    %1830 = vmatprep.subr.mxu0 0.0
    %1831 = vmatpush1.msra.mxu0 0.0
    %1832 = vmatprep.subr.mxu0 0.0
    %1833 = vmatpush1.msra.mxu0 0.0
    %1834 = vmatprep.subr.mxu0 0.0
    %1835 = vmatpush1.msra.mxu0 0.0
    %1836 = vmatprep.subr.mxu0 0.0
    %1837 = vmatpush1.msra.mxu0 0.0
    %1838 = vmatprep.subr.mxu0 0.0
    %1839 = vmatpush1.msra.mxu0 0.0
    %1840 = vmatprep.subr.mxu0 0.0
    %1841 = vmatpush1.msra.mxu0 0.0
    %1842 = vmatprep.subr.mxu0 0.0
    %1843 = vmatpush1.msra.mxu0 0.0
    %1844 = vmatprep.subr.mxu0 0.0
    %1845 = vmatpush1.msra.mxu0 0.0
    %1846 = vmatprep.subr.mxu0 0.0
    %1847 = vmatpush1.msra.mxu0 0.0
    %1848 = vmatprep.subr.mxu0 0.0
    %1849 = vmatpush1.msra.mxu0 0.0
    %1850 = vmatprep.mubr.f32.mxu0 0.0
    %1851 = vmatmul.mubr.f32.gmra.mrb[0].mxu0 %v1364
    %v1852 = vpop.f32.mrb[0].mxu0
    %v1853 = vadd.f32 0.0, %v1852
    %v1854 = vpop.f32.mrb[0].mxu0
    %1855 = vdwg.mxu0
    %1856 = vmatprep.subr.mxu0 0.0
    %1857 = vmatpush1.msra.mxu0 %v118
    %1858 = vmatprep.subr.mxu0 0.0
    %1859 = vmatpush1.msra.mxu0 %v119
    %1860 = vmatprep.subr.mxu0 0.0
    %1861 = vmatpush1.msra.mxu0 %v120
    %1862 = vmatprep.subr.mxu0 0.0
    %1863 = vmatpush1.msra.mxu0 %v121
    %1864 = vmatprep.subr.mxu0 0.0
    %1865 = vmatpush1.msra.mxu0 0.0
    %1866 = vmatprep.subr.mxu0 0.0
    %1867 = vmatpush1.msra.mxu0 0.0
    %1868 = vmatprep.subr.mxu0 0.0
    %1869 = vmatpush1.msra.mxu0 0.0
    %1870 = vmatprep.subr.mxu0 0.0
    %1871 = vmatpush1.msra.mxu0 0.0
    %1872 = vmatprep.subr.mxu0 0.0
    %1873 = vmatpush1.msra.mxu0 0.0
    %1874 = vmatprep.subr.mxu0 0.0
    %1875 = vmatpush1.msra.mxu0 0.0
    %1876 = vmatprep.subr.mxu0 0.0
    %1877 = vmatpush1.msra.mxu0 0.0
    %1878 = vmatprep.subr.mxu0 0.0
    %1879 = vmatpush1.msra.mxu0 0.0
    %1880 = vmatprep.subr.mxu0 0.0
    %1881 = vmatpush1.msra.mxu0 0.0
    %1882 = vmatprep.subr.mxu0 0.0
    %1883 = vmatpush1.msra.mxu0 0.0
    %1884 = vmatprep.subr.mxu0 0.0
    %1885 = vmatpush1.msra.mxu0 0.0
    %1886 = vmatprep.subr.mxu0 0.0
    %1887 = vmatpush1.msra.mxu0 0.0
    %1888 = vmatprep.subr.mxu0 0.0
    %1889 = vmatpush1.msra.mxu0 0.0
    %1890 = vmatprep.subr.mxu0 0.0
    %1891 = vmatpush1.msra.mxu0 0.0
    %1892 = vmatprep.subr.mxu0 0.0
    %1893 = vmatpush1.msra.mxu0 0.0
    %1894 = vmatprep.subr.mxu0 0.0
    %1895 = vmatpush1.msra.mxu0 0.0
    %1896 = vmatprep.subr.mxu0 0.0
    %1897 = vmatpush1.msra.mxu0 0.0
    %1898 = vmatprep.subr.mxu0 0.0
    %1899 = vmatpush1.msra.mxu0 0.0
    %1900 = vmatprep.subr.mxu0 0.0
    %1901 = vmatpush1.msra.mxu0 0.0
    %1902 = vmatprep.subr.mxu0 0.0
    %1903 = vmatpush1.msra.mxu0 0.0
    %1904 = vmatprep.subr.mxu0 0.0
    %1905 = vmatpush1.msra.mxu0 0.0
    %1906 = vmatprep.subr.mxu0 0.0
    %1907 = vmatpush1.msra.mxu0 0.0
    %1908 = vmatprep.subr.mxu0 0.0
    %1909 = vmatpush1.msra.mxu0 0.0
    %1910 = vmatprep.subr.mxu0 0.0
    %1911 = vmatpush1.msra.mxu0 0.0
    %1912 = vmatprep.subr.mxu0 0.0
    %1913 = vmatpush1.msra.mxu0 0.0
    %1914 = vmatprep.subr.mxu0 0.0
    %1915 = vmatpush1.msra.mxu0 0.0
    %1916 = vmatprep.subr.mxu0 0.0
    %1917 = vmatpush1.msra.mxu0 0.0
    %1918 = vmatprep.subr.mxu0 0.0
    %1919 = vmatpush1.msra.mxu0 0.0
    %1920 = vmatprep.mubr.f32.mxu0 0.0
    %1921 = vmatmul.mubr.f32.gmra.mrb[0].mxu0 %v1364
    %v1922 = vpop.f32.mrb[0].mxu0
    %v1923 = vadd.f32 0.0, %v1922
    %v1924 = vpop.f32.mrb[0].mxu0
    %1925 = vdwg.mxu0
    %v1927 = vsel %vm239, %v238, 0
    %1929 = vmatprep.subr.mxu0 0.0
    %1930 = vmatpush1.msra.mxu0 %v122
    %1931 = vmatprep.subr.mxu0 0.0
    %1932 = vmatpush1.msra.mxu0 %v123
    %1933 = vmatprep.subr.mxu0 0.0
    %1934 = vmatpush1.msra.mxu0 %v124
    %1935 = vmatprep.subr.mxu0 0.0
    %1936 = vmatpush1.msra.mxu0 %v125
    %1937 = vmatprep.subr.mxu0 0.0
    %1938 = vmatpush1.msra.mxu0 0.0
    %1939 = vmatprep.subr.mxu0 0.0
    %1940 = vmatpush1.msra.mxu0 0.0
    %1941 = vmatprep.subr.mxu0 0.0
    %1942 = vmatpush1.msra.mxu0 0.0
    %1943 = vmatprep.subr.mxu0 0.0
    %1944 = vmatpush1.msra.mxu0 0.0
    %1945 = vmatprep.subr.mxu0 0.0
    %1946 = vmatpush1.msra.mxu0 0.0
    %1947 = vmatprep.subr.mxu0 0.0
    %1948 = vmatpush1.msra.mxu0 0.0
    %1949 = vmatprep.subr.mxu0 0.0
    %1950 = vmatpush1.msra.mxu0 0.0
    %1951 = vmatprep.subr.mxu0 0.0
    %1952 = vmatpush1.msra.mxu0 0.0
    %1953 = vmatprep.subr.mxu0 0.0
    %1954 = vmatpush1.msra.mxu0 0.0
    %1955 = vmatprep.subr.mxu0 0.0
    %1956 = vmatpush1.msra.mxu0 0.0
    %1957 = vmatprep.subr.mxu0 0.0
    %1958 = vmatpush1.msra.mxu0 0.0
    %1959 = vmatprep.subr.mxu0 0.0
    %1960 = vmatpush1.msra.mxu0 0.0
    %1961 = vmatprep.subr.mxu0 0.0
    %1962 = vmatpush1.msra.mxu0 0.0
    %1963 = vmatprep.subr.mxu0 0.0
    %1964 = vmatpush1.msra.mxu0 0.0
    %1965 = vmatprep.subr.mxu0 0.0
    %1966 = vmatpush1.msra.mxu0 0.0
    %1967 = vmatprep.subr.mxu0 0.0
    %1968 = vmatpush1.msra.mxu0 0.0
    %1969 = vmatprep.subr.mxu0 0.0
    %1970 = vmatpush1.msra.mxu0 0.0
    %1971 = vmatprep.subr.mxu0 0.0
    %1972 = vmatpush1.msra.mxu0 0.0
    %1973 = vmatprep.subr.mxu0 0.0
    %1974 = vmatpush1.msra.mxu0 0.0
    %1975 = vmatprep.subr.mxu0 0.0
    %1976 = vmatpush1.msra.mxu0 0.0
    %1977 = vmatprep.subr.mxu0 0.0
    %1978 = vmatpush1.msra.mxu0 0.0
    %1979 = vmatprep.subr.mxu0 0.0
    %1980 = vmatpush1.msra.mxu0 0.0
    %1981 = vmatprep.subr.mxu0 0.0
    %1982 = vmatpush1.msra.mxu0 0.0
    %1983 = vmatprep.subr.mxu0 0.0
    %1984 = vmatpush1.msra.mxu0 0.0
    %1985 = vmatprep.subr.mxu0 0.0
    %1986 = vmatpush1.msra.mxu0 0.0
    %1987 = vmatprep.subr.mxu0 0.0
    %1988 = vmatpush1.msra.mxu0 0.0
    %1989 = vmatprep.subr.mxu0 0.0
    %1990 = vmatpush1.msra.mxu0 0.0
    %1991 = vmatprep.subr.mxu0 0.0
    %1992 = vmatpush1.msra.mxu0 0.0
    %1993 = vmatprep.mubr.f32.mxu0 0.0
    %1994 = vmatmul.mubr.f32.gmra.mrb[0].mxu0 %v1927
    %v1995 = vpop.f32.mrb[0].mxu0
    %v1996 = vadd.f32 0.0, %v1995
    %v1997 = vpop.f32.mrb[0].mxu0
    %1998 = vdwg.mxu0
    %1999 = vmatprep.subr.mxu0 0.0
    %2000 = vmatpush1.msra.mxu0 %v126
    %2001 = vmatprep.subr.mxu0 0.0
    %2002 = vmatpush1.msra.mxu0 %v127
    %2003 = vmatprep.subr.mxu0 0.0
    %2004 = vmatpush1.msra.mxu0 %v128
    %2005 = vmatprep.subr.mxu0 0.0
    %2006 = vmatpush1.msra.mxu0 %v129
    %2007 = vmatprep.subr.mxu0 0.0
    %2008 = vmatpush1.msra.mxu0 0.0
    %2009 = vmatprep.subr.mxu0 0.0
    %2010 = vmatpush1.msra.mxu0 0.0
    %2011 = vmatprep.subr.mxu0 0.0
    %2012 = vmatpush1.msra.mxu0 0.0
    %2013 = vmatprep.subr.mxu0 0.0
    %2014 = vmatpush1.msra.mxu0 0.0
    %2015 = vmatprep.subr.mxu0 0.0
    %2016 = vmatpush1.msra.mxu0 0.0
    %2017 = vmatprep.subr.mxu0 0.0
    %2018 = vmatpush1.msra.mxu0 0.0
    %2019 = vmatprep.subr.mxu0 0.0
    %2020 = vmatpush1.msra.mxu0 0.0
    %2021 = vmatprep.subr.mxu0 0.0
    %2022 = vmatpush1.msra.mxu0 0.0
    %2023 = vmatprep.subr.mxu0 0.0
    %2024 = vmatpush1.msra.mxu0 0.0
    %2025 = vmatprep.subr.mxu0 0.0
    %2026 = vmatpush1.msra.mxu0 0.0
    %2027 = vmatprep.subr.mxu0 0.0
    %2028 = vmatpush1.msra.mxu0 0.0
    %2029 = vmatprep.subr.mxu0 0.0
    %2030 = vmatpush1.msra.mxu0 0.0
    %2031 = vmatprep.subr.mxu0 0.0
    %2032 = vmatpush1.msra.mxu0 0.0
    %2033 = vmatprep.subr.mxu0 0.0
    %2034 = vmatpush1.msra.mxu0 0.0
    %2035 = vmatprep.subr.mxu0 0.0
    %2036 = vmatpush1.msra.mxu0 0.0
    %2037 = vmatprep.subr.mxu0 0.0
    %2038 = vmatpush1.msra.mxu0 0.0
    %2039 = vmatprep.subr.mxu0 0.0
    %2040 = vmatpush1.msra.mxu0 0.0
    %2041 = vmatprep.subr.mxu0 0.0
    %2042 = vmatpush1.msra.mxu0 0.0
    %2043 = vmatprep.subr.mxu0 0.0
    %2044 = vmatpush1.msra.mxu0 0.0
    %2045 = vmatprep.subr.mxu0 0.0
    %2046 = vmatpush1.msra.mxu0 0.0
    %2047 = vmatprep.subr.mxu0 0.0
    %2048 = vmatpush1.msra.mxu0 0.0
    %2049 = vmatprep.subr.mxu0 0.0
    %2050 = vmatpush1.msra.mxu0 0.0
    %2051 = vmatprep.subr.mxu0 0.0
    %2052 = vmatpush1.msra.mxu0 0.0
    %2053 = vmatprep.subr.mxu0 0.0
    %2054 = vmatpush1.msra.mxu0 0.0
    %2055 = vmatprep.subr.mxu0 0.0
    %2056 = vmatpush1.msra.mxu0 0.0
    %2057 = vmatprep.subr.mxu0 0.0
    %2058 = vmatpush1.msra.mxu0 0.0
    %2059 = vmatprep.subr.mxu0 0.0
    %2060 = vmatpush1.msra.mxu0 0.0
    %2061 = vmatprep.subr.mxu0 0.0
    %2062 = vmatpush1.msra.mxu0 0.0
    %2063 = vmatprep.mubr.f32.mxu0 0.0
    %2064 = vmatmul.mubr.f32.gmra.mrb[0].mxu0 %v1927
    %v2065 = vpop.f32.mrb[0].mxu0
    %v2066 = vadd.f32 0.0, %v2065
    %v2067 = vpop.f32.mrb[0].mxu0
    %2068 = vdwg.mxu0
    %2069 = vmatprep.subr.mxu0 0.0
    %2070 = vmatpush1.msra.mxu0 %v130
    %2071 = vmatprep.subr.mxu0 0.0
    %2072 = vmatpush1.msra.mxu0 %v131
    %2073 = vmatprep.subr.mxu0 0.0
    %2074 = vmatpush1.msra.mxu0 %v132
    %2075 = vmatprep.subr.mxu0 0.0
    %2076 = vmatpush1.msra.mxu0 %v133
    %2077 = vmatprep.subr.mxu0 0.0
    %2078 = vmatpush1.msra.mxu0 0.0
    %2079 = vmatprep.subr.mxu0 0.0
    %2080 = vmatpush1.msra.mxu0 0.0
    %2081 = vmatprep.subr.mxu0 0.0
    %2082 = vmatpush1.msra.mxu0 0.0
    %2083 = vmatprep.subr.mxu0 0.0
    %2084 = vmatpush1.msra.mxu0 0.0
    %2085 = vmatprep.subr.mxu0 0.0
    %2086 = vmatpush1.msra.mxu0 0.0
    %2087 = vmatprep.subr.mxu0 0.0
    %2088 = vmatpush1.msra.mxu0 0.0
    %2089 = vmatprep.subr.mxu0 0.0
    %2090 = vmatpush1.msra.mxu0 0.0
    %2091 = vmatprep.subr.mxu0 0.0
    %2092 = vmatpush1.msra.mxu0 0.0
    %2093 = vmatprep.subr.mxu0 0.0
    %2094 = vmatpush1.msra.mxu0 0.0
    %2095 = vmatprep.subr.mxu0 0.0
    %2096 = vmatpush1.msra.mxu0 0.0
    %2097 = vmatprep.subr.mxu0 0.0
    %2098 = vmatpush1.msra.mxu0 0.0
    %2099 = vmatprep.subr.mxu0 0.0
    %2100 = vmatpush1.msra.mxu0 0.0
    %2101 = vmatprep.subr.mxu0 0.0
    %2102 = vmatpush1.msra.mxu0 0.0
    %2103 = vmatprep.subr.mxu0 0.0
    %2104 = vmatpush1.msra.mxu0 0.0
    %2105 = vmatprep.subr.mxu0 0.0
    %2106 = vmatpush1.msra.mxu0 0.0
    %2107 = vmatprep.subr.mxu0 0.0
    %2108 = vmatpush1.msra.mxu0 0.0
    %2109 = vmatprep.subr.mxu0 0.0
    %2110 = vmatpush1.msra.mxu0 0.0
    %2111 = vmatprep.subr.mxu0 0.0
    %2112 = vmatpush1.msra.mxu0 0.0
    %2113 = vmatprep.subr.mxu0 0.0
    %2114 = vmatpush1.msra.mxu0 0.0
    %2115 = vmatprep.subr.mxu0 0.0
    %2116 = vmatpush1.msra.mxu0 0.0
    %2117 = vmatprep.subr.mxu0 0.0
    %2118 = vmatpush1.msra.mxu0 0.0
    %2119 = vmatprep.subr.mxu0 0.0
    %2120 = vmatpush1.msra.mxu0 0.0
    %2121 = vmatprep.subr.mxu0 0.0
    %2122 = vmatpush1.msra.mxu0 0.0
    %2123 = vmatprep.subr.mxu0 0.0
    %2124 = vmatpush1.msra.mxu0 0.0
    %2125 = vmatprep.subr.mxu0 0.0
    %2126 = vmatpush1.msra.mxu0 0.0
    %2127 = vmatprep.subr.mxu0 0.0
    %2128 = vmatpush1.msra.mxu0 0.0
    %2129 = vmatprep.subr.mxu0 0.0
    %2130 = vmatpush1.msra.mxu0 0.0
    %2131 = vmatprep.subr.mxu0 0.0
    %2132 = vmatpush1.msra.mxu0 0.0
    %2133 = vmatprep.mubr.f32.mxu0 0.0
    %2134 = vmatmul.mubr.f32.gmra.mrb[0].mxu0 %v1927
    %v2135 = vpop.f32.mrb[0].mxu0
    %v2136 = vadd.f32 0.0, %v2135
    %v2137 = vpop.f32.mrb[0].mxu0
    %2138 = vdwg.mxu0
    %2139 = vmatprep.subr.mxu0 0.0
    %2140 = vmatpush1.msra.mxu0 %v134
    %2141 = vmatprep.subr.mxu0 0.0
    %2142 = vmatpush1.msra.mxu0 %v135
    %2143 = vmatprep.subr.mxu0 0.0
    %2144 = vmatpush1.msra.mxu0 %v136
    %2145 = vmatprep.subr.mxu0 0.0
    %2146 = vmatpush1.msra.mxu0 %v137
    %2147 = vmatprep.subr.mxu0 0.0
    %2148 = vmatpush1.msra.mxu0 0.0
    %2149 = vmatprep.subr.mxu0 0.0
    %2150 = vmatpush1.msra.mxu0 0.0
    %2151 = vmatprep.subr.mxu0 0.0
    %2152 = vmatpush1.msra.mxu0 0.0
    %2153 = vmatprep.subr.mxu0 0.0
    %2154 = vmatpush1.msra.mxu0 0.0
    %2155 = vmatprep.subr.mxu0 0.0
    %2156 = vmatpush1.msra.mxu0 0.0
    %2157 = vmatprep.subr.mxu0 0.0
    %2158 = vmatpush1.msra.mxu0 0.0
    %2159 = vmatprep.subr.mxu0 0.0
    %2160 = vmatpush1.msra.mxu0 0.0
    %2161 = vmatprep.subr.mxu0 0.0
    %2162 = vmatpush1.msra.mxu0 0.0
    %2163 = vmatprep.subr.mxu0 0.0
    %2164 = vmatpush1.msra.mxu0 0.0
    %2165 = vmatprep.subr.mxu0 0.0
    %2166 = vmatpush1.msra.mxu0 0.0
    %2167 = vmatprep.subr.mxu0 0.0
    %2168 = vmatpush1.msra.mxu0 0.0
    %2169 = vmatprep.subr.mxu0 0.0
    %2170 = vmatpush1.msra.mxu0 0.0
    %2171 = vmatprep.subr.mxu0 0.0
    %2172 = vmatpush1.msra.mxu0 0.0
    %2173 = vmatprep.subr.mxu0 0.0
    %2174 = vmatpush1.msra.mxu0 0.0
    %2175 = vmatprep.subr.mxu0 0.0
    %2176 = vmatpush1.msra.mxu0 0.0
    %2177 = vmatprep.subr.mxu0 0.0
    %2178 = vmatpush1.msra.mxu0 0.0
    %2179 = vmatprep.subr.mxu0 0.0
    %2180 = vmatpush1.msra.mxu0 0.0
    %2181 = vmatprep.subr.mxu0 0.0
    %2182 = vmatpush1.msra.mxu0 0.0
    %2183 = vmatprep.subr.mxu0 0.0
    %2184 = vmatpush1.msra.mxu0 0.0
    %2185 = vmatprep.subr.mxu0 0.0
    %2186 = vmatpush1.msra.mxu0 0.0
    %2187 = vmatprep.subr.mxu0 0.0
    %2188 = vmatpush1.msra.mxu0 0.0
    %2189 = vmatprep.subr.mxu0 0.0
    %2190 = vmatpush1.msra.mxu0 0.0
    %2191 = vmatprep.subr.mxu0 0.0
    %2192 = vmatpush1.msra.mxu0 0.0
    %2193 = vmatprep.subr.mxu0 0.0
    %2194 = vmatpush1.msra.mxu0 0.0
    %2195 = vmatprep.subr.mxu0 0.0
    %2196 = vmatpush1.msra.mxu0 0.0
    %2197 = vmatprep.subr.mxu0 0.0
    %2198 = vmatpush1.msra.mxu0 0.0
    %2199 = vmatprep.subr.mxu0 0.0
    %2200 = vmatpush1.msra.mxu0 0.0
    %2201 = vmatprep.subr.mxu0 0.0
    %2202 = vmatpush1.msra.mxu0 0.0
    %2203 = vmatprep.mubr.f32.mxu0 0.0
    %2204 = vmatmul.mubr.f32.gmra.mrb[0].mxu0 %v1927
    %v2205 = vpop.f32.mrb[0].mxu0
    %v2206 = vadd.f32 0.0, %v2205
    %v2207 = vpop.f32.mrb[0].mxu0
    %2208 = vdwg.mxu0
    %2209 = vmatprep.subr.mxu0 0.0
    %2210 = vmatpush1.msra.mxu0 %v138
    %2211 = vmatprep.subr.mxu0 0.0
    %2212 = vmatpush1.msra.mxu0 %v139
    %2213 = vmatprep.subr.mxu0 0.0
    %2214 = vmatpush1.msra.mxu0 %v140
    %2215 = vmatprep.subr.mxu0 0.0
    %2216 = vmatpush1.msra.mxu0 %v141
    %2217 = vmatprep.subr.mxu0 0.0
    %2218 = vmatpush1.msra.mxu0 0.0
    %2219 = vmatprep.subr.mxu0 0.0
    %2220 = vmatpush1.msra.mxu0 0.0
    %2221 = vmatprep.subr.mxu0 0.0
    %2222 = vmatpush1.msra.mxu0 0.0
    %2223 = vmatprep.subr.mxu0 0.0
    %2224 = vmatpush1.msra.mxu0 0.0
    %2225 = vmatprep.subr.mxu0 0.0
    %2226 = vmatpush1.msra.mxu0 0.0
    %2227 = vmatprep.subr.mxu0 0.0
    %2228 = vmatpush1.msra.mxu0 0.0
    %2229 = vmatprep.subr.mxu0 0.0
    %2230 = vmatpush1.msra.mxu0 0.0
    %2231 = vmatprep.subr.mxu0 0.0
    %2232 = vmatpush1.msra.mxu0 0.0
    %2233 = vmatprep.subr.mxu0 0.0
    %2234 = vmatpush1.msra.mxu0 0.0
    %2235 = vmatprep.subr.mxu0 0.0
    %2236 = vmatpush1.msra.mxu0 0.0
    %2237 = vmatprep.subr.mxu0 0.0
    %2238 = vmatpush1.msra.mxu0 0.0
    %2239 = vmatprep.subr.mxu0 0.0
    %2240 = vmatpush1.msra.mxu0 0.0
    %2241 = vmatprep.subr.mxu0 0.0
    %2242 = vmatpush1.msra.mxu0 0.0
    %2243 = vmatprep.subr.mxu0 0.0
    %2244 = vmatpush1.msra.mxu0 0.0
    %2245 = vmatprep.subr.mxu0 0.0
    %2246 = vmatpush1.msra.mxu0 0.0
    %2247 = vmatprep.subr.mxu0 0.0
    %2248 = vmatpush1.msra.mxu0 0.0
    %2249 = vmatprep.subr.mxu0 0.0
    %2250 = vmatpush1.msra.mxu0 0.0
    %2251 = vmatprep.subr.mxu0 0.0
    %2252 = vmatpush1.msra.mxu0 0.0
    %2253 = vmatprep.subr.mxu0 0.0
    %2254 = vmatpush1.msra.mxu0 0.0
    %2255 = vmatprep.subr.mxu0 0.0
    %2256 = vmatpush1.msra.mxu0 0.0
    %2257 = vmatprep.subr.mxu0 0.0
    %2258 = vmatpush1.msra.mxu0 0.0
    %2259 = vmatprep.subr.mxu0 0.0
    %2260 = vmatpush1.msra.mxu0 0.0
    %2261 = vmatprep.subr.mxu0 0.0
    %2262 = vmatpush1.msra.mxu0 0.0
    %2263 = vmatprep.subr.mxu0 0.0
    %2264 = vmatpush1.msra.mxu0 0.0
    %2265 = vmatprep.subr.mxu0 0.0
    %2266 = vmatpush1.msra.mxu0 0.0
    %2267 = vmatprep.subr.mxu0 0.0
    %2268 = vmatpush1.msra.mxu0 0.0
    %2269 = vmatprep.subr.mxu0 0.0
    %2270 = vmatpush1.msra.mxu0 0.0
    %2271 = vmatprep.subr.mxu0 0.0
    %2272 = vmatpush1.msra.mxu0 0.0
    %2273 = vmatprep.mubr.f32.mxu0 0.0
    %2274 = vmatmul.mubr.f32.gmra.mrb[0].mxu0 %v1927
    %v2275 = vpop.f32.mrb[0].mxu0
    %v2276 = vadd.f32 0.0, %v2275
    %v2277 = vpop.f32.mrb[0].mxu0
    %2278 = vdwg.mxu0
    %2279 = vmatprep.subr.mxu0 0.0
    %2280 = vmatpush1.msra.mxu0 %v142
    %2281 = vmatprep.subr.mxu0 0.0
    %2282 = vmatpush1.msra.mxu0 %v143
    %2283 = vmatprep.subr.mxu0 0.0
    %2284 = vmatpush1.msra.mxu0 %v144
    %2285 = vmatprep.subr.mxu0 0.0
    %2286 = vmatpush1.msra.mxu0 %v145
    %2287 = vmatprep.subr.mxu0 0.0
    %2288 = vmatpush1.msra.mxu0 0.0
    %2289 = vmatprep.subr.mxu0 0.0
    %2290 = vmatpush1.msra.mxu0 0.0
    %2291 = vmatprep.subr.mxu0 0.0
    %2292 = vmatpush1.msra.mxu0 0.0
    %2293 = vmatprep.subr.mxu0 0.0
    %2294 = vmatpush1.msra.mxu0 0.0
    %2295 = vmatprep.subr.mxu0 0.0
    %2296 = vmatpush1.msra.mxu0 0.0
    %2297 = vmatprep.subr.mxu0 0.0
    %2298 = vmatpush1.msra.mxu0 0.0
    %2299 = vmatprep.subr.mxu0 0.0
    %2300 = vmatpush1.msra.mxu0 0.0
    %2301 = vmatprep.subr.mxu0 0.0
    %2302 = vmatpush1.msra.mxu0 0.0
    %2303 = vmatprep.subr.mxu0 0.0
    %2304 = vmatpush1.msra.mxu0 0.0
    %2305 = vmatprep.subr.mxu0 0.0
    %2306 = vmatpush1.msra.mxu0 0.0
    %2307 = vmatprep.subr.mxu0 0.0
    %2308 = vmatpush1.msra.mxu0 0.0
    %2309 = vmatprep.subr.mxu0 0.0
    %2310 = vmatpush1.msra.mxu0 0.0
    %2311 = vmatprep.subr.mxu0 0.0
    %2312 = vmatpush1.msra.mxu0 0.0
    %2313 = vmatprep.subr.mxu0 0.0
    %2314 = vmatpush1.msra.mxu0 0.0
    %2315 = vmatprep.subr.mxu0 0.0
    %2316 = vmatpush1.msra.mxu0 0.0
    %2317 = vmatprep.subr.mxu0 0.0
    %2318 = vmatpush1.msra.mxu0 0.0
    %2319 = vmatprep.subr.mxu0 0.0
    %2320 = vmatpush1.msra.mxu0 0.0
    %2321 = vmatprep.subr.mxu0 0.0
    %2322 = vmatpush1.msra.mxu0 0.0
    %2323 = vmatprep.subr.mxu0 0.0
    %2324 = vmatpush1.msra.mxu0 0.0
    %2325 = vmatprep.subr.mxu0 0.0
    %2326 = vmatpush1.msra.mxu0 0.0
    %2327 = vmatprep.subr.mxu0 0.0
    %2328 = vmatpush1.msra.mxu0 0.0
    %2329 = vmatprep.subr.mxu0 0.0
    %2330 = vmatpush1.msra.mxu0 0.0
    %2331 = vmatprep.subr.mxu0 0.0
    %2332 = vmatpush1.msra.mxu0 0.0
    %2333 = vmatprep.subr.mxu0 0.0
    %2334 = vmatpush1.msra.mxu0 0.0
    %2335 = vmatprep.subr.mxu0 0.0
    %2336 = vmatpush1.msra.mxu0 0.0
    %2337 = vmatprep.subr.mxu0 0.0
    %2338 = vmatpush1.msra.mxu0 0.0
    %2339 = vmatprep.subr.mxu0 0.0
    %2340 = vmatpush1.msra.mxu0 0.0
    %2341 = vmatprep.subr.mxu0 0.0
    %2342 = vmatpush1.msra.mxu0 0.0
    %2343 = vmatprep.mubr.f32.mxu0 0.0
    %2344 = vmatmul.mubr.f32.gmra.mrb[0].mxu0 %v1927
    %v2345 = vpop.f32.mrb[0].mxu0
    %v2346 = vadd.f32 0.0, %v2345
    %v2347 = vpop.f32.mrb[0].mxu0
    %2348 = vdwg.mxu0
    %2349 = vmatprep.subr.mxu0 0.0
    %2350 = vmatpush1.msra.mxu0 %v146
    %2351 = vmatprep.subr.mxu0 0.0
    %2352 = vmatpush1.msra.mxu0 %v147
    %2353 = vmatprep.subr.mxu0 0.0
    %2354 = vmatpush1.msra.mxu0 %v148
    %2355 = vmatprep.subr.mxu0 0.0
    %2356 = vmatpush1.msra.mxu0 %v149
    %2357 = vmatprep.subr.mxu0 0.0
    %2358 = vmatpush1.msra.mxu0 0.0
    %2359 = vmatprep.subr.mxu0 0.0
    %2360 = vmatpush1.msra.mxu0 0.0
    %2361 = vmatprep.subr.mxu0 0.0
    %2362 = vmatpush1.msra.mxu0 0.0
    %2363 = vmatprep.subr.mxu0 0.0
    %2364 = vmatpush1.msra.mxu0 0.0
    %2365 = vmatprep.subr.mxu0 0.0
    %2366 = vmatpush1.msra.mxu0 0.0
    %2367 = vmatprep.subr.mxu0 0.0
    %2368 = vmatpush1.msra.mxu0 0.0
    %2369 = vmatprep.subr.mxu0 0.0
    %2370 = vmatpush1.msra.mxu0 0.0
    %2371 = vmatprep.subr.mxu0 0.0
    %2372 = vmatpush1.msra.mxu0 0.0
    %2373 = vmatprep.subr.mxu0 0.0
    %2374 = vmatpush1.msra.mxu0 0.0
    %2375 = vmatprep.subr.mxu0 0.0
    %2376 = vmatpush1.msra.mxu0 0.0
    %2377 = vmatprep.subr.mxu0 0.0
    %2378 = vmatpush1.msra.mxu0 0.0
    %2379 = vmatprep.subr.mxu0 0.0
    %2380 = vmatpush1.msra.mxu0 0.0
    %2381 = vmatprep.subr.mxu0 0.0
    %2382 = vmatpush1.msra.mxu0 0.0
    %2383 = vmatprep.subr.mxu0 0.0
    %2384 = vmatpush1.msra.mxu0 0.0
    %2385 = vmatprep.subr.mxu0 0.0
    %2386 = vmatpush1.msra.mxu0 0.0
    %2387 = vmatprep.subr.mxu0 0.0
    %2388 = vmatpush1.msra.mxu0 0.0
    %2389 = vmatprep.subr.mxu0 0.0
    %2390 = vmatpush1.msra.mxu0 0.0
    %2391 = vmatprep.subr.mxu0 0.0
    %2392 = vmatpush1.msra.mxu0 0.0
    %2393 = vmatprep.subr.mxu0 0.0
    %2394 = vmatpush1.msra.mxu0 0.0
    %2395 = vmatprep.subr.mxu0 0.0
    %2396 = vmatpush1.msra.mxu0 0.0
    %2397 = vmatprep.subr.mxu0 0.0
    %2398 = vmatpush1.msra.mxu0 0.0
    %2399 = vmatprep.subr.mxu0 0.0
    %2400 = vmatpush1.msra.mxu0 0.0
    %2401 = vmatprep.subr.mxu0 0.0
    %2402 = vmatpush1.msra.mxu0 0.0
    %2403 = vmatprep.subr.mxu0 0.0
    %2404 = vmatpush1.msra.mxu0 0.0
    %2405 = vmatprep.subr.mxu0 0.0
    %2406 = vmatpush1.msra.mxu0 0.0
    %2407 = vmatprep.subr.mxu0 0.0
    %2408 = vmatpush1.msra.mxu0 0.0
    %2409 = vmatprep.subr.mxu0 0.0
    %2410 = vmatpush1.msra.mxu0 0.0
    %2411 = vmatprep.subr.mxu0 0.0
    %2412 = vmatpush1.msra.mxu0 0.0
    %2413 = vmatprep.mubr.f32.mxu0 0.0
    %2414 = vmatmul.mubr.f32.gmra.mrb[0].mxu0 %v1927
    %v2415 = vpop.f32.mrb[0].mxu0
    %v2416 = vadd.f32 0.0, %v2415
    %v2417 = vpop.f32.mrb[0].mxu0
    %2418 = vdwg.mxu0
    %2419 = vmatprep.subr.mxu0 0.0
    %2420 = vmatpush1.msra.mxu0 %v150
    %2421 = vmatprep.subr.mxu0 0.0
    %2422 = vmatpush1.msra.mxu0 %v151
    %2423 = vmatprep.subr.mxu0 0.0
    %2424 = vmatpush1.msra.mxu0 %v152
    %2425 = vmatprep.subr.mxu0 0.0
    %2426 = vmatpush1.msra.mxu0 %v153
    %2427 = vmatprep.subr.mxu0 0.0
    %2428 = vmatpush1.msra.mxu0 0.0
    %2429 = vmatprep.subr.mxu0 0.0
    %2430 = vmatpush1.msra.mxu0 0.0
    %2431 = vmatprep.subr.mxu0 0.0
    %2432 = vmatpush1.msra.mxu0 0.0
    %2433 = vmatprep.subr.mxu0 0.0
    %2434 = vmatpush1.msra.mxu0 0.0
    %2435 = vmatprep.subr.mxu0 0.0
    %2436 = vmatpush1.msra.mxu0 0.0
    %2437 = vmatprep.subr.mxu0 0.0
    %2438 = vmatpush1.msra.mxu0 0.0
    %2439 = vmatprep.subr.mxu0 0.0
    %2440 = vmatpush1.msra.mxu0 0.0
    %2441 = vmatprep.subr.mxu0 0.0
    %2442 = vmatpush1.msra.mxu0 0.0
    %2443 = vmatprep.subr.mxu0 0.0
    %2444 = vmatpush1.msra.mxu0 0.0
    %2445 = vmatprep.subr.mxu0 0.0
    %2446 = vmatpush1.msra.mxu0 0.0
    %2447 = vmatprep.subr.mxu0 0.0
    %2448 = vmatpush1.msra.mxu0 0.0
    %2449 = vmatprep.subr.mxu0 0.0
    %2450 = vmatpush1.msra.mxu0 0.0
    %2451 = vmatprep.subr.mxu0 0.0
    %2452 = vmatpush1.msra.mxu0 0.0
    %2453 = vmatprep.subr.mxu0 0.0
    %2454 = vmatpush1.msra.mxu0 0.0
    %2455 = vmatprep.subr.mxu0 0.0
    %2456 = vmatpush1.msra.mxu0 0.0
    %2457 = vmatprep.subr.mxu0 0.0
    %2458 = vmatpush1.msra.mxu0 0.0
    %2459 = vmatprep.subr.mxu0 0.0
    %2460 = vmatpush1.msra.mxu0 0.0
    %2461 = vmatprep.subr.mxu0 0.0
    %2462 = vmatpush1.msra.mxu0 0.0
    %2463 = vmatprep.subr.mxu0 0.0
    %2464 = vmatpush1.msra.mxu0 0.0
    %2465 = vmatprep.subr.mxu0 0.0
    %2466 = vmatpush1.msra.mxu0 0.0
    %2467 = vmatprep.subr.mxu0 0.0
    %2468 = vmatpush1.msra.mxu0 0.0
    %2469 = vmatprep.subr.mxu0 0.0
    %2470 = vmatpush1.msra.mxu0 0.0
    %2471 = vmatprep.subr.mxu0 0.0
    %2472 = vmatpush1.msra.mxu0 0.0
    %2473 = vmatprep.subr.mxu0 0.0
    %2474 = vmatpush1.msra.mxu0 0.0
    %2475 = vmatprep.subr.mxu0 0.0
    %2476 = vmatpush1.msra.mxu0 0.0
    %2477 = vmatprep.subr.mxu0 0.0
    %2478 = vmatpush1.msra.mxu0 0.0
    %2479 = vmatprep.subr.mxu0 0.0
    %2480 = vmatpush1.msra.mxu0 0.0
    %2481 = vmatprep.subr.mxu0 0.0
    %2482 = vmatpush1.msra.mxu0 0.0
    %2483 = vmatprep.mubr.f32.mxu0 0.0
    %2484 = vmatmul.mubr.f32.gmra.mrb[0].mxu0 %v1927
    %v2485 = vpop.f32.mrb[0].mxu0
    %v2486 = vadd.f32 0.0, %v2485
    %v2487 = vpop.f32.mrb[0].mxu0
    %2488 = vdwg.mxu0
    %2489 = vmatprep.subr.mxu0 0.0
    %2490 = vmatpush1.msra.mxu0 %v155
    %2491 = vmatprep.subr.mxu0 0.0
    %2492 = vmatpush1.msra.mxu0 %v156
    %2493 = vmatprep.subr.mxu0 0.0
    %2494 = vmatpush1.msra.mxu0 %v157
    %2495 = vmatprep.subr.mxu0 0.0
    %2496 = vmatpush1.msra.mxu0 %v158
    %2497 = vmatprep.subr.mxu0 0.0
    %2498 = vmatpush1.msra.mxu0 0.0
    %2499 = vmatprep.subr.mxu0 0.0
    %2500 = vmatpush1.msra.mxu0 0.0
    %2501 = vmatprep.subr.mxu0 0.0
    %2502 = vmatpush1.msra.mxu0 0.0
    %2503 = vmatprep.subr.mxu0 0.0
    %2504 = vmatpush1.msra.mxu0 0.0
    %2505 = vmatprep.subr.mxu0 0.0
    %2506 = vmatpush1.msra.mxu0 0.0
    %2507 = vmatprep.subr.mxu0 0.0
    %2508 = vmatpush1.msra.mxu0 0.0
    %2509 = vmatprep.subr.mxu0 0.0
    %2510 = vmatpush1.msra.mxu0 0.0
    %2511 = vmatprep.subr.mxu0 0.0
    %2512 = vmatpush1.msra.mxu0 0.0
    %2513 = vmatprep.subr.mxu0 0.0
    %2514 = vmatpush1.msra.mxu0 0.0
    %2515 = vmatprep.subr.mxu0 0.0
    %2516 = vmatpush1.msra.mxu0 0.0
    %2517 = vmatprep.subr.mxu0 0.0
    %2518 = vmatpush1.msra.mxu0 0.0
    %2519 = vmatprep.subr.mxu0 0.0
    %2520 = vmatpush1.msra.mxu0 0.0
    %2521 = vmatprep.subr.mxu0 0.0
    %2522 = vmatpush1.msra.mxu0 0.0
    %2523 = vmatprep.subr.mxu0 0.0
    %2524 = vmatpush1.msra.mxu0 0.0
    %2525 = vmatprep.subr.mxu0 0.0
    %2526 = vmatpush1.msra.mxu0 0.0
    %2527 = vmatprep.subr.mxu0 0.0
    %2528 = vmatpush1.msra.mxu0 0.0
    %2529 = vmatprep.subr.mxu0 0.0
    %2530 = vmatpush1.msra.mxu0 0.0
    %2531 = vmatprep.subr.mxu0 0.0
    %2532 = vmatpush1.msra.mxu0 0.0
    %2533 = vmatprep.subr.mxu0 0.0
    %2534 = vmatpush1.msra.mxu0 0.0
    %2535 = vmatprep.subr.mxu0 0.0
    %2536 = vmatpush1.msra.mxu0 0.0
    %2537 = vmatprep.subr.mxu0 0.0
    %2538 = vmatpush1.msra.mxu0 0.0
    %2539 = vmatprep.subr.mxu0 0.0
    %2540 = vmatpush1.msra.mxu0 0.0
    %2541 = vmatprep.subr.mxu0 0.0
    %2542 = vmatpush1.msra.mxu0 0.0
    %2543 = vmatprep.subr.mxu0 0.0
    %2544 = vmatpush1.msra.mxu0 0.0
    %2545 = vmatprep.subr.mxu0 0.0
    %2546 = vmatpush1.msra.mxu0 0.0
    %2547 = vmatprep.subr.mxu0 0.0
    %2548 = vmatpush1.msra.mxu0 0.0
    %2549 = vmatprep.subr.mxu0 0.0
    %2550 = vmatpush1.msra.mxu0 0.0
    %2551 = vmatprep.subr.mxu0 0.0
    %2552 = vmatpush1.msra.mxu0 0.0
    %2553 = vmatprep.mubr.f32.mxu0 0.0
    %2554 = vmatmul.mubr.f32.gmra.mrb[0].mxu0 %v1364
    %v2555 = vpop.f32.mrb[0].mxu0
    %v2556 = vadd.f32 0.0, %v2555
    %v2557 = vpop.f32.mrb[0].mxu0
    %2558 = vdwg.mxu0
    %2559 = vmatprep.subr.mxu0 0.0
    %2560 = vmatpush1.msra.mxu0 %v159
    %2561 = vmatprep.subr.mxu0 0.0
    %2562 = vmatpush1.msra.mxu0 %v160
    %2563 = vmatprep.subr.mxu0 0.0
    %2564 = vmatpush1.msra.mxu0 %v161
    %2565 = vmatprep.subr.mxu0 0.0
    %2566 = vmatpush1.msra.mxu0 %v162
    %2567 = vmatprep.subr.mxu0 0.0
    %2568 = vmatpush1.msra.mxu0 0.0
    %2569 = vmatprep.subr.mxu0 0.0
    %2570 = vmatpush1.msra.mxu0 0.0
    %2571 = vmatprep.subr.mxu0 0.0
    %2572 = vmatpush1.msra.mxu0 0.0
    %2573 = vmatprep.subr.mxu0 0.0
    %2574 = vmatpush1.msra.mxu0 0.0
    %2575 = vmatprep.subr.mxu0 0.0
    %2576 = vmatpush1.msra.mxu0 0.0
    %2577 = vmatprep.subr.mxu0 0.0
    %2578 = vmatpush1.msra.mxu0 0.0
    %2579 = vmatprep.subr.mxu0 0.0
    %2580 = vmatpush1.msra.mxu0 0.0
    %2581 = vmatprep.subr.mxu0 0.0
    %2582 = vmatpush1.msra.mxu0 0.0
    %2583 = vmatprep.subr.mxu0 0.0
    %2584 = vmatpush1.msra.mxu0 0.0
    %2585 = vmatprep.subr.mxu0 0.0
    %2586 = vmatpush1.msra.mxu0 0.0
    %2587 = vmatprep.subr.mxu0 0.0
    %2588 = vmatpush1.msra.mxu0 0.0
    %2589 = vmatprep.subr.mxu0 0.0
    %2590 = vmatpush1.msra.mxu0 0.0
    %2591 = vmatprep.subr.mxu0 0.0
    %2592 = vmatpush1.msra.mxu0 0.0
    %2593 = vmatprep.subr.mxu0 0.0
    %2594 = vmatpush1.msra.mxu0 0.0
    %2595 = vmatprep.subr.mxu0 0.0
    %2596 = vmatpush1.msra.mxu0 0.0
    %2597 = vmatprep.subr.mxu0 0.0
    %2598 = vmatpush1.msra.mxu0 0.0
    %2599 = vmatprep.subr.mxu0 0.0
    %2600 = vmatpush1.msra.mxu0 0.0
    %2601 = vmatprep.subr.mxu0 0.0
    %2602 = vmatpush1.msra.mxu0 0.0
    %2603 = vmatprep.subr.mxu0 0.0
    %2604 = vmatpush1.msra.mxu0 0.0
    %2605 = vmatprep.subr.mxu0 0.0
    %2606 = vmatpush1.msra.mxu0 0.0
    %2607 = vmatprep.subr.mxu0 0.0
    %2608 = vmatpush1.msra.mxu0 0.0
    %2609 = vmatprep.subr.mxu0 0.0
    %2610 = vmatpush1.msra.mxu0 0.0
    %2611 = vmatprep.subr.mxu0 0.0
    %2612 = vmatpush1.msra.mxu0 0.0
    %2613 = vmatprep.subr.mxu0 0.0
    %2614 = vmatpush1.msra.mxu0 0.0
    %2615 = vmatprep.subr.mxu0 0.0
    %2616 = vmatpush1.msra.mxu0 0.0
    %2617 = vmatprep.subr.mxu0 0.0
    %2618 = vmatpush1.msra.mxu0 0.0
    %2619 = vmatprep.subr.mxu0 0.0
    %2620 = vmatpush1.msra.mxu0 0.0
    %2621 = vmatprep.subr.mxu0 0.0
    %2622 = vmatpush1.msra.mxu0 0.0
    %2623 = vmatprep.mubr.f32.mxu0 0.0
    %2624 = vmatmul.mubr.f32.gmra.mrb[0].mxu0 %v1364
    %v2625 = vpop.f32.mrb[0].mxu0
    %v2626 = vadd.f32 0.0, %v2625
    %v2627 = vpop.f32.mrb[0].mxu0
    %2628 = vdwg.mxu0
    %2629 = vmatprep.subr.mxu0 0.0
    %2630 = vmatpush1.msra.mxu0 %v163
    %2631 = vmatprep.subr.mxu0 0.0
    %2632 = vmatpush1.msra.mxu0 %v164
    %2633 = vmatprep.subr.mxu0 0.0
    %2634 = vmatpush1.msra.mxu0 %v165
    %2635 = vmatprep.subr.mxu0 0.0
    %2636 = vmatpush1.msra.mxu0 %v166
    %2637 = vmatprep.subr.mxu0 0.0
    %2638 = vmatpush1.msra.mxu0 0.0
    %2639 = vmatprep.subr.mxu0 0.0
    %2640 = vmatpush1.msra.mxu0 0.0
    %2641 = vmatprep.subr.mxu0 0.0
    %2642 = vmatpush1.msra.mxu0 0.0
    %2643 = vmatprep.subr.mxu0 0.0
    %2644 = vmatpush1.msra.mxu0 0.0
    %2645 = vmatprep.subr.mxu0 0.0
    %2646 = vmatpush1.msra.mxu0 0.0
    %2647 = vmatprep.subr.mxu0 0.0
    %2648 = vmatpush1.msra.mxu0 0.0
    %2649 = vmatprep.subr.mxu0 0.0
    %2650 = vmatpush1.msra.mxu0 0.0
    %2651 = vmatprep.subr.mxu0 0.0
    %2652 = vmatpush1.msra.mxu0 0.0
    %2653 = vmatprep.subr.mxu0 0.0
    %2654 = vmatpush1.msra.mxu0 0.0
    %2655 = vmatprep.subr.mxu0 0.0
    %2656 = vmatpush1.msra.mxu0 0.0
    %2657 = vmatprep.subr.mxu0 0.0
    %2658 = vmatpush1.msra.mxu0 0.0
    %2659 = vmatprep.subr.mxu0 0.0
    %2660 = vmatpush1.msra.mxu0 0.0
    %2661 = vmatprep.subr.mxu0 0.0
    %2662 = vmatpush1.msra.mxu0 0.0
    %2663 = vmatprep.subr.mxu0 0.0
    %2664 = vmatpush1.msra.mxu0 0.0
    %2665 = vmatprep.subr.mxu0 0.0
    %2666 = vmatpush1.msra.mxu0 0.0
    %2667 = vmatprep.subr.mxu0 0.0
    %2668 = vmatpush1.msra.mxu0 0.0
    %2669 = vmatprep.subr.mxu0 0.0
    %2670 = vmatpush1.msra.mxu0 0.0
    %2671 = vmatprep.subr.mxu0 0.0
    %2672 = vmatpush1.msra.mxu0 0.0
    %2673 = vmatprep.subr.mxu0 0.0
    %2674 = vmatpush1.msra.mxu0 0.0
    %2675 = vmatprep.subr.mxu0 0.0
    %2676 = vmatpush1.msra.mxu0 0.0
    %2677 = vmatprep.subr.mxu0 0.0
    %2678 = vmatpush1.msra.mxu0 0.0
    %2679 = vmatprep.subr.mxu0 0.0
    %2680 = vmatpush1.msra.mxu0 0.0
    %2681 = vmatprep.subr.mxu0 0.0
    %2682 = vmatpush1.msra.mxu0 0.0
    %2683 = vmatprep.subr.mxu0 0.0
    %2684 = vmatpush1.msra.mxu0 0.0
    %2685 = vmatprep.subr.mxu0 0.0
    %2686 = vmatpush1.msra.mxu0 0.0
    %2687 = vmatprep.subr.mxu0 0.0
    %2688 = vmatpush1.msra.mxu0 0.0
    %2689 = vmatprep.subr.mxu0 0.0
    %2690 = vmatpush1.msra.mxu0 0.0
    %2691 = vmatprep.subr.mxu0 0.0
    %2692 = vmatpush1.msra.mxu0 0.0
    %2693 = vmatprep.mubr.f32.mxu0 0.0
    %2694 = vmatmul.mubr.f32.gmra.mrb[0].mxu0 %v1364
    %v2695 = vpop.f32.mrb[0].mxu0
    %v2696 = vadd.f32 0.0, %v2695
    %v2697 = vpop.f32.mrb[0].mxu0
    %2698 = vdwg.mxu0
    %2699 = vmatprep.subr.mxu0 0.0
    %2700 = vmatpush1.msra.mxu0 %v167
    %2701 = vmatprep.subr.mxu0 0.0
    %2702 = vmatpush1.msra.mxu0 %v168
    %2703 = vmatprep.subr.mxu0 0.0
    %2704 = vmatpush1.msra.mxu0 %v169
    %2705 = vmatprep.subr.mxu0 0.0
    %2706 = vmatpush1.msra.mxu0 %v170
    %2707 = vmatprep.subr.mxu0 0.0
    %2708 = vmatpush1.msra.mxu0 0.0
    %2709 = vmatprep.subr.mxu0 0.0
    %2710 = vmatpush1.msra.mxu0 0.0
    %2711 = vmatprep.subr.mxu0 0.0
    %2712 = vmatpush1.msra.mxu0 0.0
    %2713 = vmatprep.subr.mxu0 0.0
    %2714 = vmatpush1.msra.mxu0 0.0
    %2715 = vmatprep.subr.mxu0 0.0
    %2716 = vmatpush1.msra.mxu0 0.0
    %2717 = vmatprep.subr.mxu0 0.0
    %2718 = vmatpush1.msra.mxu0 0.0
    %2719 = vmatprep.subr.mxu0 0.0
    %2720 = vmatpush1.msra.mxu0 0.0
    %2721 = vmatprep.subr.mxu0 0.0
    %2722 = vmatpush1.msra.mxu0 0.0
    %2723 = vmatprep.subr.mxu0 0.0
    %2724 = vmatpush1.msra.mxu0 0.0
    %2725 = vmatprep.subr.mxu0 0.0
    %2726 = vmatpush1.msra.mxu0 0.0
    %2727 = vmatprep.subr.mxu0 0.0
    %2728 = vmatpush1.msra.mxu0 0.0
    %2729 = vmatprep.subr.mxu0 0.0
    %2730 = vmatpush1.msra.mxu0 0.0
    %2731 = vmatprep.subr.mxu0 0.0
    %2732 = vmatpush1.msra.mxu0 0.0
    %2733 = vmatprep.subr.mxu0 0.0
    %2734 = vmatpush1.msra.mxu0 0.0
    %2735 = vmatprep.subr.mxu0 0.0
    %2736 = vmatpush1.msra.mxu0 0.0
    %2737 = vmatprep.subr.mxu0 0.0
    %2738 = vmatpush1.msra.mxu0 0.0
    %2739 = vmatprep.subr.mxu0 0.0
    %2740 = vmatpush1.msra.mxu0 0.0
    %2741 = vmatprep.subr.mxu0 0.0
    %2742 = vmatpush1.msra.mxu0 0.0
    %2743 = vmatprep.subr.mxu0 0.0
    %2744 = vmatpush1.msra.mxu0 0.0
    %2745 = vmatprep.subr.mxu0 0.0
    %2746 = vmatpush1.msra.mxu0 0.0
    %2747 = vmatprep.subr.mxu0 0.0
    %2748 = vmatpush1.msra.mxu0 0.0
    %2749 = vmatprep.subr.mxu0 0.0
    %2750 = vmatpush1.msra.mxu0 0.0
    %2751 = vmatprep.subr.mxu0 0.0
    %2752 = vmatpush1.msra.mxu0 0.0
    %2753 = vmatprep.subr.mxu0 0.0
    %2754 = vmatpush1.msra.mxu0 0.0
    %2755 = vmatprep.subr.mxu0 0.0
    %2756 = vmatpush1.msra.mxu0 0.0
    %2757 = vmatprep.subr.mxu0 0.0
    %2758 = vmatpush1.msra.mxu0 0.0
    %2759 = vmatprep.subr.mxu0 0.0
    %2760 = vmatpush1.msra.mxu0 0.0
    %2761 = vmatprep.subr.mxu0 0.0
    %2762 = vmatpush1.msra.mxu0 0.0
    %2763 = vmatprep.mubr.f32.mxu0 0.0
    %2764 = vmatmul.mubr.f32.gmra.mrb[0].mxu0 %v1364
    %v2765 = vpop.f32.mrb[0].mxu0
    %v2766 = vadd.f32 0.0, %v2765
    %v2767 = vpop.f32.mrb[0].mxu0
    %2768 = vdwg.mxu0
    %2769 = vmatprep.subr.mxu0 0.0
    %2770 = vmatpush1.msra.mxu0 %v171
    %2771 = vmatprep.subr.mxu0 0.0
    %2772 = vmatpush1.msra.mxu0 %v172
    %2773 = vmatprep.subr.mxu0 0.0
    %2774 = vmatpush1.msra.mxu0 %v173
    %2775 = vmatprep.subr.mxu0 0.0
    %2776 = vmatpush1.msra.mxu0 %v174
    %2777 = vmatprep.subr.mxu0 0.0
    %2778 = vmatpush1.msra.mxu0 0.0
    %2779 = vmatprep.subr.mxu0 0.0
    %2780 = vmatpush1.msra.mxu0 0.0
    %2781 = vmatprep.subr.mxu0 0.0
    %2782 = vmatpush1.msra.mxu0 0.0
    %2783 = vmatprep.subr.mxu0 0.0
    %2784 = vmatpush1.msra.mxu0 0.0
    %2785 = vmatprep.subr.mxu0 0.0
    %2786 = vmatpush1.msra.mxu0 0.0
    %2787 = vmatprep.subr.mxu0 0.0
    %2788 = vmatpush1.msra.mxu0 0.0
    %2789 = vmatprep.subr.mxu0 0.0
    %2790 = vmatpush1.msra.mxu0 0.0
    %2791 = vmatprep.subr.mxu0 0.0
    %2792 = vmatpush1.msra.mxu0 0.0
    %2793 = vmatprep.subr.mxu0 0.0
    %2794 = vmatpush1.msra.mxu0 0.0
    %2795 = vmatprep.subr.mxu0 0.0
    %2796 = vmatpush1.msra.mxu0 0.0
    %2797 = vmatprep.subr.mxu0 0.0
    %2798 = vmatpush1.msra.mxu0 0.0
    %2799 = vmatprep.subr.mxu0 0.0
    %2800 = vmatpush1.msra.mxu0 0.0
    %2801 = vmatprep.subr.mxu0 0.0
    %2802 = vmatpush1.msra.mxu0 0.0
    %2803 = vmatprep.subr.mxu0 0.0
    %2804 = vmatpush1.msra.mxu0 0.0
    %2805 = vmatprep.subr.mxu0 0.0
    %2806 = vmatpush1.msra.mxu0 0.0
    %2807 = vmatprep.subr.mxu0 0.0
    %2808 = vmatpush1.msra.mxu0 0.0
    %2809 = vmatprep.subr.mxu0 0.0
    %2810 = vmatpush1.msra.mxu0 0.0
    %2811 = vmatprep.subr.mxu0 0.0
    %2812 = vmatpush1.msra.mxu0 0.0
    %2813 = vmatprep.subr.mxu0 0.0
    %2814 = vmatpush1.msra.mxu0 0.0
    %2815 = vmatprep.subr.mxu0 0.0
    %2816 = vmatpush1.msra.mxu0 0.0
    %2817 = vmatprep.subr.mxu0 0.0
    %2818 = vmatpush1.msra.mxu0 0.0
    %2819 = vmatprep.subr.mxu0 0.0
    %2820 = vmatpush1.msra.mxu0 0.0
    %2821 = vmatprep.subr.mxu0 0.0
    %2822 = vmatpush1.msra.mxu0 0.0
    %2823 = vmatprep.subr.mxu0 0.0
    %2824 = vmatpush1.msra.mxu0 0.0
    %2825 = vmatprep.subr.mxu0 0.0
    %2826 = vmatpush1.msra.mxu0 0.0
    %2827 = vmatprep.subr.mxu0 0.0
    %2828 = vmatpush1.msra.mxu0 0.0
    %2829 = vmatprep.subr.mxu0 0.0
    %2830 = vmatpush1.msra.mxu0 0.0
    %2831 = vmatprep.subr.mxu0 0.0
    %2832 = vmatpush1.msra.mxu0 0.0
    %2833 = vmatprep.mubr.f32.mxu0 0.0
    %2834 = vmatmul.mubr.f32.gmra.mrb[0].mxu0 %v1364
    %v2835 = vpop.f32.mrb[0].mxu0
    %v2836 = vadd.f32 0.0, %v2835
    %v2837 = vpop.f32.mrb[0].mxu0
    %2838 = vdwg.mxu0
    %2839 = vmatprep.subr.mxu0 0.0
    %2840 = vmatpush1.msra.mxu0 %v175
    %2841 = vmatprep.subr.mxu0 0.0
    %2842 = vmatpush1.msra.mxu0 %v176
    %2843 = vmatprep.subr.mxu0 0.0
    %2844 = vmatpush1.msra.mxu0 %v177
    %2845 = vmatprep.subr.mxu0 0.0
    %2846 = vmatpush1.msra.mxu0 %v178
    %2847 = vmatprep.subr.mxu0 0.0
    %2848 = vmatpush1.msra.mxu0 0.0
    %2849 = vmatprep.subr.mxu0 0.0
    %2850 = vmatpush1.msra.mxu0 0.0
    %2851 = vmatprep.subr.mxu0 0.0
    %2852 = vmatpush1.msra.mxu0 0.0
    %2853 = vmatprep.subr.mxu0 0.0
    %2854 = vmatpush1.msra.mxu0 0.0
    %2855 = vmatprep.subr.mxu0 0.0
    %2856 = vmatpush1.msra.mxu0 0.0
    %2857 = vmatprep.subr.mxu0 0.0
    %2858 = vmatpush1.msra.mxu0 0.0
    %2859 = vmatprep.subr.mxu0 0.0
    %2860 = vmatpush1.msra.mxu0 0.0
    %2861 = vmatprep.subr.mxu0 0.0
    %2862 = vmatpush1.msra.mxu0 0.0
    %2863 = vmatprep.subr.mxu0 0.0
    %2864 = vmatpush1.msra.mxu0 0.0
    %2865 = vmatprep.subr.mxu0 0.0
    %2866 = vmatpush1.msra.mxu0 0.0
    %2867 = vmatprep.subr.mxu0 0.0
    %2868 = vmatpush1.msra.mxu0 0.0
    %2869 = vmatprep.subr.mxu0 0.0
    %2870 = vmatpush1.msra.mxu0 0.0
    %2871 = vmatprep.subr.mxu0 0.0
    %2872 = vmatpush1.msra.mxu0 0.0
    %2873 = vmatprep.subr.mxu0 0.0
    %2874 = vmatpush1.msra.mxu0 0.0
    %2875 = vmatprep.subr.mxu0 0.0
    %2876 = vmatpush1.msra.mxu0 0.0
    %2877 = vmatprep.subr.mxu0 0.0
    %2878 = vmatpush1.msra.mxu0 0.0
    %2879 = vmatprep.subr.mxu0 0.0
    %2880 = vmatpush1.msra.mxu0 0.0
    %2881 = vmatprep.subr.mxu0 0.0
    %2882 = vmatpush1.msra.mxu0 0.0
    %2883 = vmatprep.subr.mxu0 0.0
    %2884 = vmatpush1.msra.mxu0 0.0
    %2885 = vmatprep.subr.mxu0 0.0
    %2886 = vmatpush1.msra.mxu0 0.0
    %2887 = vmatprep.subr.mxu0 0.0
    %2888 = vmatpush1.msra.mxu0 0.0
    %2889 = vmatprep.subr.mxu0 0.0
    %2890 = vmatpush1.msra.mxu0 0.0
    %2891 = vmatprep.subr.mxu0 0.0
    %2892 = vmatpush1.msra.mxu0 0.0
    %2893 = vmatprep.subr.mxu0 0.0
    %2894 = vmatpush1.msra.mxu0 0.0
    %2895 = vmatprep.subr.mxu0 0.0
    %2896 = vmatpush1.msra.mxu0 0.0
    %2897 = vmatprep.subr.mxu0 0.0
    %2898 = vmatpush1.msra.mxu0 0.0
    %2899 = vmatprep.subr.mxu0 0.0
    %2900 = vmatpush1.msra.mxu0 0.0
    %2901 = vmatprep.subr.mxu0 0.0
    %2902 = vmatpush1.msra.mxu0 0.0
    %2903 = vmatprep.mubr.f32.mxu0 0.0
    %2904 = vmatmul.mubr.f32.gmra.mrb[0].mxu0 %v1364
    %v2905 = vpop.f32.mrb[0].mxu0
    %v2906 = vadd.f32 0.0, %v2905
    %v2907 = vpop.f32.mrb[0].mxu0
    %2908 = vdwg.mxu0
    %2909 = vmatprep.subr.mxu0 0.0
    %2910 = vmatpush1.msra.mxu0 %v179
    %2911 = vmatprep.subr.mxu0 0.0
    %2912 = vmatpush1.msra.mxu0 %v180
    %2913 = vmatprep.subr.mxu0 0.0
    %2914 = vmatpush1.msra.mxu0 %v181
    %2915 = vmatprep.subr.mxu0 0.0
    %2916 = vmatpush1.msra.mxu0 %v182
    %2917 = vmatprep.subr.mxu0 0.0
    %2918 = vmatpush1.msra.mxu0 0.0
    %2919 = vmatprep.subr.mxu0 0.0
    %2920 = vmatpush1.msra.mxu0 0.0
    %2921 = vmatprep.subr.mxu0 0.0
    %2922 = vmatpush1.msra.mxu0 0.0
    %2923 = vmatprep.subr.mxu0 0.0
    %2924 = vmatpush1.msra.mxu0 0.0
    %2925 = vmatprep.subr.mxu0 0.0
    %2926 = vmatpush1.msra.mxu0 0.0
    %2927 = vmatprep.subr.mxu0 0.0
    %2928 = vmatpush1.msra.mxu0 0.0
    %2929 = vmatprep.subr.mxu0 0.0
    %2930 = vmatpush1.msra.mxu0 0.0
    %2931 = vmatprep.subr.mxu0 0.0
    %2932 = vmatpush1.msra.mxu0 0.0
    %2933 = vmatprep.subr.mxu0 0.0
    %2934 = vmatpush1.msra.mxu0 0.0
    %2935 = vmatprep.subr.mxu0 0.0
    %2936 = vmatpush1.msra.mxu0 0.0
    %2937 = vmatprep.subr.mxu0 0.0
    %2938 = vmatpush1.msra.mxu0 0.0
    %2939 = vmatprep.subr.mxu0 0.0
    %2940 = vmatpush1.msra.mxu0 0.0
    %2941 = vmatprep.subr.mxu0 0.0
    %2942 = vmatpush1.msra.mxu0 0.0
    %2943 = vmatprep.subr.mxu0 0.0
    %2944 = vmatpush1.msra.mxu0 0.0
    %2945 = vmatprep.subr.mxu0 0.0
    %2946 = vmatpush1.msra.mxu0 0.0
    %2947 = vmatprep.subr.mxu0 0.0
    %2948 = vmatpush1.msra.mxu0 0.0
    %2949 = vmatprep.subr.mxu0 0.0
    %2950 = vmatpush1.msra.mxu0 0.0
    %2951 = vmatprep.subr.mxu0 0.0
    %2952 = vmatpush1.msra.mxu0 0.0
    %2953 = vmatprep.subr.mxu0 0.0
    %2954 = vmatpush1.msra.mxu0 0.0
    %2955 = vmatprep.subr.mxu0 0.0
    %2956 = vmatpush1.msra.mxu0 0.0
    %2957 = vmatprep.subr.mxu0 0.0
    %2958 = vmatpush1.msra.mxu0 0.0
    %2959 = vmatprep.subr.mxu0 0.0
    %2960 = vmatpush1.msra.mxu0 0.0
    %2961 = vmatprep.subr.mxu0 0.0
    %2962 = vmatpush1.msra.mxu0 0.0
    %2963 = vmatprep.subr.mxu0 0.0
    %2964 = vmatpush1.msra.mxu0 0.0
    %2965 = vmatprep.subr.mxu0 0.0
    %2966 = vmatpush1.msra.mxu0 0.0
    %2967 = vmatprep.subr.mxu0 0.0
    %2968 = vmatpush1.msra.mxu0 0.0
    %2969 = vmatprep.subr.mxu0 0.0
    %2970 = vmatpush1.msra.mxu0 0.0
    %2971 = vmatprep.subr.mxu0 0.0
    %2972 = vmatpush1.msra.mxu0 0.0
    %2973 = vmatprep.mubr.f32.mxu0 0.0
    %2974 = vmatmul.mubr.f32.gmra.mrb[0].mxu0 %v1364
    %v2975 = vpop.f32.mrb[0].mxu0
    %v2976 = vadd.f32 0.0, %v2975
    %v2977 = vpop.f32.mrb[0].mxu0
    %2978 = vdwg.mxu0
    %2979 = vmatprep.subr.mxu0 0.0
    %2980 = vmatpush1.msra.mxu0 %v183
    %2981 = vmatprep.subr.mxu0 0.0
    %2982 = vmatpush1.msra.mxu0 %v184
    %2983 = vmatprep.subr.mxu0 0.0
    %2984 = vmatpush1.msra.mxu0 %v185
    %2985 = vmatprep.subr.mxu0 0.0
    %2986 = vmatpush1.msra.mxu0 %v186
    %2987 = vmatprep.subr.mxu0 0.0
    %2988 = vmatpush1.msra.mxu0 0.0
    %2989 = vmatprep.subr.mxu0 0.0
    %2990 = vmatpush1.msra.mxu0 0.0
    %2991 = vmatprep.subr.mxu0 0.0
    %2992 = vmatpush1.msra.mxu0 0.0
    %2993 = vmatprep.subr.mxu0 0.0
    %2994 = vmatpush1.msra.mxu0 0.0
    %2995 = vmatprep.subr.mxu0 0.0
    %2996 = vmatpush1.msra.mxu0 0.0
    %2997 = vmatprep.subr.mxu0 0.0
    %2998 = vmatpush1.msra.mxu0 0.0
    %2999 = vmatprep.subr.mxu0 0.0
    %3000 = vmatpush1.msra.mxu0 0.0
    %3001 = vmatprep.subr.mxu0 0.0
    %3002 = vmatpush1.msra.mxu0 0.0
    %3003 = vmatprep.subr.mxu0 0.0
    %3004 = vmatpush1.msra.mxu0 0.0
    %3005 = vmatprep.subr.mxu0 0.0
    %3006 = vmatpush1.msra.mxu0 0.0
    %3007 = vmatprep.subr.mxu0 0.0
    %3008 = vmatpush1.msra.mxu0 0.0
    %3009 = vmatprep.subr.mxu0 0.0
    %3010 = vmatpush1.msra.mxu0 0.0
    %3011 = vmatprep.subr.mxu0 0.0
    %3012 = vmatpush1.msra.mxu0 0.0
    %3013 = vmatprep.subr.mxu0 0.0
    %3014 = vmatpush1.msra.mxu0 0.0
    %3015 = vmatprep.subr.mxu0 0.0
    %3016 = vmatpush1.msra.mxu0 0.0
    %3017 = vmatprep.subr.mxu0 0.0
    %3018 = vmatpush1.msra.mxu0 0.0
    %3019 = vmatprep.subr.mxu0 0.0
    %3020 = vmatpush1.msra.mxu0 0.0
    %3021 = vmatprep.subr.mxu0 0.0
    %3022 = vmatpush1.msra.mxu0 0.0
    %3023 = vmatprep.subr.mxu0 0.0
    %3024 = vmatpush1.msra.mxu0 0.0
    %3025 = vmatprep.subr.mxu0 0.0
    %3026 = vmatpush1.msra.mxu0 0.0
    %3027 = vmatprep.subr.mxu0 0.0
    %3028 = vmatpush1.msra.mxu0 0.0
    %3029 = vmatprep.subr.mxu0 0.0
    %3030 = vmatpush1.msra.mxu0 0.0
    %3031 = vmatprep.subr.mxu0 0.0
    %3032 = vmatpush1.msra.mxu0 0.0
    %3033 = vmatprep.subr.mxu0 0.0
    %3034 = vmatpush1.msra.mxu0 0.0
    %3035 = vmatprep.subr.mxu0 0.0
    %3036 = vmatpush1.msra.mxu0 0.0
    %3037 = vmatprep.subr.mxu0 0.0
    %3038 = vmatpush1.msra.mxu0 0.0
    %3039 = vmatprep.subr.mxu0 0.0
    %3040 = vmatpush1.msra.mxu0 0.0
    %3041 = vmatprep.subr.mxu0 0.0
    %3042 = vmatpush1.msra.mxu0 0.0
    %3043 = vmatprep.mubr.f32.mxu0 0.0
    %3044 = vmatmul.mubr.f32.gmra.mrb[0].mxu0 %v1364
    %v3045 = vpop.f32.mrb[0].mxu0
    %v3046 = vadd.f32 0.0, %v3045
    %v3047 = vpop.f32.mrb[0].mxu0
    %3048 = vdwg.mxu0
    %3049 = vmatprep.subr.mxu0 0.0
    %3050 = vmatpush1.msra.mxu0 %v187
    %3051 = vmatprep.subr.mxu0 0.0
    %3052 = vmatpush1.msra.mxu0 %v188
    %3053 = vmatprep.subr.mxu0 0.0
    %3054 = vmatpush1.msra.mxu0 %v189
    %3055 = vmatprep.subr.mxu0 0.0
    %3056 = vmatpush1.msra.mxu0 %v190
    %3057 = vmatprep.subr.mxu0 0.0
    %3058 = vmatpush1.msra.mxu0 0.0
    %3059 = vmatprep.subr.mxu0 0.0
    %3060 = vmatpush1.msra.mxu0 0.0
    %3061 = vmatprep.subr.mxu0 0.0
    %3062 = vmatpush1.msra.mxu0 0.0
    %3063 = vmatprep.subr.mxu0 0.0
    %3064 = vmatpush1.msra.mxu0 0.0
    %3065 = vmatprep.subr.mxu0 0.0
    %3066 = vmatpush1.msra.mxu0 0.0
    %3067 = vmatprep.subr.mxu0 0.0
    %3068 = vmatpush1.msra.mxu0 0.0
    %3069 = vmatprep.subr.mxu0 0.0
    %3070 = vmatpush1.msra.mxu0 0.0
    %3071 = vmatprep.subr.mxu0 0.0
    %3072 = vmatpush1.msra.mxu0 0.0
    %3073 = vmatprep.subr.mxu0 0.0
    %3074 = vmatpush1.msra.mxu0 0.0
    %3075 = vmatprep.subr.mxu0 0.0
    %3076 = vmatpush1.msra.mxu0 0.0
    %3077 = vmatprep.subr.mxu0 0.0
    %3078 = vmatpush1.msra.mxu0 0.0
    %3079 = vmatprep.subr.mxu0 0.0
    %3080 = vmatpush1.msra.mxu0 0.0
    %3081 = vmatprep.subr.mxu0 0.0
    %3082 = vmatpush1.msra.mxu0 0.0
    %3083 = vmatprep.subr.mxu0 0.0
    %3084 = vmatpush1.msra.mxu0 0.0
    %3085 = vmatprep.subr.mxu0 0.0
    %3086 = vmatpush1.msra.mxu0 0.0
    %3087 = vmatprep.subr.mxu0 0.0
    %3088 = vmatpush1.msra.mxu0 0.0
    %3089 = vmatprep.subr.mxu0 0.0
    %3090 = vmatpush1.msra.mxu0 0.0
    %3091 = vmatprep.subr.mxu0 0.0
    %3092 = vmatpush1.msra.mxu0 0.0
    %3093 = vmatprep.subr.mxu0 0.0
    %3094 = vmatpush1.msra.mxu0 0.0
    %3095 = vmatprep.subr.mxu0 0.0
    %3096 = vmatpush1.msra.mxu0 0.0
    %3097 = vmatprep.subr.mxu0 0.0
    %3098 = vmatpush1.msra.mxu0 0.0
    %3099 = vmatprep.subr.mxu0 0.0
    %3100 = vmatpush1.msra.mxu0 0.0
    %3101 = vmatprep.subr.mxu0 0.0
    %3102 = vmatpush1.msra.mxu0 0.0
    %3103 = vmatprep.subr.mxu0 0.0
    %3104 = vmatpush1.msra.mxu0 0.0
    %3105 = vmatprep.subr.mxu0 0.0
    %3106 = vmatpush1.msra.mxu0 0.0
    %3107 = vmatprep.subr.mxu0 0.0
    %3108 = vmatpush1.msra.mxu0 0.0
    %3109 = vmatprep.subr.mxu0 0.0
    %3110 = vmatpush1.msra.mxu0 0.0
    %3111 = vmatprep.subr.mxu0 0.0
    %3112 = vmatpush1.msra.mxu0 0.0
    %3113 = vmatprep.mubr.f32.mxu0 0.0
    %3114 = vmatmul.mubr.f32.gmra.mrb[0].mxu0 %v1927
    %v3115 = vpop.f32.mrb[0].mxu0
    %v3116 = vadd.f32 0.0, %v3115
    %v3117 = vpop.f32.mrb[0].mxu0
    %3118 = vdwg.mxu0
    %3119 = vmatprep.subr.mxu0 0.0
    %3120 = vmatpush1.msra.mxu0 %v191
    %3121 = vmatprep.subr.mxu0 0.0
    %3122 = vmatpush1.msra.mxu0 %v192
    %3123 = vmatprep.subr.mxu0 0.0
    %3124 = vmatpush1.msra.mxu0 %v193
    %3125 = vmatprep.subr.mxu0 0.0
    %3126 = vmatpush1.msra.mxu0 %v194
    %3127 = vmatprep.subr.mxu0 0.0
    %3128 = vmatpush1.msra.mxu0 0.0
    %3129 = vmatprep.subr.mxu0 0.0
    %3130 = vmatpush1.msra.mxu0 0.0
    %3131 = vmatprep.subr.mxu0 0.0
    %3132 = vmatpush1.msra.mxu0 0.0
    %3133 = vmatprep.subr.mxu0 0.0
    %3134 = vmatpush1.msra.mxu0 0.0
    %3135 = vmatprep.subr.mxu0 0.0
    %3136 = vmatpush1.msra.mxu0 0.0
    %3137 = vmatprep.subr.mxu0 0.0
    %3138 = vmatpush1.msra.mxu0 0.0
    %3139 = vmatprep.subr.mxu0 0.0
    %3140 = vmatpush1.msra.mxu0 0.0
    %3141 = vmatprep.subr.mxu0 0.0
    %3142 = vmatpush1.msra.mxu0 0.0
    %3143 = vmatprep.subr.mxu0 0.0
    %3144 = vmatpush1.msra.mxu0 0.0
    %3145 = vmatprep.subr.mxu0 0.0
    %3146 = vmatpush1.msra.mxu0 0.0
    %3147 = vmatprep.subr.mxu0 0.0
    %3148 = vmatpush1.msra.mxu0 0.0
    %3149 = vmatprep.subr.mxu0 0.0
    %3150 = vmatpush1.msra.mxu0 0.0
    %3151 = vmatprep.subr.mxu0 0.0
    %3152 = vmatpush1.msra.mxu0 0.0
    %3153 = vmatprep.subr.mxu0 0.0
    %3154 = vmatpush1.msra.mxu0 0.0
    %3155 = vmatprep.subr.mxu0 0.0
    %3156 = vmatpush1.msra.mxu0 0.0
    %3157 = vmatprep.subr.mxu0 0.0
    %3158 = vmatpush1.msra.mxu0 0.0
    %3159 = vmatprep.subr.mxu0 0.0
    %3160 = vmatpush1.msra.mxu0 0.0
    %3161 = vmatprep.subr.mxu0 0.0
    %3162 = vmatpush1.msra.mxu0 0.0
    %3163 = vmatprep.subr.mxu0 0.0
    %3164 = vmatpush1.msra.mxu0 0.0
    %3165 = vmatprep.subr.mxu0 0.0
    %3166 = vmatpush1.msra.mxu0 0.0
    %3167 = vmatprep.subr.mxu0 0.0
    %3168 = vmatpush1.msra.mxu0 0.0
    %3169 = vmatprep.subr.mxu0 0.0
    %3170 = vmatpush1.msra.mxu0 0.0
    %3171 = vmatprep.subr.mxu0 0.0
    %3172 = vmatpush1.msra.mxu0 0.0
    %3173 = vmatprep.subr.mxu0 0.0
    %3174 = vmatpush1.msra.mxu0 0.0
    %3175 = vmatprep.subr.mxu0 0.0
    %3176 = vmatpush1.msra.mxu0 0.0
    %3177 = vmatprep.subr.mxu0 0.0
    %3178 = vmatpush1.msra.mxu0 0.0
    %3179 = vmatprep.subr.mxu0 0.0
    %3180 = vmatpush1.msra.mxu0 0.0
    %3181 = vmatprep.subr.mxu0 0.0
    %3182 = vmatpush1.msra.mxu0 0.0
    %3183 = vmatprep.mubr.f32.mxu0 0.0
    %3184 = vmatmul.mubr.f32.gmra.mrb[0].mxu0 %v1927
    %v3185 = vpop.f32.mrb[0].mxu0
    %v3186 = vadd.f32 0.0, %v3185
    %v3187 = vpop.f32.mrb[0].mxu0
    %3188 = vdwg.mxu0
    %3189 = vmatprep.subr.mxu0 0.0
    %3190 = vmatpush1.msra.mxu0 %v195
    %3191 = vmatprep.subr.mxu0 0.0
    %3192 = vmatpush1.msra.mxu0 %v196
    %3193 = vmatprep.subr.mxu0 0.0
    %3194 = vmatpush1.msra.mxu0 %v197
    %3195 = vmatprep.subr.mxu0 0.0
    %3196 = vmatpush1.msra.mxu0 %v198
    %3197 = vmatprep.subr.mxu0 0.0
    %3198 = vmatpush1.msra.mxu0 0.0
    %3199 = vmatprep.subr.mxu0 0.0
    %3200 = vmatpush1.msra.mxu0 0.0
    %3201 = vmatprep.subr.mxu0 0.0
    %3202 = vmatpush1.msra.mxu0 0.0
    %3203 = vmatprep.subr.mxu0 0.0
    %3204 = vmatpush1.msra.mxu0 0.0
    %3205 = vmatprep.subr.mxu0 0.0
    %3206 = vmatpush1.msra.mxu0 0.0
    %3207 = vmatprep.subr.mxu0 0.0
    %3208 = vmatpush1.msra.mxu0 0.0
    %3209 = vmatprep.subr.mxu0 0.0
    %3210 = vmatpush1.msra.mxu0 0.0
    %3211 = vmatprep.subr.mxu0 0.0
    %3212 = vmatpush1.msra.mxu0 0.0
    %3213 = vmatprep.subr.mxu0 0.0
    %3214 = vmatpush1.msra.mxu0 0.0
    %3215 = vmatprep.subr.mxu0 0.0
    %3216 = vmatpush1.msra.mxu0 0.0
    %3217 = vmatprep.subr.mxu0 0.0
    %3218 = vmatpush1.msra.mxu0 0.0
    %3219 = vmatprep.subr.mxu0 0.0
    %3220 = vmatpush1.msra.mxu0 0.0
    %3221 = vmatprep.subr.mxu0 0.0
    %3222 = vmatpush1.msra.mxu0 0.0
    %3223 = vmatprep.subr.mxu0 0.0
    %3224 = vmatpush1.msra.mxu0 0.0
    %3225 = vmatprep.subr.mxu0 0.0
    %3226 = vmatpush1.msra.mxu0 0.0
    %3227 = vmatprep.subr.mxu0 0.0
    %3228 = vmatpush1.msra.mxu0 0.0
    %3229 = vmatprep.subr.mxu0 0.0
    %3230 = vmatpush1.msra.mxu0 0.0
    %3231 = vmatprep.subr.mxu0 0.0
    %3232 = vmatpush1.msra.mxu0 0.0
    %3233 = vmatprep.subr.mxu0 0.0
    %3234 = vmatpush1.msra.mxu0 0.0
    %3235 = vmatprep.subr.mxu0 0.0
    %3236 = vmatpush1.msra.mxu0 0.0
    %3237 = vmatprep.subr.mxu0 0.0
    %3238 = vmatpush1.msra.mxu0 0.0
    %3239 = vmatprep.subr.mxu0 0.0
    %3240 = vmatpush1.msra.mxu0 0.0
    %3241 = vmatprep.subr.mxu0 0.0
    %3242 = vmatpush1.msra.mxu0 0.0
    %3243 = vmatprep.subr.mxu0 0.0
    %3244 = vmatpush1.msra.mxu0 0.0
    %3245 = vmatprep.subr.mxu0 0.0
    %3246 = vmatpush1.msra.mxu0 0.0
    %3247 = vmatprep.subr.mxu0 0.0
    %3248 = vmatpush1.msra.mxu0 0.0
    %3249 = vmatprep.subr.mxu0 0.0
    %3250 = vmatpush1.msra.mxu0 0.0
    %3251 = vmatprep.subr.mxu0 0.0
    %3252 = vmatpush1.msra.mxu0 0.0
    %3253 = vmatprep.mubr.f32.mxu0 0.0
    %3254 = vmatmul.mubr.f32.gmra.mrb[0].mxu0 %v1927
    %v3255 = vpop.f32.mrb[0].mxu0
    %v3256 = vadd.f32 0.0, %v3255
    %v3257 = vpop.f32.mrb[0].mxu0
    %3258 = vdwg.mxu0
    %3259 = vmatprep.subr.mxu0 0.0
    %3260 = vmatpush1.msra.mxu0 %v199
    %3261 = vmatprep.subr.mxu0 0.0
    %3262 = vmatpush1.msra.mxu0 %v200
    %3263 = vmatprep.subr.mxu0 0.0
    %3264 = vmatpush1.msra.mxu0 %v201
    %3265 = vmatprep.subr.mxu0 0.0
    %3266 = vmatpush1.msra.mxu0 %v202
    %3267 = vmatprep.subr.mxu0 0.0
    %3268 = vmatpush1.msra.mxu0 0.0
    %3269 = vmatprep.subr.mxu0 0.0
    %3270 = vmatpush1.msra.mxu0 0.0
    %3271 = vmatprep.subr.mxu0 0.0
    %3272 = vmatpush1.msra.mxu0 0.0
    %3273 = vmatprep.subr.mxu0 0.0
    %3274 = vmatpush1.msra.mxu0 0.0
    %3275 = vmatprep.subr.mxu0 0.0
    %3276 = vmatpush1.msra.mxu0 0.0
    %3277 = vmatprep.subr.mxu0 0.0
    %3278 = vmatpush1.msra.mxu0 0.0
    %3279 = vmatprep.subr.mxu0 0.0
    %3280 = vmatpush1.msra.mxu0 0.0
    %3281 = vmatprep.subr.mxu0 0.0
    %3282 = vmatpush1.msra.mxu0 0.0
    %3283 = vmatprep.subr.mxu0 0.0
    %3284 = vmatpush1.msra.mxu0 0.0
    %3285 = vmatprep.subr.mxu0 0.0
    %3286 = vmatpush1.msra.mxu0 0.0
    %3287 = vmatprep.subr.mxu0 0.0
    %3288 = vmatpush1.msra.mxu0 0.0
    %3289 = vmatprep.subr.mxu0 0.0
    %3290 = vmatpush1.msra.mxu0 0.0
    %3291 = vmatprep.subr.mxu0 0.0
    %3292 = vmatpush1.msra.mxu0 0.0
    %3293 = vmatprep.subr.mxu0 0.0
    %3294 = vmatpush1.msra.mxu0 0.0
    %3295 = vmatprep.subr.mxu0 0.0
    %3296 = vmatpush1.msra.mxu0 0.0
    %3297 = vmatprep.subr.mxu0 0.0
    %3298 = vmatpush1.msra.mxu0 0.0
    %3299 = vmatprep.subr.mxu0 0.0
    %3300 = vmatpush1.msra.mxu0 0.0
    %3301 = vmatprep.subr.mxu0 0.0
    %3302 = vmatpush1.msra.mxu0 0.0
    %3303 = vmatprep.subr.mxu0 0.0
    %3304 = vmatpush1.msra.mxu0 0.0
    %3305 = vmatprep.subr.mxu0 0.0
    %3306 = vmatpush1.msra.mxu0 0.0
    %3307 = vmatprep.subr.mxu0 0.0
    %3308 = vmatpush1.msra.mxu0 0.0
    %3309 = vmatprep.subr.mxu0 0.0
    %3310 = vmatpush1.msra.mxu0 0.0
    %3311 = vmatprep.subr.mxu0 0.0
    %3312 = vmatpush1.msra.mxu0 0.0
    %3313 = vmatprep.subr.mxu0 0.0
    %3314 = vmatpush1.msra.mxu0 0.0
    %3315 = vmatprep.subr.mxu0 0.0
    %3316 = vmatpush1.msra.mxu0 0.0
    %3317 = vmatprep.subr.mxu0 0.0
    %3318 = vmatpush1.msra.mxu0 0.0
    %3319 = vmatprep.subr.mxu0 0.0
    %3320 = vmatpush1.msra.mxu0 0.0
    %3321 = vmatprep.subr.mxu0 0.0
    %3322 = vmatpush1.msra.mxu0 0.0
    %3323 = vmatprep.mubr.f32.mxu0 0.0
    %3324 = vmatmul.mubr.f32.gmra.mrb[0].mxu0 %v1927
    %v3325 = vpop.f32.mrb[0].mxu0
    %v3326 = vadd.f32 0.0, %v3325
    %v3327 = vpop.f32.mrb[0].mxu0
    %3328 = vdwg.mxu0
    %3329 = vmatprep.subr.mxu0 0.0
    %3330 = vmatpush1.msra.mxu0 %v203
    %3331 = vmatprep.subr.mxu0 0.0
    %3332 = vmatpush1.msra.mxu0 %v204
    %3333 = vmatprep.subr.mxu0 0.0
    %3334 = vmatpush1.msra.mxu0 %v205
    %3335 = vmatprep.subr.mxu0 0.0
    %3336 = vmatpush1.msra.mxu0 %v206
    %3337 = vmatprep.subr.mxu0 0.0
    %3338 = vmatpush1.msra.mxu0 0.0
    %3339 = vmatprep.subr.mxu0 0.0
    %3340 = vmatpush1.msra.mxu0 0.0
    %3341 = vmatprep.subr.mxu0 0.0
    %3342 = vmatpush1.msra.mxu0 0.0
    %3343 = vmatprep.subr.mxu0 0.0
    %3344 = vmatpush1.msra.mxu0 0.0
    %3345 = vmatprep.subr.mxu0 0.0
    %3346 = vmatpush1.msra.mxu0 0.0
    %3347 = vmatprep.subr.mxu0 0.0
    %3348 = vmatpush1.msra.mxu0 0.0
    %3349 = vmatprep.subr.mxu0 0.0
    %3350 = vmatpush1.msra.mxu0 0.0
    %3351 = vmatprep.subr.mxu0 0.0
    %3352 = vmatpush1.msra.mxu0 0.0
    %3353 = vmatprep.subr.mxu0 0.0
    %3354 = vmatpush1.msra.mxu0 0.0
    %3355 = vmatprep.subr.mxu0 0.0
    %3356 = vmatpush1.msra.mxu0 0.0
    %3357 = vmatprep.subr.mxu0 0.0
    %3358 = vmatpush1.msra.mxu0 0.0
    %3359 = vmatprep.subr.mxu0 0.0
    %3360 = vmatpush1.msra.mxu0 0.0
    %3361 = vmatprep.subr.mxu0 0.0
    %3362 = vmatpush1.msra.mxu0 0.0
    %3363 = vmatprep.subr.mxu0 0.0
    %3364 = vmatpush1.msra.mxu0 0.0
    %3365 = vmatprep.subr.mxu0 0.0
    %3366 = vmatpush1.msra.mxu0 0.0
    %3367 = vmatprep.subr.mxu0 0.0
    %3368 = vmatpush1.msra.mxu0 0.0
    %3369 = vmatprep.subr.mxu0 0.0
    %3370 = vmatpush1.msra.mxu0 0.0
    %3371 = vmatprep.subr.mxu0 0.0
    %3372 = vmatpush1.msra.mxu0 0.0
    %3373 = vmatprep.subr.mxu0 0.0
    %3374 = vmatpush1.msra.mxu0 0.0
    %3375 = vmatprep.subr.mxu0 0.0
    %3376 = vmatpush1.msra.mxu0 0.0
    %3377 = vmatprep.subr.mxu0 0.0
    %3378 = vmatpush1.msra.mxu0 0.0
    %3379 = vmatprep.subr.mxu0 0.0
    %3380 = vmatpush1.msra.mxu0 0.0
    %3381 = vmatprep.subr.mxu0 0.0
    %3382 = vmatpush1.msra.mxu0 0.0
    %3383 = vmatprep.subr.mxu0 0.0
    %3384 = vmatpush1.msra.mxu0 0.0
    %3385 = vmatprep.subr.mxu0 0.0
    %3386 = vmatpush1.msra.mxu0 0.0
    %3387 = vmatprep.subr.mxu0 0.0
    %3388 = vmatpush1.msra.mxu0 0.0
    %3389 = vmatprep.subr.mxu0 0.0
    %3390 = vmatpush1.msra.mxu0 0.0
    %3391 = vmatprep.subr.mxu0 0.0
    %3392 = vmatpush1.msra.mxu0 0.0
    %3393 = vmatprep.mubr.f32.mxu0 0.0
    %3394 = vmatmul.mubr.f32.gmra.mrb[0].mxu0 %v1927
    %v3395 = vpop.f32.mrb[0].mxu0
    %v3396 = vadd.f32 0.0, %v3395
    %v3397 = vpop.f32.mrb[0].mxu0
    %3398 = vdwg.mxu0
    %3399 = vmatprep.subr.mxu0 0.0
    %3400 = vmatpush1.msra.mxu0 %v207
    %3401 = vmatprep.subr.mxu0 0.0
    %3402 = vmatpush1.msra.mxu0 %v208
    %3403 = vmatprep.subr.mxu0 0.0
    %3404 = vmatpush1.msra.mxu0 %v209
    %3405 = vmatprep.subr.mxu0 0.0
    %3406 = vmatpush1.msra.mxu0 %v210
    %3407 = vmatprep.subr.mxu0 0.0
    %3408 = vmatpush1.msra.mxu0 0.0
    %3409 = vmatprep.subr.mxu0 0.0
    %3410 = vmatpush1.msra.mxu0 0.0
    %3411 = vmatprep.subr.mxu0 0.0
    %3412 = vmatpush1.msra.mxu0 0.0
    %3413 = vmatprep.subr.mxu0 0.0
    %3414 = vmatpush1.msra.mxu0 0.0
    %3415 = vmatprep.subr.mxu0 0.0
    %3416 = vmatpush1.msra.mxu0 0.0
    %3417 = vmatprep.subr.mxu0 0.0
    %3418 = vmatpush1.msra.mxu0 0.0
    %3419 = vmatprep.subr.mxu0 0.0
    %3420 = vmatpush1.msra.mxu0 0.0
    %3421 = vmatprep.subr.mxu0 0.0
    %3422 = vmatpush1.msra.mxu0 0.0
    %3423 = vmatprep.subr.mxu0 0.0
    %3424 = vmatpush1.msra.mxu0 0.0
    %3425 = vmatprep.subr.mxu0 0.0
    %3426 = vmatpush1.msra.mxu0 0.0
    %3427 = vmatprep.subr.mxu0 0.0
    %3428 = vmatpush1.msra.mxu0 0.0
    %3429 = vmatprep.subr.mxu0 0.0
    %3430 = vmatpush1.msra.mxu0 0.0
    %3431 = vmatprep.subr.mxu0 0.0
    %3432 = vmatpush1.msra.mxu0 0.0
    %3433 = vmatprep.subr.mxu0 0.0
    %3434 = vmatpush1.msra.mxu0 0.0
    %3435 = vmatprep.subr.mxu0 0.0
    %3436 = vmatpush1.msra.mxu0 0.0
    %3437 = vmatprep.subr.mxu0 0.0
    %3438 = vmatpush1.msra.mxu0 0.0
    %3439 = vmatprep.subr.mxu0 0.0
    %3440 = vmatpush1.msra.mxu0 0.0
    %3441 = vmatprep.subr.mxu0 0.0
    %3442 = vmatpush1.msra.mxu0 0.0
    %3443 = vmatprep.subr.mxu0 0.0
    %3444 = vmatpush1.msra.mxu0 0.0
    %3445 = vmatprep.subr.mxu0 0.0
    %3446 = vmatpush1.msra.mxu0 0.0
    %3447 = vmatprep.subr.mxu0 0.0
    %3448 = vmatpush1.msra.mxu0 0.0
    %3449 = vmatprep.subr.mxu0 0.0
    %3450 = vmatpush1.msra.mxu0 0.0
    %3451 = vmatprep.subr.mxu0 0.0
    %3452 = vmatpush1.msra.mxu0 0.0
    %3453 = vmatprep.subr.mxu0 0.0
    %3454 = vmatpush1.msra.mxu0 0.0
    %3455 = vmatprep.subr.mxu0 0.0
    %3456 = vmatpush1.msra.mxu0 0.0
    %3457 = vmatprep.subr.mxu0 0.0
    %3458 = vmatpush1.msra.mxu0 0.0
    %3459 = vmatprep.subr.mxu0 0.0
    %3460 = vmatpush1.msra.mxu0 0.0
    %3461 = vmatprep.subr.mxu0 0.0
    %3462 = vmatpush1.msra.mxu0 0.0
    %3463 = vmatprep.mubr.f32.mxu0 0.0
    %3464 = vmatmul.mubr.f32.gmra.mrb[0].mxu0 %v1927
    %v3465 = vpop.f32.mrb[0].mxu0
    %v3466 = vadd.f32 0.0, %v3465
    %v3467 = vpop.f32.mrb[0].mxu0
    %3468 = vdwg.mxu0
    %3469 = vmatprep.subr.mxu0 0.0
    %3470 = vmatpush1.msra.mxu0 %v211
    %3471 = vmatprep.subr.mxu0 0.0
    %3472 = vmatpush1.msra.mxu0 %v212
    %3473 = vmatprep.subr.mxu0 0.0
    %3474 = vmatpush1.msra.mxu0 %v213
    %3475 = vmatprep.subr.mxu0 0.0
    %3476 = vmatpush1.msra.mxu0 %v214
    %3477 = vmatprep.subr.mxu0 0.0
    %3478 = vmatpush1.msra.mxu0 0.0
    %3479 = vmatprep.subr.mxu0 0.0
    %3480 = vmatpush1.msra.mxu0 0.0
    %3481 = vmatprep.subr.mxu0 0.0
    %3482 = vmatpush1.msra.mxu0 0.0
    %3483 = vmatprep.subr.mxu0 0.0
    %3484 = vmatpush1.msra.mxu0 0.0
    %3485 = vmatprep.subr.mxu0 0.0
    %3486 = vmatpush1.msra.mxu0 0.0
    %3487 = vmatprep.subr.mxu0 0.0
    %3488 = vmatpush1.msra.mxu0 0.0
    %3489 = vmatprep.subr.mxu0 0.0
    %3490 = vmatpush1.msra.mxu0 0.0
    %3491 = vmatprep.subr.mxu0 0.0
    %3492 = vmatpush1.msra.mxu0 0.0
    %3493 = vmatprep.subr.mxu0 0.0
    %3494 = vmatpush1.msra.mxu0 0.0
    %3495 = vmatprep.subr.mxu0 0.0
    %3496 = vmatpush1.msra.mxu0 0.0
    %3497 = vmatprep.subr.mxu0 0.0
    %3498 = vmatpush1.msra.mxu0 0.0
    %3499 = vmatprep.subr.mxu0 0.0
    %3500 = vmatpush1.msra.mxu0 0.0
    %3501 = vmatprep.subr.mxu0 0.0
    %3502 = vmatpush1.msra.mxu0 0.0
    %3503 = vmatprep.subr.mxu0 0.0
    %3504 = vmatpush1.msra.mxu0 0.0
    %3505 = vmatprep.subr.mxu0 0.0
    %3506 = vmatpush1.msra.mxu0 0.0
    %3507 = vmatprep.subr.mxu0 0.0
    %3508 = vmatpush1.msra.mxu0 0.0
    %3509 = vmatprep.subr.mxu0 0.0
    %3510 = vmatpush1.msra.mxu0 0.0
    %3511 = vmatprep.subr.mxu0 0.0
    %3512 = vmatpush1.msra.mxu0 0.0
    %3513 = vmatprep.subr.mxu0 0.0
    %3514 = vmatpush1.msra.mxu0 0.0
    %3515 = vmatprep.subr.mxu0 0.0
    %3516 = vmatpush1.msra.mxu0 0.0
    %3517 = vmatprep.subr.mxu0 0.0
    %3518 = vmatpush1.msra.mxu0 0.0
    %3519 = vmatprep.subr.mxu0 0.0
    %3520 = vmatpush1.msra.mxu0 0.0
    %3521 = vmatprep.subr.mxu0 0.0
    %3522 = vmatpush1.msra.mxu0 0.0
    %3523 = vmatprep.subr.mxu0 0.0
    %3524 = vmatpush1.msra.mxu0 0.0
    %3525 = vmatprep.subr.mxu0 0.0
    %3526 = vmatpush1.msra.mxu0 0.0
    %3527 = vmatprep.subr.mxu0 0.0
    %3528 = vmatpush1.msra.mxu0 0.0
    %3529 = vmatprep.subr.mxu0 0.0
    %3530 = vmatpush1.msra.mxu0 0.0
    %3531 = vmatprep.subr.mxu0 0.0
    %3532 = vmatpush1.msra.mxu0 0.0
    %3533 = vmatprep.mubr.f32.mxu0 0.0
    %3534 = vmatmul.mubr.f32.gmra.mrb[0].mxu0 %v1927
    %v3535 = vpop.f32.mrb[0].mxu0
    %v3536 = vadd.f32 0.0, %v3535
    %v3537 = vpop.f32.mrb[0].mxu0
    %3538 = vdwg.mxu0
    %3539 = vmatprep.subr.mxu0 0.0
    %3540 = vmatpush1.msra.mxu0 %v215
    %3541 = vmatprep.subr.mxu0 0.0
    %3542 = vmatpush1.msra.mxu0 %v216
    %3543 = vmatprep.subr.mxu0 0.0
    %3544 = vmatpush1.msra.mxu0 %v217
    %3545 = vmatprep.subr.mxu0 0.0
    %3546 = vmatpush1.msra.mxu0 %v218
    %3547 = vmatprep.subr.mxu0 0.0
    %3548 = vmatpush1.msra.mxu0 0.0
    %3549 = vmatprep.subr.mxu0 0.0
    %3550 = vmatpush1.msra.mxu0 0.0
    %3551 = vmatprep.subr.mxu0 0.0
    %3552 = vmatpush1.msra.mxu0 0.0
    %3553 = vmatprep.subr.mxu0 0.0
    %3554 = vmatpush1.msra.mxu0 0.0
    %3555 = vmatprep.subr.mxu0 0.0
    %3556 = vmatpush1.msra.mxu0 0.0
    %3557 = vmatprep.subr.mxu0 0.0
    %3558 = vmatpush1.msra.mxu0 0.0
    %3559 = vmatprep.subr.mxu0 0.0
    %3560 = vmatpush1.msra.mxu0 0.0
    %3561 = vmatprep.subr.mxu0 0.0
    %3562 = vmatpush1.msra.mxu0 0.0
    %3563 = vmatprep.subr.mxu0 0.0
    %3564 = vmatpush1.msra.mxu0 0.0
    %3565 = vmatprep.subr.mxu0 0.0
    %3566 = vmatpush1.msra.mxu0 0.0
    %3567 = vmatprep.subr.mxu0 0.0
    %3568 = vmatpush1.msra.mxu0 0.0
    %3569 = vmatprep.subr.mxu0 0.0
    %3570 = vmatpush1.msra.mxu0 0.0
    %3571 = vmatprep.subr.mxu0 0.0
    %3572 = vmatpush1.msra.mxu0 0.0
    %3573 = vmatprep.subr.mxu0 0.0
    %3574 = vmatpush1.msra.mxu0 0.0
    %3575 = vmatprep.subr.mxu0 0.0
    %3576 = vmatpush1.msra.mxu0 0.0
    %3577 = vmatprep.subr.mxu0 0.0
    %3578 = vmatpush1.msra.mxu0 0.0
    %3579 = vmatprep.subr.mxu0 0.0
    %3580 = vmatpush1.msra.mxu0 0.0
    %3581 = vmatprep.subr.mxu0 0.0
    %3582 = vmatpush1.msra.mxu0 0.0
    %3583 = vmatprep.subr.mxu0 0.0
    %3584 = vmatpush1.msra.mxu0 0.0
    %3585 = vmatprep.subr.mxu0 0.0
    %3586 = vmatpush1.msra.mxu0 0.0
    %3587 = vmatprep.subr.mxu0 0.0
    %3588 = vmatpush1.msra.mxu0 0.0
    %3589 = vmatprep.subr.mxu0 0.0
    %3590 = vmatpush1.msra.mxu0 0.0
    %3591 = vmatprep.subr.mxu0 0.0
    %3592 = vmatpush1.msra.mxu0 0.0
    %3593 = vmatprep.subr.mxu0 0.0
    %3594 = vmatpush1.msra.mxu0 0.0
    %3595 = vmatprep.subr.mxu0 0.0
    %3596 = vmatpush1.msra.mxu0 0.0
    %3597 = vmatprep.subr.mxu0 0.0
    %3598 = vmatpush1.msra.mxu0 0.0
    %3599 = vmatprep.subr.mxu0 0.0
    %3600 = vmatpush1.msra.mxu0 0.0
    %3601 = vmatprep.subr.mxu0 0.0
    %3602 = vmatpush1.msra.mxu0 0.0
    %3603 = vmatprep.mubr.f32.mxu0 0.0
    %3604 = vmatmul.mubr.f32.gmra.mrb[0].mxu0 %v1927
    %v3605 = vpop.f32.mrb[0].mxu0
    %v3606 = vadd.f32 0.0, %v3605
    %v3607 = vpop.f32.mrb[0].mxu0
    %3608 = vdwg.mxu0
    %vm3609 = vcmask 31744
    %v3611 = vsel %vm3609, %v310, 0
    %v3614 = vsel %vm3609, %v1433, 0
    %3616 = vmatprep.subr.mxu0 0.0
    %3617 = vmatpush1.xpose.msra.mxu0 %v3614
    %3618 = vmatprep.subr.mxu0 0.0
    %3619 = vmatpush1.xpose.msra.mxu0 0.0
    %3620 = vmatprep.subr.mxu0 0.0
    %3621 = vmatpush1.xpose.msra.mxu0 0.0
    %3622 = vmatprep.subr.mxu0 0.0
    %3623 = vmatpush1.xpose.msra.mxu0 0.0
    %3624 = vmatprep.subr.mxu0 0.0
    %3625 = vmatpush1.xpose.msra.mxu0 0.0
    %3626 = vmatprep.subr.mxu0 0.0
    %3627 = vmatpush1.xpose.msra.mxu0 0.0
    %3628 = vmatprep.subr.mxu0 0.0
    %3629 = vmatpush1.xpose.msra.mxu0 0.0
    %3630 = vmatprep.subr.mxu0 0.0
    %3631 = vmatpush1.xpose.msra.mxu0 0.0
    %3632 = vmatprep.subr.mxu0 0.0
    %3633 = vmatpush1.xpose.msra.mxu0 0.0
    %3634 = vmatprep.subr.mxu0 0.0
    %3635 = vmatpush1.xpose.msra.mxu0 0.0
    %3636 = vmatprep.subr.mxu0 0.0
    %3637 = vmatpush1.xpose.msra.mxu0 0.0
    %3638 = vmatprep.subr.mxu0 0.0
    %3639 = vmatpush1.xpose.msra.mxu0 0.0
    %3640 = vmatprep.subr.mxu0 0.0
    %3641 = vmatpush1.xpose.msra.mxu0 0.0
    %3642 = vmatprep.subr.mxu0 0.0
    %3643 = vmatpush1.xpose.msra.mxu0 0.0
    %3644 = vmatprep.subr.mxu0 0.0
    %3645 = vmatpush1.xpose.msra.mxu0 0.0
    %3646 = vmatprep.subr.mxu0 0.0
    %3647 = vmatpush1.xpose.msra.mxu0 0.0
    %3648 = vmatprep.subr.mxu0 0.0
    %3649 = vmatpush1.xpose.msra.mxu0 0.0
    %3650 = vmatprep.subr.mxu0 0.0
    %3651 = vmatpush1.xpose.msra.mxu0 0.0
    %3652 = vmatprep.subr.mxu0 0.0
    %3653 = vmatpush1.xpose.msra.mxu0 0.0
    %3654 = vmatprep.subr.mxu0 0.0
    %3655 = vmatpush1.xpose.msra.mxu0 0.0
    %3656 = vmatprep.subr.mxu0 0.0
    %3657 = vmatpush1.xpose.msra.mxu0 0.0
    %3658 = vmatprep.subr.mxu0 0.0
    %3659 = vmatpush1.xpose.msra.mxu0 0.0
    %3660 = vmatprep.subr.mxu0 0.0
    %3661 = vmatpush1.xpose.msra.mxu0 0.0
    %3662 = vmatprep.subr.mxu0 0.0
    %3663 = vmatpush1.xpose.msra.mxu0 0.0
    %3664 = vmatprep.subr.mxu0 0.0
    %3665 = vmatpush1.xpose.msra.mxu0 0.0
    %3666 = vmatprep.subr.mxu0 0.0
    %3667 = vmatpush1.xpose.msra.mxu0 0.0
    %3668 = vmatprep.subr.mxu0 0.0
    %3669 = vmatpush1.xpose.msra.mxu0 0.0
    %3670 = vmatprep.subr.mxu0 0.0
    %3671 = vmatpush1.xpose.msra.mxu0 0.0
    %3672 = vmatprep.subr.mxu0 0.0
    %3673 = vmatpush1.xpose.msra.mxu0 0.0
    %3674 = vmatprep.subr.mxu0 0.0
    %3675 = vmatpush1.xpose.msra.mxu0 0.0
    %3676 = vmatprep.subr.mxu0 0.0
    %3677 = vmatpush1.xpose.msra.mxu0 0.0
    %3678 = vmatprep.subr.mxu0 0.0
    %3679 = vmatpush1.xpose.msra.mxu0 0.0
    %3680 = vmatprep.mubr.f32.mxu0 0.0
    %3681 = vmatmul.mubr.f32.gmra.mrb[0].mxu0 %v3611
    %v3682 = vpop.f32.mrb[0].mxu0
    %v3683 = vadd.f32 0.0, %v3682
    %v3684 = vpop.f32.mrb[0].mxu0
    %3685 = vdwg.mxu0
    %v3687 = vsel %vm3609, %v380, 0
    %v3690 = vsel %vm3609, %v1503, 0
    %3692 = vmatprep.subr.mxu0 0.0
    %3693 = vmatpush1.xpose.msra.mxu0 %v3690
    %3694 = vmatprep.subr.mxu0 0.0
    %3695 = vmatpush1.xpose.msra.mxu0 0.0
    %3696 = vmatprep.subr.mxu0 0.0
    %3697 = vmatpush1.xpose.msra.mxu0 0.0
    %3698 = vmatprep.subr.mxu0 0.0
    %3699 = vmatpush1.xpose.msra.mxu0 0.0
    %3700 = vmatprep.subr.mxu0 0.0
    %3701 = vmatpush1.xpose.msra.mxu0 0.0
    %3702 = vmatprep.subr.mxu0 0.0
    %3703 = vmatpush1.xpose.msra.mxu0 0.0
    %3704 = vmatprep.subr.mxu0 0.0
    %3705 = vmatpush1.xpose.msra.mxu0 0.0
    %3706 = vmatprep.subr.mxu0 0.0
    %3707 = vmatpush1.xpose.msra.mxu0 0.0
    %3708 = vmatprep.subr.mxu0 0.0
    %3709 = vmatpush1.xpose.msra.mxu0 0.0
    %3710 = vmatprep.subr.mxu0 0.0
    %3711 = vmatpush1.xpose.msra.mxu0 0.0
    %3712 = vmatprep.subr.mxu0 0.0
    %3713 = vmatpush1.xpose.msra.mxu0 0.0
    %3714 = vmatprep.subr.mxu0 0.0
    %3715 = vmatpush1.xpose.msra.mxu0 0.0
    %3716 = vmatprep.subr.mxu0 0.0
    %3717 = vmatpush1.xpose.msra.mxu0 0.0
    %3718 = vmatprep.subr.mxu0 0.0
    %3719 = vmatpush1.xpose.msra.mxu0 0.0
    %3720 = vmatprep.subr.mxu0 0.0
    %3721 = vmatpush1.xpose.msra.mxu0 0.0
    %3722 = vmatprep.subr.mxu0 0.0
    %3723 = vmatpush1.xpose.msra.mxu0 0.0
    %3724 = vmatprep.subr.mxu0 0.0
    %3725 = vmatpush1.xpose.msra.mxu0 0.0
    %3726 = vmatprep.subr.mxu0 0.0
    %3727 = vmatpush1.xpose.msra.mxu0 0.0
    %3728 = vmatprep.subr.mxu0 0.0
    %3729 = vmatpush1.xpose.msra.mxu0 0.0
    %3730 = vmatprep.subr.mxu0 0.0
    %3731 = vmatpush1.xpose.msra.mxu0 0.0
    %3732 = vmatprep.subr.mxu0 0.0
    %3733 = vmatpush1.xpose.msra.mxu0 0.0
    %3734 = vmatprep.subr.mxu0 0.0
    %3735 = vmatpush1.xpose.msra.mxu0 0.0
    %3736 = vmatprep.subr.mxu0 0.0
    %3737 = vmatpush1.xpose.msra.mxu0 0.0
    %3738 = vmatprep.subr.mxu0 0.0
    %3739 = vmatpush1.xpose.msra.mxu0 0.0
    %3740 = vmatprep.subr.mxu0 0.0
    %3741 = vmatpush1.xpose.msra.mxu0 0.0
    %3742 = vmatprep.subr.mxu0 0.0
    %3743 = vmatpush1.xpose.msra.mxu0 0.0
    %3744 = vmatprep.subr.mxu0 0.0
    %3745 = vmatpush1.xpose.msra.mxu0 0.0
    %3746 = vmatprep.subr.mxu0 0.0
    %3747 = vmatpush1.xpose.msra.mxu0 0.0
    %3748 = vmatprep.subr.mxu0 0.0
    %3749 = vmatpush1.xpose.msra.mxu0 0.0
    %3750 = vmatprep.subr.mxu0 0.0
    %3751 = vmatpush1.xpose.msra.mxu0 0.0
    %3752 = vmatprep.subr.mxu0 0.0
    %3753 = vmatpush1.xpose.msra.mxu0 0.0
    %3754 = vmatprep.subr.mxu0 0.0
    %3755 = vmatpush1.xpose.msra.mxu0 0.0
    %3756 = vmatprep.mubr.f32.mxu0 0.0
    %3757 = vmatmul.mubr.f32.gmra.mrb[0].mxu0 %v3687
    %v3758 = vpop.f32.mrb[0].mxu0
    %v3759 = vadd.f32 0.0, %v3758
    %v3760 = vpop.f32.mrb[0].mxu0
    %3761 = vdwg.mxu0
    %v3763 = vsel %vm3609, %v450, 0
    %v3766 = vsel %vm3609, %v1573, 0
    %3768 = vmatprep.subr.mxu0 0.0
    %3769 = vmatpush1.xpose.msra.mxu0 %v3766
    %3770 = vmatprep.subr.mxu0 0.0
    %3771 = vmatpush1.xpose.msra.mxu0 0.0
    %3772 = vmatprep.subr.mxu0 0.0
    %3773 = vmatpush1.xpose.msra.mxu0 0.0
    %3774 = vmatprep.subr.mxu0 0.0
    %3775 = vmatpush1.xpose.msra.mxu0 0.0
    %3776 = vmatprep.subr.mxu0 0.0
    %3777 = vmatpush1.xpose.msra.mxu0 0.0
    %3778 = vmatprep.subr.mxu0 0.0
    %3779 = vmatpush1.xpose.msra.mxu0 0.0
    %3780 = vmatprep.subr.mxu0 0.0
    %3781 = vmatpush1.xpose.msra.mxu0 0.0
    %3782 = vmatprep.subr.mxu0 0.0
    %3783 = vmatpush1.xpose.msra.mxu0 0.0
    %3784 = vmatprep.subr.mxu0 0.0
    %3785 = vmatpush1.xpose.msra.mxu0 0.0
    %3786 = vmatprep.subr.mxu0 0.0
    %3787 = vmatpush1.xpose.msra.mxu0 0.0
    %3788 = vmatprep.subr.mxu0 0.0
    %3789 = vmatpush1.xpose.msra.mxu0 0.0
    %3790 = vmatprep.subr.mxu0 0.0
    %3791 = vmatpush1.xpose.msra.mxu0 0.0
    %3792 = vmatprep.subr.mxu0 0.0
    %3793 = vmatpush1.xpose.msra.mxu0 0.0
    %3794 = vmatprep.subr.mxu0 0.0
    %3795 = vmatpush1.xpose.msra.mxu0 0.0
    %3796 = vmatprep.subr.mxu0 0.0
    %3797 = vmatpush1.xpose.msra.mxu0 0.0
    %3798 = vmatprep.subr.mxu0 0.0
    %3799 = vmatpush1.xpose.msra.mxu0 0.0
    %3800 = vmatprep.subr.mxu0 0.0
    %3801 = vmatpush1.xpose.msra.mxu0 0.0
    %3802 = vmatprep.subr.mxu0 0.0
    %3803 = vmatpush1.xpose.msra.mxu0 0.0
    %3804 = vmatprep.subr.mxu0 0.0
    %3805 = vmatpush1.xpose.msra.mxu0 0.0
    %3806 = vmatprep.subr.mxu0 0.0
    %3807 = vmatpush1.xpose.msra.mxu0 0.0
    %3808 = vmatprep.subr.mxu0 0.0
    %3809 = vmatpush1.xpose.msra.mxu0 0.0
    %3810 = vmatprep.subr.mxu0 0.0
    %3811 = vmatpush1.xpose.msra.mxu0 0.0
    %3812 = vmatprep.subr.mxu0 0.0
    %3813 = vmatpush1.xpose.msra.mxu0 0.0
    %3814 = vmatprep.subr.mxu0 0.0
    %3815 = vmatpush1.xpose.msra.mxu0 0.0
    %3816 = vmatprep.subr.mxu0 0.0
    %3817 = vmatpush1.xpose.msra.mxu0 0.0
    %3818 = vmatprep.subr.mxu0 0.0
    %3819 = vmatpush1.xpose.msra.mxu0 0.0
    %3820 = vmatprep.subr.mxu0 0.0
    %3821 = vmatpush1.xpose.msra.mxu0 0.0
    %3822 = vmatprep.subr.mxu0 0.0
    %3823 = vmatpush1.xpose.msra.mxu0 0.0
    %3824 = vmatprep.subr.mxu0 0.0
    %3825 = vmatpush1.xpose.msra.mxu0 0.0
    %3826 = vmatprep.subr.mxu0 0.0
    %3827 = vmatpush1.xpose.msra.mxu0 0.0
    %3828 = vmatprep.subr.mxu0 0.0
    %3829 = vmatpush1.xpose.msra.mxu0 0.0
    %3830 = vmatprep.subr.mxu0 0.0
    %3831 = vmatpush1.xpose.msra.mxu0 0.0
    %3832 = vmatprep.mubr.f32.mxu0 0.0
    %3833 = vmatmul.mubr.f32.gmra.mrb[0].mxu0 %v3763
    %v3834 = vpop.f32.mrb[0].mxu0
    %v3835 = vadd.f32 0.0, %v3834
    %v3836 = vpop.f32.mrb[0].mxu0
    %3837 = vdwg.mxu0
    %v3839 = vsel %vm3609, %v520, 0
    %v3842 = vsel %vm3609, %v1643, 0
    %3844 = vmatprep.subr.mxu0 0.0
    %3845 = vmatpush1.xpose.msra.mxu0 %v3842
    %3846 = vmatprep.subr.mxu0 0.0
    %3847 = vmatpush1.xpose.msra.mxu0 0.0
    %3848 = vmatprep.subr.mxu0 0.0
    %3849 = vmatpush1.xpose.msra.mxu0 0.0
    %3850 = vmatprep.subr.mxu0 0.0
    %3851 = vmatpush1.xpose.msra.mxu0 0.0
    %3852 = vmatprep.subr.mxu0 0.0
    %3853 = vmatpush1.xpose.msra.mxu0 0.0
    %3854 = vmatprep.subr.mxu0 0.0
    %3855 = vmatpush1.xpose.msra.mxu0 0.0
    %3856 = vmatprep.subr.mxu0 0.0
    %3857 = vmatpush1.xpose.msra.mxu0 0.0
    %3858 = vmatprep.subr.mxu0 0.0
    %3859 = vmatpush1.xpose.msra.mxu0 0.0
    %3860 = vmatprep.subr.mxu0 0.0
    %3861 = vmatpush1.xpose.msra.mxu0 0.0
    %3862 = vmatprep.subr.mxu0 0.0
    %3863 = vmatpush1.xpose.msra.mxu0 0.0
    %3864 = vmatprep.subr.mxu0 0.0
    %3865 = vmatpush1.xpose.msra.mxu0 0.0
    %3866 = vmatprep.subr.mxu0 0.0
    %3867 = vmatpush1.xpose.msra.mxu0 0.0
    %3868 = vmatprep.subr.mxu0 0.0
    %3869 = vmatpush1.xpose.msra.mxu0 0.0
    %3870 = vmatprep.subr.mxu0 0.0
    %3871 = vmatpush1.xpose.msra.mxu0 0.0
    %3872 = vmatprep.subr.mxu0 0.0
    %3873 = vmatpush1.xpose.msra.mxu0 0.0
    %3874 = vmatprep.subr.mxu0 0.0
    %3875 = vmatpush1.xpose.msra.mxu0 0.0
    %3876 = vmatprep.subr.mxu0 0.0
    %3877 = vmatpush1.xpose.msra.mxu0 0.0
    %3878 = vmatprep.subr.mxu0 0.0
    %3879 = vmatpush1.xpose.msra.mxu0 0.0
    %3880 = vmatprep.subr.mxu0 0.0
    %3881 = vmatpush1.xpose.msra.mxu0 0.0
    %3882 = vmatprep.subr.mxu0 0.0
    %3883 = vmatpush1.xpose.msra.mxu0 0.0
    %3884 = vmatprep.subr.mxu0 0.0
    %3885 = vmatpush1.xpose.msra.mxu0 0.0
    %3886 = vmatprep.subr.mxu0 0.0
    %3887 = vmatpush1.xpose.msra.mxu0 0.0
    %3888 = vmatprep.subr.mxu0 0.0
    %3889 = vmatpush1.xpose.msra.mxu0 0.0
    %3890 = vmatprep.subr.mxu0 0.0
    %3891 = vmatpush1.xpose.msra.mxu0 0.0
    %3892 = vmatprep.subr.mxu0 0.0
    %3893 = vmatpush1.xpose.msra.mxu0 0.0
    %3894 = vmatprep.subr.mxu0 0.0
    %3895 = vmatpush1.xpose.msra.mxu0 0.0
    %3896 = vmatprep.subr.mxu0 0.0
    %3897 = vmatpush1.xpose.msra.mxu0 0.0
    %3898 = vmatprep.subr.mxu0 0.0
    %3899 = vmatpush1.xpose.msra.mxu0 0.0
    %3900 = vmatprep.subr.mxu0 0.0
    %3901 = vmatpush1.xpose.msra.mxu0 0.0
    %3902 = vmatprep.subr.mxu0 0.0
    %3903 = vmatpush1.xpose.msra.mxu0 0.0
    %3904 = vmatprep.subr.mxu0 0.0
    %3905 = vmatpush1.xpose.msra.mxu0 0.0
    %3906 = vmatprep.subr.mxu0 0.0
    %3907 = vmatpush1.xpose.msra.mxu0 0.0
    %3908 = vmatprep.mubr.f32.mxu0 0.0
    %3909 = vmatmul.mubr.f32.gmra.mrb[0].mxu0 %v3839
    %v3910 = vpop.f32.mrb[0].mxu0
    %v3911 = vadd.f32 0.0, %v3910
    %v3912 = vpop.f32.mrb[0].mxu0
    %3913 = vdwg.mxu0
    %v3915 = vsel %vm3609, %v590, 0
    %v3918 = vsel %vm3609, %v1713, 0
    %3920 = vmatprep.subr.mxu0 0.0
    %3921 = vmatpush1.xpose.msra.mxu0 %v3918
    %3922 = vmatprep.subr.mxu0 0.0
    %3923 = vmatpush1.xpose.msra.mxu0 0.0
    %3924 = vmatprep.subr.mxu0 0.0
    %3925 = vmatpush1.xpose.msra.mxu0 0.0
    %3926 = vmatprep.subr.mxu0 0.0
    %3927 = vmatpush1.xpose.msra.mxu0 0.0
    %3928 = vmatprep.subr.mxu0 0.0
    %3929 = vmatpush1.xpose.msra.mxu0 0.0
    %3930 = vmatprep.subr.mxu0 0.0
    %3931 = vmatpush1.xpose.msra.mxu0 0.0
    %3932 = vmatprep.subr.mxu0 0.0
    %3933 = vmatpush1.xpose.msra.mxu0 0.0
    %3934 = vmatprep.subr.mxu0 0.0
    %3935 = vmatpush1.xpose.msra.mxu0 0.0
    %3936 = vmatprep.subr.mxu0 0.0
    %3937 = vmatpush1.xpose.msra.mxu0 0.0
    %3938 = vmatprep.subr.mxu0 0.0
    %3939 = vmatpush1.xpose.msra.mxu0 0.0
    %3940 = vmatprep.subr.mxu0 0.0
    %3941 = vmatpush1.xpose.msra.mxu0 0.0
    %3942 = vmatprep.subr.mxu0 0.0
    %3943 = vmatpush1.xpose.msra.mxu0 0.0
    %3944 = vmatprep.subr.mxu0 0.0
    %3945 = vmatpush1.xpose.msra.mxu0 0.0
    %3946 = vmatprep.subr.mxu0 0.0
    %3947 = vmatpush1.xpose.msra.mxu0 0.0
    %3948 = vmatprep.subr.mxu0 0.0
    %3949 = vmatpush1.xpose.msra.mxu0 0.0
    %3950 = vmatprep.subr.mxu0 0.0
    %3951 = vmatpush1.xpose.msra.mxu0 0.0
    %3952 = vmatprep.subr.mxu0 0.0
    %3953 = vmatpush1.xpose.msra.mxu0 0.0
    %3954 = vmatprep.subr.mxu0 0.0
    %3955 = vmatpush1.xpose.msra.mxu0 0.0
    %3956 = vmatprep.subr.mxu0 0.0
    %3957 = vmatpush1.xpose.msra.mxu0 0.0
    %3958 = vmatprep.subr.mxu0 0.0
    %3959 = vmatpush1.xpose.msra.mxu0 0.0
    %3960 = vmatprep.subr.mxu0 0.0
    %3961 = vmatpush1.xpose.msra.mxu0 0.0
    %3962 = vmatprep.subr.mxu0 0.0
    %3963 = vmatpush1.xpose.msra.mxu0 0.0
    %3964 = vmatprep.subr.mxu0 0.0
    %3965 = vmatpush1.xpose.msra.mxu0 0.0
    %3966 = vmatprep.subr.mxu0 0.0
    %3967 = vmatpush1.xpose.msra.mxu0 0.0
    %3968 = vmatprep.subr.mxu0 0.0
    %3969 = vmatpush1.xpose.msra.mxu0 0.0
    %3970 = vmatprep.subr.mxu0 0.0
    %3971 = vmatpush1.xpose.msra.mxu0 0.0
    %3972 = vmatprep.subr.mxu0 0.0
    %3973 = vmatpush1.xpose.msra.mxu0 0.0
    %3974 = vmatprep.subr.mxu0 0.0
    %3975 = vmatpush1.xpose.msra.mxu0 0.0
    %3976 = vmatprep.subr.mxu0 0.0
    %3977 = vmatpush1.xpose.msra.mxu0 0.0
    %3978 = vmatprep.subr.mxu0 0.0
    %3979 = vmatpush1.xpose.msra.mxu0 0.0
    %3980 = vmatprep.subr.mxu0 0.0
    %3981 = vmatpush1.xpose.msra.mxu0 0.0
    %3982 = vmatprep.subr.mxu0 0.0
    %3983 = vmatpush1.xpose.msra.mxu0 0.0
    %3984 = vmatprep.mubr.f32.mxu0 0.0
    %3985 = vmatmul.mubr.f32.gmra.mrb[0].mxu0 %v3915
    %v3986 = vpop.f32.mrb[0].mxu0
    %v3987 = vadd.f32 0.0, %v3986
    %v3988 = vpop.f32.mrb[0].mxu0
    %3989 = vdwg.mxu0
    %v3991 = vsel %vm3609, %v660, 0
    %v3994 = vsel %vm3609, %v1783, 0
    %3996 = vmatprep.subr.mxu0 0.0
    %3997 = vmatpush1.xpose.msra.mxu0 %v3994
    %3998 = vmatprep.subr.mxu0 0.0
    %3999 = vmatpush1.xpose.msra.mxu0 0.0
    %4000 = vmatprep.subr.mxu0 0.0
    %4001 = vmatpush1.xpose.msra.mxu0 0.0
    %4002 = vmatprep.subr.mxu0 0.0
    %4003 = vmatpush1.xpose.msra.mxu0 0.0
    %4004 = vmatprep.subr.mxu0 0.0
    %4005 = vmatpush1.xpose.msra.mxu0 0.0
    %4006 = vmatprep.subr.mxu0 0.0
    %4007 = vmatpush1.xpose.msra.mxu0 0.0
    %4008 = vmatprep.subr.mxu0 0.0
    %4009 = vmatpush1.xpose.msra.mxu0 0.0
    %4010 = vmatprep.subr.mxu0 0.0
    %4011 = vmatpush1.xpose.msra.mxu0 0.0
    %4012 = vmatprep.subr.mxu0 0.0
    %4013 = vmatpush1.xpose.msra.mxu0 0.0
    %4014 = vmatprep.subr.mxu0 0.0
    %4015 = vmatpush1.xpose.msra.mxu0 0.0
    %4016 = vmatprep.subr.mxu0 0.0
    %4017 = vmatpush1.xpose.msra.mxu0 0.0
    %4018 = vmatprep.subr.mxu0 0.0
    %4019 = vmatpush1.xpose.msra.mxu0 0.0
    %4020 = vmatprep.subr.mxu0 0.0
    %4021 = vmatpush1.xpose.msra.mxu0 0.0
    %4022 = vmatprep.subr.mxu0 0.0
    %4023 = vmatpush1.xpose.msra.mxu0 0.0
    %4024 = vmatprep.subr.mxu0 0.0
    %4025 = vmatpush1.xpose.msra.mxu0 0.0
    %4026 = vmatprep.subr.mxu0 0.0
    %4027 = vmatpush1.xpose.msra.mxu0 0.0
    %4028 = vmatprep.subr.mxu0 0.0
    %4029 = vmatpush1.xpose.msra.mxu0 0.0
    %4030 = vmatprep.subr.mxu0 0.0
    %4031 = vmatpush1.xpose.msra.mxu0 0.0
    %4032 = vmatprep.subr.mxu0 0.0
    %4033 = vmatpush1.xpose.msra.mxu0 0.0
    %4034 = vmatprep.subr.mxu0 0.0
    %4035 = vmatpush1.xpose.msra.mxu0 0.0
    %4036 = vmatprep.subr.mxu0 0.0
    %4037 = vmatpush1.xpose.msra.mxu0 0.0
    %4038 = vmatprep.subr.mxu0 0.0
    %4039 = vmatpush1.xpose.msra.mxu0 0.0
    %4040 = vmatprep.subr.mxu0 0.0
    %4041 = vmatpush1.xpose.msra.mxu0 0.0
    %4042 = vmatprep.subr.mxu0 0.0
    %4043 = vmatpush1.xpose.msra.mxu0 0.0
    %4044 = vmatprep.subr.mxu0 0.0
    %4045 = vmatpush1.xpose.msra.mxu0 0.0
    %4046 = vmatprep.subr.mxu0 0.0
    %4047 = vmatpush1.xpose.msra.mxu0 0.0
    %4048 = vmatprep.subr.mxu0 0.0
    %4049 = vmatpush1.xpose.msra.mxu0 0.0
    %4050 = vmatprep.subr.mxu0 0.0
    %4051 = vmatpush1.xpose.msra.mxu0 0.0
    %4052 = vmatprep.subr.mxu0 0.0
    %4053 = vmatpush1.xpose.msra.mxu0 0.0
    %4054 = vmatprep.subr.mxu0 0.0
    %4055 = vmatpush1.xpose.msra.mxu0 0.0
    %4056 = vmatprep.subr.mxu0 0.0
    %4057 = vmatpush1.xpose.msra.mxu0 0.0
    %4058 = vmatprep.subr.mxu0 0.0
    %4059 = vmatpush1.xpose.msra.mxu0 0.0
    %4060 = vmatprep.mubr.f32.mxu0 0.0
    %4061 = vmatmul.mubr.f32.gmra.mrb[0].mxu0 %v3991
    %v4062 = vpop.f32.mrb[0].mxu0
    %v4063 = vadd.f32 0.0, %v4062
    %v4064 = vpop.f32.mrb[0].mxu0
    %4065 = vdwg.mxu0
    %v4067 = vsel %vm3609, %v730, 0
    %v4070 = vsel %vm3609, %v1853, 0
    %4072 = vmatprep.subr.mxu0 0.0
    %4073 = vmatpush1.xpose.msra.mxu0 %v4070
    %4074 = vmatprep.subr.mxu0 0.0
    %4075 = vmatpush1.xpose.msra.mxu0 0.0
    %4076 = vmatprep.subr.mxu0 0.0
    %4077 = vmatpush1.xpose.msra.mxu0 0.0
    %4078 = vmatprep.subr.mxu0 0.0
    %4079 = vmatpush1.xpose.msra.mxu0 0.0
    %4080 = vmatprep.subr.mxu0 0.0
    %4081 = vmatpush1.xpose.msra.mxu0 0.0
    %4082 = vmatprep.subr.mxu0 0.0
    %4083 = vmatpush1.xpose.msra.mxu0 0.0
    %4084 = vmatprep.subr.mxu0 0.0
    %4085 = vmatpush1.xpose.msra.mxu0 0.0
    %4086 = vmatprep.subr.mxu0 0.0
    %4087 = vmatpush1.xpose.msra.mxu0 0.0
    %4088 = vmatprep.subr.mxu0 0.0
    %4089 = vmatpush1.xpose.msra.mxu0 0.0
    %4090 = vmatprep.subr.mxu0 0.0
    %4091 = vmatpush1.xpose.msra.mxu0 0.0
    %4092 = vmatprep.subr.mxu0 0.0
    %4093 = vmatpush1.xpose.msra.mxu0 0.0
    %4094 = vmatprep.subr.mxu0 0.0
    %4095 = vmatpush1.xpose.msra.mxu0 0.0
    %4096 = vmatprep.subr.mxu0 0.0
    %4097 = vmatpush1.xpose.msra.mxu0 0.0
    %4098 = vmatprep.subr.mxu0 0.0
    %4099 = vmatpush1.xpose.msra.mxu0 0.0
    %4100 = vmatprep.subr.mxu0 0.0
    %4101 = vmatpush1.xpose.msra.mxu0 0.0
    %4102 = vmatprep.subr.mxu0 0.0
    %4103 = vmatpush1.xpose.msra.mxu0 0.0
    %4104 = vmatprep.subr.mxu0 0.0
    %4105 = vmatpush1.xpose.msra.mxu0 0.0
    %4106 = vmatprep.subr.mxu0 0.0
    %4107 = vmatpush1.xpose.msra.mxu0 0.0
    %4108 = vmatprep.subr.mxu0 0.0
    %4109 = vmatpush1.xpose.msra.mxu0 0.0
    %4110 = vmatprep.subr.mxu0 0.0
    %4111 = vmatpush1.xpose.msra.mxu0 0.0
    %4112 = vmatprep.subr.mxu0 0.0
    %4113 = vmatpush1.xpose.msra.mxu0 0.0
    %4114 = vmatprep.subr.mxu0 0.0
    %4115 = vmatpush1.xpose.msra.mxu0 0.0
    %4116 = vmatprep.subr.mxu0 0.0
    %4117 = vmatpush1.xpose.msra.mxu0 0.0
    %4118 = vmatprep.subr.mxu0 0.0
    %4119 = vmatpush1.xpose.msra.mxu0 0.0
    %4120 = vmatprep.subr.mxu0 0.0
    %4121 = vmatpush1.xpose.msra.mxu0 0.0
    %4122 = vmatprep.subr.mxu0 0.0
    %4123 = vmatpush1.xpose.msra.mxu0 0.0
    %4124 = vmatprep.subr.mxu0 0.0
    %4125 = vmatpush1.xpose.msra.mxu0 0.0
    %4126 = vmatprep.subr.mxu0 0.0
    %4127 = vmatpush1.xpose.msra.mxu0 0.0
    %4128 = vmatprep.subr.mxu0 0.0
    %4129 = vmatpush1.xpose.msra.mxu0 0.0
    %4130 = vmatprep.subr.mxu0 0.0
    %4131 = vmatpush1.xpose.msra.mxu0 0.0
    %4132 = vmatprep.subr.mxu0 0.0
    %4133 = vmatpush1.xpose.msra.mxu0 0.0
    %4134 = vmatprep.subr.mxu0 0.0
    %4135 = vmatpush1.xpose.msra.mxu0 0.0
    %4136 = vmatprep.mubr.f32.mxu0 0.0
    %4137 = vmatmul.mubr.f32.gmra.mrb[0].mxu0 %v4067
    %v4138 = vpop.f32.mrb[0].mxu0
    %v4139 = vadd.f32 0.0, %v4138
    %v4140 = vpop.f32.mrb[0].mxu0
    %4141 = vdwg.mxu0
    %v4143 = vsel %vm3609, %v800, 0
    %v4146 = vsel %vm3609, %v1923, 0
    %4148 = vmatprep.subr.mxu0 0.0
    %4149 = vmatpush1.xpose.msra.mxu0 %v4146
    %4150 = vmatprep.subr.mxu0 0.0
    %4151 = vmatpush1.xpose.msra.mxu0 0.0
    %4152 = vmatprep.subr.mxu0 0.0
    %4153 = vmatpush1.xpose.msra.mxu0 0.0
    %4154 = vmatprep.subr.mxu0 0.0
    %4155 = vmatpush1.xpose.msra.mxu0 0.0
    %4156 = vmatprep.subr.mxu0 0.0
    %4157 = vmatpush1.xpose.msra.mxu0 0.0
    %4158 = vmatprep.subr.mxu0 0.0
    %4159 = vmatpush1.xpose.msra.mxu0 0.0
    %4160 = vmatprep.subr.mxu0 0.0
    %4161 = vmatpush1.xpose.msra.mxu0 0.0
    %4162 = vmatprep.subr.mxu0 0.0
    %4163 = vmatpush1.xpose.msra.mxu0 0.0
    %4164 = vmatprep.subr.mxu0 0.0
    %4165 = vmatpush1.xpose.msra.mxu0 0.0
    %4166 = vmatprep.subr.mxu0 0.0
    %4167 = vmatpush1.xpose.msra.mxu0 0.0
    %4168 = vmatprep.subr.mxu0 0.0
    %4169 = vmatpush1.xpose.msra.mxu0 0.0
    %4170 = vmatprep.subr.mxu0 0.0
    %4171 = vmatpush1.xpose.msra.mxu0 0.0
    %4172 = vmatprep.subr.mxu0 0.0
    %4173 = vmatpush1.xpose.msra.mxu0 0.0
    %4174 = vmatprep.subr.mxu0 0.0
    %4175 = vmatpush1.xpose.msra.mxu0 0.0
    %4176 = vmatprep.subr.mxu0 0.0
    %4177 = vmatpush1.xpose.msra.mxu0 0.0
    %4178 = vmatprep.subr.mxu0 0.0
    %4179 = vmatpush1.xpose.msra.mxu0 0.0
    %4180 = vmatprep.subr.mxu0 0.0
    %4181 = vmatpush1.xpose.msra.mxu0 0.0
    %4182 = vmatprep.subr.mxu0 0.0
    %4183 = vmatpush1.xpose.msra.mxu0 0.0
    %4184 = vmatprep.subr.mxu0 0.0
    %4185 = vmatpush1.xpose.msra.mxu0 0.0
    %4186 = vmatprep.subr.mxu0 0.0
    %4187 = vmatpush1.xpose.msra.mxu0 0.0
    %4188 = vmatprep.subr.mxu0 0.0
    %4189 = vmatpush1.xpose.msra.mxu0 0.0
    %4190 = vmatprep.subr.mxu0 0.0
    %4191 = vmatpush1.xpose.msra.mxu0 0.0
    %4192 = vmatprep.subr.mxu0 0.0
    %4193 = vmatpush1.xpose.msra.mxu0 0.0
    %4194 = vmatprep.subr.mxu0 0.0
    %4195 = vmatpush1.xpose.msra.mxu0 0.0
    %4196 = vmatprep.subr.mxu0 0.0
    %4197 = vmatpush1.xpose.msra.mxu0 0.0
    %4198 = vmatprep.subr.mxu0 0.0
    %4199 = vmatpush1.xpose.msra.mxu0 0.0
    %4200 = vmatprep.subr.mxu0 0.0
    %4201 = vmatpush1.xpose.msra.mxu0 0.0
    %4202 = vmatprep.subr.mxu0 0.0
    %4203 = vmatpush1.xpose.msra.mxu0 0.0
    %4204 = vmatprep.subr.mxu0 0.0
    %4205 = vmatpush1.xpose.msra.mxu0 0.0
    %4206 = vmatprep.subr.mxu0 0.0
    %4207 = vmatpush1.xpose.msra.mxu0 0.0
    %4208 = vmatprep.subr.mxu0 0.0
    %4209 = vmatpush1.xpose.msra.mxu0 0.0
    %4210 = vmatprep.subr.mxu0 0.0
    %4211 = vmatpush1.xpose.msra.mxu0 0.0
    %4212 = vmatprep.mubr.f32.mxu0 0.0
    %4213 = vmatmul.mubr.f32.gmra.mrb[0].mxu0 %v4143
    %v4214 = vpop.f32.mrb[0].mxu0
    %v4215 = vadd.f32 0.0, %v4214
    %v4216 = vpop.f32.mrb[0].mxu0
    %4217 = vdwg.mxu0
    %v4219 = vsel %vm3609, %v870, 0
    %v4222 = vsel %vm3609, %v1996, 0
    %4224 = vmatprep.subr.mxu0 0.0
    %4225 = vmatpush1.xpose.msra.mxu0 %v4222
    %4226 = vmatprep.subr.mxu0 0.0
    %4227 = vmatpush1.xpose.msra.mxu0 0.0
    %4228 = vmatprep.subr.mxu0 0.0
    %4229 = vmatpush1.xpose.msra.mxu0 0.0
    %4230 = vmatprep.subr.mxu0 0.0
    %4231 = vmatpush1.xpose.msra.mxu0 0.0
    %4232 = vmatprep.subr.mxu0 0.0
    %4233 = vmatpush1.xpose.msra.mxu0 0.0
    %4234 = vmatprep.subr.mxu0 0.0
    %4235 = vmatpush1.xpose.msra.mxu0 0.0
    %4236 = vmatprep.subr.mxu0 0.0
    %4237 = vmatpush1.xpose.msra.mxu0 0.0
    %4238 = vmatprep.subr.mxu0 0.0
    %4239 = vmatpush1.xpose.msra.mxu0 0.0
    %4240 = vmatprep.subr.mxu0 0.0
    %4241 = vmatpush1.xpose.msra.mxu0 0.0
    %4242 = vmatprep.subr.mxu0 0.0
    %4243 = vmatpush1.xpose.msra.mxu0 0.0
    %4244 = vmatprep.subr.mxu0 0.0
    %4245 = vmatpush1.xpose.msra.mxu0 0.0
    %4246 = vmatprep.subr.mxu0 0.0
    %4247 = vmatpush1.xpose.msra.mxu0 0.0
    %4248 = vmatprep.subr.mxu0 0.0
    %4249 = vmatpush1.xpose.msra.mxu0 0.0
    %4250 = vmatprep.subr.mxu0 0.0
    %4251 = vmatpush1.xpose.msra.mxu0 0.0
    %4252 = vmatprep.subr.mxu0 0.0
    %4253 = vmatpush1.xpose.msra.mxu0 0.0
    %4254 = vmatprep.subr.mxu0 0.0
    %4255 = vmatpush1.xpose.msra.mxu0 0.0
    %4256 = vmatprep.subr.mxu0 0.0
    %4257 = vmatpush1.xpose.msra.mxu0 0.0
    %4258 = vmatprep.subr.mxu0 0.0
    %4259 = vmatpush1.xpose.msra.mxu0 0.0
    %4260 = vmatprep.subr.mxu0 0.0
    %4261 = vmatpush1.xpose.msra.mxu0 0.0
    %4262 = vmatprep.subr.mxu0 0.0
    %4263 = vmatpush1.xpose.msra.mxu0 0.0
    %4264 = vmatprep.subr.mxu0 0.0
    %4265 = vmatpush1.xpose.msra.mxu0 0.0
    %4266 = vmatprep.subr.mxu0 0.0
    %4267 = vmatpush1.xpose.msra.mxu0 0.0
    %4268 = vmatprep.subr.mxu0 0.0
    %4269 = vmatpush1.xpose.msra.mxu0 0.0
    %4270 = vmatprep.subr.mxu0 0.0
    %4271 = vmatpush1.xpose.msra.mxu0 0.0
    %4272 = vmatprep.subr.mxu0 0.0
    %4273 = vmatpush1.xpose.msra.mxu0 0.0
    %4274 = vmatprep.subr.mxu0 0.0
    %4275 = vmatpush1.xpose.msra.mxu0 0.0
    %4276 = vmatprep.subr.mxu0 0.0
    %4277 = vmatpush1.xpose.msra.mxu0 0.0
    %4278 = vmatprep.subr.mxu0 0.0
    %4279 = vmatpush1.xpose.msra.mxu0 0.0
    %4280 = vmatprep.subr.mxu0 0.0
    %4281 = vmatpush1.xpose.msra.mxu0 0.0
    %4282 = vmatprep.subr.mxu0 0.0
    %4283 = vmatpush1.xpose.msra.mxu0 0.0
    %4284 = vmatprep.subr.mxu0 0.0
    %4285 = vmatpush1.xpose.msra.mxu0 0.0
    %4286 = vmatprep.subr.mxu0 0.0
    %4287 = vmatpush1.xpose.msra.mxu0 0.0
    %4288 = vmatprep.mubr.f32.mxu0 0.0
    %4289 = vmatmul.mubr.f32.gmra.mrb[0].mxu0 %v4219
    %v4290 = vpop.f32.mrb[0].mxu0
    %v4291 = vadd.f32 0.0, %v4290
    %v4292 = vpop.f32.mrb[0].mxu0
    %4293 = vdwg.mxu0
    %v4295 = vsel %vm3609, %v940, 0
    %v4298 = vsel %vm3609, %v2066, 0
    %4300 = vmatprep.subr.mxu0 0.0
    %4301 = vmatpush1.xpose.msra.mxu0 %v4298
    %4302 = vmatprep.subr.mxu0 0.0
    %4303 = vmatpush1.xpose.msra.mxu0 0.0
    %4304 = vmatprep.subr.mxu0 0.0
    %4305 = vmatpush1.xpose.msra.mxu0 0.0
    %4306 = vmatprep.subr.mxu0 0.0
    %4307 = vmatpush1.xpose.msra.mxu0 0.0
    %4308 = vmatprep.subr.mxu0 0.0
    %4309 = vmatpush1.xpose.msra.mxu0 0.0
    %4310 = vmatprep.subr.mxu0 0.0
    %4311 = vmatpush1.xpose.msra.mxu0 0.0
    %4312 = vmatprep.subr.mxu0 0.0
    %4313 = vmatpush1.xpose.msra.mxu0 0.0
    %4314 = vmatprep.subr.mxu0 0.0
    %4315 = vmatpush1.xpose.msra.mxu0 0.0
    %4316 = vmatprep.subr.mxu0 0.0
    %4317 = vmatpush1.xpose.msra.mxu0 0.0
    %4318 = vmatprep.subr.mxu0 0.0
    %4319 = vmatpush1.xpose.msra.mxu0 0.0
    %4320 = vmatprep.subr.mxu0 0.0
    %4321 = vmatpush1.xpose.msra.mxu0 0.0
    %4322 = vmatprep.subr.mxu0 0.0
    %4323 = vmatpush1.xpose.msra.mxu0 0.0
    %4324 = vmatprep.subr.mxu0 0.0
    %4325 = vmatpush1.xpose.msra.mxu0 0.0
    %4326 = vmatprep.subr.mxu0 0.0
    %4327 = vmatpush1.xpose.msra.mxu0 0.0
    %4328 = vmatprep.subr.mxu0 0.0
    %4329 = vmatpush1.xpose.msra.mxu0 0.0
    %4330 = vmatprep.subr.mxu0 0.0
    %4331 = vmatpush1.xpose.msra.mxu0 0.0
    %4332 = vmatprep.subr.mxu0 0.0
    %4333 = vmatpush1.xpose.msra.mxu0 0.0
    %4334 = vmatprep.subr.mxu0 0.0
    %4335 = vmatpush1.xpose.msra.mxu0 0.0
    %4336 = vmatprep.subr.mxu0 0.0
    %4337 = vmatpush1.xpose.msra.mxu0 0.0
    %4338 = vmatprep.subr.mxu0 0.0
    %4339 = vmatpush1.xpose.msra.mxu0 0.0
    %4340 = vmatprep.subr.mxu0 0.0
    %4341 = vmatpush1.xpose.msra.mxu0 0.0
    %4342 = vmatprep.subr.mxu0 0.0
    %4343 = vmatpush1.xpose.msra.mxu0 0.0
    %4344 = vmatprep.subr.mxu0 0.0
    %4345 = vmatpush1.xpose.msra.mxu0 0.0
    %4346 = vmatprep.subr.mxu0 0.0
    %4347 = vmatpush1.xpose.msra.mxu0 0.0
    %4348 = vmatprep.subr.mxu0 0.0
    %4349 = vmatpush1.xpose.msra.mxu0 0.0
    %4350 = vmatprep.subr.mxu0 0.0
    %4351 = vmatpush1.xpose.msra.mxu0 0.0
    %4352 = vmatprep.subr.mxu0 0.0
    %4353 = vmatpush1.xpose.msra.mxu0 0.0
    %4354 = vmatprep.subr.mxu0 0.0
    %4355 = vmatpush1.xpose.msra.mxu0 0.0
    %4356 = vmatprep.subr.mxu0 0.0
    %4357 = vmatpush1.xpose.msra.mxu0 0.0
    %4358 = vmatprep.subr.mxu0 0.0
    %4359 = vmatpush1.xpose.msra.mxu0 0.0
    %4360 = vmatprep.subr.mxu0 0.0
    %4361 = vmatpush1.xpose.msra.mxu0 0.0
    %4362 = vmatprep.subr.mxu0 0.0
    %4363 = vmatpush1.xpose.msra.mxu0 0.0
    %4364 = vmatprep.mubr.f32.mxu0 0.0
    %4365 = vmatmul.mubr.f32.gmra.mrb[0].mxu0 %v4295
    %v4366 = vpop.f32.mrb[0].mxu0
    %v4367 = vadd.f32 0.0, %v4366
    %v4368 = vpop.f32.mrb[0].mxu0
    %4369 = vdwg.mxu0
    %v4371 = vsel %vm3609, %v1010, 0
    %v4374 = vsel %vm3609, %v2136, 0
    %4376 = vmatprep.subr.mxu0 0.0
    %4377 = vmatpush1.xpose.msra.mxu0 %v4374
    %4378 = vmatprep.subr.mxu0 0.0
    %4379 = vmatpush1.xpose.msra.mxu0 0.0
    %4380 = vmatprep.subr.mxu0 0.0
    %4381 = vmatpush1.xpose.msra.mxu0 0.0
    %4382 = vmatprep.subr.mxu0 0.0
    %4383 = vmatpush1.xpose.msra.mxu0 0.0
    %4384 = vmatprep.subr.mxu0 0.0
    %4385 = vmatpush1.xpose.msra.mxu0 0.0
    %4386 = vmatprep.subr.mxu0 0.0
    %4387 = vmatpush1.xpose.msra.mxu0 0.0
    %4388 = vmatprep.subr.mxu0 0.0
    %4389 = vmatpush1.xpose.msra.mxu0 0.0
    %4390 = vmatprep.subr.mxu0 0.0
    %4391 = vmatpush1.xpose.msra.mxu0 0.0
    %4392 = vmatprep.subr.mxu0 0.0
    %4393 = vmatpush1.xpose.msra.mxu0 0.0
    %4394 = vmatprep.subr.mxu0 0.0
    %4395 = vmatpush1.xpose.msra.mxu0 0.0
    %4396 = vmatprep.subr.mxu0 0.0
    %4397 = vmatpush1.xpose.msra.mxu0 0.0
    %4398 = vmatprep.subr.mxu0 0.0
    %4399 = vmatpush1.xpose.msra.mxu0 0.0
    %4400 = vmatprep.subr.mxu0 0.0
    %4401 = vmatpush1.xpose.msra.mxu0 0.0
    %4402 = vmatprep.subr.mxu0 0.0
    %4403 = vmatpush1.xpose.msra.mxu0 0.0
    %4404 = vmatprep.subr.mxu0 0.0
    %4405 = vmatpush1.xpose.msra.mxu0 0.0
    %4406 = vmatprep.subr.mxu0 0.0
    %4407 = vmatpush1.xpose.msra.mxu0 0.0
    %4408 = vmatprep.subr.mxu0 0.0
    %4409 = vmatpush1.xpose.msra.mxu0 0.0
    %4410 = vmatprep.subr.mxu0 0.0
    %4411 = vmatpush1.xpose.msra.mxu0 0.0
    %4412 = vmatprep.subr.mxu0 0.0
    %4413 = vmatpush1.xpose.msra.mxu0 0.0
    %4414 = vmatprep.subr.mxu0 0.0
    %4415 = vmatpush1.xpose.msra.mxu0 0.0
    %4416 = vmatprep.subr.mxu0 0.0
    %4417 = vmatpush1.xpose.msra.mxu0 0.0
    %4418 = vmatprep.subr.mxu0 0.0
    %4419 = vmatpush1.xpose.msra.mxu0 0.0
    %4420 = vmatprep.subr.mxu0 0.0
    %4421 = vmatpush1.xpose.msra.mxu0 0.0
    %4422 = vmatprep.subr.mxu0 0.0
    %4423 = vmatpush1.xpose.msra.mxu0 0.0
    %4424 = vmatprep.subr.mxu0 0.0
    %4425 = vmatpush1.xpose.msra.mxu0 0.0
    %4426 = vmatprep.subr.mxu0 0.0
    %4427 = vmatpush1.xpose.msra.mxu0 0.0
    %4428 = vmatprep.subr.mxu0 0.0
    %4429 = vmatpush1.xpose.msra.mxu0 0.0
    %4430 = vmatprep.subr.mxu0 0.0
    %4431 = vmatpush1.xpose.msra.mxu0 0.0
    %4432 = vmatprep.subr.mxu0 0.0
    %4433 = vmatpush1.xpose.msra.mxu0 0.0
    %4434 = vmatprep.subr.mxu0 0.0
    %4435 = vmatpush1.xpose.msra.mxu0 0.0
    %4436 = vmatprep.subr.mxu0 0.0
    %4437 = vmatpush1.xpose.msra.mxu0 0.0
    %4438 = vmatprep.subr.mxu0 0.0
    %4439 = vmatpush1.xpose.msra.mxu0 0.0
    %4440 = vmatprep.mubr.f32.mxu0 0.0
    %4441 = vmatmul.mubr.f32.gmra.mrb[0].mxu0 %v4371
    %v4442 = vpop.f32.mrb[0].mxu0
    %v4443 = vadd.f32 0.0, %v4442
    %v4444 = vpop.f32.mrb[0].mxu0
    %4445 = vdwg.mxu0
    %v4447 = vsel %vm3609, %v1080, 0
    %v4450 = vsel %vm3609, %v2206, 0
    %4452 = vmatprep.subr.mxu0 0.0
    %4453 = vmatpush1.xpose.msra.mxu0 %v4450
    %4454 = vmatprep.subr.mxu0 0.0
    %4455 = vmatpush1.xpose.msra.mxu0 0.0
    %4456 = vmatprep.subr.mxu0 0.0
    %4457 = vmatpush1.xpose.msra.mxu0 0.0
    %4458 = vmatprep.subr.mxu0 0.0
    %4459 = vmatpush1.xpose.msra.mxu0 0.0
    %4460 = vmatprep.subr.mxu0 0.0
    %4461 = vmatpush1.xpose.msra.mxu0 0.0
    %4462 = vmatprep.subr.mxu0 0.0
    %4463 = vmatpush1.xpose.msra.mxu0 0.0
    %4464 = vmatprep.subr.mxu0 0.0
    %4465 = vmatpush1.xpose.msra.mxu0 0.0
    %4466 = vmatprep.subr.mxu0 0.0
    %4467 = vmatpush1.xpose.msra.mxu0 0.0
    %4468 = vmatprep.subr.mxu0 0.0
    %4469 = vmatpush1.xpose.msra.mxu0 0.0
    %4470 = vmatprep.subr.mxu0 0.0
    %4471 = vmatpush1.xpose.msra.mxu0 0.0
    %4472 = vmatprep.subr.mxu0 0.0
    %4473 = vmatpush1.xpose.msra.mxu0 0.0
    %4474 = vmatprep.subr.mxu0 0.0
    %4475 = vmatpush1.xpose.msra.mxu0 0.0
    %4476 = vmatprep.subr.mxu0 0.0
    %4477 = vmatpush1.xpose.msra.mxu0 0.0
    %4478 = vmatprep.subr.mxu0 0.0
    %4479 = vmatpush1.xpose.msra.mxu0 0.0
    %4480 = vmatprep.subr.mxu0 0.0
    %4481 = vmatpush1.xpose.msra.mxu0 0.0
    %4482 = vmatprep.subr.mxu0 0.0
    %4483 = vmatpush1.xpose.msra.mxu0 0.0
    %4484 = vmatprep.subr.mxu0 0.0
    %4485 = vmatpush1.xpose.msra.mxu0 0.0
    %4486 = vmatprep.subr.mxu0 0.0
    %4487 = vmatpush1.xpose.msra.mxu0 0.0
    %4488 = vmatprep.subr.mxu0 0.0
    %4489 = vmatpush1.xpose.msra.mxu0 0.0
    %4490 = vmatprep.subr.mxu0 0.0
    %4491 = vmatpush1.xpose.msra.mxu0 0.0
    %4492 = vmatprep.subr.mxu0 0.0
    %4493 = vmatpush1.xpose.msra.mxu0 0.0
    %4494 = vmatprep.subr.mxu0 0.0
    %4495 = vmatpush1.xpose.msra.mxu0 0.0
    %4496 = vmatprep.subr.mxu0 0.0
    %4497 = vmatpush1.xpose.msra.mxu0 0.0
    %4498 = vmatprep.subr.mxu0 0.0
    %4499 = vmatpush1.xpose.msra.mxu0 0.0
    %4500 = vmatprep.subr.mxu0 0.0
    %4501 = vmatpush1.xpose.msra.mxu0 0.0
    %4502 = vmatprep.subr.mxu0 0.0
    %4503 = vmatpush1.xpose.msra.mxu0 0.0
    %4504 = vmatprep.subr.mxu0 0.0
    %4505 = vmatpush1.xpose.msra.mxu0 0.0
    %4506 = vmatprep.subr.mxu0 0.0
    %4507 = vmatpush1.xpose.msra.mxu0 0.0
    %4508 = vmatprep.subr.mxu0 0.0
    %4509 = vmatpush1.xpose.msra.mxu0 0.0
    %4510 = vmatprep.subr.mxu0 0.0
    %4511 = vmatpush1.xpose.msra.mxu0 0.0
    %4512 = vmatprep.subr.mxu0 0.0
    %4513 = vmatpush1.xpose.msra.mxu0 0.0
    %4514 = vmatprep.subr.mxu0 0.0
    %4515 = vmatpush1.xpose.msra.mxu0 0.0
    %4516 = vmatprep.mubr.f32.mxu0 0.0
    %4517 = vmatmul.mubr.f32.gmra.mrb[0].mxu0 %v4447
    %v4518 = vpop.f32.mrb[0].mxu0
    %v4519 = vadd.f32 0.0, %v4518
    %v4520 = vpop.f32.mrb[0].mxu0
    %4521 = vdwg.mxu0
    %v4523 = vsel %vm3609, %v1150, 0
    %v4526 = vsel %vm3609, %v2276, 0
    %4528 = vmatprep.subr.mxu0 0.0
    %4529 = vmatpush1.xpose.msra.mxu0 %v4526
    %4530 = vmatprep.subr.mxu0 0.0
    %4531 = vmatpush1.xpose.msra.mxu0 0.0
    %4532 = vmatprep.subr.mxu0 0.0
    %4533 = vmatpush1.xpose.msra.mxu0 0.0
    %4534 = vmatprep.subr.mxu0 0.0
    %4535 = vmatpush1.xpose.msra.mxu0 0.0
    %4536 = vmatprep.subr.mxu0 0.0
    %4537 = vmatpush1.xpose.msra.mxu0 0.0
    %4538 = vmatprep.subr.mxu0 0.0
    %4539 = vmatpush1.xpose.msra.mxu0 0.0
    %4540 = vmatprep.subr.mxu0 0.0
    %4541 = vmatpush1.xpose.msra.mxu0 0.0
    %4542 = vmatprep.subr.mxu0 0.0
    %4543 = vmatpush1.xpose.msra.mxu0 0.0
    %4544 = vmatprep.subr.mxu0 0.0
    %4545 = vmatpush1.xpose.msra.mxu0 0.0
    %4546 = vmatprep.subr.mxu0 0.0
    %4547 = vmatpush1.xpose.msra.mxu0 0.0
    %4548 = vmatprep.subr.mxu0 0.0
    %4549 = vmatpush1.xpose.msra.mxu0 0.0
    %4550 = vmatprep.subr.mxu0 0.0
    %4551 = vmatpush1.xpose.msra.mxu0 0.0
    %4552 = vmatprep.subr.mxu0 0.0
    %4553 = vmatpush1.xpose.msra.mxu0 0.0
    %4554 = vmatprep.subr.mxu0 0.0
    %4555 = vmatpush1.xpose.msra.mxu0 0.0
    %4556 = vmatprep.subr.mxu0 0.0
    %4557 = vmatpush1.xpose.msra.mxu0 0.0
    %4558 = vmatprep.subr.mxu0 0.0
    %4559 = vmatpush1.xpose.msra.mxu0 0.0
    %4560 = vmatprep.subr.mxu0 0.0
    %4561 = vmatpush1.xpose.msra.mxu0 0.0
    %4562 = vmatprep.subr.mxu0 0.0
    %4563 = vmatpush1.xpose.msra.mxu0 0.0
    %4564 = vmatprep.subr.mxu0 0.0
    %4565 = vmatpush1.xpose.msra.mxu0 0.0
    %4566 = vmatprep.subr.mxu0 0.0
    %4567 = vmatpush1.xpose.msra.mxu0 0.0
    %4568 = vmatprep.subr.mxu0 0.0
    %4569 = vmatpush1.xpose.msra.mxu0 0.0
    %4570 = vmatprep.subr.mxu0 0.0
    %4571 = vmatpush1.xpose.msra.mxu0 0.0
    %4572 = vmatprep.subr.mxu0 0.0
    %4573 = vmatpush1.xpose.msra.mxu0 0.0
    %4574 = vmatprep.subr.mxu0 0.0
    %4575 = vmatpush1.xpose.msra.mxu0 0.0
    %4576 = vmatprep.subr.mxu0 0.0
    %4577 = vmatpush1.xpose.msra.mxu0 0.0
    %4578 = vmatprep.subr.mxu0 0.0
    %4579 = vmatpush1.xpose.msra.mxu0 0.0
    %4580 = vmatprep.subr.mxu0 0.0
    %4581 = vmatpush1.xpose.msra.mxu0 0.0
    %4582 = vmatprep.subr.mxu0 0.0
    %4583 = vmatpush1.xpose.msra.mxu0 0.0
    %4584 = vmatprep.subr.mxu0 0.0
    %4585 = vmatpush1.xpose.msra.mxu0 0.0
    %4586 = vmatprep.subr.mxu0 0.0
    %4587 = vmatpush1.xpose.msra.mxu0 0.0
    %4588 = vmatprep.subr.mxu0 0.0
    %4589 = vmatpush1.xpose.msra.mxu0 0.0
    %4590 = vmatprep.subr.mxu0 0.0
    %4591 = vmatpush1.xpose.msra.mxu0 0.0
    %4592 = vmatprep.mubr.f32.mxu0 0.0
    %4593 = vmatmul.mubr.f32.gmra.mrb[0].mxu0 %v4523
    %v4594 = vpop.f32.mrb[0].mxu0
    %v4595 = vadd.f32 0.0, %v4594
    %v4596 = vpop.f32.mrb[0].mxu0
    %4597 = vdwg.mxu0
    %v4599 = vsel %vm3609, %v1220, 0
    %v4602 = vsel %vm3609, %v2346, 0
    %4604 = vmatprep.subr.mxu0 0.0
    %4605 = vmatpush1.xpose.msra.mxu0 %v4602
    %4606 = vmatprep.subr.mxu0 0.0
    %4607 = vmatpush1.xpose.msra.mxu0 0.0
    %4608 = vmatprep.subr.mxu0 0.0
    %4609 = vmatpush1.xpose.msra.mxu0 0.0
    %4610 = vmatprep.subr.mxu0 0.0
    %4611 = vmatpush1.xpose.msra.mxu0 0.0
    %4612 = vmatprep.subr.mxu0 0.0
    %4613 = vmatpush1.xpose.msra.mxu0 0.0
    %4614 = vmatprep.subr.mxu0 0.0
    %4615 = vmatpush1.xpose.msra.mxu0 0.0
    %4616 = vmatprep.subr.mxu0 0.0
    %4617 = vmatpush1.xpose.msra.mxu0 0.0
    %4618 = vmatprep.subr.mxu0 0.0
    %4619 = vmatpush1.xpose.msra.mxu0 0.0
    %4620 = vmatprep.subr.mxu0 0.0
    %4621 = vmatpush1.xpose.msra.mxu0 0.0
    %4622 = vmatprep.subr.mxu0 0.0
    %4623 = vmatpush1.xpose.msra.mxu0 0.0
    %4624 = vmatprep.subr.mxu0 0.0
    %4625 = vmatpush1.xpose.msra.mxu0 0.0
    %4626 = vmatprep.subr.mxu0 0.0
    %4627 = vmatpush1.xpose.msra.mxu0 0.0
    %4628 = vmatprep.subr.mxu0 0.0
    %4629 = vmatpush1.xpose.msra.mxu0 0.0
    %4630 = vmatprep.subr.mxu0 0.0
    %4631 = vmatpush1.xpose.msra.mxu0 0.0
    %4632 = vmatprep.subr.mxu0 0.0
    %4633 = vmatpush1.xpose.msra.mxu0 0.0
    %4634 = vmatprep.subr.mxu0 0.0
    %4635 = vmatpush1.xpose.msra.mxu0 0.0
    %4636 = vmatprep.subr.mxu0 0.0
    %4637 = vmatpush1.xpose.msra.mxu0 0.0
    %4638 = vmatprep.subr.mxu0 0.0
    %4639 = vmatpush1.xpose.msra.mxu0 0.0
    %4640 = vmatprep.subr.mxu0 0.0
    %4641 = vmatpush1.xpose.msra.mxu0 0.0
    %4642 = vmatprep.subr.mxu0 0.0
    %4643 = vmatpush1.xpose.msra.mxu0 0.0
    %4644 = vmatprep.subr.mxu0 0.0
    %4645 = vmatpush1.xpose.msra.mxu0 0.0
    %4646 = vmatprep.subr.mxu0 0.0
    %4647 = vmatpush1.xpose.msra.mxu0 0.0
    %4648 = vmatprep.subr.mxu0 0.0
    %4649 = vmatpush1.xpose.msra.mxu0 0.0
    %4650 = vmatprep.subr.mxu0 0.0
    %4651 = vmatpush1.xpose.msra.mxu0 0.0
    %4652 = vmatprep.subr.mxu0 0.0
    %4653 = vmatpush1.xpose.msra.mxu0 0.0
    %4654 = vmatprep.subr.mxu0 0.0
    %4655 = vmatpush1.xpose.msra.mxu0 0.0
    %4656 = vmatprep.subr.mxu0 0.0
    %4657 = vmatpush1.xpose.msra.mxu0 0.0
    %4658 = vmatprep.subr.mxu0 0.0
    %4659 = vmatpush1.xpose.msra.mxu0 0.0
    %4660 = vmatprep.subr.mxu0 0.0
    %4661 = vmatpush1.xpose.msra.mxu0 0.0
    %4662 = vmatprep.subr.mxu0 0.0
    %4663 = vmatpush1.xpose.msra.mxu0 0.0
    %4664 = vmatprep.subr.mxu0 0.0
    %4665 = vmatpush1.xpose.msra.mxu0 0.0
    %4666 = vmatprep.subr.mxu0 0.0
    %4667 = vmatpush1.xpose.msra.mxu0 0.0
    %4668 = vmatprep.mubr.f32.mxu0 0.0
    %4669 = vmatmul.mubr.f32.gmra.mrb[0].mxu0 %v4599
    %v4670 = vpop.f32.mrb[0].mxu0
    %v4671 = vadd.f32 0.0, %v4670
    %v4672 = vpop.f32.mrb[0].mxu0
    %4673 = vdwg.mxu0
    %v4675 = vsel %vm3609, %v1290, 0
    %v4678 = vsel %vm3609, %v2416, 0
    %4680 = vmatprep.subr.mxu0 0.0
    %4681 = vmatpush1.xpose.msra.mxu0 %v4678
    %4682 = vmatprep.subr.mxu0 0.0
    %4683 = vmatpush1.xpose.msra.mxu0 0.0
    %4684 = vmatprep.subr.mxu0 0.0
    %4685 = vmatpush1.xpose.msra.mxu0 0.0
    %4686 = vmatprep.subr.mxu0 0.0
    %4687 = vmatpush1.xpose.msra.mxu0 0.0
    %4688 = vmatprep.subr.mxu0 0.0
    %4689 = vmatpush1.xpose.msra.mxu0 0.0
    %4690 = vmatprep.subr.mxu0 0.0
    %4691 = vmatpush1.xpose.msra.mxu0 0.0
    %4692 = vmatprep.subr.mxu0 0.0
    %4693 = vmatpush1.xpose.msra.mxu0 0.0
    %4694 = vmatprep.subr.mxu0 0.0
    %4695 = vmatpush1.xpose.msra.mxu0 0.0
    %4696 = vmatprep.subr.mxu0 0.0
    %4697 = vmatpush1.xpose.msra.mxu0 0.0
    %4698 = vmatprep.subr.mxu0 0.0
    %4699 = vmatpush1.xpose.msra.mxu0 0.0
    %4700 = vmatprep.subr.mxu0 0.0
    %4701 = vmatpush1.xpose.msra.mxu0 0.0
    %4702 = vmatprep.subr.mxu0 0.0
    %4703 = vmatpush1.xpose.msra.mxu0 0.0
    %4704 = vmatprep.subr.mxu0 0.0
    %4705 = vmatpush1.xpose.msra.mxu0 0.0
    %4706 = vmatprep.subr.mxu0 0.0
    %4707 = vmatpush1.xpose.msra.mxu0 0.0
    %4708 = vmatprep.subr.mxu0 0.0
    %4709 = vmatpush1.xpose.msra.mxu0 0.0
    %4710 = vmatprep.subr.mxu0 0.0
    %4711 = vmatpush1.xpose.msra.mxu0 0.0
    %4712 = vmatprep.subr.mxu0 0.0
    %4713 = vmatpush1.xpose.msra.mxu0 0.0
    %4714 = vmatprep.subr.mxu0 0.0
    %4715 = vmatpush1.xpose.msra.mxu0 0.0
    %4716 = vmatprep.subr.mxu0 0.0
    %4717 = vmatpush1.xpose.msra.mxu0 0.0
    %4718 = vmatprep.subr.mxu0 0.0
    %4719 = vmatpush1.xpose.msra.mxu0 0.0
    %4720 = vmatprep.subr.mxu0 0.0
    %4721 = vmatpush1.xpose.msra.mxu0 0.0
    %4722 = vmatprep.subr.mxu0 0.0
    %4723 = vmatpush1.xpose.msra.mxu0 0.0
    %4724 = vmatprep.subr.mxu0 0.0
    %4725 = vmatpush1.xpose.msra.mxu0 0.0
    %4726 = vmatprep.subr.mxu0 0.0
    %4727 = vmatpush1.xpose.msra.mxu0 0.0
    %4728 = vmatprep.subr.mxu0 0.0
    %4729 = vmatpush1.xpose.msra.mxu0 0.0
    %4730 = vmatprep.subr.mxu0 0.0
    %4731 = vmatpush1.xpose.msra.mxu0 0.0
    %4732 = vmatprep.subr.mxu0 0.0
    %4733 = vmatpush1.xpose.msra.mxu0 0.0
    %4734 = vmatprep.subr.mxu0 0.0
    %4735 = vmatpush1.xpose.msra.mxu0 0.0
    %4736 = vmatprep.subr.mxu0 0.0
    %4737 = vmatpush1.xpose.msra.mxu0 0.0
    %4738 = vmatprep.subr.mxu0 0.0
    %4739 = vmatpush1.xpose.msra.mxu0 0.0
    %4740 = vmatprep.subr.mxu0 0.0
    %4741 = vmatpush1.xpose.msra.mxu0 0.0
    %4742 = vmatprep.subr.mxu0 0.0
    %4743 = vmatpush1.xpose.msra.mxu0 0.0
    %4744 = vmatprep.mubr.f32.mxu0 0.0
    %4745 = vmatmul.mubr.f32.gmra.mrb[0].mxu0 %v4675
    %v4746 = vpop.f32.mrb[0].mxu0
    %v4747 = vadd.f32 0.0, %v4746
    %v4748 = vpop.f32.mrb[0].mxu0
    %4749 = vdwg.mxu0
    %v4751 = vsel %vm3609, %v1360, 0
    %v4754 = vsel %vm3609, %v2486, 0
    %4756 = vmatprep.subr.mxu0 0.0
    %4757 = vmatpush1.xpose.msra.mxu0 %v4754
    %4758 = vmatprep.subr.mxu0 0.0
    %4759 = vmatpush1.xpose.msra.mxu0 0.0
    %4760 = vmatprep.subr.mxu0 0.0
    %4761 = vmatpush1.xpose.msra.mxu0 0.0
    %4762 = vmatprep.subr.mxu0 0.0
    %4763 = vmatpush1.xpose.msra.mxu0 0.0
    %4764 = vmatprep.subr.mxu0 0.0
    %4765 = vmatpush1.xpose.msra.mxu0 0.0
    %4766 = vmatprep.subr.mxu0 0.0
    %4767 = vmatpush1.xpose.msra.mxu0 0.0
    %4768 = vmatprep.subr.mxu0 0.0
    %4769 = vmatpush1.xpose.msra.mxu0 0.0
    %4770 = vmatprep.subr.mxu0 0.0
    %4771 = vmatpush1.xpose.msra.mxu0 0.0
    %4772 = vmatprep.subr.mxu0 0.0
    %4773 = vmatpush1.xpose.msra.mxu0 0.0
    %4774 = vmatprep.subr.mxu0 0.0
    %4775 = vmatpush1.xpose.msra.mxu0 0.0
    %4776 = vmatprep.subr.mxu0 0.0
    %4777 = vmatpush1.xpose.msra.mxu0 0.0
    %4778 = vmatprep.subr.mxu0 0.0
    %4779 = vmatpush1.xpose.msra.mxu0 0.0
    %4780 = vmatprep.subr.mxu0 0.0
    %4781 = vmatpush1.xpose.msra.mxu0 0.0
    %4782 = vmatprep.subr.mxu0 0.0
    %4783 = vmatpush1.xpose.msra.mxu0 0.0
    %4784 = vmatprep.subr.mxu0 0.0
    %4785 = vmatpush1.xpose.msra.mxu0 0.0
    %4786 = vmatprep.subr.mxu0 0.0
    %4787 = vmatpush1.xpose.msra.mxu0 0.0
    %4788 = vmatprep.subr.mxu0 0.0
    %4789 = vmatpush1.xpose.msra.mxu0 0.0
    %4790 = vmatprep.subr.mxu0 0.0
    %4791 = vmatpush1.xpose.msra.mxu0 0.0
    %4792 = vmatprep.subr.mxu0 0.0
    %4793 = vmatpush1.xpose.msra.mxu0 0.0
    %4794 = vmatprep.subr.mxu0 0.0
    %4795 = vmatpush1.xpose.msra.mxu0 0.0
    %4796 = vmatprep.subr.mxu0 0.0
    %4797 = vmatpush1.xpose.msra.mxu0 0.0
    %4798 = vmatprep.subr.mxu0 0.0
    %4799 = vmatpush1.xpose.msra.mxu0 0.0
    %4800 = vmatprep.subr.mxu0 0.0
    %4801 = vmatpush1.xpose.msra.mxu0 0.0
    %4802 = vmatprep.subr.mxu0 0.0
    %4803 = vmatpush1.xpose.msra.mxu0 0.0
    %4804 = vmatprep.subr.mxu0 0.0
    %4805 = vmatpush1.xpose.msra.mxu0 0.0
    %4806 = vmatprep.subr.mxu0 0.0
    %4807 = vmatpush1.xpose.msra.mxu0 0.0
    %4808 = vmatprep.subr.mxu0 0.0
    %4809 = vmatpush1.xpose.msra.mxu0 0.0
    %4810 = vmatprep.subr.mxu0 0.0
    %4811 = vmatpush1.xpose.msra.mxu0 0.0
    %4812 = vmatprep.subr.mxu0 0.0
    %4813 = vmatpush1.xpose.msra.mxu0 0.0
    %4814 = vmatprep.subr.mxu0 0.0
    %4815 = vmatpush1.xpose.msra.mxu0 0.0
    %4816 = vmatprep.subr.mxu0 0.0
    %4817 = vmatpush1.xpose.msra.mxu0 0.0
    %4818 = vmatprep.subr.mxu0 0.0
    %4819 = vmatpush1.xpose.msra.mxu0 0.0
    %4820 = vmatprep.mubr.f32.mxu0 0.0
    %4821 = vmatmul.mubr.f32.gmra.mrb[0].mxu0 %v4751
    %v4822 = vpop.f32.mrb[0].mxu0
    %v4823 = vadd.f32 0.0, %v4822
    %v4824 = vpop.f32.mrb[0].mxu0
    %4825 = vdwg.mxu0
    %vm4826 = vcmask 64512
    %v4827 = vsel %vm4826, %v3683, -inf
    %4828 = vmax.xlane.f32.xlu0 %v4827
    %v4829 = vpop.xlane.xlu0 %4828
    %v4830 = vsel %vm4826, %v3759, -inf
    %4831 = vmax.xlane.f32.xlu0 %v4830
    %v4832 = vpop.xlane.xlu0 %4831
    %v4833 = vsel %vm4826, %v3835, -inf
    %4834 = vmax.xlane.f32.xlu0 %v4833
    %v4835 = vpop.xlane.xlu0 %4834
    %v4836 = vsel %vm4826, %v3911, -inf
    %4837 = vmax.xlane.f32.xlu0 %v4836
    %v4838 = vpop.xlane.xlu0 %4837
    %v4839 = vsel %vm4826, %v3987, -inf
    %4840 = vmax.xlane.f32.xlu0 %v4839
    %v4841 = vpop.xlane.xlu0 %4840
    %v4842 = vsel %vm4826, %v4063, -inf
    %4843 = vmax.xlane.f32.xlu0 %v4842
    %v4844 = vpop.xlane.xlu0 %4843
    %v4845 = vsel %vm4826, %v4139, -inf
    %4846 = vmax.xlane.f32.xlu0 %v4845
    %v4847 = vpop.xlane.xlu0 %4846
    %v4848 = vsel %vm4826, %v4215, -inf
    %4849 = vmax.xlane.f32.xlu0 %v4848
    %v4850 = vpop.xlane.xlu0 %4849
    %v4851 = vsel %vm4826, %v4291, -inf
    %4852 = vmax.xlane.f32.xlu0 %v4851
    %v4853 = vpop.xlane.xlu0 %4852
    %v4854 = vsel %vm4826, %v4367, -inf
    %4855 = vmax.xlane.f32.xlu0 %v4854
    %v4856 = vpop.xlane.xlu0 %4855
    %v4857 = vsel %vm4826, %v4443, -inf
    %4858 = vmax.xlane.f32.xlu0 %v4857
    %v4859 = vpop.xlane.xlu0 %4858
    %v4860 = vsel %vm4826, %v4519, -inf
    %4861 = vmax.xlane.f32.xlu0 %v4860
    %v4862 = vpop.xlane.xlu0 %4861
    %v4863 = vsel %vm4826, %v4595, -inf
    %4864 = vmax.xlane.f32.xlu0 %v4863
    %v4865 = vpop.xlane.xlu0 %4864
    %v4866 = vsel %vm4826, %v4671, -inf
    %4867 = vmax.xlane.f32.xlu0 %v4866
    %v4868 = vpop.xlane.xlu0 %4867
    %v4869 = vsel %vm4826, %v4747, -inf
    %4870 = vmax.xlane.f32.xlu0 %v4869
    %v4871 = vpop.xlane.xlu0 %4870
    %v4872 = vsel %vm4826, %v4823, -inf
    %4873 = vmax.xlane.f32.xlu0 %v4872
    %v4874 = vpop.xlane.xlu0 %4873
    %v4875 = vsub.f32 %v3683, %v4829
    %v4876 = vsub.f32 %v3759, %v4832
    %v4877 = vsub.f32 %v3835, %v4835
    %v4878 = vsub.f32 %v3911, %v4838
    %v4879 = vsub.f32 %v3987, %v4841
    %v4880 = vsub.f32 %v4063, %v4844
    %v4881 = vsub.f32 %v4139, %v4847
    %v4882 = vsub.f32 %v4215, %v4850
    %v4883 = vsub.f32 %v4291, %v4853
    %v4884 = vsub.f32 %v4367, %v4856
    %v4885 = vsub.f32 %v4443, %v4859
    %v4886 = vsub.f32 %v4519, %v4862
    %v4887 = vsub.f32 %v4595, %v4865
    %v4888 = vsub.f32 %v4671, %v4868
    %v4889 = vsub.f32 %v4747, %v4871
    %v4890 = vsub.f32 %v4823, %v4874
    %v4891 = vmul.f32 %v4875, 1.442695
    %v4892 = vpow.pop %v4891
    %v4893 = vmul.f32 %v4876, 1.442695
    %v4894 = vpow.pop %v4893
    %v4895 = vmul.f32 %v4877, 1.442695
    %v4896 = vpow.pop %v4895
    %v4897 = vmul.f32 %v4878, 1.442695
    %v4898 = vpow.pop %v4897
    %v4899 = vmul.f32 %v4879, 1.442695
    %v4900 = vpow.pop %v4899
    %v4901 = vmul.f32 %v4880, 1.442695
    %v4902 = vpow.pop %v4901
    %v4903 = vmul.f32 %v4881, 1.442695
    %v4904 = vpow.pop %v4903
    %v4905 = vmul.f32 %v4882, 1.442695
    %v4906 = vpow.pop %v4905
    %v4907 = vmul.f32 %v4883, 1.442695
    %v4908 = vpow.pop %v4907
    %v4909 = vmul.f32 %v4884, 1.442695
    %v4910 = vpow.pop %v4909
    %v4911 = vmul.f32 %v4885, 1.442695
    %v4912 = vpow.pop %v4911
    %v4913 = vmul.f32 %v4886, 1.442695
    %v4914 = vpow.pop %v4913
    %v4915 = vmul.f32 %v4887, 1.442695
    %v4916 = vpow.pop %v4915
    %v4917 = vmul.f32 %v4888, 1.442695
    %v4918 = vpow.pop %v4917
    %v4919 = vmul.f32 %v4889, 1.442695
    %v4920 = vpow.pop %v4919
    %v4921 = vmul.f32 %v4890, 1.442695
    %v4922 = vpow.pop %v4921
    %v4923 = vsel %vm4826, %v4892, 0.0
    %4924 = vadd.xlane.f32.xlu0 %v4923
    %v4925 = vpop.xlane.xlu0 %4924
    %v4926 = vsel %vm4826, %v4894, 0.0
    %4927 = vadd.xlane.f32.xlu0 %v4926
    %v4928 = vpop.xlane.xlu0 %4927
    %v4929 = vsel %vm4826, %v4896, 0.0
    %4930 = vadd.xlane.f32.xlu0 %v4929
    %v4931 = vpop.xlane.xlu0 %4930
    %v4932 = vsel %vm4826, %v4898, 0.0
    %4933 = vadd.xlane.f32.xlu0 %v4932
    %v4934 = vpop.xlane.xlu0 %4933
    %v4935 = vsel %vm4826, %v4900, 0.0
    %4936 = vadd.xlane.f32.xlu0 %v4935
    %v4937 = vpop.xlane.xlu0 %4936
    %v4938 = vsel %vm4826, %v4902, 0.0
    %4939 = vadd.xlane.f32.xlu0 %v4938
    %v4940 = vpop.xlane.xlu0 %4939
    %v4941 = vsel %vm4826, %v4904, 0.0
    %4942 = vadd.xlane.f32.xlu0 %v4941
    %v4943 = vpop.xlane.xlu0 %4942
    %v4944 = vsel %vm4826, %v4906, 0.0
    %4945 = vadd.xlane.f32.xlu0 %v4944
    %v4946 = vpop.xlane.xlu0 %4945
    %v4947 = vsel %vm4826, %v4908, 0.0
    %4948 = vadd.xlane.f32.xlu0 %v4947
    %v4949 = vpop.xlane.xlu0 %4948
    %v4950 = vsel %vm4826, %v4910, 0.0
    %4951 = vadd.xlane.f32.xlu0 %v4950
    %v4952 = vpop.xlane.xlu0 %4951
    %v4953 = vsel %vm4826, %v4912, 0.0
    %4954 = vadd.xlane.f32.xlu0 %v4953
    %v4955 = vpop.xlane.xlu0 %4954
    %v4956 = vsel %vm4826, %v4914, 0.0
    %4957 = vadd.xlane.f32.xlu0 %v4956
    %v4958 = vpop.xlane.xlu0 %4957
    %v4959 = vsel %vm4826, %v4916, 0.0
    %4960 = vadd.xlane.f32.xlu0 %v4959
    %v4961 = vpop.xlane.xlu0 %4960
    %v4962 = vsel %vm4826, %v4918, 0.0
    %4963 = vadd.xlane.f32.xlu0 %v4962
    %v4964 = vpop.xlane.xlu0 %4963
    %v4965 = vsel %vm4826, %v4920, 0.0
    %4966 = vadd.xlane.f32.xlu0 %v4965
    %v4967 = vpop.xlane.xlu0 %4966
    %v4968 = vsel %vm4826, %v4922, 0.0
    %4969 = vadd.xlane.f32.xlu0 %v4968
    %v4970 = vpop.xlane.xlu0 %4969
    %v4971 = vrcp.pop %v4925
    %v4972 = vmul.f32 %v4892, %v4971
    %v4973 = vrcp.pop %v4928
    %v4974 = vmul.f32 %v4894, %v4973
    %v4975 = vrcp.pop %v4931
    %v4976 = vmul.f32 %v4896, %v4975
    %v4977 = vrcp.pop %v4934
    %v4978 = vmul.f32 %v4898, %v4977
    %v4979 = vrcp.pop %v4937
    %v4980 = vmul.f32 %v4900, %v4979
    %v4981 = vrcp.pop %v4940
    %v4982 = vmul.f32 %v4902, %v4981
    %v4983 = vrcp.pop %v4943
    %v4984 = vmul.f32 %v4904, %v4983
    %v4985 = vrcp.pop %v4946
    %v4986 = vmul.f32 %v4906, %v4985
    %v4987 = vrcp.pop %v4949
    %v4988 = vmul.f32 %v4908, %v4987
    %v4989 = vrcp.pop %v4952
    %v4990 = vmul.f32 %v4910, %v4989
    %v4991 = vrcp.pop %v4955
    %v4992 = vmul.f32 %v4912, %v4991
    %v4993 = vrcp.pop %v4958
    %v4994 = vmul.f32 %v4914, %v4993
    %v4995 = vrcp.pop %v4961
    %v4996 = vmul.f32 %v4916, %v4995
    %v4997 = vrcp.pop %v4964
    %v4998 = vmul.f32 %v4918, %v4997
    %v4999 = vrcp.pop %v4967
    %v5000 = vmul.f32 %v4920, %v4999
    %v5001 = vrcp.pop %v4970
    %v5002 = vmul.f32 %v4922, %v5001
    %v5004 = vsel %vm4826, %v4972, 0
    %5006 = vmatprep.subr.mxu0 0.0
    %5007 = vmatpush1.msra.mxu0 %v2556
    %5008 = vmatprep.subr.mxu0 0.0
    %5009 = vmatpush1.msra.mxu0 0.0
    %5010 = vmatprep.subr.mxu0 0.0
    %5011 = vmatpush1.msra.mxu0 0.0
    %5012 = vmatprep.subr.mxu0 0.0
    %5013 = vmatpush1.msra.mxu0 0.0
    %5014 = vmatprep.subr.mxu0 0.0
    %5015 = vmatpush1.msra.mxu0 0.0
    %5016 = vmatprep.subr.mxu0 0.0
    %5017 = vmatpush1.msra.mxu0 0.0
    %5018 = vmatprep.subr.mxu0 0.0
    %5019 = vmatpush1.msra.mxu0 0.0
    %5020 = vmatprep.subr.mxu0 0.0
    %5021 = vmatpush1.msra.mxu0 0.0
    %5022 = vmatprep.subr.mxu0 0.0
    %5023 = vmatpush1.msra.mxu0 0.0
    %5024 = vmatprep.subr.mxu0 0.0
    %5025 = vmatpush1.msra.mxu0 0.0
    %5026 = vmatprep.subr.mxu0 0.0
    %5027 = vmatpush1.msra.mxu0 0.0
    %5028 = vmatprep.subr.mxu0 0.0
    %5029 = vmatpush1.msra.mxu0 0.0
    %5030 = vmatprep.subr.mxu0 0.0
    %5031 = vmatpush1.msra.mxu0 0.0
    %5032 = vmatprep.subr.mxu0 0.0
    %5033 = vmatpush1.msra.mxu0 0.0
    %5034 = vmatprep.subr.mxu0 0.0
    %5035 = vmatpush1.msra.mxu0 0.0
    %5036 = vmatprep.subr.mxu0 0.0
    %5037 = vmatpush1.msra.mxu0 0.0
    %5038 = vmatprep.subr.mxu0 0.0
    %5039 = vmatpush1.msra.mxu0 0.0
    %5040 = vmatprep.subr.mxu0 0.0
    %5041 = vmatpush1.msra.mxu0 0.0
    %5042 = vmatprep.subr.mxu0 0.0
    %5043 = vmatpush1.msra.mxu0 0.0
    %5044 = vmatprep.subr.mxu0 0.0
    %5045 = vmatpush1.msra.mxu0 0.0
    %5046 = vmatprep.subr.mxu0 0.0
    %5047 = vmatpush1.msra.mxu0 0.0
    %5048 = vmatprep.subr.mxu0 0.0
    %5049 = vmatpush1.msra.mxu0 0.0
    %5050 = vmatprep.subr.mxu0 0.0
    %5051 = vmatpush1.msra.mxu0 0.0
    %5052 = vmatprep.subr.mxu0 0.0
    %5053 = vmatpush1.msra.mxu0 0.0
    %5054 = vmatprep.subr.mxu0 0.0
    %5055 = vmatpush1.msra.mxu0 0.0
    %5056 = vmatprep.subr.mxu0 0.0
    %5057 = vmatpush1.msra.mxu0 0.0
    %5058 = vmatprep.subr.mxu0 0.0
    %5059 = vmatpush1.msra.mxu0 0.0
    %5060 = vmatprep.subr.mxu0 0.0
    %5061 = vmatpush1.msra.mxu0 0.0
    %5062 = vmatprep.subr.mxu0 0.0
    %5063 = vmatpush1.msra.mxu0 0.0
    %5064 = vmatprep.subr.mxu0 0.0
    %5065 = vmatpush1.msra.mxu0 0.0
    %5066 = vmatprep.subr.mxu0 0.0
    %5067 = vmatpush1.msra.mxu0 0.0
    %5068 = vmatprep.subr.mxu0 0.0
    %5069 = vmatpush1.msra.mxu0 0.0
    %5070 = vmatprep.mubr.f32.mxu0 0.0
    %5071 = vmatmul.mubr.f32.gmra.mrb[0].mxu0 %v5004
    %v5072 = vpop.f32.mrb[0].mxu0
    %v5073 = vadd.f32 0.0, %v5072
    %v5074 = vpop.f32.mrb[0].mxu0
    %5075 = vdwg.mxu0
    %v5077 = vsel %vm4826, %v4974, 0
    %5079 = vmatprep.subr.mxu0 0.0
    %5080 = vmatpush1.msra.mxu0 %v2626
    %5081 = vmatprep.subr.mxu0 0.0
    %5082 = vmatpush1.msra.mxu0 0.0
    %5083 = vmatprep.subr.mxu0 0.0
    %5084 = vmatpush1.msra.mxu0 0.0
    %5085 = vmatprep.subr.mxu0 0.0
    %5086 = vmatpush1.msra.mxu0 0.0
    %5087 = vmatprep.subr.mxu0 0.0
    %5088 = vmatpush1.msra.mxu0 0.0
    %5089 = vmatprep.subr.mxu0 0.0
    %5090 = vmatpush1.msra.mxu0 0.0
    %5091 = vmatprep.subr.mxu0 0.0
    %5092 = vmatpush1.msra.mxu0 0.0
    %5093 = vmatprep.subr.mxu0 0.0
    %5094 = vmatpush1.msra.mxu0 0.0
    %5095 = vmatprep.subr.mxu0 0.0
    %5096 = vmatpush1.msra.mxu0 0.0
    %5097 = vmatprep.subr.mxu0 0.0
    %5098 = vmatpush1.msra.mxu0 0.0
    %5099 = vmatprep.subr.mxu0 0.0
    %5100 = vmatpush1.msra.mxu0 0.0
    %5101 = vmatprep.subr.mxu0 0.0
    %5102 = vmatpush1.msra.mxu0 0.0
    %5103 = vmatprep.subr.mxu0 0.0
    %5104 = vmatpush1.msra.mxu0 0.0
    %5105 = vmatprep.subr.mxu0 0.0
    %5106 = vmatpush1.msra.mxu0 0.0
    %5107 = vmatprep.subr.mxu0 0.0
    %5108 = vmatpush1.msra.mxu0 0.0
    %5109 = vmatprep.subr.mxu0 0.0
    %5110 = vmatpush1.msra.mxu0 0.0
    %5111 = vmatprep.subr.mxu0 0.0
    %5112 = vmatpush1.msra.mxu0 0.0
    %5113 = vmatprep.subr.mxu0 0.0
    %5114 = vmatpush1.msra.mxu0 0.0
    %5115 = vmatprep.subr.mxu0 0.0
    %5116 = vmatpush1.msra.mxu0 0.0
    %5117 = vmatprep.subr.mxu0 0.0
    %5118 = vmatpush1.msra.mxu0 0.0
    %5119 = vmatprep.subr.mxu0 0.0
    %5120 = vmatpush1.msra.mxu0 0.0
    %5121 = vmatprep.subr.mxu0 0.0
    %5122 = vmatpush1.msra.mxu0 0.0
    %5123 = vmatprep.subr.mxu0 0.0
    %5124 = vmatpush1.msra.mxu0 0.0
    %5125 = vmatprep.subr.mxu0 0.0
    %5126 = vmatpush1.msra.mxu0 0.0
    %5127 = vmatprep.subr.mxu0 0.0
    %5128 = vmatpush1.msra.mxu0 0.0
    %5129 = vmatprep.subr.mxu0 0.0
    %5130 = vmatpush1.msra.mxu0 0.0
    %5131 = vmatprep.subr.mxu0 0.0
    %5132 = vmatpush1.msra.mxu0 0.0
    %5133 = vmatprep.subr.mxu0 0.0
    %5134 = vmatpush1.msra.mxu0 0.0
    %5135 = vmatprep.subr.mxu0 0.0
    %5136 = vmatpush1.msra.mxu0 0.0
    %5137 = vmatprep.subr.mxu0 0.0
    %5138 = vmatpush1.msra.mxu0 0.0
    %5139 = vmatprep.subr.mxu0 0.0
    %5140 = vmatpush1.msra.mxu0 0.0
    %5141 = vmatprep.subr.mxu0 0.0
    %5142 = vmatpush1.msra.mxu0 0.0
    %5143 = vmatprep.mubr.f32.mxu0 0.0
    %5144 = vmatmul.mubr.f32.gmra.mrb[0].mxu0 %v5077
    %v5145 = vpop.f32.mrb[0].mxu0
    %v5146 = vadd.f32 0.0, %v5145
    %v5147 = vpop.f32.mrb[0].mxu0
    %5148 = vdwg.mxu0
    %v5150 = vsel %vm4826, %v4976, 0
    %5152 = vmatprep.subr.mxu0 0.0
    %5153 = vmatpush1.msra.mxu0 %v2696
    %5154 = vmatprep.subr.mxu0 0.0
    %5155 = vmatpush1.msra.mxu0 0.0
    %5156 = vmatprep.subr.mxu0 0.0
    %5157 = vmatpush1.msra.mxu0 0.0
    %5158 = vmatprep.subr.mxu0 0.0
    %5159 = vmatpush1.msra.mxu0 0.0
    %5160 = vmatprep.subr.mxu0 0.0
    %5161 = vmatpush1.msra.mxu0 0.0
    %5162 = vmatprep.subr.mxu0 0.0
    %5163 = vmatpush1.msra.mxu0 0.0
    %5164 = vmatprep.subr.mxu0 0.0
    %5165 = vmatpush1.msra.mxu0 0.0
    %5166 = vmatprep.subr.mxu0 0.0
    %5167 = vmatpush1.msra.mxu0 0.0
    %5168 = vmatprep.subr.mxu0 0.0
    %5169 = vmatpush1.msra.mxu0 0.0
    %5170 = vmatprep.subr.mxu0 0.0
    %5171 = vmatpush1.msra.mxu0 0.0
    %5172 = vmatprep.subr.mxu0 0.0
    %5173 = vmatpush1.msra.mxu0 0.0
    %5174 = vmatprep.subr.mxu0 0.0
    %5175 = vmatpush1.msra.mxu0 0.0
    %5176 = vmatprep.subr.mxu0 0.0
    %5177 = vmatpush1.msra.mxu0 0.0
    %5178 = vmatprep.subr.mxu0 0.0
    %5179 = vmatpush1.msra.mxu0 0.0
    %5180 = vmatprep.subr.mxu0 0.0
    %5181 = vmatpush1.msra.mxu0 0.0
    %5182 = vmatprep.subr.mxu0 0.0
    %5183 = vmatpush1.msra.mxu0 0.0
    %5184 = vmatprep.subr.mxu0 0.0
    %5185 = vmatpush1.msra.mxu0 0.0
    %5186 = vmatprep.subr.mxu0 0.0
    %5187 = vmatpush1.msra.mxu0 0.0
    %5188 = vmatprep.subr.mxu0 0.0
    %5189 = vmatpush1.msra.mxu0 0.0
    %5190 = vmatprep.subr.mxu0 0.0
    %5191 = vmatpush1.msra.mxu0 0.0
    %5192 = vmatprep.subr.mxu0 0.0
    %5193 = vmatpush1.msra.mxu0 0.0
    %5194 = vmatprep.subr.mxu0 0.0
    %5195 = vmatpush1.msra.mxu0 0.0
    %5196 = vmatprep.subr.mxu0 0.0
    %5197 = vmatpush1.msra.mxu0 0.0
    %5198 = vmatprep.subr.mxu0 0.0
    %5199 = vmatpush1.msra.mxu0 0.0
    %5200 = vmatprep.subr.mxu0 0.0
    %5201 = vmatpush1.msra.mxu0 0.0
    %5202 = vmatprep.subr.mxu0 0.0
    %5203 = vmatpush1.msra.mxu0 0.0
    %5204 = vmatprep.subr.mxu0 0.0
    %5205 = vmatpush1.msra.mxu0 0.0
    %5206 = vmatprep.subr.mxu0 0.0
    %5207 = vmatpush1.msra.mxu0 0.0
    %5208 = vmatprep.subr.mxu0 0.0
    %5209 = vmatpush1.msra.mxu0 0.0
    %5210 = vmatprep.subr.mxu0 0.0
    %5211 = vmatpush1.msra.mxu0 0.0
    %5212 = vmatprep.subr.mxu0 0.0
    %5213 = vmatpush1.msra.mxu0 0.0
    %5214 = vmatprep.subr.mxu0 0.0
    %5215 = vmatpush1.msra.mxu0 0.0
    %5216 = vmatprep.mubr.f32.mxu0 0.0
    %5217 = vmatmul.mubr.f32.gmra.mrb[0].mxu0 %v5150
    %v5218 = vpop.f32.mrb[0].mxu0
    %v5219 = vadd.f32 0.0, %v5218
    %v5220 = vpop.f32.mrb[0].mxu0
    %5221 = vdwg.mxu0
    %v5223 = vsel %vm4826, %v4978, 0
    %5225 = vmatprep.subr.mxu0 0.0
    %5226 = vmatpush1.msra.mxu0 %v2766
    %5227 = vmatprep.subr.mxu0 0.0
    %5228 = vmatpush1.msra.mxu0 0.0
    %5229 = vmatprep.subr.mxu0 0.0
    %5230 = vmatpush1.msra.mxu0 0.0
    %5231 = vmatprep.subr.mxu0 0.0
    %5232 = vmatpush1.msra.mxu0 0.0
    %5233 = vmatprep.subr.mxu0 0.0
    %5234 = vmatpush1.msra.mxu0 0.0
    %5235 = vmatprep.subr.mxu0 0.0
    %5236 = vmatpush1.msra.mxu0 0.0
    %5237 = vmatprep.subr.mxu0 0.0
    %5238 = vmatpush1.msra.mxu0 0.0
    %5239 = vmatprep.subr.mxu0 0.0
    %5240 = vmatpush1.msra.mxu0 0.0
    %5241 = vmatprep.subr.mxu0 0.0
    %5242 = vmatpush1.msra.mxu0 0.0
    %5243 = vmatprep.subr.mxu0 0.0
    %5244 = vmatpush1.msra.mxu0 0.0
    %5245 = vmatprep.subr.mxu0 0.0
    %5246 = vmatpush1.msra.mxu0 0.0
    %5247 = vmatprep.subr.mxu0 0.0
    %5248 = vmatpush1.msra.mxu0 0.0
    %5249 = vmatprep.subr.mxu0 0.0
    %5250 = vmatpush1.msra.mxu0 0.0
    %5251 = vmatprep.subr.mxu0 0.0
    %5252 = vmatpush1.msra.mxu0 0.0
    %5253 = vmatprep.subr.mxu0 0.0
    %5254 = vmatpush1.msra.mxu0 0.0
    %5255 = vmatprep.subr.mxu0 0.0
    %5256 = vmatpush1.msra.mxu0 0.0
    %5257 = vmatprep.subr.mxu0 0.0
    %5258 = vmatpush1.msra.mxu0 0.0
    %5259 = vmatprep.subr.mxu0 0.0
    %5260 = vmatpush1.msra.mxu0 0.0
    %5261 = vmatprep.subr.mxu0 0.0
    %5262 = vmatpush1.msra.mxu0 0.0
    %5263 = vmatprep.subr.mxu0 0.0
    %5264 = vmatpush1.msra.mxu0 0.0
    %5265 = vmatprep.subr.mxu0 0.0
    %5266 = vmatpush1.msra.mxu0 0.0
    %5267 = vmatprep.subr.mxu0 0.0
    %5268 = vmatpush1.msra.mxu0 0.0
    %5269 = vmatprep.subr.mxu0 0.0
    %5270 = vmatpush1.msra.mxu0 0.0
    %5271 = vmatprep.subr.mxu0 0.0
    %5272 = vmatpush1.msra.mxu0 0.0
    %5273 = vmatprep.subr.mxu0 0.0
    %5274 = vmatpush1.msra.mxu0 0.0
    %5275 = vmatprep.subr.mxu0 0.0
    %5276 = vmatpush1.msra.mxu0 0.0
    %5277 = vmatprep.subr.mxu0 0.0
    %5278 = vmatpush1.msra.mxu0 0.0
    %5279 = vmatprep.subr.mxu0 0.0
    %5280 = vmatpush1.msra.mxu0 0.0
    %5281 = vmatprep.subr.mxu0 0.0
    %5282 = vmatpush1.msra.mxu0 0.0
    %5283 = vmatprep.subr.mxu0 0.0
    %5284 = vmatpush1.msra.mxu0 0.0
    %5285 = vmatprep.subr.mxu0 0.0
    %5286 = vmatpush1.msra.mxu0 0.0
    %5287 = vmatprep.subr.mxu0 0.0
    %5288 = vmatpush1.msra.mxu0 0.0
    %5289 = vmatprep.mubr.f32.mxu0 0.0
    %5290 = vmatmul.mubr.f32.gmra.mrb[0].mxu0 %v5223
    %v5291 = vpop.f32.mrb[0].mxu0
    %v5292 = vadd.f32 0.0, %v5291
    %v5293 = vpop.f32.mrb[0].mxu0
    %5294 = vdwg.mxu0
    %v5296 = vsel %vm4826, %v4980, 0
    %5298 = vmatprep.subr.mxu0 0.0
    %5299 = vmatpush1.msra.mxu0 %v2836
    %5300 = vmatprep.subr.mxu0 0.0
    %5301 = vmatpush1.msra.mxu0 0.0
    %5302 = vmatprep.subr.mxu0 0.0
    %5303 = vmatpush1.msra.mxu0 0.0
    %5304 = vmatprep.subr.mxu0 0.0
    %5305 = vmatpush1.msra.mxu0 0.0
    %5306 = vmatprep.subr.mxu0 0.0
    %5307 = vmatpush1.msra.mxu0 0.0
    %5308 = vmatprep.subr.mxu0 0.0
    %5309 = vmatpush1.msra.mxu0 0.0
    %5310 = vmatprep.subr.mxu0 0.0
    %5311 = vmatpush1.msra.mxu0 0.0
    %5312 = vmatprep.subr.mxu0 0.0
    %5313 = vmatpush1.msra.mxu0 0.0
    %5314 = vmatprep.subr.mxu0 0.0
    %5315 = vmatpush1.msra.mxu0 0.0
    %5316 = vmatprep.subr.mxu0 0.0
    %5317 = vmatpush1.msra.mxu0 0.0
    %5318 = vmatprep.subr.mxu0 0.0
    %5319 = vmatpush1.msra.mxu0 0.0
    %5320 = vmatprep.subr.mxu0 0.0
    %5321 = vmatpush1.msra.mxu0 0.0
    %5322 = vmatprep.subr.mxu0 0.0
    %5323 = vmatpush1.msra.mxu0 0.0
    %5324 = vmatprep.subr.mxu0 0.0
    %5325 = vmatpush1.msra.mxu0 0.0
    %5326 = vmatprep.subr.mxu0 0.0
    %5327 = vmatpush1.msra.mxu0 0.0
    %5328 = vmatprep.subr.mxu0 0.0
    %5329 = vmatpush1.msra.mxu0 0.0
    %5330 = vmatprep.subr.mxu0 0.0
    %5331 = vmatpush1.msra.mxu0 0.0
    %5332 = vmatprep.subr.mxu0 0.0
    %5333 = vmatpush1.msra.mxu0 0.0
    %5334 = vmatprep.subr.mxu0 0.0
    %5335 = vmatpush1.msra.mxu0 0.0
    %5336 = vmatprep.subr.mxu0 0.0
    %5337 = vmatpush1.msra.mxu0 0.0
    %5338 = vmatprep.subr.mxu0 0.0
    %5339 = vmatpush1.msra.mxu0 0.0
    %5340 = vmatprep.subr.mxu0 0.0
    %5341 = vmatpush1.msra.mxu0 0.0
    %5342 = vmatprep.subr.mxu0 0.0
    %5343 = vmatpush1.msra.mxu0 0.0
    %5344 = vmatprep.subr.mxu0 0.0
    %5345 = vmatpush1.msra.mxu0 0.0
    %5346 = vmatprep.subr.mxu0 0.0
    %5347 = vmatpush1.msra.mxu0 0.0
    %5348 = vmatprep.subr.mxu0 0.0
    %5349 = vmatpush1.msra.mxu0 0.0
    %5350 = vmatprep.subr.mxu0 0.0
    %5351 = vmatpush1.msra.mxu0 0.0
    %5352 = vmatprep.subr.mxu0 0.0
    %5353 = vmatpush1.msra.mxu0 0.0
    %5354 = vmatprep.subr.mxu0 0.0
    %5355 = vmatpush1.msra.mxu0 0.0
    %5356 = vmatprep.subr.mxu0 0.0
    %5357 = vmatpush1.msra.mxu0 0.0
    %5358 = vmatprep.subr.mxu0 0.0
    %5359 = vmatpush1.msra.mxu0 0.0
    %5360 = vmatprep.subr.mxu0 0.0
    %5361 = vmatpush1.msra.mxu0 0.0
    %5362 = vmatprep.mubr.f32.mxu0 0.0
    %5363 = vmatmul.mubr.f32.gmra.mrb[0].mxu0 %v5296
    %v5364 = vpop.f32.mrb[0].mxu0
    %v5365 = vadd.f32 0.0, %v5364
    %v5366 = vpop.f32.mrb[0].mxu0
    %5367 = vdwg.mxu0
    %v5369 = vsel %vm4826, %v4982, 0
    %5371 = vmatprep.subr.mxu0 0.0
    %5372 = vmatpush1.msra.mxu0 %v2906
    %5373 = vmatprep.subr.mxu0 0.0
    %5374 = vmatpush1.msra.mxu0 0.0
    %5375 = vmatprep.subr.mxu0 0.0
    %5376 = vmatpush1.msra.mxu0 0.0
    %5377 = vmatprep.subr.mxu0 0.0
    %5378 = vmatpush1.msra.mxu0 0.0
    %5379 = vmatprep.subr.mxu0 0.0
    %5380 = vmatpush1.msra.mxu0 0.0
    %5381 = vmatprep.subr.mxu0 0.0
    %5382 = vmatpush1.msra.mxu0 0.0
    %5383 = vmatprep.subr.mxu0 0.0
    %5384 = vmatpush1.msra.mxu0 0.0
    %5385 = vmatprep.subr.mxu0 0.0
    %5386 = vmatpush1.msra.mxu0 0.0
    %5387 = vmatprep.subr.mxu0 0.0
    %5388 = vmatpush1.msra.mxu0 0.0
    %5389 = vmatprep.subr.mxu0 0.0
    %5390 = vmatpush1.msra.mxu0 0.0
    %5391 = vmatprep.subr.mxu0 0.0
    %5392 = vmatpush1.msra.mxu0 0.0
    %5393 = vmatprep.subr.mxu0 0.0
    %5394 = vmatpush1.msra.mxu0 0.0
    %5395 = vmatprep.subr.mxu0 0.0
    %5396 = vmatpush1.msra.mxu0 0.0
    %5397 = vmatprep.subr.mxu0 0.0
    %5398 = vmatpush1.msra.mxu0 0.0
    %5399 = vmatprep.subr.mxu0 0.0
    %5400 = vmatpush1.msra.mxu0 0.0
    %5401 = vmatprep.subr.mxu0 0.0
    %5402 = vmatpush1.msra.mxu0 0.0
    %5403 = vmatprep.subr.mxu0 0.0
    %5404 = vmatpush1.msra.mxu0 0.0
    %5405 = vmatprep.subr.mxu0 0.0
    %5406 = vmatpush1.msra.mxu0 0.0
    %5407 = vmatprep.subr.mxu0 0.0
    %5408 = vmatpush1.msra.mxu0 0.0
    %5409 = vmatprep.subr.mxu0 0.0
    %5410 = vmatpush1.msra.mxu0 0.0
    %5411 = vmatprep.subr.mxu0 0.0
    %5412 = vmatpush1.msra.mxu0 0.0
    %5413 = vmatprep.subr.mxu0 0.0
    %5414 = vmatpush1.msra.mxu0 0.0
    %5415 = vmatprep.subr.mxu0 0.0
    %5416 = vmatpush1.msra.mxu0 0.0
    %5417 = vmatprep.subr.mxu0 0.0
    %5418 = vmatpush1.msra.mxu0 0.0
    %5419 = vmatprep.subr.mxu0 0.0
    %5420 = vmatpush1.msra.mxu0 0.0
    %5421 = vmatprep.subr.mxu0 0.0
    %5422 = vmatpush1.msra.mxu0 0.0
    %5423 = vmatprep.subr.mxu0 0.0
    %5424 = vmatpush1.msra.mxu0 0.0
    %5425 = vmatprep.subr.mxu0 0.0
    %5426 = vmatpush1.msra.mxu0 0.0
    %5427 = vmatprep.subr.mxu0 0.0
    %5428 = vmatpush1.msra.mxu0 0.0
    %5429 = vmatprep.subr.mxu0 0.0
    %5430 = vmatpush1.msra.mxu0 0.0
    %5431 = vmatprep.subr.mxu0 0.0
    %5432 = vmatpush1.msra.mxu0 0.0
    %5433 = vmatprep.subr.mxu0 0.0
    %5434 = vmatpush1.msra.mxu0 0.0
    %5435 = vmatprep.mubr.f32.mxu0 0.0
    %5436 = vmatmul.mubr.f32.gmra.mrb[0].mxu0 %v5369
    %v5437 = vpop.f32.mrb[0].mxu0
    %v5438 = vadd.f32 0.0, %v5437
    %v5439 = vpop.f32.mrb[0].mxu0
    %5440 = vdwg.mxu0
    %v5442 = vsel %vm4826, %v4984, 0
    %5444 = vmatprep.subr.mxu0 0.0
    %5445 = vmatpush1.msra.mxu0 %v2976
    %5446 = vmatprep.subr.mxu0 0.0
    %5447 = vmatpush1.msra.mxu0 0.0
    %5448 = vmatprep.subr.mxu0 0.0
    %5449 = vmatpush1.msra.mxu0 0.0
    %5450 = vmatprep.subr.mxu0 0.0
    %5451 = vmatpush1.msra.mxu0 0.0
    %5452 = vmatprep.subr.mxu0 0.0
    %5453 = vmatpush1.msra.mxu0 0.0
    %5454 = vmatprep.subr.mxu0 0.0
    %5455 = vmatpush1.msra.mxu0 0.0
    %5456 = vmatprep.subr.mxu0 0.0
    %5457 = vmatpush1.msra.mxu0 0.0
    %5458 = vmatprep.subr.mxu0 0.0
    %5459 = vmatpush1.msra.mxu0 0.0
    %5460 = vmatprep.subr.mxu0 0.0
    %5461 = vmatpush1.msra.mxu0 0.0
    %5462 = vmatprep.subr.mxu0 0.0
    %5463 = vmatpush1.msra.mxu0 0.0
    %5464 = vmatprep.subr.mxu0 0.0
    %5465 = vmatpush1.msra.mxu0 0.0
    %5466 = vmatprep.subr.mxu0 0.0
    %5467 = vmatpush1.msra.mxu0 0.0
    %5468 = vmatprep.subr.mxu0 0.0
    %5469 = vmatpush1.msra.mxu0 0.0
    %5470 = vmatprep.subr.mxu0 0.0
    %5471 = vmatpush1.msra.mxu0 0.0
    %5472 = vmatprep.subr.mxu0 0.0
    %5473 = vmatpush1.msra.mxu0 0.0
    %5474 = vmatprep.subr.mxu0 0.0
    %5475 = vmatpush1.msra.mxu0 0.0
    %5476 = vmatprep.subr.mxu0 0.0
    %5477 = vmatpush1.msra.mxu0 0.0
    %5478 = vmatprep.subr.mxu0 0.0
    %5479 = vmatpush1.msra.mxu0 0.0
    %5480 = vmatprep.subr.mxu0 0.0
    %5481 = vmatpush1.msra.mxu0 0.0
    %5482 = vmatprep.subr.mxu0 0.0
    %5483 = vmatpush1.msra.mxu0 0.0
    %5484 = vmatprep.subr.mxu0 0.0
    %5485 = vmatpush1.msra.mxu0 0.0
    %5486 = vmatprep.subr.mxu0 0.0
    %5487 = vmatpush1.msra.mxu0 0.0
    %5488 = vmatprep.subr.mxu0 0.0
    %5489 = vmatpush1.msra.mxu0 0.0
    %5490 = vmatprep.subr.mxu0 0.0
    %5491 = vmatpush1.msra.mxu0 0.0
    %5492 = vmatprep.subr.mxu0 0.0
    %5493 = vmatpush1.msra.mxu0 0.0
    %5494 = vmatprep.subr.mxu0 0.0
    %5495 = vmatpush1.msra.mxu0 0.0
    %5496 = vmatprep.subr.mxu0 0.0
    %5497 = vmatpush1.msra.mxu0 0.0
    %5498 = vmatprep.subr.mxu0 0.0
    %5499 = vmatpush1.msra.mxu0 0.0
    %5500 = vmatprep.subr.mxu0 0.0
    %5501 = vmatpush1.msra.mxu0 0.0
    %5502 = vmatprep.subr.mxu0 0.0
    %5503 = vmatpush1.msra.mxu0 0.0
    %5504 = vmatprep.subr.mxu0 0.0
    %5505 = vmatpush1.msra.mxu0 0.0
    %5506 = vmatprep.subr.mxu0 0.0
    %5507 = vmatpush1.msra.mxu0 0.0
    %5508 = vmatprep.mubr.f32.mxu0 0.0
    %5509 = vmatmul.mubr.f32.gmra.mrb[0].mxu0 %v5442
    %v5510 = vpop.f32.mrb[0].mxu0
    %v5511 = vadd.f32 0.0, %v5510
    %v5512 = vpop.f32.mrb[0].mxu0
    %5513 = vdwg.mxu0
    %v5515 = vsel %vm4826, %v4986, 0
    %5517 = vmatprep.subr.mxu0 0.0
    %5518 = vmatpush1.msra.mxu0 %v3046
    %5519 = vmatprep.subr.mxu0 0.0
    %5520 = vmatpush1.msra.mxu0 0.0
    %5521 = vmatprep.subr.mxu0 0.0
    %5522 = vmatpush1.msra.mxu0 0.0
    %5523 = vmatprep.subr.mxu0 0.0
    %5524 = vmatpush1.msra.mxu0 0.0
    %5525 = vmatprep.subr.mxu0 0.0
    %5526 = vmatpush1.msra.mxu0 0.0
    %5527 = vmatprep.subr.mxu0 0.0
    %5528 = vmatpush1.msra.mxu0 0.0
    %5529 = vmatprep.subr.mxu0 0.0
    %5530 = vmatpush1.msra.mxu0 0.0
    %5531 = vmatprep.subr.mxu0 0.0
    %5532 = vmatpush1.msra.mxu0 0.0
    %5533 = vmatprep.subr.mxu0 0.0
    %5534 = vmatpush1.msra.mxu0 0.0
    %5535 = vmatprep.subr.mxu0 0.0
    %5536 = vmatpush1.msra.mxu0 0.0
    %5537 = vmatprep.subr.mxu0 0.0
    %5538 = vmatpush1.msra.mxu0 0.0
    %5539 = vmatprep.subr.mxu0 0.0
    %5540 = vmatpush1.msra.mxu0 0.0
    %5541 = vmatprep.subr.mxu0 0.0
    %5542 = vmatpush1.msra.mxu0 0.0
    %5543 = vmatprep.subr.mxu0 0.0
    %5544 = vmatpush1.msra.mxu0 0.0
    %5545 = vmatprep.subr.mxu0 0.0
    %5546 = vmatpush1.msra.mxu0 0.0
    %5547 = vmatprep.subr.mxu0 0.0
    %5548 = vmatpush1.msra.mxu0 0.0
    %5549 = vmatprep.subr.mxu0 0.0
    %5550 = vmatpush1.msra.mxu0 0.0
    %5551 = vmatprep.subr.mxu0 0.0
    %5552 = vmatpush1.msra.mxu0 0.0
    %5553 = vmatprep.subr.mxu0 0.0
    %5554 = vmatpush1.msra.mxu0 0.0
    %5555 = vmatprep.subr.mxu0 0.0
    %5556 = vmatpush1.msra.mxu0 0.0
    %5557 = vmatprep.subr.mxu0 0.0
    %5558 = vmatpush1.msra.mxu0 0.0
    %5559 = vmatprep.subr.mxu0 0.0
    %5560 = vmatpush1.msra.mxu0 0.0
    %5561 = vmatprep.subr.mxu0 0.0
    %5562 = vmatpush1.msra.mxu0 0.0
    %5563 = vmatprep.subr.mxu0 0.0
    %5564 = vmatpush1.msra.mxu0 0.0
    %5565 = vmatprep.subr.mxu0 0.0
    %5566 = vmatpush1.msra.mxu0 0.0
    %5567 = vmatprep.subr.mxu0 0.0
    %5568 = vmatpush1.msra.mxu0 0.0
    %5569 = vmatprep.subr.mxu0 0.0
    %5570 = vmatpush1.msra.mxu0 0.0
    %5571 = vmatprep.subr.mxu0 0.0
    %5572 = vmatpush1.msra.mxu0 0.0
    %5573 = vmatprep.subr.mxu0 0.0
    %5574 = vmatpush1.msra.mxu0 0.0
    %5575 = vmatprep.subr.mxu0 0.0
    %5576 = vmatpush1.msra.mxu0 0.0
    %5577 = vmatprep.subr.mxu0 0.0
    %5578 = vmatpush1.msra.mxu0 0.0
    %5579 = vmatprep.subr.mxu0 0.0
    %5580 = vmatpush1.msra.mxu0 0.0
    %5581 = vmatprep.mubr.f32.mxu0 0.0
    %5582 = vmatmul.mubr.f32.gmra.mrb[0].mxu0 %v5515
    %v5583 = vpop.f32.mrb[0].mxu0
    %v5584 = vadd.f32 0.0, %v5583
    %v5585 = vpop.f32.mrb[0].mxu0
    %5586 = vdwg.mxu0
    %v5588 = vsel %vm4826, %v4988, 0
    %5590 = vmatprep.subr.mxu0 0.0
    %5591 = vmatpush1.msra.mxu0 %v3116
    %5592 = vmatprep.subr.mxu0 0.0
    %5593 = vmatpush1.msra.mxu0 0.0
    %5594 = vmatprep.subr.mxu0 0.0
    %5595 = vmatpush1.msra.mxu0 0.0
    %5596 = vmatprep.subr.mxu0 0.0
    %5597 = vmatpush1.msra.mxu0 0.0
    %5598 = vmatprep.subr.mxu0 0.0
    %5599 = vmatpush1.msra.mxu0 0.0
    %5600 = vmatprep.subr.mxu0 0.0
    %5601 = vmatpush1.msra.mxu0 0.0
    %5602 = vmatprep.subr.mxu0 0.0
    %5603 = vmatpush1.msra.mxu0 0.0
    %5604 = vmatprep.subr.mxu0 0.0
    %5605 = vmatpush1.msra.mxu0 0.0
    %5606 = vmatprep.subr.mxu0 0.0
    %5607 = vmatpush1.msra.mxu0 0.0
    %5608 = vmatprep.subr.mxu0 0.0
    %5609 = vmatpush1.msra.mxu0 0.0
    %5610 = vmatprep.subr.mxu0 0.0
    %5611 = vmatpush1.msra.mxu0 0.0
    %5612 = vmatprep.subr.mxu0 0.0
    %5613 = vmatpush1.msra.mxu0 0.0
    %5614 = vmatprep.subr.mxu0 0.0
    %5615 = vmatpush1.msra.mxu0 0.0
    %5616 = vmatprep.subr.mxu0 0.0
    %5617 = vmatpush1.msra.mxu0 0.0
    %5618 = vmatprep.subr.mxu0 0.0
    %5619 = vmatpush1.msra.mxu0 0.0
    %5620 = vmatprep.subr.mxu0 0.0
    %5621 = vmatpush1.msra.mxu0 0.0
    %5622 = vmatprep.subr.mxu0 0.0
    %5623 = vmatpush1.msra.mxu0 0.0
    %5624 = vmatprep.subr.mxu0 0.0
    %5625 = vmatpush1.msra.mxu0 0.0
    %5626 = vmatprep.subr.mxu0 0.0
    %5627 = vmatpush1.msra.mxu0 0.0
    %5628 = vmatprep.subr.mxu0 0.0
    %5629 = vmatpush1.msra.mxu0 0.0
    %5630 = vmatprep.subr.mxu0 0.0
    %5631 = vmatpush1.msra.mxu0 0.0
    %5632 = vmatprep.subr.mxu0 0.0
    %5633 = vmatpush1.msra.mxu0 0.0
    %5634 = vmatprep.subr.mxu0 0.0
    %5635 = vmatpush1.msra.mxu0 0.0
    %5636 = vmatprep.subr.mxu0 0.0
    %5637 = vmatpush1.msra.mxu0 0.0
    %5638 = vmatprep.subr.mxu0 0.0
    %5639 = vmatpush1.msra.mxu0 0.0
    %5640 = vmatprep.subr.mxu0 0.0
    %5641 = vmatpush1.msra.mxu0 0.0
    %5642 = vmatprep.subr.mxu0 0.0
    %5643 = vmatpush1.msra.mxu0 0.0
    %5644 = vmatprep.subr.mxu0 0.0
    %5645 = vmatpush1.msra.mxu0 0.0
    %5646 = vmatprep.subr.mxu0 0.0
    %5647 = vmatpush1.msra.mxu0 0.0
    %5648 = vmatprep.subr.mxu0 0.0
    %5649 = vmatpush1.msra.mxu0 0.0
    %5650 = vmatprep.subr.mxu0 0.0
    %5651 = vmatpush1.msra.mxu0 0.0
    %5652 = vmatprep.subr.mxu0 0.0
    %5653 = vmatpush1.msra.mxu0 0.0
    %5654 = vmatprep.mubr.f32.mxu0 0.0
    %5655 = vmatmul.mubr.f32.gmra.mrb[0].mxu0 %v5588
    %v5656 = vpop.f32.mrb[0].mxu0
    %v5657 = vadd.f32 0.0, %v5656
    %v5658 = vpop.f32.mrb[0].mxu0
    %5659 = vdwg.mxu0
    %v5661 = vsel %vm4826, %v4990, 0
    %5663 = vmatprep.subr.mxu0 0.0
    %5664 = vmatpush1.msra.mxu0 %v3186
    %5665 = vmatprep.subr.mxu0 0.0
    %5666 = vmatpush1.msra.mxu0 0.0
    %5667 = vmatprep.subr.mxu0 0.0
    %5668 = vmatpush1.msra.mxu0 0.0
    %5669 = vmatprep.subr.mxu0 0.0
    %5670 = vmatpush1.msra.mxu0 0.0
    %5671 = vmatprep.subr.mxu0 0.0
    %5672 = vmatpush1.msra.mxu0 0.0
    %5673 = vmatprep.subr.mxu0 0.0
    %5674 = vmatpush1.msra.mxu0 0.0
    %5675 = vmatprep.subr.mxu0 0.0
    %5676 = vmatpush1.msra.mxu0 0.0
    %5677 = vmatprep.subr.mxu0 0.0
    %5678 = vmatpush1.msra.mxu0 0.0
    %5679 = vmatprep.subr.mxu0 0.0
    %5680 = vmatpush1.msra.mxu0 0.0
    %5681 = vmatprep.subr.mxu0 0.0
    %5682 = vmatpush1.msra.mxu0 0.0
    %5683 = vmatprep.subr.mxu0 0.0
    %5684 = vmatpush1.msra.mxu0 0.0
    %5685 = vmatprep.subr.mxu0 0.0
    %5686 = vmatpush1.msra.mxu0 0.0
    %5687 = vmatprep.subr.mxu0 0.0
    %5688 = vmatpush1.msra.mxu0 0.0
    %5689 = vmatprep.subr.mxu0 0.0
    %5690 = vmatpush1.msra.mxu0 0.0
    %5691 = vmatprep.subr.mxu0 0.0
    %5692 = vmatpush1.msra.mxu0 0.0
    %5693 = vmatprep.subr.mxu0 0.0
    %5694 = vmatpush1.msra.mxu0 0.0
    %5695 = vmatprep.subr.mxu0 0.0
    %5696 = vmatpush1.msra.mxu0 0.0
    %5697 = vmatprep.subr.mxu0 0.0
    %5698 = vmatpush1.msra.mxu0 0.0
    %5699 = vmatprep.subr.mxu0 0.0
    %5700 = vmatpush1.msra.mxu0 0.0
    %5701 = vmatprep.subr.mxu0 0.0
    %5702 = vmatpush1.msra.mxu0 0.0
    %5703 = vmatprep.subr.mxu0 0.0
    %5704 = vmatpush1.msra.mxu0 0.0
    %5705 = vmatprep.subr.mxu0 0.0
    %5706 = vmatpush1.msra.mxu0 0.0
    %5707 = vmatprep.subr.mxu0 0.0
    %5708 = vmatpush1.msra.mxu0 0.0
    %5709 = vmatprep.subr.mxu0 0.0
    %5710 = vmatpush1.msra.mxu0 0.0
    %5711 = vmatprep.subr.mxu0 0.0
    %5712 = vmatpush1.msra.mxu0 0.0
    %5713 = vmatprep.subr.mxu0 0.0
    %5714 = vmatpush1.msra.mxu0 0.0
    %5715 = vmatprep.subr.mxu0 0.0
    %5716 = vmatpush1.msra.mxu0 0.0
    %5717 = vmatprep.subr.mxu0 0.0
    %5718 = vmatpush1.msra.mxu0 0.0
    %5719 = vmatprep.subr.mxu0 0.0
    %5720 = vmatpush1.msra.mxu0 0.0
    %5721 = vmatprep.subr.mxu0 0.0
    %5722 = vmatpush1.msra.mxu0 0.0
    %5723 = vmatprep.subr.mxu0 0.0
    %5724 = vmatpush1.msra.mxu0 0.0
    %5725 = vmatprep.subr.mxu0 0.0
    %5726 = vmatpush1.msra.mxu0 0.0
    %5727 = vmatprep.mubr.f32.mxu0 0.0
    %5728 = vmatmul.mubr.f32.gmra.mrb[0].mxu0 %v5661
    %v5729 = vpop.f32.mrb[0].mxu0
    %v5730 = vadd.f32 0.0, %v5729
    %v5731 = vpop.f32.mrb[0].mxu0
    %5732 = vdwg.mxu0
    %v5734 = vsel %vm4826, %v4992, 0
    %5736 = vmatprep.subr.mxu0 0.0
    %5737 = vmatpush1.msra.mxu0 %v3256
    %5738 = vmatprep.subr.mxu0 0.0
    %5739 = vmatpush1.msra.mxu0 0.0
    %5740 = vmatprep.subr.mxu0 0.0
    %5741 = vmatpush1.msra.mxu0 0.0
    %5742 = vmatprep.subr.mxu0 0.0
    %5743 = vmatpush1.msra.mxu0 0.0
    %5744 = vmatprep.subr.mxu0 0.0
    %5745 = vmatpush1.msra.mxu0 0.0
    %5746 = vmatprep.subr.mxu0 0.0
    %5747 = vmatpush1.msra.mxu0 0.0
    %5748 = vmatprep.subr.mxu0 0.0
    %5749 = vmatpush1.msra.mxu0 0.0
    %5750 = vmatprep.subr.mxu0 0.0
    %5751 = vmatpush1.msra.mxu0 0.0
    %5752 = vmatprep.subr.mxu0 0.0
    %5753 = vmatpush1.msra.mxu0 0.0
    %5754 = vmatprep.subr.mxu0 0.0
    %5755 = vmatpush1.msra.mxu0 0.0
    %5756 = vmatprep.subr.mxu0 0.0
    %5757 = vmatpush1.msra.mxu0 0.0
    %5758 = vmatprep.subr.mxu0 0.0
    %5759 = vmatpush1.msra.mxu0 0.0
    %5760 = vmatprep.subr.mxu0 0.0
    %5761 = vmatpush1.msra.mxu0 0.0
    %5762 = vmatprep.subr.mxu0 0.0
    %5763 = vmatpush1.msra.mxu0 0.0
    %5764 = vmatprep.subr.mxu0 0.0
    %5765 = vmatpush1.msra.mxu0 0.0
    %5766 = vmatprep.subr.mxu0 0.0
    %5767 = vmatpush1.msra.mxu0 0.0
    %5768 = vmatprep.subr.mxu0 0.0
    %5769 = vmatpush1.msra.mxu0 0.0
    %5770 = vmatprep.subr.mxu0 0.0
    %5771 = vmatpush1.msra.mxu0 0.0
    %5772 = vmatprep.subr.mxu0 0.0
    %5773 = vmatpush1.msra.mxu0 0.0
    %5774 = vmatprep.subr.mxu0 0.0
    %5775 = vmatpush1.msra.mxu0 0.0
    %5776 = vmatprep.subr.mxu0 0.0
    %5777 = vmatpush1.msra.mxu0 0.0
    %5778 = vmatprep.subr.mxu0 0.0
    %5779 = vmatpush1.msra.mxu0 0.0
    %5780 = vmatprep.subr.mxu0 0.0
    %5781 = vmatpush1.msra.mxu0 0.0
    %5782 = vmatprep.subr.mxu0 0.0
    %5783 = vmatpush1.msra.mxu0 0.0
    %5784 = vmatprep.subr.mxu0 0.0
    %5785 = vmatpush1.msra.mxu0 0.0
    %5786 = vmatprep.subr.mxu0 0.0
    %5787 = vmatpush1.msra.mxu0 0.0
    %5788 = vmatprep.subr.mxu0 0.0
    %5789 = vmatpush1.msra.mxu0 0.0
    %5790 = vmatprep.subr.mxu0 0.0
    %5791 = vmatpush1.msra.mxu0 0.0
    %5792 = vmatprep.subr.mxu0 0.0
    %5793 = vmatpush1.msra.mxu0 0.0
    %5794 = vmatprep.subr.mxu0 0.0
    %5795 = vmatpush1.msra.mxu0 0.0
    %5796 = vmatprep.subr.mxu0 0.0
    %5797 = vmatpush1.msra.mxu0 0.0
    %5798 = vmatprep.subr.mxu0 0.0
    %5799 = vmatpush1.msra.mxu0 0.0
    %5800 = vmatprep.mubr.f32.mxu0 0.0
    %5801 = vmatmul.mubr.f32.gmra.mrb[0].mxu0 %v5734
    %v5802 = vpop.f32.mrb[0].mxu0
    %v5803 = vadd.f32 0.0, %v5802
    %v5804 = vpop.f32.mrb[0].mxu0
    %5805 = vdwg.mxu0
    %v5807 = vsel %vm4826, %v4994, 0
    %5809 = vmatprep.subr.mxu0 0.0
    %5810 = vmatpush1.msra.mxu0 %v3326
    %5811 = vmatprep.subr.mxu0 0.0
    %5812 = vmatpush1.msra.mxu0 0.0
    %5813 = vmatprep.subr.mxu0 0.0
    %5814 = vmatpush1.msra.mxu0 0.0
    %5815 = vmatprep.subr.mxu0 0.0
    %5816 = vmatpush1.msra.mxu0 0.0
    %5817 = vmatprep.subr.mxu0 0.0
    %5818 = vmatpush1.msra.mxu0 0.0
    %5819 = vmatprep.subr.mxu0 0.0
    %5820 = vmatpush1.msra.mxu0 0.0
    %5821 = vmatprep.subr.mxu0 0.0
    %5822 = vmatpush1.msra.mxu0 0.0
    %5823 = vmatprep.subr.mxu0 0.0
    %5824 = vmatpush1.msra.mxu0 0.0
    %5825 = vmatprep.subr.mxu0 0.0
    %5826 = vmatpush1.msra.mxu0 0.0
    %5827 = vmatprep.subr.mxu0 0.0
    %5828 = vmatpush1.msra.mxu0 0.0
    %5829 = vmatprep.subr.mxu0 0.0
    %5830 = vmatpush1.msra.mxu0 0.0
    %5831 = vmatprep.subr.mxu0 0.0
    %5832 = vmatpush1.msra.mxu0 0.0
    %5833 = vmatprep.subr.mxu0 0.0
    %5834 = vmatpush1.msra.mxu0 0.0
    %5835 = vmatprep.subr.mxu0 0.0
    %5836 = vmatpush1.msra.mxu0 0.0
    %5837 = vmatprep.subr.mxu0 0.0
    %5838 = vmatpush1.msra.mxu0 0.0
    %5839 = vmatprep.subr.mxu0 0.0
    %5840 = vmatpush1.msra.mxu0 0.0
    %5841 = vmatprep.subr.mxu0 0.0
    %5842 = vmatpush1.msra.mxu0 0.0
    %5843 = vmatprep.subr.mxu0 0.0
    %5844 = vmatpush1.msra.mxu0 0.0
    %5845 = vmatprep.subr.mxu0 0.0
    %5846 = vmatpush1.msra.mxu0 0.0
    %5847 = vmatprep.subr.mxu0 0.0
    %5848 = vmatpush1.msra.mxu0 0.0
    %5849 = vmatprep.subr.mxu0 0.0
    %5850 = vmatpush1.msra.mxu0 0.0
    %5851 = vmatprep.subr.mxu0 0.0
    %5852 = vmatpush1.msra.mxu0 0.0
    %5853 = vmatprep.subr.mxu0 0.0
    %5854 = vmatpush1.msra.mxu0 0.0
    %5855 = vmatprep.subr.mxu0 0.0
    %5856 = vmatpush1.msra.mxu0 0.0
    %5857 = vmatprep.subr.mxu0 0.0
    %5858 = vmatpush1.msra.mxu0 0.0
    %5859 = vmatprep.subr.mxu0 0.0
    %5860 = vmatpush1.msra.mxu0 0.0
    %5861 = vmatprep.subr.mxu0 0.0
    %5862 = vmatpush1.msra.mxu0 0.0
    %5863 = vmatprep.subr.mxu0 0.0
    %5864 = vmatpush1.msra.mxu0 0.0
    %5865 = vmatprep.subr.mxu0 0.0
    %5866 = vmatpush1.msra.mxu0 0.0
    %5867 = vmatprep.subr.mxu0 0.0
    %5868 = vmatpush1.msra.mxu0 0.0
    %5869 = vmatprep.subr.mxu0 0.0
    %5870 = vmatpush1.msra.mxu0 0.0
    %5871 = vmatprep.subr.mxu0 0.0
    %5872 = vmatpush1.msra.mxu0 0.0
    %5873 = vmatprep.mubr.f32.mxu0 0.0
    %5874 = vmatmul.mubr.f32.gmra.mrb[0].mxu0 %v5807
    %v5875 = vpop.f32.mrb[0].mxu0
    %v5876 = vadd.f32 0.0, %v5875
    %v5877 = vpop.f32.mrb[0].mxu0
    %5878 = vdwg.mxu0
    %v5880 = vsel %vm4826, %v4996, 0
    %5882 = vmatprep.subr.mxu0 0.0
    %5883 = vmatpush1.msra.mxu0 %v3396
    %5884 = vmatprep.subr.mxu0 0.0
    %5885 = vmatpush1.msra.mxu0 0.0
    %5886 = vmatprep.subr.mxu0 0.0
    %5887 = vmatpush1.msra.mxu0 0.0
    %5888 = vmatprep.subr.mxu0 0.0
    %5889 = vmatpush1.msra.mxu0 0.0
    %5890 = vmatprep.subr.mxu0 0.0
    %5891 = vmatpush1.msra.mxu0 0.0
    %5892 = vmatprep.subr.mxu0 0.0
    %5893 = vmatpush1.msra.mxu0 0.0
    %5894 = vmatprep.subr.mxu0 0.0
    %5895 = vmatpush1.msra.mxu0 0.0
    %5896 = vmatprep.subr.mxu0 0.0
    %5897 = vmatpush1.msra.mxu0 0.0
    %5898 = vmatprep.subr.mxu0 0.0
    %5899 = vmatpush1.msra.mxu0 0.0
    %5900 = vmatprep.subr.mxu0 0.0
    %5901 = vmatpush1.msra.mxu0 0.0
    %5902 = vmatprep.subr.mxu0 0.0
    %5903 = vmatpush1.msra.mxu0 0.0
    %5904 = vmatprep.subr.mxu0 0.0
    %5905 = vmatpush1.msra.mxu0 0.0
    %5906 = vmatprep.subr.mxu0 0.0
    %5907 = vmatpush1.msra.mxu0 0.0
    %5908 = vmatprep.subr.mxu0 0.0
    %5909 = vmatpush1.msra.mxu0 0.0
    %5910 = vmatprep.subr.mxu0 0.0
    %5911 = vmatpush1.msra.mxu0 0.0
    %5912 = vmatprep.subr.mxu0 0.0
    %5913 = vmatpush1.msra.mxu0 0.0
    %5914 = vmatprep.subr.mxu0 0.0
    %5915 = vmatpush1.msra.mxu0 0.0
    %5916 = vmatprep.subr.mxu0 0.0
    %5917 = vmatpush1.msra.mxu0 0.0
    %5918 = vmatprep.subr.mxu0 0.0
    %5919 = vmatpush1.msra.mxu0 0.0
    %5920 = vmatprep.subr.mxu0 0.0
    %5921 = vmatpush1.msra.mxu0 0.0
    %5922 = vmatprep.subr.mxu0 0.0
    %5923 = vmatpush1.msra.mxu0 0.0
    %5924 = vmatprep.subr.mxu0 0.0
    %5925 = vmatpush1.msra.mxu0 0.0
    %5926 = vmatprep.subr.mxu0 0.0
    %5927 = vmatpush1.msra.mxu0 0.0
    %5928 = vmatprep.subr.mxu0 0.0
    %5929 = vmatpush1.msra.mxu0 0.0
    %5930 = vmatprep.subr.mxu0 0.0
    %5931 = vmatpush1.msra.mxu0 0.0
    %5932 = vmatprep.subr.mxu0 0.0
    %5933 = vmatpush1.msra.mxu0 0.0
    %5934 = vmatprep.subr.mxu0 0.0
    %5935 = vmatpush1.msra.mxu0 0.0
    %5936 = vmatprep.subr.mxu0 0.0
    %5937 = vmatpush1.msra.mxu0 0.0
    %5938 = vmatprep.subr.mxu0 0.0
    %5939 = vmatpush1.msra.mxu0 0.0
    %5940 = vmatprep.subr.mxu0 0.0
    %5941 = vmatpush1.msra.mxu0 0.0
    %5942 = vmatprep.subr.mxu0 0.0
    %5943 = vmatpush1.msra.mxu0 0.0
    %5944 = vmatprep.subr.mxu0 0.0
    %5945 = vmatpush1.msra.mxu0 0.0
    %5946 = vmatprep.mubr.f32.mxu0 0.0
    %5947 = vmatmul.mubr.f32.gmra.mrb[0].mxu0 %v5880
    %v5948 = vpop.f32.mrb[0].mxu0
    %v5949 = vadd.f32 0.0, %v5948
    %v5950 = vpop.f32.mrb[0].mxu0
    %5951 = vdwg.mxu0
    %v5953 = vsel %vm4826, %v4998, 0
    %5955 = vmatprep.subr.mxu0 0.0
    %5956 = vmatpush1.msra.mxu0 %v3466
    %5957 = vmatprep.subr.mxu0 0.0
    %5958 = vmatpush1.msra.mxu0 0.0
    %5959 = vmatprep.subr.mxu0 0.0
    %5960 = vmatpush1.msra.mxu0 0.0
    %5961 = vmatprep.subr.mxu0 0.0
    %5962 = vmatpush1.msra.mxu0 0.0
    %5963 = vmatprep.subr.mxu0 0.0
    %5964 = vmatpush1.msra.mxu0 0.0
    %5965 = vmatprep.subr.mxu0 0.0
    %5966 = vmatpush1.msra.mxu0 0.0
    %5967 = vmatprep.subr.mxu0 0.0
    %5968 = vmatpush1.msra.mxu0 0.0
    %5969 = vmatprep.subr.mxu0 0.0
    %5970 = vmatpush1.msra.mxu0 0.0
    %5971 = vmatprep.subr.mxu0 0.0
    %5972 = vmatpush1.msra.mxu0 0.0
    %5973 = vmatprep.subr.mxu0 0.0
    %5974 = vmatpush1.msra.mxu0 0.0
    %5975 = vmatprep.subr.mxu0 0.0
    %5976 = vmatpush1.msra.mxu0 0.0
    %5977 = vmatprep.subr.mxu0 0.0
    %5978 = vmatpush1.msra.mxu0 0.0
    %5979 = vmatprep.subr.mxu0 0.0
    %5980 = vmatpush1.msra.mxu0 0.0
    %5981 = vmatprep.subr.mxu0 0.0
    %5982 = vmatpush1.msra.mxu0 0.0
    %5983 = vmatprep.subr.mxu0 0.0
    %5984 = vmatpush1.msra.mxu0 0.0
    %5985 = vmatprep.subr.mxu0 0.0
    %5986 = vmatpush1.msra.mxu0 0.0
    %5987 = vmatprep.subr.mxu0 0.0
    %5988 = vmatpush1.msra.mxu0 0.0
    %5989 = vmatprep.subr.mxu0 0.0
    %5990 = vmatpush1.msra.mxu0 0.0
    %5991 = vmatprep.subr.mxu0 0.0
    %5992 = vmatpush1.msra.mxu0 0.0
    %5993 = vmatprep.subr.mxu0 0.0
    %5994 = vmatpush1.msra.mxu0 0.0
    %5995 = vmatprep.subr.mxu0 0.0
    %5996 = vmatpush1.msra.mxu0 0.0
    %5997 = vmatprep.subr.mxu0 0.0
    %5998 = vmatpush1.msra.mxu0 0.0
    %5999 = vmatprep.subr.mxu0 0.0
    %6000 = vmatpush1.msra.mxu0 0.0
    %6001 = vmatprep.subr.mxu0 0.0
    %6002 = vmatpush1.msra.mxu0 0.0
    %6003 = vmatprep.subr.mxu0 0.0
    %6004 = vmatpush1.msra.mxu0 0.0
    %6005 = vmatprep.subr.mxu0 0.0
    %6006 = vmatpush1.msra.mxu0 0.0
    %6007 = vmatprep.subr.mxu0 0.0
    %6008 = vmatpush1.msra.mxu0 0.0
    %6009 = vmatprep.subr.mxu0 0.0
    %6010 = vmatpush1.msra.mxu0 0.0
    %6011 = vmatprep.subr.mxu0 0.0
    %6012 = vmatpush1.msra.mxu0 0.0
    %6013 = vmatprep.subr.mxu0 0.0
    %6014 = vmatpush1.msra.mxu0 0.0
    %6015 = vmatprep.subr.mxu0 0.0
    %6016 = vmatpush1.msra.mxu0 0.0
    %6017 = vmatprep.subr.mxu0 0.0
    %6018 = vmatpush1.msra.mxu0 0.0
    %6019 = vmatprep.mubr.f32.mxu0 0.0
    %6020 = vmatmul.mubr.f32.gmra.mrb[0].mxu0 %v5953
    %v6021 = vpop.f32.mrb[0].mxu0
    %v6022 = vadd.f32 0.0, %v6021
    %v6023 = vpop.f32.mrb[0].mxu0
    %6024 = vdwg.mxu0
    %v6026 = vsel %vm4826, %v5000, 0
    %6028 = vmatprep.subr.mxu0 0.0
    %6029 = vmatpush1.msra.mxu0 %v3536
    %6030 = vmatprep.subr.mxu0 0.0
    %6031 = vmatpush1.msra.mxu0 0.0
    %6032 = vmatprep.subr.mxu0 0.0
    %6033 = vmatpush1.msra.mxu0 0.0
    %6034 = vmatprep.subr.mxu0 0.0
    %6035 = vmatpush1.msra.mxu0 0.0
    %6036 = vmatprep.subr.mxu0 0.0
    %6037 = vmatpush1.msra.mxu0 0.0
    %6038 = vmatprep.subr.mxu0 0.0
    %6039 = vmatpush1.msra.mxu0 0.0
    %6040 = vmatprep.subr.mxu0 0.0
    %6041 = vmatpush1.msra.mxu0 0.0
    %6042 = vmatprep.subr.mxu0 0.0
    %6043 = vmatpush1.msra.mxu0 0.0
    %6044 = vmatprep.subr.mxu0 0.0
    %6045 = vmatpush1.msra.mxu0 0.0
    %6046 = vmatprep.subr.mxu0 0.0
    %6047 = vmatpush1.msra.mxu0 0.0
    %6048 = vmatprep.subr.mxu0 0.0
    %6049 = vmatpush1.msra.mxu0 0.0
    %6050 = vmatprep.subr.mxu0 0.0
    %6051 = vmatpush1.msra.mxu0 0.0
    %6052 = vmatprep.subr.mxu0 0.0
    %6053 = vmatpush1.msra.mxu0 0.0
    %6054 = vmatprep.subr.mxu0 0.0
    %6055 = vmatpush1.msra.mxu0 0.0
    %6056 = vmatprep.subr.mxu0 0.0
    %6057 = vmatpush1.msra.mxu0 0.0
    %6058 = vmatprep.subr.mxu0 0.0
    %6059 = vmatpush1.msra.mxu0 0.0
    %6060 = vmatprep.subr.mxu0 0.0
    %6061 = vmatpush1.msra.mxu0 0.0
    %6062 = vmatprep.subr.mxu0 0.0
    %6063 = vmatpush1.msra.mxu0 0.0
    %6064 = vmatprep.subr.mxu0 0.0
    %6065 = vmatpush1.msra.mxu0 0.0
    %6066 = vmatprep.subr.mxu0 0.0
    %6067 = vmatpush1.msra.mxu0 0.0
    %6068 = vmatprep.subr.mxu0 0.0
    %6069 = vmatpush1.msra.mxu0 0.0
    %6070 = vmatprep.subr.mxu0 0.0
    %6071 = vmatpush1.msra.mxu0 0.0
    %6072 = vmatprep.subr.mxu0 0.0
    %6073 = vmatpush1.msra.mxu0 0.0
    %6074 = vmatprep.subr.mxu0 0.0
    %6075 = vmatpush1.msra.mxu0 0.0
    %6076 = vmatprep.subr.mxu0 0.0
    %6077 = vmatpush1.msra.mxu0 0.0
    %6078 = vmatprep.subr.mxu0 0.0
    %6079 = vmatpush1.msra.mxu0 0.0
    %6080 = vmatprep.subr.mxu0 0.0
    %6081 = vmatpush1.msra.mxu0 0.0
    %6082 = vmatprep.subr.mxu0 0.0
    %6083 = vmatpush1.msra.mxu0 0.0
    %6084 = vmatprep.subr.mxu0 0.0
    %6085 = vmatpush1.msra.mxu0 0.0
    %6086 = vmatprep.subr.mxu0 0.0
    %6087 = vmatpush1.msra.mxu0 0.0
    %6088 = vmatprep.subr.mxu0 0.0
    %6089 = vmatpush1.msra.mxu0 0.0
    %6090 = vmatprep.subr.mxu0 0.0
    %6091 = vmatpush1.msra.mxu0 0.0
    %6092 = vmatprep.mubr.f32.mxu0 0.0
    %6093 = vmatmul.mubr.f32.gmra.mrb[0].mxu0 %v6026
    %v6094 = vpop.f32.mrb[0].mxu0
    %v6095 = vadd.f32 0.0, %v6094
    %v6096 = vpop.f32.mrb[0].mxu0
    %6097 = vdwg.mxu0
    %v6099 = vsel %vm4826, %v5002, 0
    %6101 = vmatprep.subr.mxu0 0.0
    %6102 = vmatpush1.msra.mxu0 %v3606
    %6103 = vmatprep.subr.mxu0 0.0
    %6104 = vmatpush1.msra.mxu0 0.0
    %6105 = vmatprep.subr.mxu0 0.0
    %6106 = vmatpush1.msra.mxu0 0.0
    %6107 = vmatprep.subr.mxu0 0.0
    %6108 = vmatpush1.msra.mxu0 0.0
    %6109 = vmatprep.subr.mxu0 0.0
    %6110 = vmatpush1.msra.mxu0 0.0
    %6111 = vmatprep.subr.mxu0 0.0
    %6112 = vmatpush1.msra.mxu0 0.0
    %6113 = vmatprep.subr.mxu0 0.0
    %6114 = vmatpush1.msra.mxu0 0.0
    %6115 = vmatprep.subr.mxu0 0.0
    %6116 = vmatpush1.msra.mxu0 0.0
    %6117 = vmatprep.subr.mxu0 0.0
    %6118 = vmatpush1.msra.mxu0 0.0
    %6119 = vmatprep.subr.mxu0 0.0
    %6120 = vmatpush1.msra.mxu0 0.0
    %6121 = vmatprep.subr.mxu0 0.0
    %6122 = vmatpush1.msra.mxu0 0.0
    %6123 = vmatprep.subr.mxu0 0.0
    %6124 = vmatpush1.msra.mxu0 0.0
    %6125 = vmatprep.subr.mxu0 0.0
    %6126 = vmatpush1.msra.mxu0 0.0
    %6127 = vmatprep.subr.mxu0 0.0
    %6128 = vmatpush1.msra.mxu0 0.0
    %6129 = vmatprep.subr.mxu0 0.0
    %6130 = vmatpush1.msra.mxu0 0.0
    %6131 = vmatprep.subr.mxu0 0.0
    %6132 = vmatpush1.msra.mxu0 0.0
    %6133 = vmatprep.subr.mxu0 0.0
    %6134 = vmatpush1.msra.mxu0 0.0
    %6135 = vmatprep.subr.mxu0 0.0
    %6136 = vmatpush1.msra.mxu0 0.0
    %6137 = vmatprep.subr.mxu0 0.0
    %6138 = vmatpush1.msra.mxu0 0.0
    %6139 = vmatprep.subr.mxu0 0.0
    %6140 = vmatpush1.msra.mxu0 0.0
    %6141 = vmatprep.subr.mxu0 0.0
    %6142 = vmatpush1.msra.mxu0 0.0
    %6143 = vmatprep.subr.mxu0 0.0
    %6144 = vmatpush1.msra.mxu0 0.0
    %6145 = vmatprep.subr.mxu0 0.0
    %6146 = vmatpush1.msra.mxu0 0.0
    %6147 = vmatprep.subr.mxu0 0.0
    %6148 = vmatpush1.msra.mxu0 0.0
    %6149 = vmatprep.subr.mxu0 0.0
    %6150 = vmatpush1.msra.mxu0 0.0
    %6151 = vmatprep.subr.mxu0 0.0
    %6152 = vmatpush1.msra.mxu0 0.0
    %6153 = vmatprep.subr.mxu0 0.0
    %6154 = vmatpush1.msra.mxu0 0.0
    %6155 = vmatprep.subr.mxu0 0.0
    %6156 = vmatpush1.msra.mxu0 0.0
    %6157 = vmatprep.subr.mxu0 0.0
    %6158 = vmatpush1.msra.mxu0 0.0
    %6159 = vmatprep.subr.mxu0 0.0
    %6160 = vmatpush1.msra.mxu0 0.0
    %6161 = vmatprep.subr.mxu0 0.0
    %6162 = vmatpush1.msra.mxu0 0.0
    %6163 = vmatprep.subr.mxu0 0.0
    %6164 = vmatpush1.msra.mxu0 0.0
    %6165 = vmatprep.mubr.f32.mxu0 0.0
    %6166 = vmatmul.mubr.f32.gmra.mrb[0].mxu0 %v6099
    %v6167 = vpop.f32.mrb[0].mxu0
    %v6168 = vadd.f32 0.0, %v6167
    %v6169 = vpop.f32.mrb[0].mxu0
    %6170 = vdwg.mxu0
    %v6172 = vsel %vm3609, %v5073, 0
    %vm6174 = vcmask 1043456
    %v6176 = vsel %vm6174, %v219, 0
    %6178 = vmatprep.subr.mxu0 0.0
    %6179 = vmatpush1.msra.mxu0 %v6176
    %6180 = vmatprep.subr.mxu0 0.0
    %6181 = vmatpush1.msra.mxu0 0.0
    %6182 = vmatprep.subr.mxu0 0.0
    %6183 = vmatpush1.msra.mxu0 0.0
    %6184 = vmatprep.subr.mxu0 0.0
    %6185 = vmatpush1.msra.mxu0 0.0
    %6186 = vmatprep.subr.mxu0 0.0
    %6187 = vmatpush1.msra.mxu0 0.0
    %6188 = vmatprep.subr.mxu0 0.0
    %6189 = vmatpush1.msra.mxu0 0.0
    %6190 = vmatprep.subr.mxu0 0.0
    %6191 = vmatpush1.msra.mxu0 0.0
    %6192 = vmatprep.subr.mxu0 0.0
    %6193 = vmatpush1.msra.mxu0 0.0
    %6194 = vmatprep.subr.mxu0 0.0
    %6195 = vmatpush1.msra.mxu0 0.0
    %6196 = vmatprep.subr.mxu0 0.0
    %6197 = vmatpush1.msra.mxu0 0.0
    %6198 = vmatprep.subr.mxu0 0.0
    %6199 = vmatpush1.msra.mxu0 0.0
    %6200 = vmatprep.subr.mxu0 0.0
    %6201 = vmatpush1.msra.mxu0 0.0
    %6202 = vmatprep.subr.mxu0 0.0
    %6203 = vmatpush1.msra.mxu0 0.0
    %6204 = vmatprep.subr.mxu0 0.0
    %6205 = vmatpush1.msra.mxu0 0.0
    %6206 = vmatprep.subr.mxu0 0.0
    %6207 = vmatpush1.msra.mxu0 0.0
    %6208 = vmatprep.subr.mxu0 0.0
    %6209 = vmatpush1.msra.mxu0 0.0
    %6210 = vmatprep.subr.mxu0 0.0
    %6211 = vmatpush1.msra.mxu0 0.0
    %6212 = vmatprep.subr.mxu0 0.0
    %6213 = vmatpush1.msra.mxu0 0.0
    %6214 = vmatprep.subr.mxu0 0.0
    %6215 = vmatpush1.msra.mxu0 0.0
    %6216 = vmatprep.subr.mxu0 0.0
    %6217 = vmatpush1.msra.mxu0 0.0
    %6218 = vmatprep.subr.mxu0 0.0
    %6219 = vmatpush1.msra.mxu0 0.0
    %6220 = vmatprep.subr.mxu0 0.0
    %6221 = vmatpush1.msra.mxu0 0.0
    %6222 = vmatprep.subr.mxu0 0.0
    %6223 = vmatpush1.msra.mxu0 0.0
    %6224 = vmatprep.subr.mxu0 0.0
    %6225 = vmatpush1.msra.mxu0 0.0
    %6226 = vmatprep.subr.mxu0 0.0
    %6227 = vmatpush1.msra.mxu0 0.0
    %6228 = vmatprep.subr.mxu0 0.0
    %6229 = vmatpush1.msra.mxu0 0.0
    %6230 = vmatprep.subr.mxu0 0.0
    %6231 = vmatpush1.msra.mxu0 0.0
    %6232 = vmatprep.subr.mxu0 0.0
    %6233 = vmatpush1.msra.mxu0 0.0
    %6234 = vmatprep.subr.mxu0 0.0
    %6235 = vmatpush1.msra.mxu0 0.0
    %6236 = vmatprep.subr.mxu0 0.0
    %6237 = vmatpush1.msra.mxu0 0.0
    %6238 = vmatprep.subr.mxu0 0.0
    %6239 = vmatpush1.msra.mxu0 0.0
    %6240 = vmatprep.subr.mxu0 0.0
    %6241 = vmatpush1.msra.mxu0 0.0
    %6242 = vmatprep.mubr.f32.mxu0 0.0
    %6243 = vmatmul.mubr.f32.gmra.mrb[0].mxu0 %v6172
    %v6244 = vpop.f32.mrb[0].mxu0
    %v6245 = vadd.f32 0.0, %v6244
    %v6246 = vpop.f32.mrb[0].mxu0
    %6247 = vdwg.mxu0
    %v6249 = vsel %vm3609, %v5146, 0
    %v6252 = vsel %vm6174, %v220, 0
    %6254 = vmatprep.subr.mxu0 0.0
    %6255 = vmatpush1.msra.mxu0 %v6252
    %6256 = vmatprep.subr.mxu0 0.0
    %6257 = vmatpush1.msra.mxu0 0.0
    %6258 = vmatprep.subr.mxu0 0.0
    %6259 = vmatpush1.msra.mxu0 0.0
    %6260 = vmatprep.subr.mxu0 0.0
    %6261 = vmatpush1.msra.mxu0 0.0
    %6262 = vmatprep.subr.mxu0 0.0
    %6263 = vmatpush1.msra.mxu0 0.0
    %6264 = vmatprep.subr.mxu0 0.0
    %6265 = vmatpush1.msra.mxu0 0.0
    %6266 = vmatprep.subr.mxu0 0.0
    %6267 = vmatpush1.msra.mxu0 0.0
    %6268 = vmatprep.subr.mxu0 0.0
    %6269 = vmatpush1.msra.mxu0 0.0
    %6270 = vmatprep.subr.mxu0 0.0
    %6271 = vmatpush1.msra.mxu0 0.0
    %6272 = vmatprep.subr.mxu0 0.0
    %6273 = vmatpush1.msra.mxu0 0.0
    %6274 = vmatprep.subr.mxu0 0.0
    %6275 = vmatpush1.msra.mxu0 0.0
    %6276 = vmatprep.subr.mxu0 0.0
    %6277 = vmatpush1.msra.mxu0 0.0
    %6278 = vmatprep.subr.mxu0 0.0
    %6279 = vmatpush1.msra.mxu0 0.0
    %6280 = vmatprep.subr.mxu0 0.0
    %6281 = vmatpush1.msra.mxu0 0.0
    %6282 = vmatprep.subr.mxu0 0.0
    %6283 = vmatpush1.msra.mxu0 0.0
    %6284 = vmatprep.subr.mxu0 0.0
    %6285 = vmatpush1.msra.mxu0 0.0
    %6286 = vmatprep.subr.mxu0 0.0
    %6287 = vmatpush1.msra.mxu0 0.0
    %6288 = vmatprep.subr.mxu0 0.0
    %6289 = vmatpush1.msra.mxu0 0.0
    %6290 = vmatprep.subr.mxu0 0.0
    %6291 = vmatpush1.msra.mxu0 0.0
    %6292 = vmatprep.subr.mxu0 0.0
    %6293 = vmatpush1.msra.mxu0 0.0
    %6294 = vmatprep.subr.mxu0 0.0
    %6295 = vmatpush1.msra.mxu0 0.0
    %6296 = vmatprep.subr.mxu0 0.0
    %6297 = vmatpush1.msra.mxu0 0.0
    %6298 = vmatprep.subr.mxu0 0.0
    %6299 = vmatpush1.msra.mxu0 0.0
    %6300 = vmatprep.subr.mxu0 0.0
    %6301 = vmatpush1.msra.mxu0 0.0
    %6302 = vmatprep.subr.mxu0 0.0
    %6303 = vmatpush1.msra.mxu0 0.0
    %6304 = vmatprep.subr.mxu0 0.0
    %6305 = vmatpush1.msra.mxu0 0.0
    %6306 = vmatprep.subr.mxu0 0.0
    %6307 = vmatpush1.msra.mxu0 0.0
    %6308 = vmatprep.subr.mxu0 0.0
    %6309 = vmatpush1.msra.mxu0 0.0
    %6310 = vmatprep.subr.mxu0 0.0
    %6311 = vmatpush1.msra.mxu0 0.0
    %6312 = vmatprep.subr.mxu0 0.0
    %6313 = vmatpush1.msra.mxu0 0.0
    %6314 = vmatprep.subr.mxu0 0.0
    %6315 = vmatpush1.msra.mxu0 0.0
    %6316 = vmatprep.subr.mxu0 0.0
    %6317 = vmatpush1.msra.mxu0 0.0
    %6318 = vmatprep.mubr.f32.mxu0 0.0
    %6319 = vmatmul.mubr.f32.gmra.mrb[0].mxu0 %v6249
    %v6320 = vpop.f32.mrb[0].mxu0
    %v6321 = vadd.f32 0.0, %v6320
    %v6322 = vpop.f32.mrb[0].mxu0
    %6323 = vdwg.mxu0
    %v6325 = vsel %vm3609, %v5219, 0
    %v6328 = vsel %vm6174, %v221, 0
    %6330 = vmatprep.subr.mxu0 0.0
    %6331 = vmatpush1.msra.mxu0 %v6328
    %6332 = vmatprep.subr.mxu0 0.0
    %6333 = vmatpush1.msra.mxu0 0.0
    %6334 = vmatprep.subr.mxu0 0.0
    %6335 = vmatpush1.msra.mxu0 0.0
    %6336 = vmatprep.subr.mxu0 0.0
    %6337 = vmatpush1.msra.mxu0 0.0
    %6338 = vmatprep.subr.mxu0 0.0
    %6339 = vmatpush1.msra.mxu0 0.0
    %6340 = vmatprep.subr.mxu0 0.0
    %6341 = vmatpush1.msra.mxu0 0.0
    %6342 = vmatprep.subr.mxu0 0.0
    %6343 = vmatpush1.msra.mxu0 0.0
    %6344 = vmatprep.subr.mxu0 0.0
    %6345 = vmatpush1.msra.mxu0 0.0
    %6346 = vmatprep.subr.mxu0 0.0
    %6347 = vmatpush1.msra.mxu0 0.0
    %6348 = vmatprep.subr.mxu0 0.0
    %6349 = vmatpush1.msra.mxu0 0.0
    %6350 = vmatprep.subr.mxu0 0.0
    %6351 = vmatpush1.msra.mxu0 0.0
    %6352 = vmatprep.subr.mxu0 0.0
    %6353 = vmatpush1.msra.mxu0 0.0
    %6354 = vmatprep.subr.mxu0 0.0
    %6355 = vmatpush1.msra.mxu0 0.0
    %6356 = vmatprep.subr.mxu0 0.0
    %6357 = vmatpush1.msra.mxu0 0.0
    %6358 = vmatprep.subr.mxu0 0.0
    %6359 = vmatpush1.msra.mxu0 0.0
    %6360 = vmatprep.subr.mxu0 0.0
    %6361 = vmatpush1.msra.mxu0 0.0
    %6362 = vmatprep.subr.mxu0 0.0
    %6363 = vmatpush1.msra.mxu0 0.0
    %6364 = vmatprep.subr.mxu0 0.0
    %6365 = vmatpush1.msra.mxu0 0.0
    %6366 = vmatprep.subr.mxu0 0.0
    %6367 = vmatpush1.msra.mxu0 0.0
    %6368 = vmatprep.subr.mxu0 0.0
    %6369 = vmatpush1.msra.mxu0 0.0
    %6370 = vmatprep.subr.mxu0 0.0
    %6371 = vmatpush1.msra.mxu0 0.0
    %6372 = vmatprep.subr.mxu0 0.0
    %6373 = vmatpush1.msra.mxu0 0.0
    %6374 = vmatprep.subr.mxu0 0.0
    %6375 = vmatpush1.msra.mxu0 0.0
    %6376 = vmatprep.subr.mxu0 0.0
    %6377 = vmatpush1.msra.mxu0 0.0
    %6378 = vmatprep.subr.mxu0 0.0
    %6379 = vmatpush1.msra.mxu0 0.0
    %6380 = vmatprep.subr.mxu0 0.0
    %6381 = vmatpush1.msra.mxu0 0.0
    %6382 = vmatprep.subr.mxu0 0.0
    %6383 = vmatpush1.msra.mxu0 0.0
    %6384 = vmatprep.subr.mxu0 0.0
    %6385 = vmatpush1.msra.mxu0 0.0
    %6386 = vmatprep.subr.mxu0 0.0
    %6387 = vmatpush1.msra.mxu0 0.0
    %6388 = vmatprep.subr.mxu0 0.0
    %6389 = vmatpush1.msra.mxu0 0.0
    %6390 = vmatprep.subr.mxu0 0.0
    %6391 = vmatpush1.msra.mxu0 0.0
    %6392 = vmatprep.subr.mxu0 0.0
    %6393 = vmatpush1.msra.mxu0 0.0
    %6394 = vmatprep.mubr.f32.mxu0 0.0
    %6395 = vmatmul.mubr.f32.gmra.mrb[0].mxu0 %v6325
    %v6396 = vpop.f32.mrb[0].mxu0
    %v6397 = vadd.f32 0.0, %v6396
    %v6398 = vpop.f32.mrb[0].mxu0
    %6399 = vdwg.mxu0
    %v6401 = vsel %vm3609, %v5292, 0
    %v6404 = vsel %vm6174, %v222, 0
    %6406 = vmatprep.subr.mxu0 0.0
    %6407 = vmatpush1.msra.mxu0 %v6404
    %6408 = vmatprep.subr.mxu0 0.0
    %6409 = vmatpush1.msra.mxu0 0.0
    %6410 = vmatprep.subr.mxu0 0.0
    %6411 = vmatpush1.msra.mxu0 0.0
    %6412 = vmatprep.subr.mxu0 0.0
    %6413 = vmatpush1.msra.mxu0 0.0
    %6414 = vmatprep.subr.mxu0 0.0
    %6415 = vmatpush1.msra.mxu0 0.0
    %6416 = vmatprep.subr.mxu0 0.0
    %6417 = vmatpush1.msra.mxu0 0.0
    %6418 = vmatprep.subr.mxu0 0.0
    %6419 = vmatpush1.msra.mxu0 0.0
    %6420 = vmatprep.subr.mxu0 0.0
    %6421 = vmatpush1.msra.mxu0 0.0
    %6422 = vmatprep.subr.mxu0 0.0
    %6423 = vmatpush1.msra.mxu0 0.0
    %6424 = vmatprep.subr.mxu0 0.0
    %6425 = vmatpush1.msra.mxu0 0.0
    %6426 = vmatprep.subr.mxu0 0.0
    %6427 = vmatpush1.msra.mxu0 0.0
    %6428 = vmatprep.subr.mxu0 0.0
    %6429 = vmatpush1.msra.mxu0 0.0
    %6430 = vmatprep.subr.mxu0 0.0
    %6431 = vmatpush1.msra.mxu0 0.0
    %6432 = vmatprep.subr.mxu0 0.0
    %6433 = vmatpush1.msra.mxu0 0.0
    %6434 = vmatprep.subr.mxu0 0.0
    %6435 = vmatpush1.msra.mxu0 0.0
    %6436 = vmatprep.subr.mxu0 0.0
    %6437 = vmatpush1.msra.mxu0 0.0
    %6438 = vmatprep.subr.mxu0 0.0
    %6439 = vmatpush1.msra.mxu0 0.0
    %6440 = vmatprep.subr.mxu0 0.0
    %6441 = vmatpush1.msra.mxu0 0.0
    %6442 = vmatprep.subr.mxu0 0.0
    %6443 = vmatpush1.msra.mxu0 0.0
    %6444 = vmatprep.subr.mxu0 0.0
    %6445 = vmatpush1.msra.mxu0 0.0
    %6446 = vmatprep.subr.mxu0 0.0
    %6447 = vmatpush1.msra.mxu0 0.0
    %6448 = vmatprep.subr.mxu0 0.0
    %6449 = vmatpush1.msra.mxu0 0.0
    %6450 = vmatprep.subr.mxu0 0.0
    %6451 = vmatpush1.msra.mxu0 0.0
    %6452 = vmatprep.subr.mxu0 0.0
    %6453 = vmatpush1.msra.mxu0 0.0
    %6454 = vmatprep.subr.mxu0 0.0
    %6455 = vmatpush1.msra.mxu0 0.0
    %6456 = vmatprep.subr.mxu0 0.0
    %6457 = vmatpush1.msra.mxu0 0.0
    %6458 = vmatprep.subr.mxu0 0.0
    %6459 = vmatpush1.msra.mxu0 0.0
    %6460 = vmatprep.subr.mxu0 0.0
    %6461 = vmatpush1.msra.mxu0 0.0
    %6462 = vmatprep.subr.mxu0 0.0
    %6463 = vmatpush1.msra.mxu0 0.0
    %6464 = vmatprep.subr.mxu0 0.0
    %6465 = vmatpush1.msra.mxu0 0.0
    %6466 = vmatprep.subr.mxu0 0.0
    %6467 = vmatpush1.msra.mxu0 0.0
    %6468 = vmatprep.subr.mxu0 0.0
    %6469 = vmatpush1.msra.mxu0 0.0
    %6470 = vmatprep.mubr.f32.mxu0 0.0
    %6471 = vmatmul.mubr.f32.gmra.mrb[0].mxu0 %v6401
    %v6472 = vpop.f32.mrb[0].mxu0
    %v6473 = vadd.f32 0.0, %v6472
    %v6474 = vpop.f32.mrb[0].mxu0
    %6475 = vdwg.mxu0
    %v6477 = vsel %vm3609, %v5365, 0
    %v6480 = vsel %vm6174, %v223, 0
    %6482 = vmatprep.subr.mxu0 0.0
    %6483 = vmatpush1.msra.mxu0 %v6480
    %6484 = vmatprep.subr.mxu0 0.0
    %6485 = vmatpush1.msra.mxu0 0.0
    %6486 = vmatprep.subr.mxu0 0.0
    %6487 = vmatpush1.msra.mxu0 0.0
    %6488 = vmatprep.subr.mxu0 0.0
    %6489 = vmatpush1.msra.mxu0 0.0
    %6490 = vmatprep.subr.mxu0 0.0
    %6491 = vmatpush1.msra.mxu0 0.0
    %6492 = vmatprep.subr.mxu0 0.0
    %6493 = vmatpush1.msra.mxu0 0.0
    %6494 = vmatprep.subr.mxu0 0.0
    %6495 = vmatpush1.msra.mxu0 0.0
    %6496 = vmatprep.subr.mxu0 0.0
    %6497 = vmatpush1.msra.mxu0 0.0
    %6498 = vmatprep.subr.mxu0 0.0
    %6499 = vmatpush1.msra.mxu0 0.0
    %6500 = vmatprep.subr.mxu0 0.0
    %6501 = vmatpush1.msra.mxu0 0.0
    %6502 = vmatprep.subr.mxu0 0.0
    %6503 = vmatpush1.msra.mxu0 0.0
    %6504 = vmatprep.subr.mxu0 0.0
    %6505 = vmatpush1.msra.mxu0 0.0
    %6506 = vmatprep.subr.mxu0 0.0
    %6507 = vmatpush1.msra.mxu0 0.0
    %6508 = vmatprep.subr.mxu0 0.0
    %6509 = vmatpush1.msra.mxu0 0.0
    %6510 = vmatprep.subr.mxu0 0.0
    %6511 = vmatpush1.msra.mxu0 0.0
    %6512 = vmatprep.subr.mxu0 0.0
    %6513 = vmatpush1.msra.mxu0 0.0
    %6514 = vmatprep.subr.mxu0 0.0
    %6515 = vmatpush1.msra.mxu0 0.0
    %6516 = vmatprep.subr.mxu0 0.0
    %6517 = vmatpush1.msra.mxu0 0.0
    %6518 = vmatprep.subr.mxu0 0.0
    %6519 = vmatpush1.msra.mxu0 0.0
    %6520 = vmatprep.subr.mxu0 0.0
    %6521 = vmatpush1.msra.mxu0 0.0
    %6522 = vmatprep.subr.mxu0 0.0
    %6523 = vmatpush1.msra.mxu0 0.0
    %6524 = vmatprep.subr.mxu0 0.0
    %6525 = vmatpush1.msra.mxu0 0.0
    %6526 = vmatprep.subr.mxu0 0.0
    %6527 = vmatpush1.msra.mxu0 0.0
    %6528 = vmatprep.subr.mxu0 0.0
    %6529 = vmatpush1.msra.mxu0 0.0
    %6530 = vmatprep.subr.mxu0 0.0
    %6531 = vmatpush1.msra.mxu0 0.0
    %6532 = vmatprep.subr.mxu0 0.0
    %6533 = vmatpush1.msra.mxu0 0.0
    %6534 = vmatprep.subr.mxu0 0.0
    %6535 = vmatpush1.msra.mxu0 0.0
    %6536 = vmatprep.subr.mxu0 0.0
    %6537 = vmatpush1.msra.mxu0 0.0
    %6538 = vmatprep.subr.mxu0 0.0
    %6539 = vmatpush1.msra.mxu0 0.0
    %6540 = vmatprep.subr.mxu0 0.0
    %6541 = vmatpush1.msra.mxu0 0.0
    %6542 = vmatprep.subr.mxu0 0.0
    %6543 = vmatpush1.msra.mxu0 0.0
    %6544 = vmatprep.subr.mxu0 0.0
    %6545 = vmatpush1.msra.mxu0 0.0
    %6546 = vmatprep.mubr.f32.mxu0 0.0
    %6547 = vmatmul.mubr.f32.gmra.mrb[0].mxu0 %v6477
    %v6548 = vpop.f32.mrb[0].mxu0
    %v6549 = vadd.f32 0.0, %v6548
    %v6550 = vpop.f32.mrb[0].mxu0
    %6551 = vdwg.mxu0
    %v6553 = vsel %vm3609, %v5438, 0
    %v6556 = vsel %vm6174, %v224, 0
    %6558 = vmatprep.subr.mxu0 0.0
    %6559 = vmatpush1.msra.mxu0 %v6556
    %6560 = vmatprep.subr.mxu0 0.0
    %6561 = vmatpush1.msra.mxu0 0.0
    %6562 = vmatprep.subr.mxu0 0.0
    %6563 = vmatpush1.msra.mxu0 0.0
    %6564 = vmatprep.subr.mxu0 0.0
    %6565 = vmatpush1.msra.mxu0 0.0
    %6566 = vmatprep.subr.mxu0 0.0
    %6567 = vmatpush1.msra.mxu0 0.0
    %6568 = vmatprep.subr.mxu0 0.0
    %6569 = vmatpush1.msra.mxu0 0.0
    %6570 = vmatprep.subr.mxu0 0.0
    %6571 = vmatpush1.msra.mxu0 0.0
    %6572 = vmatprep.subr.mxu0 0.0
    %6573 = vmatpush1.msra.mxu0 0.0
    %6574 = vmatprep.subr.mxu0 0.0
    %6575 = vmatpush1.msra.mxu0 0.0
    %6576 = vmatprep.subr.mxu0 0.0
    %6577 = vmatpush1.msra.mxu0 0.0
    %6578 = vmatprep.subr.mxu0 0.0
    %6579 = vmatpush1.msra.mxu0 0.0
    %6580 = vmatprep.subr.mxu0 0.0
    %6581 = vmatpush1.msra.mxu0 0.0
    %6582 = vmatprep.subr.mxu0 0.0
    %6583 = vmatpush1.msra.mxu0 0.0
    %6584 = vmatprep.subr.mxu0 0.0
    %6585 = vmatpush1.msra.mxu0 0.0
    %6586 = vmatprep.subr.mxu0 0.0
    %6587 = vmatpush1.msra.mxu0 0.0
    %6588 = vmatprep.subr.mxu0 0.0
    %6589 = vmatpush1.msra.mxu0 0.0
    %6590 = vmatprep.subr.mxu0 0.0
    %6591 = vmatpush1.msra.mxu0 0.0
    %6592 = vmatprep.subr.mxu0 0.0
    %6593 = vmatpush1.msra.mxu0 0.0
    %6594 = vmatprep.subr.mxu0 0.0
    %6595 = vmatpush1.msra.mxu0 0.0
    %6596 = vmatprep.subr.mxu0 0.0
    %6597 = vmatpush1.msra.mxu0 0.0
    %6598 = vmatprep.subr.mxu0 0.0
    %6599 = vmatpush1.msra.mxu0 0.0
    %6600 = vmatprep.subr.mxu0 0.0
    %6601 = vmatpush1.msra.mxu0 0.0
    %6602 = vmatprep.subr.mxu0 0.0
    %6603 = vmatpush1.msra.mxu0 0.0
    %6604 = vmatprep.subr.mxu0 0.0
    %6605 = vmatpush1.msra.mxu0 0.0
    %6606 = vmatprep.subr.mxu0 0.0
    %6607 = vmatpush1.msra.mxu0 0.0
    %6608 = vmatprep.subr.mxu0 0.0
    %6609 = vmatpush1.msra.mxu0 0.0
    %6610 = vmatprep.subr.mxu0 0.0
    %6611 = vmatpush1.msra.mxu0 0.0
    %6612 = vmatprep.subr.mxu0 0.0
    %6613 = vmatpush1.msra.mxu0 0.0
    %6614 = vmatprep.subr.mxu0 0.0
    %6615 = vmatpush1.msra.mxu0 0.0
    %6616 = vmatprep.subr.mxu0 0.0
    %6617 = vmatpush1.msra.mxu0 0.0
    %6618 = vmatprep.subr.mxu0 0.0
    %6619 = vmatpush1.msra.mxu0 0.0
    %6620 = vmatprep.subr.mxu0 0.0
    %6621 = vmatpush1.msra.mxu0 0.0
    %6622 = vmatprep.mubr.f32.mxu0 0.0
    %6623 = vmatmul.mubr.f32.gmra.mrb[0].mxu0 %v6553
    %v6624 = vpop.f32.mrb[0].mxu0
    %v6625 = vadd.f32 0.0, %v6624
    %v6626 = vpop.f32.mrb[0].mxu0
    %6627 = vdwg.mxu0
    %v6629 = vsel %vm3609, %v5511, 0
    %v6632 = vsel %vm6174, %v225, 0
    %6634 = vmatprep.subr.mxu0 0.0
    %6635 = vmatpush1.msra.mxu0 %v6632
    %6636 = vmatprep.subr.mxu0 0.0
    %6637 = vmatpush1.msra.mxu0 0.0
    %6638 = vmatprep.subr.mxu0 0.0
    %6639 = vmatpush1.msra.mxu0 0.0
    %6640 = vmatprep.subr.mxu0 0.0
    %6641 = vmatpush1.msra.mxu0 0.0
    %6642 = vmatprep.subr.mxu0 0.0
    %6643 = vmatpush1.msra.mxu0 0.0
    %6644 = vmatprep.subr.mxu0 0.0
    %6645 = vmatpush1.msra.mxu0 0.0
    %6646 = vmatprep.subr.mxu0 0.0
    %6647 = vmatpush1.msra.mxu0 0.0
    %6648 = vmatprep.subr.mxu0 0.0
    %6649 = vmatpush1.msra.mxu0 0.0
    %6650 = vmatprep.subr.mxu0 0.0
    %6651 = vmatpush1.msra.mxu0 0.0
    %6652 = vmatprep.subr.mxu0 0.0
    %6653 = vmatpush1.msra.mxu0 0.0
    %6654 = vmatprep.subr.mxu0 0.0
    %6655 = vmatpush1.msra.mxu0 0.0
    %6656 = vmatprep.subr.mxu0 0.0
    %6657 = vmatpush1.msra.mxu0 0.0
    %6658 = vmatprep.subr.mxu0 0.0
    %6659 = vmatpush1.msra.mxu0 0.0
    %6660 = vmatprep.subr.mxu0 0.0
    %6661 = vmatpush1.msra.mxu0 0.0
    %6662 = vmatprep.subr.mxu0 0.0
    %6663 = vmatpush1.msra.mxu0 0.0
    %6664 = vmatprep.subr.mxu0 0.0
    %6665 = vmatpush1.msra.mxu0 0.0
    %6666 = vmatprep.subr.mxu0 0.0
    %6667 = vmatpush1.msra.mxu0 0.0
    %6668 = vmatprep.subr.mxu0 0.0
    %6669 = vmatpush1.msra.mxu0 0.0
    %6670 = vmatprep.subr.mxu0 0.0
    %6671 = vmatpush1.msra.mxu0 0.0
    %6672 = vmatprep.subr.mxu0 0.0
    %6673 = vmatpush1.msra.mxu0 0.0
    %6674 = vmatprep.subr.mxu0 0.0
    %6675 = vmatpush1.msra.mxu0 0.0
    %6676 = vmatprep.subr.mxu0 0.0
    %6677 = vmatpush1.msra.mxu0 0.0
    %6678 = vmatprep.subr.mxu0 0.0
    %6679 = vmatpush1.msra.mxu0 0.0
    %6680 = vmatprep.subr.mxu0 0.0
    %6681 = vmatpush1.msra.mxu0 0.0
    %6682 = vmatprep.subr.mxu0 0.0
    %6683 = vmatpush1.msra.mxu0 0.0
    %6684 = vmatprep.subr.mxu0 0.0
    %6685 = vmatpush1.msra.mxu0 0.0
    %6686 = vmatprep.subr.mxu0 0.0
    %6687 = vmatpush1.msra.mxu0 0.0
    %6688 = vmatprep.subr.mxu0 0.0
    %6689 = vmatpush1.msra.mxu0 0.0
    %6690 = vmatprep.subr.mxu0 0.0
    %6691 = vmatpush1.msra.mxu0 0.0
    %6692 = vmatprep.subr.mxu0 0.0
    %6693 = vmatpush1.msra.mxu0 0.0
    %6694 = vmatprep.subr.mxu0 0.0
    %6695 = vmatpush1.msra.mxu0 0.0
    %6696 = vmatprep.subr.mxu0 0.0
    %6697 = vmatpush1.msra.mxu0 0.0
    %6698 = vmatprep.mubr.f32.mxu0 0.0
    %6699 = vmatmul.mubr.f32.gmra.mrb[0].mxu0 %v6629
    %v6700 = vpop.f32.mrb[0].mxu0
    %v6701 = vadd.f32 0.0, %v6700
    %v6702 = vpop.f32.mrb[0].mxu0
    %6703 = vdwg.mxu0
    %v6705 = vsel %vm3609, %v5584, 0
    %v6708 = vsel %vm6174, %v226, 0
    %6710 = vmatprep.subr.mxu0 0.0
    %6711 = vmatpush1.msra.mxu0 %v6708
    %6712 = vmatprep.subr.mxu0 0.0
    %6713 = vmatpush1.msra.mxu0 0.0
    %6714 = vmatprep.subr.mxu0 0.0
    %6715 = vmatpush1.msra.mxu0 0.0
    %6716 = vmatprep.subr.mxu0 0.0
    %6717 = vmatpush1.msra.mxu0 0.0
    %6718 = vmatprep.subr.mxu0 0.0
    %6719 = vmatpush1.msra.mxu0 0.0
    %6720 = vmatprep.subr.mxu0 0.0
    %6721 = vmatpush1.msra.mxu0 0.0
    %6722 = vmatprep.subr.mxu0 0.0
    %6723 = vmatpush1.msra.mxu0 0.0
    %6724 = vmatprep.subr.mxu0 0.0
    %6725 = vmatpush1.msra.mxu0 0.0
    %6726 = vmatprep.subr.mxu0 0.0
    %6727 = vmatpush1.msra.mxu0 0.0
    %6728 = vmatprep.subr.mxu0 0.0
    %6729 = vmatpush1.msra.mxu0 0.0
    %6730 = vmatprep.subr.mxu0 0.0
    %6731 = vmatpush1.msra.mxu0 0.0
    %6732 = vmatprep.subr.mxu0 0.0
    %6733 = vmatpush1.msra.mxu0 0.0
    %6734 = vmatprep.subr.mxu0 0.0
    %6735 = vmatpush1.msra.mxu0 0.0
    %6736 = vmatprep.subr.mxu0 0.0
    %6737 = vmatpush1.msra.mxu0 0.0
    %6738 = vmatprep.subr.mxu0 0.0
    %6739 = vmatpush1.msra.mxu0 0.0
    %6740 = vmatprep.subr.mxu0 0.0
    %6741 = vmatpush1.msra.mxu0 0.0
    %6742 = vmatprep.subr.mxu0 0.0
    %6743 = vmatpush1.msra.mxu0 0.0
    %6744 = vmatprep.subr.mxu0 0.0
    %6745 = vmatpush1.msra.mxu0 0.0
    %6746 = vmatprep.subr.mxu0 0.0
    %6747 = vmatpush1.msra.mxu0 0.0
    %6748 = vmatprep.subr.mxu0 0.0
    %6749 = vmatpush1.msra.mxu0 0.0
    %6750 = vmatprep.subr.mxu0 0.0
    %6751 = vmatpush1.msra.mxu0 0.0
    %6752 = vmatprep.subr.mxu0 0.0
    %6753 = vmatpush1.msra.mxu0 0.0
    %6754 = vmatprep.subr.mxu0 0.0
    %6755 = vmatpush1.msra.mxu0 0.0
    %6756 = vmatprep.subr.mxu0 0.0
    %6757 = vmatpush1.msra.mxu0 0.0
    %6758 = vmatprep.subr.mxu0 0.0
    %6759 = vmatpush1.msra.mxu0 0.0
    %6760 = vmatprep.subr.mxu0 0.0
    %6761 = vmatpush1.msra.mxu0 0.0
    %6762 = vmatprep.subr.mxu0 0.0
    %6763 = vmatpush1.msra.mxu0 0.0
    %6764 = vmatprep.subr.mxu0 0.0
    %6765 = vmatpush1.msra.mxu0 0.0
    %6766 = vmatprep.subr.mxu0 0.0
    %6767 = vmatpush1.msra.mxu0 0.0
    %6768 = vmatprep.subr.mxu0 0.0
    %6769 = vmatpush1.msra.mxu0 0.0
    %6770 = vmatprep.subr.mxu0 0.0
    %6771 = vmatpush1.msra.mxu0 0.0
    %6772 = vmatprep.subr.mxu0 0.0
    %6773 = vmatpush1.msra.mxu0 0.0
    %6774 = vmatprep.mubr.f32.mxu0 0.0
    %6775 = vmatmul.mubr.f32.gmra.mrb[0].mxu0 %v6705
    %v6776 = vpop.f32.mrb[0].mxu0
    %v6777 = vadd.f32 0.0, %v6776
    %v6778 = vpop.f32.mrb[0].mxu0
    %6779 = vdwg.mxu0
    %v6781 = vsel %vm3609, %v5657, 0
    %v6784 = vsel %vm6174, %v227, 0
    %6786 = vmatprep.subr.mxu0 0.0
    %6787 = vmatpush1.msra.mxu0 %v6784
    %6788 = vmatprep.subr.mxu0 0.0
    %6789 = vmatpush1.msra.mxu0 0.0
    %6790 = vmatprep.subr.mxu0 0.0
    %6791 = vmatpush1.msra.mxu0 0.0
    %6792 = vmatprep.subr.mxu0 0.0
    %6793 = vmatpush1.msra.mxu0 0.0
    %6794 = vmatprep.subr.mxu0 0.0
    %6795 = vmatpush1.msra.mxu0 0.0
    %6796 = vmatprep.subr.mxu0 0.0
    %6797 = vmatpush1.msra.mxu0 0.0
    %6798 = vmatprep.subr.mxu0 0.0
    %6799 = vmatpush1.msra.mxu0 0.0
    %6800 = vmatprep.subr.mxu0 0.0
    %6801 = vmatpush1.msra.mxu0 0.0
    %6802 = vmatprep.subr.mxu0 0.0
    %6803 = vmatpush1.msra.mxu0 0.0
    %6804 = vmatprep.subr.mxu0 0.0
    %6805 = vmatpush1.msra.mxu0 0.0
    %6806 = vmatprep.subr.mxu0 0.0
    %6807 = vmatpush1.msra.mxu0 0.0
    %6808 = vmatprep.subr.mxu0 0.0
    %6809 = vmatpush1.msra.mxu0 0.0
    %6810 = vmatprep.subr.mxu0 0.0
    %6811 = vmatpush1.msra.mxu0 0.0
    %6812 = vmatprep.subr.mxu0 0.0
    %6813 = vmatpush1.msra.mxu0 0.0
    %6814 = vmatprep.subr.mxu0 0.0
    %6815 = vmatpush1.msra.mxu0 0.0
    %6816 = vmatprep.subr.mxu0 0.0
    %6817 = vmatpush1.msra.mxu0 0.0
    %6818 = vmatprep.subr.mxu0 0.0
    %6819 = vmatpush1.msra.mxu0 0.0
    %6820 = vmatprep.subr.mxu0 0.0
    %6821 = vmatpush1.msra.mxu0 0.0
    %6822 = vmatprep.subr.mxu0 0.0
    %6823 = vmatpush1.msra.mxu0 0.0
    %6824 = vmatprep.subr.mxu0 0.0
    %6825 = vmatpush1.msra.mxu0 0.0
    %6826 = vmatprep.subr.mxu0 0.0
    %6827 = vmatpush1.msra.mxu0 0.0
    %6828 = vmatprep.subr.mxu0 0.0
    %6829 = vmatpush1.msra.mxu0 0.0
    %6830 = vmatprep.subr.mxu0 0.0
    %6831 = vmatpush1.msra.mxu0 0.0
    %6832 = vmatprep.subr.mxu0 0.0
    %6833 = vmatpush1.msra.mxu0 0.0
    %6834 = vmatprep.subr.mxu0 0.0
    %6835 = vmatpush1.msra.mxu0 0.0
    %6836 = vmatprep.subr.mxu0 0.0
    %6837 = vmatpush1.msra.mxu0 0.0
    %6838 = vmatprep.subr.mxu0 0.0
    %6839 = vmatpush1.msra.mxu0 0.0
    %6840 = vmatprep.subr.mxu0 0.0
    %6841 = vmatpush1.msra.mxu0 0.0
    %6842 = vmatprep.subr.mxu0 0.0
    %6843 = vmatpush1.msra.mxu0 0.0
    %6844 = vmatprep.subr.mxu0 0.0
    %6845 = vmatpush1.msra.mxu0 0.0
    %6846 = vmatprep.subr.mxu0 0.0
    %6847 = vmatpush1.msra.mxu0 0.0
    %6848 = vmatprep.subr.mxu0 0.0
    %6849 = vmatpush1.msra.mxu0 0.0
    %6850 = vmatprep.mubr.f32.mxu0 0.0
    %6851 = vmatmul.mubr.f32.gmra.mrb[0].mxu0 %v6781
    %v6852 = vpop.f32.mrb[0].mxu0
    %v6853 = vadd.f32 0.0, %v6852
    %v6854 = vpop.f32.mrb[0].mxu0
    %6855 = vdwg.mxu0
    %v6857 = vsel %vm3609, %v5730, 0
    %v6860 = vsel %vm6174, %v228, 0
    %6862 = vmatprep.subr.mxu0 0.0
    %6863 = vmatpush1.msra.mxu0 %v6860
    %6864 = vmatprep.subr.mxu0 0.0
    %6865 = vmatpush1.msra.mxu0 0.0
    %6866 = vmatprep.subr.mxu0 0.0
    %6867 = vmatpush1.msra.mxu0 0.0
    %6868 = vmatprep.subr.mxu0 0.0
    %6869 = vmatpush1.msra.mxu0 0.0
    %6870 = vmatprep.subr.mxu0 0.0
    %6871 = vmatpush1.msra.mxu0 0.0
    %6872 = vmatprep.subr.mxu0 0.0
    %6873 = vmatpush1.msra.mxu0 0.0
    %6874 = vmatprep.subr.mxu0 0.0
    %6875 = vmatpush1.msra.mxu0 0.0
    %6876 = vmatprep.subr.mxu0 0.0
    %6877 = vmatpush1.msra.mxu0 0.0
    %6878 = vmatprep.subr.mxu0 0.0
    %6879 = vmatpush1.msra.mxu0 0.0
    %6880 = vmatprep.subr.mxu0 0.0
    %6881 = vmatpush1.msra.mxu0 0.0
    %6882 = vmatprep.subr.mxu0 0.0
    %6883 = vmatpush1.msra.mxu0 0.0
    %6884 = vmatprep.subr.mxu0 0.0
    %6885 = vmatpush1.msra.mxu0 0.0
    %6886 = vmatprep.subr.mxu0 0.0
    %6887 = vmatpush1.msra.mxu0 0.0
    %6888 = vmatprep.subr.mxu0 0.0
    %6889 = vmatpush1.msra.mxu0 0.0
    %6890 = vmatprep.subr.mxu0 0.0
    %6891 = vmatpush1.msra.mxu0 0.0
    %6892 = vmatprep.subr.mxu0 0.0
    %6893 = vmatpush1.msra.mxu0 0.0
    %6894 = vmatprep.subr.mxu0 0.0
    %6895 = vmatpush1.msra.mxu0 0.0
    %6896 = vmatprep.subr.mxu0 0.0
    %6897 = vmatpush1.msra.mxu0 0.0
    %6898 = vmatprep.subr.mxu0 0.0
    %6899 = vmatpush1.msra.mxu0 0.0
    %6900 = vmatprep.subr.mxu0 0.0
    %6901 = vmatpush1.msra.mxu0 0.0
    %6902 = vmatprep.subr.mxu0 0.0
    %6903 = vmatpush1.msra.mxu0 0.0
    %6904 = vmatprep.subr.mxu0 0.0
    %6905 = vmatpush1.msra.mxu0 0.0
    %6906 = vmatprep.subr.mxu0 0.0
    %6907 = vmatpush1.msra.mxu0 0.0
    %6908 = vmatprep.subr.mxu0 0.0
    %6909 = vmatpush1.msra.mxu0 0.0
    %6910 = vmatprep.subr.mxu0 0.0
    %6911 = vmatpush1.msra.mxu0 0.0
    %6912 = vmatprep.subr.mxu0 0.0
    %6913 = vmatpush1.msra.mxu0 0.0
    %6914 = vmatprep.subr.mxu0 0.0
    %6915 = vmatpush1.msra.mxu0 0.0
    %6916 = vmatprep.subr.mxu0 0.0
    %6917 = vmatpush1.msra.mxu0 0.0
    %6918 = vmatprep.subr.mxu0 0.0
    %6919 = vmatpush1.msra.mxu0 0.0
    %6920 = vmatprep.subr.mxu0 0.0
    %6921 = vmatpush1.msra.mxu0 0.0
    %6922 = vmatprep.subr.mxu0 0.0
    %6923 = vmatpush1.msra.mxu0 0.0
    %6924 = vmatprep.subr.mxu0 0.0
    %6925 = vmatpush1.msra.mxu0 0.0
    %6926 = vmatprep.mubr.f32.mxu0 0.0
    %6927 = vmatmul.mubr.f32.gmra.mrb[0].mxu0 %v6857
    %v6928 = vpop.f32.mrb[0].mxu0
    %v6929 = vadd.f32 0.0, %v6928
    %v6930 = vpop.f32.mrb[0].mxu0
    %6931 = vdwg.mxu0
    %v6933 = vsel %vm3609, %v5803, 0
    %v6936 = vsel %vm6174, %v229, 0
    %6938 = vmatprep.subr.mxu0 0.0
    %6939 = vmatpush1.msra.mxu0 %v6936
    %6940 = vmatprep.subr.mxu0 0.0
    %6941 = vmatpush1.msra.mxu0 0.0
    %6942 = vmatprep.subr.mxu0 0.0
    %6943 = vmatpush1.msra.mxu0 0.0
    %6944 = vmatprep.subr.mxu0 0.0
    %6945 = vmatpush1.msra.mxu0 0.0
    %6946 = vmatprep.subr.mxu0 0.0
    %6947 = vmatpush1.msra.mxu0 0.0
    %6948 = vmatprep.subr.mxu0 0.0
    %6949 = vmatpush1.msra.mxu0 0.0
    %6950 = vmatprep.subr.mxu0 0.0
    %6951 = vmatpush1.msra.mxu0 0.0
    %6952 = vmatprep.subr.mxu0 0.0
    %6953 = vmatpush1.msra.mxu0 0.0
    %6954 = vmatprep.subr.mxu0 0.0
    %6955 = vmatpush1.msra.mxu0 0.0
    %6956 = vmatprep.subr.mxu0 0.0
    %6957 = vmatpush1.msra.mxu0 0.0
    %6958 = vmatprep.subr.mxu0 0.0
    %6959 = vmatpush1.msra.mxu0 0.0
    %6960 = vmatprep.subr.mxu0 0.0
    %6961 = vmatpush1.msra.mxu0 0.0
    %6962 = vmatprep.subr.mxu0 0.0
    %6963 = vmatpush1.msra.mxu0 0.0
    %6964 = vmatprep.subr.mxu0 0.0
    %6965 = vmatpush1.msra.mxu0 0.0
    %6966 = vmatprep.subr.mxu0 0.0
    %6967 = vmatpush1.msra.mxu0 0.0
    %6968 = vmatprep.subr.mxu0 0.0
    %6969 = vmatpush1.msra.mxu0 0.0
    %6970 = vmatprep.subr.mxu0 0.0
    %6971 = vmatpush1.msra.mxu0 0.0
    %6972 = vmatprep.subr.mxu0 0.0
    %6973 = vmatpush1.msra.mxu0 0.0
    %6974 = vmatprep.subr.mxu0 0.0
    %6975 = vmatpush1.msra.mxu0 0.0
    %6976 = vmatprep.subr.mxu0 0.0
    %6977 = vmatpush1.msra.mxu0 0.0
    %6978 = vmatprep.subr.mxu0 0.0
    %6979 = vmatpush1.msra.mxu0 0.0
    %6980 = vmatprep.subr.mxu0 0.0
    %6981 = vmatpush1.msra.mxu0 0.0
    %6982 = vmatprep.subr.mxu0 0.0
    %6983 = vmatpush1.msra.mxu0 0.0
    %6984 = vmatprep.subr.mxu0 0.0
    %6985 = vmatpush1.msra.mxu0 0.0
    %6986 = vmatprep.subr.mxu0 0.0
    %6987 = vmatpush1.msra.mxu0 0.0
    %6988 = vmatprep.subr.mxu0 0.0
    %6989 = vmatpush1.msra.mxu0 0.0
    %6990 = vmatprep.subr.mxu0 0.0
    %6991 = vmatpush1.msra.mxu0 0.0
    %6992 = vmatprep.subr.mxu0 0.0
    %6993 = vmatpush1.msra.mxu0 0.0
    %6994 = vmatprep.subr.mxu0 0.0
    %6995 = vmatpush1.msra.mxu0 0.0
    %6996 = vmatprep.subr.mxu0 0.0
    %6997 = vmatpush1.msra.mxu0 0.0
    %6998 = vmatprep.subr.mxu0 0.0
    %6999 = vmatpush1.msra.mxu0 0.0
    %7000 = vmatprep.subr.mxu0 0.0
    %7001 = vmatpush1.msra.mxu0 0.0
    %7002 = vmatprep.mubr.f32.mxu0 0.0
    %7003 = vmatmul.mubr.f32.gmra.mrb[0].mxu0 %v6933
    %v7004 = vpop.f32.mrb[0].mxu0
    %v7005 = vadd.f32 0.0, %v7004
    %v7006 = vpop.f32.mrb[0].mxu0
    %7007 = vdwg.mxu0
    %v7009 = vsel %vm3609, %v5876, 0
    %v7012 = vsel %vm6174, %v230, 0
    %7014 = vmatprep.subr.mxu0 0.0
    %7015 = vmatpush1.msra.mxu0 %v7012
    %7016 = vmatprep.subr.mxu0 0.0
    %7017 = vmatpush1.msra.mxu0 0.0
    %7018 = vmatprep.subr.mxu0 0.0
    %7019 = vmatpush1.msra.mxu0 0.0
    %7020 = vmatprep.subr.mxu0 0.0
    %7021 = vmatpush1.msra.mxu0 0.0
    %7022 = vmatprep.subr.mxu0 0.0
    %7023 = vmatpush1.msra.mxu0 0.0
    %7024 = vmatprep.subr.mxu0 0.0
    %7025 = vmatpush1.msra.mxu0 0.0
    %7026 = vmatprep.subr.mxu0 0.0
    %7027 = vmatpush1.msra.mxu0 0.0
    %7028 = vmatprep.subr.mxu0 0.0
    %7029 = vmatpush1.msra.mxu0 0.0
    %7030 = vmatprep.subr.mxu0 0.0
    %7031 = vmatpush1.msra.mxu0 0.0
    %7032 = vmatprep.subr.mxu0 0.0
    %7033 = vmatpush1.msra.mxu0 0.0
    %7034 = vmatprep.subr.mxu0 0.0
    %7035 = vmatpush1.msra.mxu0 0.0
    %7036 = vmatprep.subr.mxu0 0.0
    %7037 = vmatpush1.msra.mxu0 0.0
    %7038 = vmatprep.subr.mxu0 0.0
    %7039 = vmatpush1.msra.mxu0 0.0
    %7040 = vmatprep.subr.mxu0 0.0
    %7041 = vmatpush1.msra.mxu0 0.0
    %7042 = vmatprep.subr.mxu0 0.0
    %7043 = vmatpush1.msra.mxu0 0.0
    %7044 = vmatprep.subr.mxu0 0.0
    %7045 = vmatpush1.msra.mxu0 0.0
    %7046 = vmatprep.subr.mxu0 0.0
    %7047 = vmatpush1.msra.mxu0 0.0
    %7048 = vmatprep.subr.mxu0 0.0
    %7049 = vmatpush1.msra.mxu0 0.0
    %7050 = vmatprep.subr.mxu0 0.0
    %7051 = vmatpush1.msra.mxu0 0.0
    %7052 = vmatprep.subr.mxu0 0.0
    %7053 = vmatpush1.msra.mxu0 0.0
    %7054 = vmatprep.subr.mxu0 0.0
    %7055 = vmatpush1.msra.mxu0 0.0
    %7056 = vmatprep.subr.mxu0 0.0
    %7057 = vmatpush1.msra.mxu0 0.0
    %7058 = vmatprep.subr.mxu0 0.0
    %7059 = vmatpush1.msra.mxu0 0.0
    %7060 = vmatprep.subr.mxu0 0.0
    %7061 = vmatpush1.msra.mxu0 0.0
    %7062 = vmatprep.subr.mxu0 0.0
    %7063 = vmatpush1.msra.mxu0 0.0
    %7064 = vmatprep.subr.mxu0 0.0
    %7065 = vmatpush1.msra.mxu0 0.0
    %7066 = vmatprep.subr.mxu0 0.0
    %7067 = vmatpush1.msra.mxu0 0.0
    %7068 = vmatprep.subr.mxu0 0.0
    %7069 = vmatpush1.msra.mxu0 0.0
    %7070 = vmatprep.subr.mxu0 0.0
    %7071 = vmatpush1.msra.mxu0 0.0
    %7072 = vmatprep.subr.mxu0 0.0
    %7073 = vmatpush1.msra.mxu0 0.0
    %7074 = vmatprep.subr.mxu0 0.0
    %7075 = vmatpush1.msra.mxu0 0.0
    %7076 = vmatprep.subr.mxu0 0.0
    %7077 = vmatpush1.msra.mxu0 0.0
    %7078 = vmatprep.mubr.f32.mxu0 0.0
    %7079 = vmatmul.mubr.f32.gmra.mrb[0].mxu0 %v7009
    %v7080 = vpop.f32.mrb[0].mxu0
    %v7081 = vadd.f32 0.0, %v7080
    %v7082 = vpop.f32.mrb[0].mxu0
    %7083 = vdwg.mxu0
    %v7085 = vsel %vm3609, %v5949, 0
    %v7088 = vsel %vm6174, %v231, 0
    %7090 = vmatprep.subr.mxu0 0.0
    %7091 = vmatpush1.msra.mxu0 %v7088
    %7092 = vmatprep.subr.mxu0 0.0
    %7093 = vmatpush1.msra.mxu0 0.0
    %7094 = vmatprep.subr.mxu0 0.0
    %7095 = vmatpush1.msra.mxu0 0.0
    %7096 = vmatprep.subr.mxu0 0.0
    %7097 = vmatpush1.msra.mxu0 0.0
    %7098 = vmatprep.subr.mxu0 0.0
    %7099 = vmatpush1.msra.mxu0 0.0
    %7100 = vmatprep.subr.mxu0 0.0
    %7101 = vmatpush1.msra.mxu0 0.0
    %7102 = vmatprep.subr.mxu0 0.0
    %7103 = vmatpush1.msra.mxu0 0.0
    %7104 = vmatprep.subr.mxu0 0.0
    %7105 = vmatpush1.msra.mxu0 0.0
    %7106 = vmatprep.subr.mxu0 0.0
    %7107 = vmatpush1.msra.mxu0 0.0
    %7108 = vmatprep.subr.mxu0 0.0
    %7109 = vmatpush1.msra.mxu0 0.0
    %7110 = vmatprep.subr.mxu0 0.0
    %7111 = vmatpush1.msra.mxu0 0.0
    %7112 = vmatprep.subr.mxu0 0.0
    %7113 = vmatpush1.msra.mxu0 0.0
    %7114 = vmatprep.subr.mxu0 0.0
    %7115 = vmatpush1.msra.mxu0 0.0
    %7116 = vmatprep.subr.mxu0 0.0
    %7117 = vmatpush1.msra.mxu0 0.0
    %7118 = vmatprep.subr.mxu0 0.0
    %7119 = vmatpush1.msra.mxu0 0.0
    %7120 = vmatprep.subr.mxu0 0.0
    %7121 = vmatpush1.msra.mxu0 0.0
    %7122 = vmatprep.subr.mxu0 0.0
    %7123 = vmatpush1.msra.mxu0 0.0
    %7124 = vmatprep.subr.mxu0 0.0
    %7125 = vmatpush1.msra.mxu0 0.0
    %7126 = vmatprep.subr.mxu0 0.0
    %7127 = vmatpush1.msra.mxu0 0.0
    %7128 = vmatprep.subr.mxu0 0.0
    %7129 = vmatpush1.msra.mxu0 0.0
    %7130 = vmatprep.subr.mxu0 0.0
    %7131 = vmatpush1.msra.mxu0 0.0
    %7132 = vmatprep.subr.mxu0 0.0
    %7133 = vmatpush1.msra.mxu0 0.0
    %7134 = vmatprep.subr.mxu0 0.0
    %7135 = vmatpush1.msra.mxu0 0.0
    %7136 = vmatprep.subr.mxu0 0.0
    %7137 = vmatpush1.msra.mxu0 0.0
    %7138 = vmatprep.subr.mxu0 0.0
    %7139 = vmatpush1.msra.mxu0 0.0
    %7140 = vmatprep.subr.mxu0 0.0
    %7141 = vmatpush1.msra.mxu0 0.0
    %7142 = vmatprep.subr.mxu0 0.0
    %7143 = vmatpush1.msra.mxu0 0.0
    %7144 = vmatprep.subr.mxu0 0.0
    %7145 = vmatpush1.msra.mxu0 0.0
    %7146 = vmatprep.subr.mxu0 0.0
    %7147 = vmatpush1.msra.mxu0 0.0
    %7148 = vmatprep.subr.mxu0 0.0
    %7149 = vmatpush1.msra.mxu0 0.0
    %7150 = vmatprep.subr.mxu0 0.0
    %7151 = vmatpush1.msra.mxu0 0.0
    %7152 = vmatprep.subr.mxu0 0.0
    %7153 = vmatpush1.msra.mxu0 0.0
    %7154 = vmatprep.mubr.f32.mxu0 0.0
    %7155 = vmatmul.mubr.f32.gmra.mrb[0].mxu0 %v7085
    %v7156 = vpop.f32.mrb[0].mxu0
    %v7157 = vadd.f32 0.0, %v7156
    %v7158 = vpop.f32.mrb[0].mxu0
    %7159 = vdwg.mxu0
    %v7161 = vsel %vm3609, %v6022, 0
    %v7164 = vsel %vm6174, %v232, 0
    %7166 = vmatprep.subr.mxu0 0.0
    %7167 = vmatpush1.msra.mxu0 %v7164
    %7168 = vmatprep.subr.mxu0 0.0
    %7169 = vmatpush1.msra.mxu0 0.0
    %7170 = vmatprep.subr.mxu0 0.0
    %7171 = vmatpush1.msra.mxu0 0.0
    %7172 = vmatprep.subr.mxu0 0.0
    %7173 = vmatpush1.msra.mxu0 0.0
    %7174 = vmatprep.subr.mxu0 0.0
    %7175 = vmatpush1.msra.mxu0 0.0
    %7176 = vmatprep.subr.mxu0 0.0
    %7177 = vmatpush1.msra.mxu0 0.0
    %7178 = vmatprep.subr.mxu0 0.0
    %7179 = vmatpush1.msra.mxu0 0.0
    %7180 = vmatprep.subr.mxu0 0.0
    %7181 = vmatpush1.msra.mxu0 0.0
    %7182 = vmatprep.subr.mxu0 0.0
    %7183 = vmatpush1.msra.mxu0 0.0
    %7184 = vmatprep.subr.mxu0 0.0
    %7185 = vmatpush1.msra.mxu0 0.0
    %7186 = vmatprep.subr.mxu0 0.0
    %7187 = vmatpush1.msra.mxu0 0.0
    %7188 = vmatprep.subr.mxu0 0.0
    %7189 = vmatpush1.msra.mxu0 0.0
    %7190 = vmatprep.subr.mxu0 0.0
    %7191 = vmatpush1.msra.mxu0 0.0
    %7192 = vmatprep.subr.mxu0 0.0
    %7193 = vmatpush1.msra.mxu0 0.0
    %7194 = vmatprep.subr.mxu0 0.0
    %7195 = vmatpush1.msra.mxu0 0.0
    %7196 = vmatprep.subr.mxu0 0.0
    %7197 = vmatpush1.msra.mxu0 0.0
    %7198 = vmatprep.subr.mxu0 0.0
    %7199 = vmatpush1.msra.mxu0 0.0
    %7200 = vmatprep.subr.mxu0 0.0
    %7201 = vmatpush1.msra.mxu0 0.0
    %7202 = vmatprep.subr.mxu0 0.0
    %7203 = vmatpush1.msra.mxu0 0.0
    %7204 = vmatprep.subr.mxu0 0.0
    %7205 = vmatpush1.msra.mxu0 0.0
    %7206 = vmatprep.subr.mxu0 0.0
    %7207 = vmatpush1.msra.mxu0 0.0
    %7208 = vmatprep.subr.mxu0 0.0
    %7209 = vmatpush1.msra.mxu0 0.0
    %7210 = vmatprep.subr.mxu0 0.0
    %7211 = vmatpush1.msra.mxu0 0.0
    %7212 = vmatprep.subr.mxu0 0.0
    %7213 = vmatpush1.msra.mxu0 0.0
    %7214 = vmatprep.subr.mxu0 0.0
    %7215 = vmatpush1.msra.mxu0 0.0
    %7216 = vmatprep.subr.mxu0 0.0
    %7217 = vmatpush1.msra.mxu0 0.0
    %7218 = vmatprep.subr.mxu0 0.0
    %7219 = vmatpush1.msra.mxu0 0.0
    %7220 = vmatprep.subr.mxu0 0.0
    %7221 = vmatpush1.msra.mxu0 0.0
    %7222 = vmatprep.subr.mxu0 0.0
    %7223 = vmatpush1.msra.mxu0 0.0
    %7224 = vmatprep.subr.mxu0 0.0
    %7225 = vmatpush1.msra.mxu0 0.0
    %7226 = vmatprep.subr.mxu0 0.0
    %7227 = vmatpush1.msra.mxu0 0.0
    %7228 = vmatprep.subr.mxu0 0.0
    %7229 = vmatpush1.msra.mxu0 0.0
    %7230 = vmatprep.mubr.f32.mxu0 0.0
    %7231 = vmatmul.mubr.f32.gmra.mrb[0].mxu0 %v7161
    %v7232 = vpop.f32.mrb[0].mxu0
    %v7233 = vadd.f32 0.0, %v7232
    %v7234 = vpop.f32.mrb[0].mxu0
    %7235 = vdwg.mxu0
    %v7237 = vsel %vm3609, %v6095, 0
    %v7240 = vsel %vm6174, %v233, 0
    %7242 = vmatprep.subr.mxu0 0.0
    %7243 = vmatpush1.msra.mxu0 %v7240
    %7244 = vmatprep.subr.mxu0 0.0
    %7245 = vmatpush1.msra.mxu0 0.0
    %7246 = vmatprep.subr.mxu0 0.0
    %7247 = vmatpush1.msra.mxu0 0.0
    %7248 = vmatprep.subr.mxu0 0.0
    %7249 = vmatpush1.msra.mxu0 0.0
    %7250 = vmatprep.subr.mxu0 0.0
    %7251 = vmatpush1.msra.mxu0 0.0
    %7252 = vmatprep.subr.mxu0 0.0
    %7253 = vmatpush1.msra.mxu0 0.0
    %7254 = vmatprep.subr.mxu0 0.0
    %7255 = vmatpush1.msra.mxu0 0.0
    %7256 = vmatprep.subr.mxu0 0.0
    %7257 = vmatpush1.msra.mxu0 0.0
    %7258 = vmatprep.subr.mxu0 0.0
    %7259 = vmatpush1.msra.mxu0 0.0
    %7260 = vmatprep.subr.mxu0 0.0
    %7261 = vmatpush1.msra.mxu0 0.0
    %7262 = vmatprep.subr.mxu0 0.0
    %7263 = vmatpush1.msra.mxu0 0.0
    %7264 = vmatprep.subr.mxu0 0.0
    %7265 = vmatpush1.msra.mxu0 0.0
    %7266 = vmatprep.subr.mxu0 0.0
    %7267 = vmatpush1.msra.mxu0 0.0
    %7268 = vmatprep.subr.mxu0 0.0
    %7269 = vmatpush1.msra.mxu0 0.0
    %7270 = vmatprep.subr.mxu0 0.0
    %7271 = vmatpush1.msra.mxu0 0.0
    %7272 = vmatprep.subr.mxu0 0.0
    %7273 = vmatpush1.msra.mxu0 0.0
    %7274 = vmatprep.subr.mxu0 0.0
    %7275 = vmatpush1.msra.mxu0 0.0
    %7276 = vmatprep.subr.mxu0 0.0
    %7277 = vmatpush1.msra.mxu0 0.0
    %7278 = vmatprep.subr.mxu0 0.0
    %7279 = vmatpush1.msra.mxu0 0.0
    %7280 = vmatprep.subr.mxu0 0.0
    %7281 = vmatpush1.msra.mxu0 0.0
    %7282 = vmatprep.subr.mxu0 0.0
    %7283 = vmatpush1.msra.mxu0 0.0
    %7284 = vmatprep.subr.mxu0 0.0
    %7285 = vmatpush1.msra.mxu0 0.0
    %7286 = vmatprep.subr.mxu0 0.0
    %7287 = vmatpush1.msra.mxu0 0.0
    %7288 = vmatprep.subr.mxu0 0.0
    %7289 = vmatpush1.msra.mxu0 0.0
    %7290 = vmatprep.subr.mxu0 0.0
    %7291 = vmatpush1.msra.mxu0 0.0
    %7292 = vmatprep.subr.mxu0 0.0
    %7293 = vmatpush1.msra.mxu0 0.0
    %7294 = vmatprep.subr.mxu0 0.0
    %7295 = vmatpush1.msra.mxu0 0.0
    %7296 = vmatprep.subr.mxu0 0.0
    %7297 = vmatpush1.msra.mxu0 0.0
    %7298 = vmatprep.subr.mxu0 0.0
    %7299 = vmatpush1.msra.mxu0 0.0
    %7300 = vmatprep.subr.mxu0 0.0
    %7301 = vmatpush1.msra.mxu0 0.0
    %7302 = vmatprep.subr.mxu0 0.0
    %7303 = vmatpush1.msra.mxu0 0.0
    %7304 = vmatprep.subr.mxu0 0.0
    %7305 = vmatpush1.msra.mxu0 0.0
    %7306 = vmatprep.mubr.f32.mxu0 0.0
    %7307 = vmatmul.mubr.f32.gmra.mrb[0].mxu0 %v7237
    %v7308 = vpop.f32.mrb[0].mxu0
    %v7309 = vadd.f32 0.0, %v7308
    %v7310 = vpop.f32.mrb[0].mxu0
    %7311 = vdwg.mxu0
    %v7313 = vsel %vm3609, %v6168, 0
    %v7316 = vsel %vm6174, %v234, 0
    %7318 = vmatprep.subr.mxu0 0.0
    %7319 = vmatpush1.msra.mxu0 %v7316
    %7320 = vmatprep.subr.mxu0 0.0
    %7321 = vmatpush1.msra.mxu0 0.0
    %7322 = vmatprep.subr.mxu0 0.0
    %7323 = vmatpush1.msra.mxu0 0.0
    %7324 = vmatprep.subr.mxu0 0.0
    %7325 = vmatpush1.msra.mxu0 0.0
    %7326 = vmatprep.subr.mxu0 0.0
    %7327 = vmatpush1.msra.mxu0 0.0
    %7328 = vmatprep.subr.mxu0 0.0
    %7329 = vmatpush1.msra.mxu0 0.0
    %7330 = vmatprep.subr.mxu0 0.0
    %7331 = vmatpush1.msra.mxu0 0.0
    %7332 = vmatprep.subr.mxu0 0.0
    %7333 = vmatpush1.msra.mxu0 0.0
    %7334 = vmatprep.subr.mxu0 0.0
    %7335 = vmatpush1.msra.mxu0 0.0
    %7336 = vmatprep.subr.mxu0 0.0
    %7337 = vmatpush1.msra.mxu0 0.0
    %7338 = vmatprep.subr.mxu0 0.0
    %7339 = vmatpush1.msra.mxu0 0.0
    %7340 = vmatprep.subr.mxu0 0.0
    %7341 = vmatpush1.msra.mxu0 0.0
    %7342 = vmatprep.subr.mxu0 0.0
    %7343 = vmatpush1.msra.mxu0 0.0
    %7344 = vmatprep.subr.mxu0 0.0
    %7345 = vmatpush1.msra.mxu0 0.0
    %7346 = vmatprep.subr.mxu0 0.0
    %7347 = vmatpush1.msra.mxu0 0.0
    %7348 = vmatprep.subr.mxu0 0.0
    %7349 = vmatpush1.msra.mxu0 0.0
    %7350 = vmatprep.subr.mxu0 0.0
    %7351 = vmatpush1.msra.mxu0 0.0
    %7352 = vmatprep.subr.mxu0 0.0
    %7353 = vmatpush1.msra.mxu0 0.0
    %7354 = vmatprep.subr.mxu0 0.0
    %7355 = vmatpush1.msra.mxu0 0.0
    %7356 = vmatprep.subr.mxu0 0.0
    %7357 = vmatpush1.msra.mxu0 0.0
    %7358 = vmatprep.subr.mxu0 0.0
    %7359 = vmatpush1.msra.mxu0 0.0
    %7360 = vmatprep.subr.mxu0 0.0
    %7361 = vmatpush1.msra.mxu0 0.0
    %7362 = vmatprep.subr.mxu0 0.0
    %7363 = vmatpush1.msra.mxu0 0.0
    %7364 = vmatprep.subr.mxu0 0.0
    %7365 = vmatpush1.msra.mxu0 0.0
    %7366 = vmatprep.subr.mxu0 0.0
    %7367 = vmatpush1.msra.mxu0 0.0
    %7368 = vmatprep.subr.mxu0 0.0
    %7369 = vmatpush1.msra.mxu0 0.0
    %7370 = vmatprep.subr.mxu0 0.0
    %7371 = vmatpush1.msra.mxu0 0.0
    %7372 = vmatprep.subr.mxu0 0.0
    %7373 = vmatpush1.msra.mxu0 0.0
    %7374 = vmatprep.subr.mxu0 0.0
    %7375 = vmatpush1.msra.mxu0 0.0
    %7376 = vmatprep.subr.mxu0 0.0
    %7377 = vmatpush1.msra.mxu0 0.0
    %7378 = vmatprep.subr.mxu0 0.0
    %7379 = vmatpush1.msra.mxu0 0.0
    %7380 = vmatprep.subr.mxu0 0.0
    %7381 = vmatpush1.msra.mxu0 0.0
    %7382 = vmatprep.mubr.f32.mxu0 0.0
    %7383 = vmatmul.mubr.f32.gmra.mrb[0].mxu0 %v7313
    %v7384 = vpop.f32.mrb[0].mxu0
    %v7385 = vadd.f32 0.0, %v7384
    %v7386 = vpop.f32.mrb[0].mxu0
    %7387 = vdwg.mxu0
    %v7388 = vsel %vm4826, %v6245, 0.0
    %v7389 = vsel %vm4826, %v6321, 0.0
    %v7390 = vadd.f32 %v7388, %v7389
    %v7391 = vsel %vm4826, %v6397, 0.0
    %v7392 = vadd.f32 %v7390, %v7391
    %v7393 = vsel %vm4826, %v6473, 0.0
    %v7394 = vadd.f32 %v7392, %v7393
    %v7395 = vsel %vm4826, %v6549, 0.0
    %v7396 = vadd.f32 %v7394, %v7395
    %v7397 = vsel %vm4826, %v6625, 0.0
    %v7398 = vadd.f32 %v7396, %v7397
    %v7399 = vsel %vm4826, %v6701, 0.0
    %v7400 = vadd.f32 %v7398, %v7399
    %v7401 = vsel %vm4826, %v6777, 0.0
    %v7402 = vadd.f32 %v7400, %v7401
    %v7403 = vlaneseq
    %v7404 = vshrl.u32 %v7403, 7
    %v7405 = vsub.s32 0, %v7404
    %v7406 = vrot.slane %v235, %v7405
    %v7407 = vadd.f32 %v7402, %v7406
    %v7408 = vsel %vm4826, %v6853, 0.0
    %v7409 = vsel %vm4826, %v6929, 0.0
    %v7410 = vadd.f32 %v7408, %v7409
    %v7411 = vsel %vm4826, %v7005, 0.0
    %v7412 = vadd.f32 %v7410, %v7411
    %v7413 = vsel %vm4826, %v7081, 0.0
    %v7414 = vadd.f32 %v7412, %v7413
    %v7415 = vsel %vm4826, %v7157, 0.0
    %v7416 = vadd.f32 %v7414, %v7415
    %v7417 = vsel %vm4826, %v7233, 0.0
    %v7418 = vadd.f32 %v7416, %v7417
    %v7419 = vsel %vm4826, %v7309, 0.0
    %v7420 = vadd.f32 %v7418, %v7419
    %v7421 = vsel %vm4826, %v7385, 0.0
    %v7422 = vadd.f32 %v7420, %v7421
    %v7423 = vlaneseq
    %v7424 = vshrl.u32 %v7423, 7
    %v7425 = vsub.s32 1, %v7424
    %v7426 = vrot.slane %v235, %v7425
    %v7427 = vadd.f32 %v7422, %v7426
    %v7428 = vld [vmem:[%s2] sm:$0xff]
    %v7429 = vmul.f32 %v7407, %v7428
    %s7430 = scalar_lea.vmem %s2, 8
    %v7431 = vld [vmem:[%s7430] sm:$0xff]
    %v7432 = vmul.f32 %v7427, %v7431
    %v7433 = vadd.f32 %v7429, %v7432
    %v7434 = vsel %vm4826, %v7433, -inf
    %7435 = vmax.xlane.f32.xlu0 %v7434
    %v7436 = vpop.xlane.xlu0 %7435
    %v7437 = vsub.f32 %v7433, %v7436
    %v7438 = vmul.f32 %v7437, 1.442695
    %v7439 = vpow.pop %v7438
    %v7440 = vsel %vm4826, %v7439, 0.0
    %7441 = vadd.xlane.f32.xlu0 %v7440
    %v7442 = vpop.xlane.xlu0 %7441
    %v7443 = vrcp.pop %v7442
    %v7444 = vmul.f32 %v7439, %v7443
    %7445 = vst.msk [vmem:[#allocation2] sm:$0xff] %vm4826, %v7444
    // Predicated region
    $region26: #{tpu_custom_call.1} parent=1 // pred_check
      _
    $region27: #{tpu_custom_call.1} parent=1 // pred_check_branch
      %7447 = sbr.rel (0) target = $region29
    $region28: #{tpu_custom_call.1} parent=1 // pred_region
      %s7449 = ssub.s32 128, 128
      %7450 = vsyncadd [#allocation3], %s7449
      %s7452 = sshll.u32 [#allocation2], 4
      %s7453 = int_to_ptr.vmem [resolvable:$true] %s7452
      %7455 = dma.vmem_to_hbm [thread:$0]  %s7453, 128, %s6, [#allocation3]
    $region29: #{tpu_custom_call.1} parent=1 // pred_fallthru
      _
    // Predicated region
    $region30: #{tpu_custom_call.1} parent=1 // pred_check
      _
    $region31: #{tpu_custom_call.1} parent=1 // pred_check_branch
      %7457 = sbr.rel (0) target = $region33
    $region32: #{tpu_custom_call.1} parent=1 // pred_region
      %7458 = dma.done [#allocation3], 128
    $region33: #{tpu_custom_call.1} parent=1 // pred_fallthru
      _
    %7459 = vsyncpa [#allocation3], 1

</llo_original>
